<compile_context>
chip_gen: v5e
topology: v5e:2x2
jax: 0.10.0
libtpu: 0.0.40
codegen_flags: <defaults>
</compile_context>

<pallas_src>
import functools

import numpy as np
import jax
import jax.numpy as jnp
from jax import lax
from jax.experimental import pallas as pl
from jax.experimental.pallas import tpu as pltpu


# ----------------------------------------------------------------------------
# Pallas kernel: one separable-conv tile (tap-accumulated matmuls + epilogue)
# ----------------------------------------------------------------------------
def _sep_conv_kernel(*refs, k, d, axis, relu, has_bn, has_res):
    """Block shapes (axis == 1, conv slides along H; axis == 2 swaps H/W roles):
      x_ref  : (1, H + 2*pad, wt, ck)   bf16   zero-padded activation tile
      w_ref  : (k, ck, cn)              bf16   tap-major weights
      s_ref  : (1, cn) f32  (has_bn)    folded BN scale
      b_ref  : (1, cn) f32  (has_bn)    folded BN bias
      r_ref  : (1, H, wt, cn) (has_res) other-branch output, added before BN
      o_ref  : (1, H, wt, cn)
      acc_ref: (H*wt, cn) f32 scratch   persists across the Cin grid axis
    """
    it = iter(refs)
    x_ref = next(it)
    w_ref = next(it)
    s_ref = next(it) if has_bn else None
    b_ref = next(it) if has_bn else None
    r_ref = next(it) if has_res else None
    o_ref = next(it)
    acc_ref = next(it)

    kk = pl.program_id(3)          # Cin-tile index (reduction axis, innermost)

    @pl.when(kk == 0)
    def _init():
        acc_ref[...] = jnp.zeros_like(acc_ref)

    _, s1, s2, cn = o_ref.shape
    ck = x_ref.shape[3]
    m2 = s1 * s2

    # k shifted taps of the padded block; each is an (M, ck) @ (ck, cn) MXU matmul
    # accumulated in f32. The activation tile is read from HBM once, not k times.
    part = None
    for t in range(k):
        if axis == 1:
            xt = x_ref[0, t * d: t * d + s1, :, :]
        else:
            xt = x_ref[0, :, t * d: t * d + s2, :]
        contrib = jnp.dot(xt.reshape(m2, ck), w_ref[t],
                          preferred_element_type=jnp.float32)
        part = contrib if part is None else part + contrib
    acc_ref[...] += part

    @pl.when(kk == pl.num_programs(3) - 1)
    def _finalize():
        y = acc_ref[...].reshape(s1, s2, cn)
        if has_res:
            y = y + r_ref[0].astype(jnp.float32)       # gcl(x) + gcr(x)
        if has_bn:
            y = y * s_ref[...] + b_ref[...]            # folded eval-mode BatchNorm
        if relu:
            y = jnp.maximum(y, 0.0)
        o_ref[0] = y.astype(o_ref.dtype)


# ----------------------------------------------------------------------------
# Tile selection helpers (portable across v5e / v6e / v7x VMEM budgets)
# ----------------------------------------------------------------------------
def _channel_tile(c):
    for t in (256, 128):               # MXU-filling, lane-dense tiles when possible
        if c % t == 0:
            return t
    return c                           # tiny channel counts: block == full dim


def _spatial_tile(s, per_unit_bytes, budget=6 * 1024 * 1024):
    """Largest tile of the non-conv spatial axis (full extent or a multiple-of-8
    divisor of s) whose per-step double-buffered VMEM footprint fits `budget`."""
    cands = [s] + [t for t in range(s - s % 8, 7, -8) if t < s and s % t == 0]
    for t in cands:
        if t * per_unit_bytes <= budget:
            return t
    return cands[-1]


# ----------------------------------------------------------------------------
# Wrapper: one (k,1) or (1,k) conv as a tiled pallas_call
# ----------------------------------------------------------------------------
def sep_conv_pallas(x, w, *, axis, d=1, scale=None, bias=None, residual=None,
                    relu=False, out_dtype=jnp.bfloat16):
    """x: (N,H,W,Cin) NHWC.  w: (k,Cin,Cout)  (== PyTorch (Cout,Cin,k,1) taps).
    axis=1 -> kernel (k,1) slides along H; axis=2 -> kernel (1,k) slides along W.
    Optional fused epilogue: + residual, * scale + bias (folded BN), ReLU."""
    N, H, W, cin = x.shape
    k, wcin, cout = w.shape
    assert wcin == cin
    assert (scale is None) == (bias is None)
    pad = d * (k // 2)

    x = x.astype(jnp.bfloat16)
    w = w.astype(jnp.bfloat16)

    pad_widths = [(0, 0)] * 4
    pad_widths[axis] = (pad, pad)
    xp = jnp.pad(x, pad_widths)        # small 1-D halo pad, not a k-x im2col copy

    conv_len = x.shape[axis]           # output length along the conv axis
    other_len = x.shape[3 - axis]      # the other spatial axis
    conv_pad = conv_len + 2 * pad

    cn = _channel_tile(cout)
    ckt = _channel_tile(cin)
    per_unit = (2 * (conv_pad * ckt * 2 + conv_len * cn * 2
                     + (conv_len * cn * 2 if residual is not None else 0))
                + conv_len * cn * 4)   # bf16 in/out (double-buffered) + f32 acc
    ot = _spatial_tile(other_len, per_unit)

    if axis == 1:                      # conv along H
        x_block = (1, conv_pad, ot, ckt)
        x_map = lambda n, j, c, kk: (n, 0, j, kk)
        o_block = (1, conv_len, ot, cn)
        o_map = lambda n, j, c, kk: (n, 0, j, c)
    else:                              # conv along W
        x_block = (1, ot, conv_pad, ckt)
        x_map = lambda n, j, c, kk: (n, j, 0, kk)
        o_block = (1, ot, conv_len, cn)
        o_map = lambda n, j, c, kk: (n, j, 0, c)

    in_specs = [pl.BlockSpec(x_block, x_map),
                pl.BlockSpec((k, ckt, cn), lambda n, j, c, kk: (0, kk, c))]
    args = [xp, w]
    has_bn = scale is not None
    if has_bn:
        # pinned to block (0, c): DMA'd once per output-column tile, not per step
        in_specs += [pl.BlockSpec((1, cn), lambda n, j, c, kk: (0, c)),
                     pl.BlockSpec((1, cn), lambda n, j, c, kk: (0, c))]
        args += [scale, bias]
    has_res = residual is not None
    if has_res:
        in_specs += [pl.BlockSpec(o_block, o_map)]
        args += [residual.astype(jnp.bfloat16)]

    grid = (N, other_len // ot, cout // cn, cin // ckt)
    kern = functools.partial(_sep_conv_kernel, k=k, d=d, axis=axis, relu=relu,
                             has_bn=has_bn, has_res=has_res)
    return pl.pallas_call(
        kern,
        out_shape=jax.ShapeDtypeStruct((N, H, W, cout), out_dtype),
        grid_spec=pltpu.PrefetchScalarGridSpec(
            num_scalar_prefetch=0,
            grid=grid,
            in_specs=in_specs,
            out_specs=pl.BlockSpec(o_block, o_map),
            scratch_shapes=[pltpu.VMEM((conv_len * ot, cn), jnp.float32)]),
        compiler_params=pltpu.CompilerParams(
            dimension_semantics=("parallel", "parallel", "parallel", "arbitrary")),
    )(*args)


# ----------------------------------------------------------------------------
# GlobalConv forward (4 fused pallas_calls, NCHW boundary layout)
# ----------------------------------------------------------------------------
def global_conv_forward(x_nchw, p, *, d=1):
    x = jnp.transpose(x_nchw, (0, 2, 3, 1))          # NCHW -> NHWC

    # left branch:  (k,1) then (1,k)
    a = sep_conv_pallas(x, p['gcl0_w'], axis=1, d=d)
    gl = sep_conv_pallas(a, p['gcl1_w'], axis=2, d=d)

    # right branch: (1,k) then (k,1); fuse "+ gcl", folded BN and ReLU into its epilogue
    b = sep_conv_pallas(x, p['gcr0_w'], axis=2, d=d)
    out = sep_conv_pallas(b, p['gcr1_w'], axis=1, d=d,
                          residual=gl, scale=p['bn_s'], bias=p['bn_b'],
                          relu=True, out_dtype=jnp.float32)
    return jnp.transpose(out, (0, 3, 1, 2))          # NHWC -> NCHW


# ----------------------------------------------------------------------------
# Pure-JAX reference (lax.conv, f32) mirroring the PyTorch forward
# ----------------------------------------------------------------------------
def ref_forward(x_nchw, p, k=7, d=1):
    x = jnp.transpose(x_nchw, (0, 2, 3, 1)).astype(jnp.float32)
    pad = d * (k // 2)

    def conv(x, w, axis):
        cin, cout = w.shape[1], w.shape[2]
        if axis == 1:                                # kernel (k,1)
            w4, padding, rhs_dil = w.reshape(k, 1, cin, cout), [(pad, pad), (0, 0)], (d, 1)
        else:                                        # kernel (1,k)
            w4, padding, rhs_dil = w.reshape(1, k, cin, cout), [(0, 0), (pad, pad)], (1, d)
        return lax.conv_general_dilated(
            x, w4, window_strides=(1, 1), padding=padding, rhs_dilation=rhs_dil,
            dimension_numbers=('NHWC', 'HWIO', 'NHWC'),
            precision=lax.Precision.HIGHEST)

    gl = conv(conv(x, p['gcl0_w'], 1), p['gcl1_w'], 2)
    gr = conv(conv(x, p['gcr0_w'], 2), p['gcr1_w'], 1)
    y = gl + gr
    y = y * p['bn_s'].reshape(1, 1, 1, -1) + p['bn_b'].reshape(1, 1, 1, -1)
    y = jnp.maximum(y, 0.0)
    return jnp.transpose(y, (0, 3, 1, 2))


# ----------------------------------------------------------------------------
# Deterministic parameter construction
# ----------------------------------------------------------------------------
def make_params(key, chi, cho, k=7):
    # Weights stored tap-major (k, Cin, Cout); PyTorch (Cout,Cin,k,1) maps to
    # w_pt[:, :, :, 0].transpose(2, 1, 0).  Conv biases are absent (bias=False).
    # BatchNorm is applied in eval mode (running stats) folded into scale/bias.
    # TODO(synk): training-mode BN (batch statistics + running-stat update) is not modeled.
    def conv_w(kk, taps, ci, co):
        fan = taps * ci
        return jax.random.normal(kk, (taps, ci, co), jnp.float32) / jnp.sqrt(float(fan))

    ks = jax.random.split(key, 8)
    p = {}
    p['gcl0_w'] = conv_w(ks[0], k, chi, cho)
    p['gcl1_w'] = conv_w(ks[1], k, cho, cho)
    p['gcr0_w'] = conv_w(ks[2], k, chi, cho)
    p['gcr1_w'] = conv_w(ks[3], k, cho, cho)

    eps = 1e-5
    gamma = 1.0 + 0.1 * jax.random.normal(ks[4], (cho,), jnp.float32)
    beta = 0.1 * jax.random.normal(ks[5], (cho,), jnp.float32)
    mean = 0.1 * jax.random.normal(ks[6], (cho,), jnp.float32)
    var = jax.random.uniform(ks[7], (cho,), jnp.float32, minval=0.5, maxval=1.5)
    scale = gamma * lax.rsqrt(var + eps)
    bias = beta - mean * scale
    p['bn_s'] = scale.reshape(1, cho)
    p['bn_b'] = bias.reshape(1, cho)
    return p


if __name__ == "__main__":
    key = jax.random.PRNGKey(0)
    kx, kp = jax.random.split(key)

    N, CHI, CHO, H, W = 2, 4, 8, 16, 16
    K, D = 7, 1
    x = jax.random.normal(kx, (N, CHI, H, W), jnp.float32)   # PyTorch NCHW input
    params = make_params(kp, CHI, CHO, K)

    fwd = jax.jit(functools.partial(global_conv_forward, d=D))
    out = jax.block_until_ready(fwd(x, params))
    assert out.shape == (N, CHO, H, W), out.shape

    ref = jax.block_until_ready(ref_forward(x, params, K, D))
    # bf16 MXU inputs + bf16 inter-layer activations => loosened tolerance.
    np.testing.assert_allclose(np.asarray(out), np.asarray(ref),
                               rtol=1e-1, atol=1e-1)
    print("KERNEL_OK")
</pallas_src>

<mosaic_0001>
module attributes {stable_mosaic.version = 11 : i64} {
  func.func @_sep_conv_kernel(%arg0: i32, %arg1: i32, %arg2: i32, %arg3: i32, %arg4: memref<1x16x22x8xbf16, #tpu.memory_space<vmem>>, %arg5: memref<7x8x8xbf16, #tpu.memory_space<vmem>>, %arg6: memref<1x16x16x8xbf16, #tpu.memory_space<vmem>>, %arg7: memref<256x8xf32, #tpu.memory_space<vmem>>) attributes {dimension_semantics = [#tpu.dimension_semantics<parallel>, #tpu.dimension_semantics<parallel>, #tpu.dimension_semantics<parallel>, #tpu.dimension_semantics<arbitrary>], iteration_bounds = array<i64: 2, 1, 1, 1>, scalar_prefetch = 0 : i64, scratch_operands = 1 : i64, tpu.core_type = #tpu.core_type<tc>, window_params = [{transform_indices = @transform_0, window_bounds = array<i64: 1, 16, 22, 8>}, {transform_indices = @transform_1, window_bounds = array<i64: 7, 8, 8>}, {transform_indices = @transform_2, window_bounds = array<i64: 1, 16, 16, 8>}]} {
    %c0_i32 = arith.constant 0 : i32
    %0 = arith.cmpi eq, %arg3, %c0_i32 : i32
    %1 = arith.extui %0 : i1 to i32
    %c0_i32_0 = arith.constant 0 : i32
    %2 = arith.cmpi ne, %1, %c0_i32_0 : i32
    scf.if %2 {
      %cst_55 = arith.constant 0.000000e+00 : f32
      %57 = vector.broadcast %cst_55 : f32 to vector<256x8xf32>
      %c0_56 = arith.constant 0 : index
      %c0_57 = arith.constant 0 : index
      %58 = vector.load %arg7[%c0_56, %c0_57] : memref<256x8xf32, #tpu.memory_space<vmem>>, vector<256x8xf32>
      tpu.vector_store %arg7[%c0_56, %c0_57], %57 {strides = array<i32>} : memref<256x8xf32, #tpu.memory_space<vmem>>, vector<256x8xf32>,
    } else {
    }
    %c0 = arith.constant 0 : index
    %c0_1 = arith.constant 0 : index
    %c0_2 = arith.constant 0 : index
    %c0_3 = arith.constant 0 : index
    %3 = vector.load %arg4[%c0, %c0_1, %c0_2, %c0_3] : memref<1x16x22x8xbf16, #tpu.memory_space<vmem>>, vector<1x16x16x8xbf16>
    %4 = vector.shape_cast %3 : vector<1x16x16x8xbf16> to vector<16x16x8xbf16>
    %5 = vector.shape_cast %4 : vector<16x16x8xbf16> to vector<256x8xbf16>
    %c0_4 = arith.constant 0 : index
    %c0_5 = arith.constant 0 : index
    %c0_6 = arith.constant 0 : index
    %6 = vector.load %arg5[%c0_4, %c0_5, %c0_6] : memref<7x8x8xbf16, #tpu.memory_space<vmem>>, vector<1x8x8xbf16>
    %7 = vector.shape_cast %6 : vector<1x8x8xbf16> to vector<8x8xbf16>
    %cst = arith.constant dense<0.000000e+00> : vector<256x8xf32>
    %8 = tpu.matmul %5, %7, %cst {dimension_numbers = #tpu.dot_dimension_numbers<[1], [0], [0], [1], [0, 0, 1, 1], [], []>} : vector<256x8xbf16>, vector<8x8xbf16>, vector<256x8xf32> -> vector<256x8xf32>
    %c0_7 = arith.constant 0 : index
    %c0_8 = arith.constant 0 : index
    %c1 = arith.constant 1 : index
    %c0_9 = arith.constant 0 : index
    %9 = vector.load %arg4[%c0_7, %c0_8, %c1, %c0_9] : memref<1x16x22x8xbf16, #tpu.memory_space<vmem>>, vector<1x16x16x8xbf16>
    %10 = vector.shape_cast %9 : vector<1x16x16x8xbf16> to vector<16x16x8xbf16>
    %11 = vector.shape_cast %10 : vector<16x16x8xbf16> to vector<256x8xbf16>
    %c1_10 = arith.constant 1 : index
    %c0_11 = arith.constant 0 : index
    %c0_12 = arith.constant 0 : index
    %12 = vector.load %arg5[%c1_10, %c0_11, %c0_12] : memref<7x8x8xbf16, #tpu.memory_space<vmem>>, vector<1x8x8xbf16>
    %13 = vector.shape_cast %12 : vector<1x8x8xbf16> to vector<8x8xbf16>
    %cst_13 = arith.constant dense<0.000000e+00> : vector<256x8xf32>
    %14 = tpu.matmul %11, %13, %cst_13 {dimension_numbers = #tpu.dot_dimension_numbers<[1], [0], [0], [1], [0, 0, 1, 1], [], []>} : vector<256x8xbf16>, vector<8x8xbf16>, vector<256x8xf32> -> vector<256x8xf32>
    %15 = arith.addf %8, %14 : vector<256x8xf32>
    %c0_14 = arith.constant 0 : index
    %c0_15 = arith.constant 0 : index
    %c2 = arith.constant 2 : index
    %c0_16 = arith.constant 0 : index
    %16 = vector.load %arg4[%c0_14, %c0_15, %c2, %c0_16] : memref<1x16x22x8xbf16, #tpu.memory_space<vmem>>, vector<1x16x16x8xbf16>
    %17 = vector.shape_cast %16 : vector<1x16x16x8xbf16> to vector<16x16x8xbf16>
    %18 = vector.shape_cast %17 : vector<16x16x8xbf16> to vector<256x8xbf16>
    %c2_17 = arith.constant 2 : index
    %c0_18 = arith.constant 0 : index
    %c0_19 = arith.constant 0 : index
    %19 = vector.load %arg5[%c2_17, %c0_18, %c0_19] : memref<7x8x8xbf16, #tpu.memory_space<vmem>>, vector<1x8x8xbf16>
    %20 = vector.shape_cast %19 : vector<1x8x8xbf16> to vector<8x8xbf16>
    %cst_20 = arith.constant dense<0.000000e+00> : vector<256x8xf32>
    %21 = tpu.matmul %18, %20, %cst_20 {dimension_numbers = #tpu.dot_dimension_numbers<[1], [0], [0], [1], [0, 0, 1, 1], [], []>} : vector<256x8xbf16>, vector<8x8xbf16>, vector<256x8xf32> -> vector<256x8xf32>
    %22 = arith.addf %15, %21 : vector<256x8xf32>
    %c0_21 = arith.constant 0 : index
    %c0_22 = arith.constant 0 : index
    %c3 = arith.constant 3 : index
    %c0_23 = arith.constant 0 : index
    %23 = vector.load %arg4[%c0_21, %c0_22, %c3, %c0_23] : memref<1x16x22x8xbf16, #tpu.memory_space<vmem>>, vector<1x16x16x8xbf16>
    %24 = vector.shape_cast %23 : vector<1x16x16x8xbf16> to vector<16x16x8xbf16>
    %25 = vector.shape_cast %24 : vector<16x16x8xbf16> to vector<256x8xbf16>
    %c3_24 = arith.constant 3 : index
    %c0_25 = arith.constant 0 : index
    %c0_26 = arith.constant 0 : index
    %26 = vector.load %arg5[%c3_24, %c0_25, %c0_26] : memref<7x8x8xbf16, #tpu.memory_space<vmem>>, vector<1x8x8xbf16>
    %27 = vector.shape_cast %26 : vector<1x8x8xbf16> to vector<8x8xbf16>
    %cst_27 = arith.constant dense<0.000000e+00> : vector<256x8xf32>
    %28 = tpu.matmul %25, %27, %cst_27 {dimension_numbers = #tpu.dot_dimension_numbers<[1], [0], [0], [1], [0, 0, 1, 1], [], []>} : vector<256x8xbf16>, vector<8x8xbf16>, vector<256x8xf32> -> vector<256x8xf32>
    %29 = arith.addf %22, %28 : vector<256x8xf32>
    %c0_28 = arith.constant 0 : index
    %c0_29 = arith.constant 0 : index
    %c4 = arith.constant 4 : index
    %c0_30 = arith.constant 0 : index
    %30 = vector.load %arg4[%c0_28, %c0_29, %c4, %c0_30] : memref<1x16x22x8xbf16, #tpu.memory_space<vmem>>, vector<1x16x16x8xbf16>
    %31 = vector.shape_cast %30 : vector<1x16x16x8xbf16> to vector<16x16x8xbf16>
    %32 = vector.shape_cast %31 : vector<16x16x8xbf16> to vector<256x8xbf16>
    %c4_31 = arith.constant 4 : index
    %c0_32 = arith.constant 0 : index
    %c0_33 = arith.constant 0 : index
    %33 = vector.load %arg5[%c4_31, %c0_32, %c0_33] : memref<7x8x8xbf16, #tpu.memory_space<vmem>>, vector<1x8x8xbf16>
    %34 = vector.shape_cast %33 : vector<1x8x8xbf16> to vector<8x8xbf16>
    %cst_34 = arith.constant dense<0.000000e+00> : vector<256x8xf32>
    %35 = tpu.matmul %32, %34, %cst_34 {dimension_numbers = #tpu.dot_dimension_numbers<[1], [0], [0], [1], [0, 0, 1, 1], [], []>} : vector<256x8xbf16>, vector<8x8xbf16>, vector<256x8xf32> -> vector<256x8xf32>
    %36 = arith.addf %29, %35 : vector<256x8xf32>
    %c0_35 = arith.constant 0 : index
    %c0_36 = arith.constant 0 : index
    %c5 = arith.constant 5 : index
    %c0_37 = arith.constant 0 : index
    %37 = vector.load %arg4[%c0_35, %c0_36, %c5, %c0_37] : memref<1x16x22x8xbf16, #tpu.memory_space<vmem>>, vector<1x16x16x8xbf16>
    %38 = vector.shape_cast %37 : vector<1x16x16x8xbf16> to vector<16x16x8xbf16>
    %39 = vector.shape_cast %38 : vector<16x16x8xbf16> to vector<256x8xbf16>
    %c5_38 = arith.constant 5 : index
    %c0_39 = arith.constant 0 : index
    %c0_40 = arith.constant 0 : index
    %40 = vector.load %arg5[%c5_38, %c0_39, %c0_40] : memref<7x8x8xbf16, #tpu.memory_space<vmem>>, vector<1x8x8xbf16>
    %41 = vector.shape_cast %40 : vector<1x8x8xbf16> to vector<8x8xbf16>
    %cst_41 = arith.constant dense<0.000000e+00> : vector<256x8xf32>
    %42 = tpu.matmul %39, %41, %cst_41 {dimension_numbers = #tpu.dot_dimension_numbers<[1], [0], [0], [1], [0, 0, 1, 1], [], []>} : vector<256x8xbf16>, vector<8x8xbf16>, vector<256x8xf32> -> vector<256x8xf32>
    %43 = arith.addf %36, %42 : vector<256x8xf32>
    %c0_42 = arith.constant 0 : index
    %c0_43 = arith.constant 0 : index
    %c6 = arith.constant 6 : index
    %c0_44 = arith.constant 0 : index
    %44 = vector.load %arg4[%c0_42, %c0_43, %c6, %c0_44] : memref<1x16x22x8xbf16, #tpu.memory_space<vmem>>, vector<1x16x16x8xbf16>
    %45 = vector.shape_cast %44 : vector<1x16x16x8xbf16> to vector<16x16x8xbf16>
    %46 = vector.shape_cast %45 : vector<16x16x8xbf16> to vector<256x8xbf16>
    %c6_45 = arith.constant 6 : index
    %c0_46 = arith.constant 0 : index
    %c0_47 = arith.constant 0 : index
    %47 = vector.load %arg5[%c6_45, %c0_46, %c0_47] : memref<7x8x8xbf16, #tpu.memory_space<vmem>>, vector<1x8x8xbf16>
    %48 = vector.shape_cast %47 : vector<1x8x8xbf16> to vector<8x8xbf16>
    %cst_48 = arith.constant dense<0.000000e+00> : vector<256x8xf32>
    %49 = tpu.matmul %46, %48, %cst_48 {dimension_numbers = #tpu.dot_dimension_numbers<[1], [0], [0], [1], [0, 0, 1, 1], [], []>} : vector<256x8xbf16>, vector<8x8xbf16>, vector<256x8xf32> -> vector<256x8xf32>
    %50 = arith.addf %43, %49 : vector<256x8xf32>
    %c0_49 = arith.constant 0 : index
    %c0_50 = arith.constant 0 : index
    %51 = vector.load %arg7[%c0_49, %c0_50] : memref<256x8xf32, #tpu.memory_space<vmem>>, vector<256x8xf32>
    %52 = arith.addf %51, %50 : vector<256x8xf32>
    %c0_51 = arith.constant 0 : index
    %c0_52 = arith.constant 0 : index
    %53 = vector.load %arg7[%c0_51, %c0_52] : memref<256x8xf32, #tpu.memory_space<vmem>>, vector<256x8xf32>
    tpu.vector_store %arg7[%c0_51, %c0_52], %52 {strides = array<i32>} : memref<256x8xf32, #tpu.memory_space<vmem>>, vector<256x8xf32>,
    %c0_i32_53 = arith.constant 0 : i32
    %54 = arith.cmpi eq, %arg3, %c0_i32_53 : i32
    %55 = arith.extui %54 : i1 to i32
    %c0_i32_54 = arith.constant 0 : i32
    %56 = arith.cmpi ne, %55, %c0_i32_54 : i32
    scf.if %56 {
      %c0_55 = arith.constant 0 : index
      %c0_56 = arith.constant 0 : index
      %57 = vector.load %arg7[%c0_55, %c0_56] : memref<256x8xf32, #tpu.memory_space<vmem>>, vector<256x8xf32>
      %58 = vector.shape_cast %57 : vector<256x8xf32> to vector<16x16x8xf32>
      %59 = arith.truncf %58 : vector<16x16x8xf32> to vector<16x16x8xbf16>
      %c0_57 = arith.constant 0 : index
      %c0_58 = arith.constant 0 : index
      %c0_59 = arith.constant 0 : index
      %c0_60 = arith.constant 0 : index
      %60 = vector.load %arg6[%c0_57, %c0_58, %c0_59, %c0_60] : memref<1x16x16x8xbf16, #tpu.memory_space<vmem>>, vector<1x16x16x8xbf16>
      %61 = vector.shape_cast %60 : vector<1x16x16x8xbf16> to vector<16x16x8xbf16>
      %62 = vector.shape_cast %59 : vector<16x16x8xbf16> to vector<1x16x16x8xbf16>
      tpu.vector_store %arg6[%c0_57, %c0_58, %c0_59, %c0_60], %62 {strides = array<i32>} : memref<1x16x16x8xbf16, #tpu.memory_space<vmem>>, vector<1x16x16x8xbf16>,
    } else {
    }
    return
  }
  func.func @transform_0(%arg0: i32, %arg1: i32, %arg2: i32, %arg3: i32) -> (i32, i32, i32, i32) {
    %c0_i32 = arith.constant 0 : i32
    %c0_i32_0 = arith.constant 0 : i32
    return %arg0, %arg1, %c0_i32, %arg3 : i32, i32, i32, i32
  }
  func.func @transform_1(%arg0: i32, %arg1: i32, %arg2: i32, %arg3: i32) -> (i32, i32, i32) {
    %c0_i32 = arith.constant 0 : i32
    %c0_i32_0 = arith.constant 0 : i32
    return %c0_i32, %arg3, %arg2 : i32, i32, i32
  }
  func.func @transform_2(%arg0: i32, %arg1: i32, %arg2: i32, %arg3: i32) -> (i32, i32, i32, i32) {
    %c0_i32 = arith.constant 0 : i32
    %c0_i32_0 = arith.constant 0 : i32
    return %arg0, %arg1, %c0_i32, %arg2 : i32, i32, i32, i32
  }
}

module attributes {stable_mosaic.version = 11 : i64} {
  func.func @_sep_conv_kernel(%arg0: i32, %arg1: i32, %arg2: i32, %arg3: i32, %arg4: memref<1x22x16x4xbf16, #tpu.memory_space<vmem>>, %arg5: memref<7x4x8xbf16, #tpu.memory_space<vmem>>, %arg6: memref<1x16x16x8xbf16, #tpu.memory_space<vmem>>, %arg7: memref<256x8xf32, #tpu.memory_space<vmem>>) attributes {dimension_semantics = [#tpu.dimension_semantics<parallel>, #tpu.dimension_semantics<parallel>, #tpu.dimension_semantics<parallel>, #tpu.dimension_semantics<arbitrary>], iteration_bounds = array<i64: 2, 1, 1, 1>, scalar_prefetch = 0 : i64, scratch_operands = 1 : i64, tpu.core_type = #tpu.core_type<tc>, window_params = [{transform_indices = @transform_0, window_bounds = array<i64: 1, 22, 16, 4>}, {transform_indices = @transform_1, window_bounds = array<i64: 7, 4, 8>}, {transform_indices = @transform_2, window_bounds = array<i64: 1, 16, 16, 8>}]} {
    %c0_i32 = arith.constant 0 : i32
    %0 = arith.cmpi eq, %arg3, %c0_i32 : i32
    %1 = arith.extui %0 : i1 to i32
    %c0_i32_0 = arith.constant 0 : i32
    %2 = arith.cmpi ne, %1, %c0_i32_0 : i32
    scf.if %2 {
      %cst_55 = arith.constant 0.000000e+00 : f32
      %57 = vector.broadcast %cst_55 : f32 to vector<256x8xf32>
      %c0_56 = arith.constant 0 : index
      %c0_57 = arith.constant 0 : index
      %58 = vector.load %arg7[%c0_56, %c0_57] : memref<256x8xf32, #tpu.memory_space<vmem>>, vector<256x8xf32>
      tpu.vector_store %arg7[%c0_56, %c0_57], %57 {strides = array<i32>} : memref<256x8xf32, #tpu.memory_space<vmem>>, vector<256x8xf32>,
    } else {
    }
    %c0 = arith.constant 0 : index
    %c0_1 = arith.constant 0 : index
    %c0_2 = arith.constant 0 : index
    %c0_3 = arith.constant 0 : index
    %3 = vector.load %arg4[%c0, %c0_1, %c0_2, %c0_3] : memref<1x22x16x4xbf16, #tpu.memory_space<vmem>>, vector<1x16x16x4xbf16>
    %4 = vector.shape_cast %3 : vector<1x16x16x4xbf16> to vector<16x16x4xbf16>
    %5 = vector.shape_cast %4 : vector<16x16x4xbf16> to vector<256x4xbf16>
    %c0_4 = arith.constant 0 : index
    %c0_5 = arith.constant 0 : index
    %c0_6 = arith.constant 0 : index
    %6 = vector.load %arg5[%c0_4, %c0_5, %c0_6] : memref<7x4x8xbf16, #tpu.memory_space<vmem>>, vector<1x4x8xbf16>
    %7 = vector.shape_cast %6 : vector<1x4x8xbf16> to vector<4x8xbf16>
    %cst = arith.constant dense<0.000000e+00> : vector<256x8xf32>
    %8 = tpu.matmul %5, %7, %cst {dimension_numbers = #tpu.dot_dimension_numbers<[1], [0], [0], [1], [0, 0, 1, 1], [], []>} : vector<256x4xbf16>, vector<4x8xbf16>, vector<256x8xf32> -> vector<256x8xf32>
    %c0_7 = arith.constant 0 : index
    %c1 = arith.constant 1 : index
    %c0_8 = arith.constant 0 : index
    %c0_9 = arith.constant 0 : index
    %9 = vector.load %arg4[%c0_7, %c1, %c0_8, %c0_9] : memref<1x22x16x4xbf16, #tpu.memory_space<vmem>>, vector<1x16x16x4xbf16>
    %10 = vector.shape_cast %9 : vector<1x16x16x4xbf16> to vector<16x16x4xbf16>
    %11 = vector.shape_cast %10 : vector<16x16x4xbf16> to vector<256x4xbf16>
    %c1_10 = arith.constant 1 : index
    %c0_11 = arith.constant 0 : index
    %c0_12 = arith.constant 0 : index
    %12 = vector.load %arg5[%c1_10, %c0_11, %c0_12] : memref<7x4x8xbf16, #tpu.memory_space<vmem>>, vector<1x4x8xbf16>
    %13 = vector.shape_cast %12 : vector<1x4x8xbf16> to vector<4x8xbf16>
    %cst_13 = arith.constant dense<0.000000e+00> : vector<256x8xf32>
    %14 = tpu.matmul %11, %13, %cst_13 {dimension_numbers = #tpu.dot_dimension_numbers<[1], [0], [0], [1], [0, 0, 1, 1], [], []>} : vector<256x4xbf16>, vector<4x8xbf16>, vector<256x8xf32> -> vector<256x8xf32>
    %15 = arith.addf %8, %14 : vector<256x8xf32>
    %c0_14 = arith.constant 0 : index
    %c2 = arith.constant 2 : index
    %c0_15 = arith.constant 0 : index
    %c0_16 = arith.constant 0 : index
    %16 = vector.load %arg4[%c0_14, %c2, %c0_15, %c0_16] : memref<1x22x16x4xbf16, #tpu.memory_space<vmem>>, vector<1x16x16x4xbf16>
    %17 = vector.shape_cast %16 : vector<1x16x16x4xbf16> to vector<16x16x4xbf16>
    %18 = vector.shape_cast %17 : vector<16x16x4xbf16> to vector<256x4xbf16>
    %c2_17 = arith.constant 2 : index
    %c0_18 = arith.constant 0 : index
    %c0_19 = arith.constant 0 : index
    %19 = vector.load %arg5[%c2_17, %c0_18, %c0_19] : memref<7x4x8xbf16, #tpu.memory_space<vmem>>, vector<1x4x8xbf16>
    %20 = vector.shape_cast %19 : vector<1x4x8xbf16> to vector<4x8xbf16>
    %cst_20 = arith.constant dense<0.000000e+00> : vector<256x8xf32>
    %21 = tpu.matmul %18, %20, %cst_20 {dimension_numbers = #tpu.dot_dimension_numbers<[1], [0], [0], [1], [0, 0, 1, 1], [], []>} : vector<256x4xbf16>, vector<4x8xbf16>, vector<256x8xf32> -> vector<256x8xf32>
    %22 = arith.addf %15, %21 : vector<256x8xf32>
    %c0_21 = arith.constant 0 : index
    %c3 = arith.constant 3 : index
    %c0_22 = arith.constant 0 : index
    %c0_23 = arith.constant 0 : index
    %23 = vector.load %arg4[%c0_21, %c3, %c0_22, %c0_23] : memref<1x22x16x4xbf16, #tpu.memory_space<vmem>>, vector<1x16x16x4xbf16>
    %24 = vector.shape_cast %23 : vector<1x16x16x4xbf16> to vector<16x16x4xbf16>
    %25 = vector.shape_cast %24 : vector<16x16x4xbf16> to vector<256x4xbf16>
    %c3_24 = arith.constant 3 : index
    %c0_25 = arith.constant 0 : index
    %c0_26 = arith.constant 0 : index
    %26 = vector.load %arg5[%c3_24, %c0_25, %c0_26] : memref<7x4x8xbf16, #tpu.memory_space<vmem>>, vector<1x4x8xbf16>
    %27 = vector.shape_cast %26 : vector<1x4x8xbf16> to vector<4x8xbf16>
    %cst_27 = arith.constant dense<0.000000e+00> : vector<256x8xf32>
    %28 = tpu.matmul %25, %27, %cst_27 {dimension_numbers = #tpu.dot_dimension_numbers<[1], [0], [0], [1], [0, 0, 1, 1], [], []>} : vector<256x4xbf16>, vector<4x8xbf16>, vector<256x8xf32> -> vector<256x8xf32>
    %29 = arith.addf %22, %28 : vector<256x8xf32>
    %c0_28 = arith.constant 0 : index
    %c4 = arith.constant 4 : index
    %c0_29 = arith.constant 0 : index
    %c0_30 = arith.constant 0 : index
    %30 = vector.load %arg4[%c0_28, %c4, %c0_29, %c0_30] : memref<1x22x16x4xbf16, #tpu.memory_space<vmem>>, vector<1x16x16x4xbf16>
    %31 = vector.shape_cast %30 : vector<1x16x16x4xbf16> to vector<16x16x4xbf16>
    %32 = vector.shape_cast %31 : vector<16x16x4xbf16> to vector<256x4xbf16>
    %c4_31 = arith.constant 4 : index
    %c0_32 = arith.constant 0 : index
    %c0_33 = arith.constant 0 : index
    %33 = vector.load %arg5[%c4_31, %c0_32, %c0_33] : memref<7x4x8xbf16, #tpu.memory_space<vmem>>, vector<1x4x8xbf16>
    %34 = vector.shape_cast %33 : vector<1x4x8xbf16> to vector<4x8xbf16>
    %cst_34 = arith.constant dense<0.000000e+00> : vector<256x8xf32>
    %35 = tpu.matmul %32, %34, %cst_34 {dimension_numbers = #tpu.dot_dimension_numbers<[1], [0], [0], [1], [0, 0, 1, 1], [], []>} : vector<256x4xbf16>, vector<4x8xbf16>, vector<256x8xf32> -> vector<256x8xf32>
    %36 = arith.addf %29, %35 : vector<256x8xf32>
    %c0_35 = arith.constant 0 : index
    %c5 = arith.constant 5 : index
    %c0_36 = arith.constant 0 : index
    %c0_37 = arith.constant 0 : index
    %37 = vector.load %arg4[%c0_35, %c5, %c0_36, %c0_37] : memref<1x22x16x4xbf16, #tpu.memory_space<vmem>>, vector<1x16x16x4xbf16>
    %38 = vector.shape_cast %37 : vector<1x16x16x4xbf16> to vector<16x16x4xbf16>
    %39 = vector.shape_cast %38 : vector<16x16x4xbf16> to vector<256x4xbf16>
    %c5_38 = arith.constant 5 : index
    %c0_39 = arith.constant 0 : index
    %c0_40 = arith.constant 0 : index
    %40 = vector.load %arg5[%c5_38, %c0_39, %c0_40] : memref<7x4x8xbf16, #tpu.memory_space<vmem>>, vector<1x4x8xbf16>
    %41 = vector.shape_cast %40 : vector<1x4x8xbf16> to vector<4x8xbf16>
    %cst_41 = arith.constant dense<0.000000e+00> : vector<256x8xf32>
    %42 = tpu.matmul %39, %41, %cst_41 {dimension_numbers = #tpu.dot_dimension_numbers<[1], [0], [0], [1], [0, 0, 1, 1], [], []>} : vector<256x4xbf16>, vector<4x8xbf16>, vector<256x8xf32> -> vector<256x8xf32>
    %43 = arith.addf %36, %42 : vector<256x8xf32>
    %c0_42 = arith.constant 0 : index
    %c6 = arith.constant 6 : index
    %c0_43 = arith.constant 0 : index
    %c0_44 = arith.constant 0 : index
    %44 = vector.load %arg4[%c0_42, %c6, %c0_43, %c0_44] : memref<1x22x16x4xbf16, #tpu.memory_space<vmem>>, vector<1x16x16x4xbf16>
    %45 = vector.shape_cast %44 : vector<1x16x16x4xbf16> to vector<16x16x4xbf16>
    %46 = vector.shape_cast %45 : vector<16x16x4xbf16> to vector<256x4xbf16>
    %c6_45 = arith.constant 6 : index
    %c0_46 = arith.constant 0 : index
    %c0_47 = arith.constant 0 : index
    %47 = vector.load %arg5[%c6_45, %c0_46, %c0_47] : memref<7x4x8xbf16, #tpu.memory_space<vmem>>, vector<1x4x8xbf16>
    %48 = vector.shape_cast %47 : vector<1x4x8xbf16> to vector<4x8xbf16>
    %cst_48 = arith.constant dense<0.000000e+00> : vector<256x8xf32>
    %49 = tpu.matmul %46, %48, %cst_48 {dimension_numbers = #tpu.dot_dimension_numbers<[1], [0], [0], [1], [0, 0, 1, 1], [], []>} : vector<256x4xbf16>, vector<4x8xbf16>, vector<256x8xf32> -> vector<256x8xf32>
    %50 = arith.addf %43, %49 : vector<256x8xf32>
    %c0_49 = arith.constant 0 : index
    %c0_50 = arith.constant 0 : index
    %51 = vector.load %arg7[%c0_49, %c0_50] : memref<256x8xf32, #tpu.memory_space<vmem>>, vector<256x8xf32>
    %52 = arith.addf %51, %50 : vector<256x8xf32>
    %c0_51 = arith.constant 0 : index
    %c0_52 = arith.constant 0 : index
    %53 = vector.load %arg7[%c0_51, %c0_52] : memref<256x8xf32, #tpu.memory_space<vmem>>, vector<256x8xf32>
    tpu.vector_store %arg7[%c0_51, %c0_52], %52 {strides = array<i32>} : memref<256x8xf32, #tpu.memory_space<vmem>>, vector<256x8xf32>,
    %c0_i32_53 = arith.constant 0 : i32
    %54 = arith.cmpi eq, %arg3, %c0_i32_53 : i32
    %55 = arith.extui %54 : i1 to i32
    %c0_i32_54 = arith.constant 0 : i32
    %56 = arith.cmpi ne, %55, %c0_i32_54 : i32
    scf.if %56 {
      %c0_55 = arith.constant 0 : index
      %c0_56 = arith.constant 0 : index
      %57 = vector.load %arg7[%c0_55, %c0_56] : memref<256x8xf32, #tpu.memory_space<vmem>>, vector<256x8xf32>
      %58 = vector.shape_cast %57 : vector<256x8xf32> to vector<16x16x8xf32>
      %59 = arith.truncf %58 : vector<16x16x8xf32> to vector<16x16x8xbf16>
      %c0_57 = arith.constant 0 : index
      %c0_58 = arith.constant 0 : index
      %c0_59 = arith.constant 0 : index
      %c0_60 = arith.constant 0 : index
      %60 = vector.load %arg6[%c0_57, %c0_58, %c0_59, %c0_60] : memref<1x16x16x8xbf16, #tpu.memory_space<vmem>>, vector<1x16x16x8xbf16>
      %61 = vector.shape_cast %60 : vector<1x16x16x8xbf16> to vector<16x16x8xbf16>
      %62 = vector.shape_cast %59 : vector<16x16x8xbf16> to vector<1x16x16x8xbf16>
      tpu.vector_store %arg6[%c0_57, %c0_58, %c0_59, %c0_60], %62 {strides = array<i32>} : memref<1x16x16x8xbf16, #tpu.memory_space<vmem>>, vector<1x16x16x8xbf16>,
    } else {
    }
    return
  }
  func.func @transform_0(%arg0: i32, %arg1: i32, %arg2: i32, %arg3: i32) -> (i32, i32, i32, i32) {
    %c0_i32 = arith.constant 0 : i32
    %c0_i32_0 = arith.constant 0 : i32
    return %arg0, %c0_i32, %arg1, %arg3 : i32, i32, i32, i32
  }
  func.func @transform_1(%arg0: i32, %arg1: i32, %arg2: i32, %arg3: i32) -> (i32, i32, i32) {
    %c0_i32 = arith.constant 0 : i32
    %c0_i32_0 = arith.constant 0 : i32
    return %c0_i32, %arg3, %arg2 : i32, i32, i32
  }
  func.func @transform_2(%arg0: i32, %arg1: i32, %arg2: i32, %arg3: i32) -> (i32, i32, i32, i32) {
    %c0_i32 = arith.constant 0 : i32
    %c0_i32_0 = arith.constant 0 : i32
    return %arg0, %c0_i32, %arg1, %arg2 : i32, i32, i32, i32
  }
}

module attributes {stable_mosaic.version = 11 : i64} {
  func.func @_sep_conv_kernel(%arg0: i32, %arg1: i32, %arg2: i32, %arg3: i32, %arg4: memref<1x16x22x4xbf16, #tpu.memory_space<vmem>>, %arg5: memref<7x4x8xbf16, #tpu.memory_space<vmem>>, %arg6: memref<1x16x16x8xbf16, #tpu.memory_space<vmem>>, %arg7: memref<256x8xf32, #tpu.memory_space<vmem>>) attributes {dimension_semantics = [#tpu.dimension_semantics<parallel>, #tpu.dimension_semantics<parallel>, #tpu.dimension_semantics<parallel>, #tpu.dimension_semantics<arbitrary>], iteration_bounds = array<i64: 2, 1, 1, 1>, scalar_prefetch = 0 : i64, scratch_operands = 1 : i64, tpu.core_type = #tpu.core_type<tc>, window_params = [{transform_indices = @transform_0, window_bounds = array<i64: 1, 16, 22, 4>}, {transform_indices = @transform_1, window_bounds = array<i64: 7, 4, 8>}, {transform_indices = @transform_2, window_bounds = array<i64: 1, 16, 16, 8>}]} {
    %c0_i32 = arith.constant 0 : i32
    %0 = arith.cmpi eq, %arg3, %c0_i32 : i32
    %1 = arith.extui %0 : i1 to i32
    %c0_i32_0 = arith.constant 0 : i32
    %2 = arith.cmpi ne, %1, %c0_i32_0 : i32
    scf.if %2 {
      %cst_55 = arith.constant 0.000000e+00 : f32
      %57 = vector.broadcast %cst_55 : f32 to vector<256x8xf32>
      %c0_56 = arith.constant 0 : index
      %c0_57 = arith.constant 0 : index
      %58 = vector.load %arg7[%c0_56, %c0_57] : memref<256x8xf32, #tpu.memory_space<vmem>>, vector<256x8xf32>
      tpu.vector_store %arg7[%c0_56, %c0_57], %57 {strides = array<i32>} : memref<256x8xf32, #tpu.memory_space<vmem>>, vector<256x8xf32>,
    } else {
    }
    %c0 = arith.constant 0 : index
    %c0_1 = arith.constant 0 : index
    %c0_2 = arith.constant 0 : index
    %c0_3 = arith.constant 0 : index
    %3 = vector.load %arg4[%c0, %c0_1, %c0_2, %c0_3] : memref<1x16x22x4xbf16, #tpu.memory_space<vmem>>, vector<1x16x16x4xbf16>
    %4 = vector.shape_cast %3 : vector<1x16x16x4xbf16> to vector<16x16x4xbf16>
    %5 = vector.shape_cast %4 : vector<16x16x4xbf16> to vector<256x4xbf16>
    %c0_4 = arith.constant 0 : index
    %c0_5 = arith.constant 0 : index
    %c0_6 = arith.constant 0 : index
    %6 = vector.load %arg5[%c0_4, %c0_5, %c0_6] : memref<7x4x8xbf16, #tpu.memory_space<vmem>>, vector<1x4x8xbf16>
    %7 = vector.shape_cast %6 : vector<1x4x8xbf16> to vector<4x8xbf16>
    %cst = arith.constant dense<0.000000e+00> : vector<256x8xf32>
    %8 = tpu.matmul %5, %7, %cst {dimension_numbers = #tpu.dot_dimension_numbers<[1], [0], [0], [1], [0, 0, 1, 1], [], []>} : vector<256x4xbf16>, vector<4x8xbf16>, vector<256x8xf32> -> vector<256x8xf32>
    %c0_7 = arith.constant 0 : index
    %c0_8 = arith.constant 0 : index
    %c1 = arith.constant 1 : index
    %c0_9 = arith.constant 0 : index
    %9 = vector.load %arg4[%c0_7, %c0_8, %c1, %c0_9] : memref<1x16x22x4xbf16, #tpu.memory_space<vmem>>, vector<1x16x16x4xbf16>
    %10 = vector.shape_cast %9 : vector<1x16x16x4xbf16> to vector<16x16x4xbf16>
    %11 = vector.shape_cast %10 : vector<16x16x4xbf16> to vector<256x4xbf16>
    %c1_10 = arith.constant 1 : index
    %c0_11 = arith.constant 0 : index
    %c0_12 = arith.constant 0 : index
    %12 = vector.load %arg5[%c1_10, %c0_11, %c0_12] : memref<7x4x8xbf16, #tpu.memory_space<vmem>>, vector<1x4x8xbf16>
    %13 = vector.shape_cast %12 : vector<1x4x8xbf16> to vector<4x8xbf16>
    %cst_13 = arith.constant dense<0.000000e+00> : vector<256x8xf32>
    %14 = tpu.matmul %11, %13, %cst_13 {dimension_numbers = #tpu.dot_dimension_numbers<[1], [0], [0], [1], [0, 0, 1, 1], [], []>} : vector<256x4xbf16>, vector<4x8xbf16>, vector<256x8xf32> -> vector<256x8xf32>
    %15 = arith.addf %8, %14 : vector<256x8xf32>
    %c0_14 = arith.constant 0 : index
    %c0_15 = arith.constant 0 : index
    %c2 = arith.constant 2 : index
    %c0_16 = arith.constant 0 : index
    %16 = vector.load %arg4[%c0_14, %c0_15, %c2, %c0_16] : memref<1x16x22x4xbf16, #tpu.memory_space<vmem>>, vector<1x16x16x4xbf16>
    %17 = vector.shape_cast %16 : vector<1x16x16x4xbf16> to vector<16x16x4xbf16>
    %18 = vector.shape_cast %17 : vector<16x16x4xbf16> to vector<256x4xbf16>
    %c2_17 = arith.constant 2 : index
    %c0_18 = arith.constant 0 : index
    %c0_19 = arith.constant 0 : index
    %19 = vector.load %arg5[%c2_17, %c0_18, %c0_19] : memref<7x4x8xbf16, #tpu.memory_space<vmem>>, vector<1x4x8xbf16>
    %20 = vector.shape_cast %19 : vector<1x4x8xbf16> to vector<4x8xbf16>
    %cst_20 = arith.constant dense<0.000000e+00> : vector<256x8xf32>
    %21 = tpu.matmul %18, %20, %cst_20 {dimension_numbers = #tpu.dot_dimension_numbers<[1], [0], [0], [1], [0, 0, 1, 1], [], []>} : vector<256x4xbf16>, vector<4x8xbf16>, vector<256x8xf32> -> vector<256x8xf32>
    %22 = arith.addf %15, %21 : vector<256x8xf32>
    %c0_21 = arith.constant 0 : index
    %c0_22 = arith.constant 0 : index
    %c3 = arith.constant 3 : index
    %c0_23 = arith.constant 0 : index
    %23 = vector.load %arg4[%c0_21, %c0_22, %c3, %c0_23] : memref<1x16x22x4xbf16, #tpu.memory_space<vmem>>, vector<1x16x16x4xbf16>
    %24 = vector.shape_cast %23 : vector<1x16x16x4xbf16> to vector<16x16x4xbf16>
    %25 = vector.shape_cast %24 : vector<16x16x4xbf16> to vector<256x4xbf16>
    %c3_24 = arith.constant 3 : index
    %c0_25 = arith.constant 0 : index
    %c0_26 = arith.constant 0 : index
    %26 = vector.load %arg5[%c3_24, %c0_25, %c0_26] : memref<7x4x8xbf16, #tpu.memory_space<vmem>>, vector<1x4x8xbf16>
    %27 = vector.shape_cast %26 : vector<1x4x8xbf16> to vector<4x8xbf16>
    %cst_27 = arith.constant dense<0.000000e+00> : vector<256x8xf32>
    %28 = tpu.matmul %25, %27, %cst_27 {dimension_numbers = #tpu.dot_dimension_numbers<[1], [0], [0], [1], [0, 0, 1, 1], [], []>} : vector<256x4xbf16>, vector<4x8xbf16>, vector<256x8xf32> -> vector<256x8xf32>
    %29 = arith.addf %22, %28 : vector<256x8xf32>
    %c0_28 = arith.constant 0 : index
    %c0_29 = arith.constant 0 : index
    %c4 = arith.constant 4 : index
    %c0_30 = arith.constant 0 : index
    %30 = vector.load %arg4[%c0_28, %c0_29, %c4, %c0_30] : memref<1x16x22x4xbf16, #tpu.memory_space<vmem>>, vector<1x16x16x4xbf16>
    %31 = vector.shape_cast %30 : vector<1x16x16x4xbf16> to vector<16x16x4xbf16>
    %32 = vector.shape_cast %31 : vector<16x16x4xbf16> to vector<256x4xbf16>
    %c4_31 = arith.constant 4 : index
    %c0_32 = arith.constant 0 : index
    %c0_33 = arith.constant 0 : index
    %33 = vector.load %arg5[%c4_31, %c0_32, %c0_33] : memref<7x4x8xbf16, #tpu.memory_space<vmem>>, vector<1x4x8xbf16>
    %34 = vector.shape_cast %33 : vector<1x4x8xbf16> to vector<4x8xbf16>
    %cst_34 = arith.constant dense<0.000000e+00> : vector<256x8xf32>
    %35 = tpu.matmul %32, %34, %cst_34 {dimension_numbers = #tpu.dot_dimension_numbers<[1], [0], [0], [1], [0, 0, 1, 1], [], []>} : vector<256x4xbf16>, vector<4x8xbf16>, vector<256x8xf32> -> vector<256x8xf32>
    %36 = arith.addf %29, %35 : vector<256x8xf32>
    %c0_35 = arith.constant 0 : index
    %c0_36 = arith.constant 0 : index
    %c5 = arith.constant 5 : index
    %c0_37 = arith.constant 0 : index
    %37 = vector.load %arg4[%c0_35, %c0_36, %c5, %c0_37] : memref<1x16x22x4xbf16, #tpu.memory_space<vmem>>, vector<1x16x16x4xbf16>
    %38 = vector.shape_cast %37 : vector<1x16x16x4xbf16> to vector<16x16x4xbf16>
    %39 = vector.shape_cast %38 : vector<16x16x4xbf16> to vector<256x4xbf16>
    %c5_38 = arith.constant 5 : index
    %c0_39 = arith.constant 0 : index
    %c0_40 = arith.constant 0 : index
    %40 = vector.load %arg5[%c5_38, %c0_39, %c0_40] : memref<7x4x8xbf16, #tpu.memory_space<vmem>>, vector<1x4x8xbf16>
    %41 = vector.shape_cast %40 : vector<1x4x8xbf16> to vector<4x8xbf16>
    %cst_41 = arith.constant dense<0.000000e+00> : vector<256x8xf32>
    %42 = tpu.matmul %39, %41, %cst_41 {dimension_numbers = #tpu.dot_dimension_numbers<[1], [0], [0], [1], [0, 0, 1, 1], [], []>} : vector<256x4xbf16>, vector<4x8xbf16>, vector<256x8xf32> -> vector<256x8xf32>
    %43 = arith.addf %36, %42 : vector<256x8xf32>
    %c0_42 = arith.constant 0 : index
    %c0_43 = arith.constant 0 : index
    %c6 = arith.constant 6 : index
    %c0_44 = arith.constant 0 : index
    %44 = vector.load %arg4[%c0_42, %c0_43, %c6, %c0_44] : memref<1x16x22x4xbf16, #tpu.memory_space<vmem>>, vector<1x16x16x4xbf16>
    %45 = vector.shape_cast %44 : vector<1x16x16x4xbf16> to vector<16x16x4xbf16>
    %46 = vector.shape_cast %45 : vector<16x16x4xbf16> to vector<256x4xbf16>
    %c6_45 = arith.constant 6 : index
    %c0_46 = arith.constant 0 : index
    %c0_47 = arith.constant 0 : index
    %47 = vector.load %arg5[%c6_45, %c0_46, %c0_47] : memref<7x4x8xbf16, #tpu.memory_space<vmem>>, vector<1x4x8xbf16>
    %48 = vector.shape_cast %47 : vector<1x4x8xbf16> to vector<4x8xbf16>
    %cst_48 = arith.constant dense<0.000000e+00> : vector<256x8xf32>
    %49 = tpu.matmul %46, %48, %cst_48 {dimension_numbers = #tpu.dot_dimension_numbers<[1], [0], [0], [1], [0, 0, 1, 1], [], []>} : vector<256x4xbf16>, vector<4x8xbf16>, vector<256x8xf32> -> vector<256x8xf32>
    %50 = arith.addf %43, %49 : vector<256x8xf32>
    %c0_49 = arith.constant 0 : index
    %c0_50 = arith.constant 0 : index
    %51 = vector.load %arg7[%c0_49, %c0_50] : memref<256x8xf32, #tpu.memory_space<vmem>>, vector<256x8xf32>
    %52 = arith.addf %51, %50 : vector<256x8xf32>
    %c0_51 = arith.constant 0 : index
    %c0_52 = arith.constant 0 : index
    %53 = vector.load %arg7[%c0_51, %c0_52] : memref<256x8xf32, #tpu.memory_space<vmem>>, vector<256x8xf32>
    tpu.vector_store %arg7[%c0_51, %c0_52], %52 {strides = array<i32>} : memref<256x8xf32, #tpu.memory_space<vmem>>, vector<256x8xf32>,
    %c0_i32_53 = arith.constant 0 : i32
    %54 = arith.cmpi eq, %arg3, %c0_i32_53 : i32
    %55 = arith.extui %54 : i1 to i32
    %c0_i32_54 = arith.constant 0 : i32
    %56 = arith.cmpi ne, %55, %c0_i32_54 : i32
    scf.if %56 {
      %c0_55 = arith.constant 0 : index
      %c0_56 = arith.constant 0 : index
      %57 = vector.load %arg7[%c0_55, %c0_56] : memref<256x8xf32, #tpu.memory_space<vmem>>, vector<256x8xf32>
      %58 = vector.shape_cast %57 : vector<256x8xf32> to vector<16x16x8xf32>
      %59 = arith.truncf %58 : vector<16x16x8xf32> to vector<16x16x8xbf16>
      %c0_57 = arith.constant 0 : index
      %c0_58 = arith.constant 0 : index
      %c0_59 = arith.constant 0 : index
      %c0_60 = arith.constant 0 : index
      %60 = vector.load %arg6[%c0_57, %c0_58, %c0_59, %c0_60] : memref<1x16x16x8xbf16, #tpu.memory_space<vmem>>, vector<1x16x16x8xbf16>
      %61 = vector.shape_cast %60 : vector<1x16x16x8xbf16> to vector<16x16x8xbf16>
      %62 = vector.shape_cast %59 : vector<16x16x8xbf16> to vector<1x16x16x8xbf16>
      tpu.vector_store %arg6[%c0_57, %c0_58, %c0_59, %c0_60], %62 {strides = array<i32>} : memref<1x16x16x8xbf16, #tpu.memory_space<vmem>>, vector<1x16x16x8xbf16>,
    } else {
    }
    return
  }
  func.func @transform_0(%arg0: i32, %arg1: i32, %arg2: i32, %arg3: i32) -> (i32, i32, i32, i32) {
    %c0_i32 = arith.constant 0 : i32
    %c0_i32_0 = arith.constant 0 : i32
    return %arg0, %arg1, %c0_i32, %arg3 : i32, i32, i32, i32
  }
  func.func @transform_1(%arg0: i32, %arg1: i32, %arg2: i32, %arg3: i32) -> (i32, i32, i32) {
    %c0_i32 = arith.constant 0 : i32
    %c0_i32_0 = arith.constant 0 : i32
    return %c0_i32, %arg3, %arg2 : i32, i32, i32
  }
  func.func @transform_2(%arg0: i32, %arg1: i32, %arg2: i32, %arg3: i32) -> (i32, i32, i32, i32) {
    %c0_i32 = arith.constant 0 : i32
    %c0_i32_0 = arith.constant 0 : i32
    return %arg0, %arg1, %c0_i32, %arg2 : i32, i32, i32, i32
  }
}

module attributes {stable_mosaic.version = 11 : i64} {
  func.func @_sep_conv_kernel(%arg0: i32, %arg1: i32, %arg2: i32, %arg3: i32, %arg4: memref<1x22x16x8xbf16, #tpu.memory_space<vmem>>, %arg5: memref<7x8x8xbf16, #tpu.memory_space<vmem>>, %arg6: memref<1x8xf32, #tpu.memory_space<vmem>>, %arg7: memref<1x8xf32, #tpu.memory_space<vmem>>, %arg8: memref<1x16x16x8xbf16, #tpu.memory_space<vmem>>, %arg9: memref<1x16x16x8xf32, #tpu.memory_space<vmem>>, %arg10: memref<256x8xf32, #tpu.memory_space<vmem>>) attributes {dimension_semantics = [#tpu.dimension_semantics<parallel>, #tpu.dimension_semantics<parallel>, #tpu.dimension_semantics<parallel>, #tpu.dimension_semantics<arbitrary>], iteration_bounds = array<i64: 2, 1, 1, 1>, scalar_prefetch = 0 : i64, scratch_operands = 1 : i64, tpu.core_type = #tpu.core_type<tc>, window_params = [{transform_indices = @transform_0, window_bounds = array<i64: 1, 22, 16, 8>}, {transform_indices = @transform_1, window_bounds = array<i64: 7, 8, 8>}, {transform_indices = @transform_2, window_bounds = array<i64: 1, 8>}, {transform_indices = @transform_3, window_bounds = array<i64: 1, 8>}, {transform_indices = @transform_4, window_bounds = array<i64: 1, 16, 16, 8>}, {transform_indices = @transform_5, window_bounds = array<i64: 1, 16, 16, 8>}]} {
    %c0_i32 = arith.constant 0 : i32
    %0 = arith.cmpi eq, %arg3, %c0_i32 : i32
    %1 = arith.extui %0 : i1 to i32
    %c0_i32_0 = arith.constant 0 : i32
    %2 = arith.cmpi ne, %1, %c0_i32_0 : i32
    scf.if %2 {
      %cst_55 = arith.constant 0.000000e+00 : f32
      %57 = vector.broadcast %cst_55 : f32 to vector<256x8xf32>
      %c0_56 = arith.constant 0 : index
      %c0_57 = arith.constant 0 : index
      %58 = vector.load %arg10[%c0_56, %c0_57] : memref<256x8xf32, #tpu.memory_space<vmem>>, vector<256x8xf32>
      tpu.vector_store %arg10[%c0_56, %c0_57], %57 {strides = array<i32>} : memref<256x8xf32, #tpu.memory_space<vmem>>, vector<256x8xf32>,
    } else {
    }
    %c0 = arith.constant 0 : index
    %c0_1 = arith.constant 0 : index
    %c0_2 = arith.constant 0 : index
    %c0_3 = arith.constant 0 : index
    %3 = vector.load %arg4[%c0, %c0_1, %c0_2, %c0_3] : memref<1x22x16x8xbf16, #tpu.memory_space<vmem>>, vector<1x16x16x8xbf16>
    %4 = vector.shape_cast %3 : vector<1x16x16x8xbf16> to vector<16x16x8xbf16>
    %5 = vector.shape_cast %4 : vector<16x16x8xbf16> to vector<256x8xbf16>
    %c0_4 = arith.constant 0 : index
    %c0_5 = arith.constant 0 : index
    %c0_6 = arith.constant 0 : index
    %6 = vector.load %arg5[%c0_4, %c0_5, %c0_6] : memref<7x8x8xbf16, #tpu.memory_space<vmem>>, vector<1x8x8xbf16>
    %7 = vector.shape_cast %6 : vector<1x8x8xbf16> to vector<8x8xbf16>
    %cst = arith.constant dense<0.000000e+00> : vector<256x8xf32>
    %8 = tpu.matmul %5, %7, %cst {dimension_numbers = #tpu.dot_dimension_numbers<[1], [0], [0], [1], [0, 0, 1, 1], [], []>} : vector<256x8xbf16>, vector<8x8xbf16>, vector<256x8xf32> -> vector<256x8xf32>
    %c0_7 = arith.constant 0 : index
    %c1 = arith.constant 1 : index
    %c0_8 = arith.constant 0 : index
    %c0_9 = arith.constant 0 : index
    %9 = vector.load %arg4[%c0_7, %c1, %c0_8, %c0_9] : memref<1x22x16x8xbf16, #tpu.memory_space<vmem>>, vector<1x16x16x8xbf16>
    %10 = vector.shape_cast %9 : vector<1x16x16x8xbf16> to vector<16x16x8xbf16>
    %11 = vector.shape_cast %10 : vector<16x16x8xbf16> to vector<256x8xbf16>
    %c1_10 = arith.constant 1 : index
    %c0_11 = arith.constant 0 : index
    %c0_12 = arith.constant 0 : index
    %12 = vector.load %arg5[%c1_10, %c0_11, %c0_12] : memref<7x8x8xbf16, #tpu.memory_space<vmem>>, vector<1x8x8xbf16>
    %13 = vector.shape_cast %12 : vector<1x8x8xbf16> to vector<8x8xbf16>
    %cst_13 = arith.constant dense<0.000000e+00> : vector<256x8xf32>
    %14 = tpu.matmul %11, %13, %cst_13 {dimension_numbers = #tpu.dot_dimension_numbers<[1], [0], [0], [1], [0, 0, 1, 1], [], []>} : vector<256x8xbf16>, vector<8x8xbf16>, vector<256x8xf32> -> vector<256x8xf32>
    %15 = arith.addf %8, %14 : vector<256x8xf32>
    %c0_14 = arith.constant 0 : index
    %c2 = arith.constant 2 : index
    %c0_15 = arith.constant 0 : index
    %c0_16 = arith.constant 0 : index
    %16 = vector.load %arg4[%c0_14, %c2, %c0_15, %c0_16] : memref<1x22x16x8xbf16, #tpu.memory_space<vmem>>, vector<1x16x16x8xbf16>
    %17 = vector.shape_cast %16 : vector<1x16x16x8xbf16> to vector<16x16x8xbf16>
    %18 = vector.shape_cast %17 : vector<16x16x8xbf16> to vector<256x8xbf16>
    %c2_17 = arith.constant 2 : index
    %c0_18 = arith.constant 0 : index
    %c0_19 = arith.constant 0 : index
    %19 = vector.load %arg5[%c2_17, %c0_18, %c0_19] : memref<7x8x8xbf16, #tpu.memory_space<vmem>>, vector<1x8x8xbf16>
    %20 = vector.shape_cast %19 : vector<1x8x8xbf16> to vector<8x8xbf16>
    %cst_20 = arith.constant dense<0.000000e+00> : vector<256x8xf32>
    %21 = tpu.matmul %18, %20, %cst_20 {dimension_numbers = #tpu.dot_dimension_numbers<[1], [0], [0], [1], [0, 0, 1, 1], [], []>} : vector<256x8xbf16>, vector<8x8xbf16>, vector<256x8xf32> -> vector<256x8xf32>
    %22 = arith.addf %15, %21 : vector<256x8xf32>
    %c0_21 = arith.constant 0 : index
    %c3 = arith.constant 3 : index
    %c0_22 = arith.constant 0 : index
    %c0_23 = arith.constant 0 : index
    %23 = vector.load %arg4[%c0_21, %c3, %c0_22, %c0_23] : memref<1x22x16x8xbf16, #tpu.memory_space<vmem>>, vector<1x16x16x8xbf16>
    %24 = vector.shape_cast %23 : vector<1x16x16x8xbf16> to vector<16x16x8xbf16>
    %25 = vector.shape_cast %24 : vector<16x16x8xbf16> to vector<256x8xbf16>
    %c3_24 = arith.constant 3 : index
    %c0_25 = arith.constant 0 : index
    %c0_26 = arith.constant 0 : index
    %26 = vector.load %arg5[%c3_24, %c0_25, %c0_26] : memref<7x8x8xbf16, #tpu.memory_space<vmem>>, vector<1x8x8xbf16>
    %27 = vector.shape_cast %26 : vector<1x8x8xbf16> to vector<8x8xbf16>
    %cst_27 = arith.constant dense<0.000000e+00> : vector<256x8xf32>
    %28 = tpu.matmul %25, %27, %cst_27 {dimension_numbers = #tpu.dot_dimension_numbers<[1], [0], [0], [1], [0, 0, 1, 1], [], []>} : vector<256x8xbf16>, vector<8x8xbf16>, vector<256x8xf32> -> vector<256x8xf32>
    %29 = arith.addf %22, %28 : vector<256x8xf32>
    %c0_28 = arith.constant 0 : index
    %c4 = arith.constant 4 : index
    %c0_29 = arith.constant 0 : index
    %c0_30 = arith.constant 0 : index
    %30 = vector.load %arg4[%c0_28, %c4, %c0_29, %c0_30] : memref<1x22x16x8xbf16, #tpu.memory_space<vmem>>, vector<1x16x16x8xbf16>
    %31 = vector.shape_cast %30 : vector<1x16x16x8xbf16> to vector<16x16x8xbf16>
    %32 = vector.shape_cast %31 : vector<16x16x8xbf16> to vector<256x8xbf16>
    %c4_31 = arith.constant 4 : index
    %c0_32 = arith.constant 0 : index
    %c0_33 = arith.constant 0 : index
    %33 = vector.load %arg5[%c4_31, %c0_32, %c0_33] : memref<7x8x8xbf16, #tpu.memory_space<vmem>>, vector<1x8x8xbf16>
    %34 = vector.shape_cast %33 : vector<1x8x8xbf16> to vector<8x8xbf16>
    %cst_34 = arith.constant dense<0.000000e+00> : vector<256x8xf32>
    %35 = tpu.matmul %32, %34, %cst_34 {dimension_numbers = #tpu.dot_dimension_numbers<[1], [0], [0], [1], [0, 0, 1, 1], [], []>} : vector<256x8xbf16>, vector<8x8xbf16>, vector<256x8xf32> -> vector<256x8xf32>
    %36 = arith.addf %29, %35 : vector<256x8xf32>
    %c0_35 = arith.constant 0 : index
    %c5 = arith.constant 5 : index
    %c0_36 = arith.constant 0 : index
    %c0_37 = arith.constant 0 : index
    %37 = vector.load %arg4[%c0_35, %c5, %c0_36, %c0_37] : memref<1x22x16x8xbf16, #tpu.memory_space<vmem>>, vector<1x16x16x8xbf16>
    %38 = vector.shape_cast %37 : vector<1x16x16x8xbf16> to vector<16x16x8xbf16>
    %39 = vector.shape_cast %38 : vector<16x16x8xbf16> to vector<256x8xbf16>
    %c5_38 = arith.constant 5 : index
    %c0_39 = arith.constant 0 : index
    %c0_40 = arith.constant 0 : index
    %40 = vector.load %arg5[%c5_38, %c0_39, %c0_40] : memref<7x8x8xbf16, #tpu.memory_space<vmem>>, vector<1x8x8xbf16>
    %41 = vector.shape_cast %40 : vector<1x8x8xbf16> to vector<8x8xbf16>
    %cst_41 = arith.constant dense<0.000000e+00> : vector<256x8xf32>
    %42 = tpu.matmul %39, %41, %cst_41 {dimension_numbers = #tpu.dot_dimension_numbers<[1], [0], [0], [1], [0, 0, 1, 1], [], []>} : vector<256x8xbf16>, vector<8x8xbf16>, vector<256x8xf32> -> vector<256x8xf32>
    %43 = arith.addf %36, %42 : vector<256x8xf32>
    %c0_42 = arith.constant 0 : index
    %c6 = arith.constant 6 : index
    %c0_43 = arith.constant 0 : index
    %c0_44 = arith.constant 0 : index
    %44 = vector.load %arg4[%c0_42, %c6, %c0_43, %c0_44] : memref<1x22x16x8xbf16, #tpu.memory_space<vmem>>, vector<1x16x16x8xbf16>
    %45 = vector.shape_cast %44 : vector<1x16x16x8xbf16> to vector<16x16x8xbf16>
    %46 = vector.shape_cast %45 : vector<16x16x8xbf16> to vector<256x8xbf16>
    %c6_45 = arith.constant 6 : index
    %c0_46 = arith.constant 0 : index
    %c0_47 = arith.constant 0 : index
    %47 = vector.load %arg5[%c6_45, %c0_46, %c0_47] : memref<7x8x8xbf16, #tpu.memory_space<vmem>>, vector<1x8x8xbf16>
    %48 = vector.shape_cast %47 : vector<1x8x8xbf16> to vector<8x8xbf16>
    %cst_48 = arith.constant dense<0.000000e+00> : vector<256x8xf32>
    %49 = tpu.matmul %46, %48, %cst_48 {dimension_numbers = #tpu.dot_dimension_numbers<[1], [0], [0], [1], [0, 0, 1, 1], [], []>} : vector<256x8xbf16>, vector<8x8xbf16>, vector<256x8xf32> -> vector<256x8xf32>
    %50 = arith.addf %43, %49 : vector<256x8xf32>
    %c0_49 = arith.constant 0 : index
    %c0_50 = arith.constant 0 : index
    %51 = vector.load %arg10[%c0_49, %c0_50] : memref<256x8xf32, #tpu.memory_space<vmem>>, vector<256x8xf32>
    %52 = arith.addf %51, %50 : vector<256x8xf32>
    %c0_51 = arith.constant 0 : index
    %c0_52 = arith.constant 0 : index
    %53 = vector.load %arg10[%c0_51, %c0_52] : memref<256x8xf32, #tpu.memory_space<vmem>>, vector<256x8xf32>
    tpu.vector_store %arg10[%c0_51, %c0_52], %52 {strides = array<i32>} : memref<256x8xf32, #tpu.memory_space<vmem>>, vector<256x8xf32>,
    %c0_i32_53 = arith.constant 0 : i32
    %54 = arith.cmpi eq, %arg3, %c0_i32_53 : i32
    %55 = arith.extui %54 : i1 to i32
    %c0_i32_54 = arith.constant 0 : i32
    %56 = arith.cmpi ne, %55, %c0_i32_54 : i32
    scf.if %56 {
      %c0_55 = arith.constant 0 : index
      %c0_56 = arith.constant 0 : index
      %57 = vector.load %arg10[%c0_55, %c0_56] : memref<256x8xf32, #tpu.memory_space<vmem>>, vector<256x8xf32>
      %58 = vector.shape_cast %57 : vector<256x8xf32> to vector<16x16x8xf32>
      %c0_57 = arith.constant 0 : index
      %c0_58 = arith.constant 0 : index
      %c0_59 = arith.constant 0 : index
      %c0_60 = arith.constant 0 : index
      %59 = vector.load %arg8[%c0_57, %c0_58, %c0_59, %c0_60] : memref<1x16x16x8xbf16, #tpu.memory_space<vmem>>, vector<1x16x16x8xbf16>
      %60 = vector.shape_cast %59 : vector<1x16x16x8xbf16> to vector<16x16x8xbf16>
      %61 = arith.extf %60 : vector<16x16x8xbf16> to vector<16x16x8xf32>
      %62 = arith.addf %58, %61 : vector<16x16x8xf32>
      %c0_61 = arith.constant 0 : index
      %c0_62 = arith.constant 0 : index
      %63 = vector.load %arg6[%c0_61, %c0_62] : memref<1x8xf32, #tpu.memory_space<vmem>>, vector<1x8xf32>
      %64 = vector.shape_cast %63 : vector<1x8xf32> to vector<1x1x8xf32>
      %65 = vector.broadcast %64 : vector<1x1x8xf32> to vector<16x16x8xf32>
      %66 = arith.mulf %62, %65 : vector<16x16x8xf32>
      %c0_63 = arith.constant 0 : index
      %c0_64 = arith.constant 0 : index
      %67 = vector.load %arg7[%c0_63, %c0_64] : memref<1x8xf32, #tpu.memory_space<vmem>>, vector<1x8xf32>
      %68 = vector.shape_cast %67 : vector<1x8xf32> to vector<1x1x8xf32>
      %69 = vector.broadcast %68 : vector<1x1x8xf32> to vector<16x16x8xf32>
      %70 = arith.addf %66, %69 : vector<16x16x8xf32>
      %cst_65 = arith.constant 0.000000e+00 : f32
      %71 = vector.broadcast %cst_65 : f32 to vector<16x16x8xf32>
      %72 = arith.maximumf %70, %71 : vector<16x16x8xf32>
      %c0_66 = arith.constant 0 : index
      %c0_67 = arith.constant 0 : index
      %c0_68 = arith.constant 0 : index
      %c0_69 = arith.constant 0 : index
      %73 = vector.load %arg9[%c0_66, %c0_67, %c0_68, %c0_69] : memref<1x16x16x8xf32, #tpu.memory_space<vmem>>, vector<1x16x16x8xf32>
      %74 = vector.shape_cast %73 : vector<1x16x16x8xf32> to vector<16x16x8xf32>
      %75 = vector.shape_cast %72 : vector<16x16x8xf32> to vector<1x16x16x8xf32>
      tpu.vector_store %arg9[%c0_66, %c0_67, %c0_68, %c0_69], %75 {strides = array<i32>} : memref<1x16x16x8xf32, #tpu.memory_space<vmem>>, vector<1x16x16x8xf32>,
    } else {
    }
    return
  }
  func.func @transform_0(%arg0: i32, %arg1: i32, %arg2: i32, %arg3: i32) -> (i32, i32, i32, i32) {
    %c0_i32 = arith.constant 0 : i32
    %c0_i32_0 = arith.constant 0 : i32
    return %arg0, %c0_i32, %arg1, %arg3 : i32, i32, i32, i32
  }
  func.func @transform_1(%arg0: i32, %arg1: i32, %arg2: i32, %arg3: i32) -> (i32, i32, i32) {
    %c0_i32 = arith.constant 0 : i32
    %c0_i32_0 = arith.constant 0 : i32
    return %c0_i32, %arg3, %arg2 : i32, i32, i32
  }
  func.func @transform_2(%arg0: i32, %arg1: i32, %arg2: i32, %arg3: i32) -> (i32, i32) {
    %c0_i32 = arith.constant 0 : i32
    %c0_i32_0 = arith.constant 0 : i32
    return %c0_i32, %arg2 : i32, i32
  }
  func.func @transform_3(%arg0: i32, %arg1: i32, %arg2: i32, %arg3: i32) -> (i32, i32) {
    %c0_i32 = arith.constant 0 : i32
    %c0_i32_0 = arith.constant 0 : i32
    return %c0_i32, %arg2 : i32, i32
  }
  func.func @transform_4(%arg0: i32, %arg1: i32, %arg2: i32, %arg3: i32) -> (i32, i32, i32, i32) {
    %c0_i32 = arith.constant 0 : i32
    %c0_i32_0 = arith.constant 0 : i32
    return %arg0, %c0_i32, %arg1, %arg2 : i32, i32, i32, i32
  }
  func.func @transform_5(%arg0: i32, %arg1: i32, %arg2: i32, %arg3: i32) -> (i32, i32, i32, i32) {
    %c0_i32 = arith.constant 0 : i32
    %c0_i32_0 = arith.constant 0 : i32
    return %arg0, %c0_i32, %arg1, %arg2 : i32, i32, i32, i32
  }
}

</mosaic_0001>

<llo_original>
// kernel: global_conv_forward.4
$region0: #{global_conv_forward.4}
  #allocation0 [shape = 'u32[]', space=smem, size = 0x4, offset = 0x4, fixed_abs, tag = 'smem constant byte address 0x4 - core index']
  #allocation1 [shape = 'u32[72,128]{1,0:T(1,128)}', space=vmem, size = 0x9000, scoped, tag = 'internal scratch']
  #allocation2 [shape = 'f32[256,8]{1,0:T(8,128)}', space=vmem, size = 0x20000, scoped, tag = 'scratch operand']
  %s0 = inlined_call_operand.vmem [shape: bf16[2,22,16,4], index: 0, kind: input, shape index: {}]
  %s1 = inlined_call_operand.vmem [shape: bf16[7,4,8], index: 1, kind: input, shape index: {}]
  %s2 = inlined_call_operand.vmem [shape: bf16[2,16,16,8], index: 2, kind: output, shape index: {}]
  %s3 = sld [smem:[#allocation0]]
  $region49: #{global_conv_forward.4} parent=0
    _
  %s5 = ssub.s32 1, %s3
  %s6 = scalar_select 0, %s5, %s3
  loop: start=0, step=1, limit=4
  $region2: #{global_conv_forward.4} parent=0 // loop_pre_header
    _
  $region3: #{global_conv_forward.4} parent=0 // loop_header
    %s8 = sphi 0, %s12
    %p9 = scmp.ge.s32.totalorder %s8, 4
    %s15 = sphi 0, %s41
    %s16 = sphi 0, %s37
    %s17 = sphi 0, %s33
    %s18 = sphi 0, %s29
    %s19 = sphi 0, %s15
    %s20 = sphi 0, %s16
    %s21 = sphi 0, %s17
    %s22 = sphi 0, %s18
    %s23 = sphi 0, %s19
    %s24 = sphi 0, %s20
    %s25 = sphi 0, %s21
    %s26 = sphi 0, %s22
    %s48 = sphi 0, %s50
    %s51 = sphi 0, %s48
    %s52 = sphi 0, %s51
    %s68 = sphi 0, %s52
    %s76 = sphi 0, %s78
    %s79 = sphi 0, %s76
    %s80 = sphi 0, %s79
    %s96 = sphi 0, %s80
    %s106 = sphi 0, %s108
    %s109 = sphi 0, %s106
    %s110 = sphi 0, %s109
    %s126 = sphi 0, %s110
  $region4: #{global_conv_forward.4} parent=0 // loop_header_branch
    %11 = sbr.rel (%p9) target = $region8
  $region5: #{global_conv_forward.4} parent=0 // loop_body
    %s13 = ssub.s32 %s8, 1
    %s14 = ssub.s32 %s8, 2
    %s27 = sadd.s32 1, %s18
    %p28 = scmp.ge.s32.totalorder %s27, 1
    %s29 = scalar_select %p28, 0, %s27
    %s30 = sadd.s32 1, %s17
    %s31 = scalar_select %p28, %s30, %s17
    %p32 = scmp.ge.s32.totalorder %s31, 1
    %s33 = scalar_select %p32, 0, %s31
    %s34 = sadd.s32 1, %s16
    %s35 = scalar_select %p32, %s34, %s16
    %p36 = scmp.ge.s32.totalorder %s35, 1
    %s37 = scalar_select %p36, 0, %s35
    %s38 = sadd.s32 1, %s15
    %s39 = scalar_select %p36, %s38, %s15
    %p40 = scmp.ge.s32.totalorder %s39, 2
    %s41 = scalar_select %p40, 0, %s39
    %s42 = ssub.s32 %s15, %s41
    %s43 = ssub.s32 %s16, %s37
    %s44 = sor.u32 %s42, %s43
    %s45 = ssub.s32 %s18, %s29
    %s46 = sor.u32 %s44, %s45
    %p47 = scmp.eq.s32.totalorder %s46, 0
    %s49 = sadd.s32 %s48, 1
    %s50 = scalar_select %p47, %s48, %s49
    %p53 = pneg %p47
    %p54 = scmp.eq.s32.totalorder %s8, 1
    %p55 = por %p53, %p54
    %p56 = scmp.ne.s32.totalorder %s48, %s51
    %p57 = scmp.eq.s32.totalorder %s8, 0
    %p58 = por %p56, %p57
    %p59 = scmp.ne.s32.totalorder %s48, %s51
    %p60 = scmp.eq.s32.totalorder %s13, 1
    %p61 = por %p59, %p60
    %p62 = scmp.ne.s32.totalorder %s51, %s52
    %p63 = scmp.eq.s32.totalorder %s13, 0
    %p64 = por %p62, %p63
    %p65 = scmp.ne.s32.totalorder %s51, %s52
    %p66 = scmp.eq.s32.totalorder %s14, 1
    %p67 = por %p65, %p66
    %p69 = scmp.ne.s32.totalorder %s52, %s68
    %p70 = scmp.eq.s32.totalorder %s14, 0
    %p71 = por %p69, %p70
    %s72 = ssub.s32 %s18, %s29
    %s73 = ssub.s32 %s17, %s33
    %s74 = sor.u32 %s72, %s73
    %p75 = scmp.eq.s32.totalorder %s74, 0
    %s77 = sadd.s32 %s76, 1
    %s78 = scalar_select %p75, %s76, %s77
    %p81 = pneg %p75
    %p82 = scmp.eq.s32.totalorder %s8, 1
    %p83 = por %p81, %p82
    %p84 = scmp.ne.s32.totalorder %s76, %s79
    %p85 = scmp.eq.s32.totalorder %s8, 0
    %p86 = por %p84, %p85
    %p87 = scmp.ne.s32.totalorder %s76, %s79
    %p88 = scmp.eq.s32.totalorder %s13, 1
    %p89 = por %p87, %p88
    %p90 = scmp.ne.s32.totalorder %s79, %s80
    %p91 = scmp.eq.s32.totalorder %s13, 0
    %p92 = por %p90, %p91
    %p93 = scmp.ne.s32.totalorder %s79, %s80
    %p94 = scmp.eq.s32.totalorder %s14, 1
    %p95 = por %p93, %p94
    %p97 = scmp.ne.s32.totalorder %s80, %s96
    %p98 = scmp.eq.s32.totalorder %s14, 0
    %p99 = por %p97, %p98
    %s100 = ssub.s32 %s15, %s41
    %s101 = ssub.s32 %s16, %s37
    %s102 = sor.u32 %s100, %s101
    %s103 = ssub.s32 %s17, %s33
    %s104 = sor.u32 %s102, %s103
    %p105 = scmp.eq.s32.totalorder %s104, 0
    %s107 = sadd.s32 %s106, 1
    %s108 = scalar_select %p105, %s106, %s107
    %p111 = pneg %p105
    %p112 = scmp.eq.s32.totalorder %s8, 1
    %p113 = por %p111, %p112
    %p114 = scmp.ne.s32.totalorder %s106, %s109
    %p115 = scmp.eq.s32.totalorder %s8, 0
    %p116 = por %p114, %p115
    %p117 = scmp.ne.s32.totalorder %s106, %s109
    %p118 = scmp.eq.s32.totalorder %s13, 1
    %p119 = por %p117, %p118
    %p120 = scmp.ne.s32.totalorder %s109, %s110
    %p121 = scmp.eq.s32.totalorder %s13, 0
    %p122 = por %p120, %p121
    %p123 = scmp.ne.s32.totalorder %s109, %s110
    %p124 = scmp.eq.s32.totalorder %s14, 1
    %p125 = por %p123, %p124
    %p127 = scmp.ne.s32.totalorder %s110, %s126
    %p128 = scmp.eq.s32.totalorder %s14, 0
    %p129 = por %p127, %p128
    %p130 = scmp.le.s32.totalorder 1, %s8
    %p131 = scmp.lt.s32.totalorder %s8, 3
    %p132 = pnand %p130, %p131
    %p133 = pneg %p132
    // Predicated region
    $region9: #{global_conv_forward.4} parent=5 // pred_check
      _
    $region10: #{global_conv_forward.4} parent=5 // pred_check_branch
      %135 = sbr.rel (%p132) target = $region12
    $region11: #{global_conv_forward.4} parent=5 // pred_region
      %s136 = ssub.s32 %s8, 1
      // Predicated region
      $region13: #{global_conv_forward.4} parent=11 // pred_check
        %p137 = pneg %p92
      $region14: #{global_conv_forward.4} parent=11 // pred_check_branch
        %139 = sbr.rel (%p137) target = $region16
      $region15: #{global_conv_forward.4} parent=11 // pred_region
        %p140 = scmp.lt.s32.totalorder %s22, 0
        %s141 = scalar_select %p140, %s22, 0
        %p142 = scmp.lt.s32.totalorder %s21, 0
        %s143 = scalar_select %p142, %s21, 0
        %s144 = sadd.s32 %s143, %s141
        %s145 = smul.addr %s144, 2
        %s146 = scalar_lea.vmem %s1, %s145
      $region16: #{global_conv_forward.4} parent=11 // pred_fallthru
        _
    $region12: #{global_conv_forward.4} parent=5 // pred_fallthru
      _
    %p147 = scmp.lt.s32.totalorder %s8, 2
    // Predicated region
    $region17: #{global_conv_forward.4} parent=5 // pred_check
      %p148 = pneg %p147
    $region18: #{global_conv_forward.4} parent=5 // pred_check_branch
      %150 = sbr.rel (%p148) target = $region20
    $region19: #{global_conv_forward.4} parent=5 // pred_region
      // Predicated region
      $region21: #{global_conv_forward.4} parent=19 // pred_check
        %p151 = pneg %p58
      $region22: #{global_conv_forward.4} parent=19 // pred_check_branch
        %153 = sbr.rel (%p151) target = $region24
      $region23: #{global_conv_forward.4} parent=19 // pred_region
        %s154 = smul.u32 2, %s16
        %p155 = scmp.lt.s32.totalorder %s15, 1
        %s156 = scalar_select %p155, %s15, 1
        %p157 = scmp.lt.s32.totalorder %s154, 1
        %s158 = scalar_select %p157, %s154, 1
        %p159 = scmp.lt.s32.totalorder %s18, 0
        %s160 = scalar_select %p159, %s18, 0
        %s161 = sadd.s32 %s160, %s158
        %s162 = smul.addr %s156, 44
        %s163 = sadd.s32 %s161, %s162
        %s164 = smul.addr %s163, 4
        %s165 = scalar_lea.vmem %s0, %s164
        %s166 = smul.u32 2, %s16
      $region24: #{global_conv_forward.4} parent=19 // pred_fallthru
        _
    $region20: #{global_conv_forward.4} parent=5 // pred_fallthru
      _
    %p167 = scmp.le.s32.totalorder 1, %s8
    %p168 = scmp.lt.s32.totalorder %s8, 3
    %p169 = pnand %p167, %p168
    %p170 = pneg %p169
    // Predicated region
    $region25: #{global_conv_forward.4} parent=5 // pred_check
      _
    $region26: #{global_conv_forward.4} parent=5 // pred_check_branch
      %172 = sbr.rel (%p169) target = $region28
    $region27: #{global_conv_forward.4} parent=5 // pred_region
      %s173 = ssub.s32 %s8, 1
      %s174 = smul.u32 2, %s20
      %p175 = scmp.lt.s32.totalorder %s19, 1
      %s176 = scalar_select %p175, %s19, 1
      %p177 = scmp.lt.s32.totalorder %s174, 1
      %s178 = scalar_select %p177, %s174, 1
      %p179 = scmp.lt.s32.totalorder %s22, 0
      %s180 = scalar_select %p179, %s22, 0
      %s181 = sadd.s32 %s180, %s178
      %s182 = smul.addr %s176, 44
      %s183 = sadd.s32 %s181, %s182
      %s184 = smul.addr %s183, 4
      %s185 = scalar_lea.vmem %s0, %s184
      %p186 = pneg %p64
      %p187 = pneg %p61
      %p188 = scmp.lt.s32.totalorder %s22, 0
      %s189 = scalar_select %p188, %s22, 0
      %p190 = scmp.lt.s32.totalorder %s21, 0
      %s191 = scalar_select %p190, %s21, 0
      %s192 = sadd.s32 %s191, %s189
      %s193 = smul.addr %s192, 2
      %s194 = scalar_lea.vmem %s1, %s193
      %p195 = pneg %p92
      %p196 = pneg %p89
      %p197 = pneg %p122
      %p198 = pneg %p119
      %s199 = smul.u32 2, %s20
      %p200 = scmp.lt.s32.totalorder %s19, 1
      %s201 = scalar_select %p200, %s19, 1
      %p202 = scmp.lt.s32.totalorder %s199, 1
      %s203 = scalar_select %p202, %s199, 1
      %p204 = scmp.lt.s32.totalorder %s21, 0
      %s205 = scalar_select %p204, %s21, 0
      %s206 = sadd.s32 %s205, %s203
      %s207 = smul.addr %s201, 32
      %s208 = sadd.s32 %s206, %s207
      %s209 = smul.addr %s208, 4
      %s210 = scalar_lea.vmem %s2, %s209
      %s211 = smul.u32 2, %s20
      %p212 = scmp.lt.s32.totalorder %s19, 1
      %s213 = scalar_select %p212, %s19, 1
      %p214 = scmp.lt.s32.totalorder %s211, 1
      %s215 = scalar_select %p214, %s211, 1
      %p216 = scmp.lt.s32.totalorder %s22, 0
      %s217 = scalar_select %p216, %s22, 0
      %s218 = sadd.s32 %s217, %s215
      %s219 = smul.addr %s213, 44
      %s220 = sadd.s32 %s218, %s219
      %s221 = smul.addr %s220, 4
      %s222 = scalar_lea.vmem %s0, %s221
      %s223 = smul.u32 2, %s20
      %p224 = scmp.lt.s32.totalorder %s22, 0
      %s225 = scalar_select %p224, %s22, 0
      %p226 = scmp.lt.s32.totalorder %s21, 0
      %s227 = scalar_select %p226, %s21, 0
      %s228 = sadd.s32 %s227, %s225
      %s229 = smul.addr %s228, 2
      %s230 = scalar_lea.vmem %s1, %s229
      %s231 = smul.u32 2, %s20
      %p232 = scmp.lt.s32.totalorder %s19, 1
      %s233 = scalar_select %p232, %s19, 1
      %p234 = scmp.lt.s32.totalorder %s231, 1
      %s235 = scalar_select %p234, %s231, 1
      %p236 = scmp.lt.s32.totalorder %s21, 0
      %s237 = scalar_select %p236, %s21, 0
      %s238 = sadd.s32 %s237, %s235
      %s239 = smul.addr %s233, 32
      %s240 = sadd.s32 %s238, %s239
      %s241 = smul.addr %s240, 4
      %s242 = scalar_lea.vmem %s2, %s241
      %s243 = smul.u32 2, %s20
      %p245 = scmp.eq.s32.totalorder %s22, 0
      // Predicated region
      $region29: #{global_conv_forward.4} parent=27 // pred_check
        %p246 = pneg %p245
      $region30: #{global_conv_forward.4} parent=27 // pred_check_branch
        %248 = sbr.rel (%p246) target = $region32
      $region31: #{global_conv_forward.4} parent=27 // pred_region
        %vm249 = vcmask 64512
        %250 = vst.msk [vmem:[#allocation2] sm:$0xff] %vm249, 0.0
        %251 = vst.msk [vmem:[#allocation2 + $0x8] sm:$0xff] %vm249, 0.0
        %252 = vst.msk [vmem:[#allocation2 + $0x10] sm:$0xff] %vm249, 0.0
        %253 = vst.msk [vmem:[#allocation2 + $0x18] sm:$0xff] %vm249, 0.0
        %254 = vst.msk [vmem:[#allocation2 + $0x20] sm:$0xff] %vm249, 0.0
        %255 = vst.msk [vmem:[#allocation2 + $0x28] sm:$0xff] %vm249, 0.0
        %256 = vst.msk [vmem:[#allocation2 + $0x30] sm:$0xff] %vm249, 0.0
        %257 = vst.msk [vmem:[#allocation2 + $0x38] sm:$0xff] %vm249, 0.0
        %258 = vst.msk [vmem:[#allocation2 + $0x40] sm:$0xff] %vm249, 0.0
        %259 = vst.msk [vmem:[#allocation2 + $0x48] sm:$0xff] %vm249, 0.0
        %260 = vst.msk [vmem:[#allocation2 + $0x50] sm:$0xff] %vm249, 0.0
        %261 = vst.msk [vmem:[#allocation2 + $0x58] sm:$0xff] %vm249, 0.0
        %262 = vst.msk [vmem:[#allocation2 + $0x60] sm:$0xff] %vm249, 0.0
        %263 = vst.msk [vmem:[#allocation2 + $0x68] sm:$0xff] %vm249, 0.0
        %264 = vst.msk [vmem:[#allocation2 + $0x70] sm:$0xff] %vm249, 0.0
        %265 = vst.msk [vmem:[#allocation2 + $0x78] sm:$0xff] %vm249, 0.0
        %266 = vst.msk [vmem:[#allocation2 + $0x80] sm:$0xff] %vm249, 0.0
        %267 = vst.msk [vmem:[#allocation2 + $0x88] sm:$0xff] %vm249, 0.0
        %268 = vst.msk [vmem:[#allocation2 + $0x90] sm:$0xff] %vm249, 0.0
        %269 = vst.msk [vmem:[#allocation2 + $0x98] sm:$0xff] %vm249, 0.0
        %270 = vst.msk [vmem:[#allocation2 + $0xa0] sm:$0xff] %vm249, 0.0
        %271 = vst.msk [vmem:[#allocation2 + $0xa8] sm:$0xff] %vm249, 0.0
        %272 = vst.msk [vmem:[#allocation2 + $0xb0] sm:$0xff] %vm249, 0.0
        %273 = vst.msk [vmem:[#allocation2 + $0xb8] sm:$0xff] %vm249, 0.0
        %274 = vst.msk [vmem:[#allocation2 + $0xc0] sm:$0xff] %vm249, 0.0
        %275 = vst.msk [vmem:[#allocation2 + $0xc8] sm:$0xff] %vm249, 0.0
        %276 = vst.msk [vmem:[#allocation2 + $0xd0] sm:$0xff] %vm249, 0.0
        %277 = vst.msk [vmem:[#allocation2 + $0xd8] sm:$0xff] %vm249, 0.0
        %278 = vst.msk [vmem:[#allocation2 + $0xe0] sm:$0xff] %vm249, 0.0
        %279 = vst.msk [vmem:[#allocation2 + $0xe8] sm:$0xff] %vm249, 0.0
        %280 = vst.msk [vmem:[#allocation2 + $0xf0] sm:$0xff] %vm249, 0.0
        %281 = vst.msk [vmem:[#allocation2 + $0xf8] sm:$0xff] %vm249, 0.0
      $region32: #{global_conv_forward.4} parent=27 // pred_fallthru
        _
      %v282 = vld [vmem:[%s222] sm:$0xf]
      %v283 = vld [vmem:[%s222 + $0x4] sm:$0xf]
      %v284 = vld [vmem:[%s222 + $0x8] sm:$0xf]
      %v285 = vld [vmem:[%s222 + $0xc] sm:$0xf]
      %v286 = vld [vmem:[%s222 + $0x10] sm:$0xf]
      %v287 = vld [vmem:[%s222 + $0x14] sm:$0xf]
      %v288 = vld [vmem:[%s222 + $0x18] sm:$0xf]
      %v289 = vld [vmem:[%s222 + $0x1c] sm:$0xf]
      %v290 = vld [vmem:[%s222 + $0x20] sm:$0xf]
      %v291 = vld [vmem:[%s222 + $0x24] sm:$0xf]
      %v292 = vld [vmem:[%s222 + $0x28] sm:$0xf]
      %v293 = vld [vmem:[%s222 + $0x2c] sm:$0xf]
      %v294 = vld [vmem:[%s222 + $0x30] sm:$0xf]
      %v295 = vld [vmem:[%s222 + $0x34] sm:$0xf]
      %v296 = vld [vmem:[%s222 + $0x38] sm:$0xf]
      %v297 = vld [vmem:[%s222 + $0x3c] sm:$0xf]
      %v298 = vld [vmem:[%s222 + $0x40] sm:$0xf]
      %v299 = vld [vmem:[%s222 + $0x44] sm:$0xf]
      %v300 = vld [vmem:[%s222 + $0x48] sm:$0xf]
      %v301 = vld [vmem:[%s222 + $0x4c] sm:$0xf]
      %v302 = vld [vmem:[%s222 + $0x50] sm:$0xf]
      %v303 = vld [vmem:[%s222 + $0x54] sm:$0xf]
      %v304 = vld [vmem:[%s222 + $0x58] sm:$0xf]
      %v305 = vld [vmem:[%s222 + $0x5c] sm:$0xf]
      %v306 = vld [vmem:[%s222 + $0x60] sm:$0xf]
      %v307 = vld [vmem:[%s222 + $0x64] sm:$0xf]
      %v308 = vld [vmem:[%s222 + $0x68] sm:$0xf]
      %v309 = vld [vmem:[%s222 + $0x6c] sm:$0xf]
      %v310 = vld [vmem:[%s222 + $0x70] sm:$0xf]
      %v311 = vld [vmem:[%s222 + $0x74] sm:$0xf]
      %v312 = vld [vmem:[%s222 + $0x78] sm:$0xf]
      %v313 = vld [vmem:[%s222 + $0x7c] sm:$0xf]
      %v314 = vld [vmem:[%s230] sm:$0x3]
      %s315 = scalar_lea.vmem %s222, 8
      %v316 = vld [vmem:[%s315] sm:$0xf]
      %v317 = vld [vmem:[%s315 + $0x4] sm:$0xf]
      %v318 = vld [vmem:[%s315 + $0x8] sm:$0xf]
      %v319 = vld [vmem:[%s315 + $0xc] sm:$0xf]
      %v320 = vld [vmem:[%s315 + $0x10] sm:$0xf]
      %v321 = vld [vmem:[%s315 + $0x14] sm:$0xf]
      %v322 = vld [vmem:[%s315 + $0x18] sm:$0xf]
      %v323 = vld [vmem:[%s315 + $0x1c] sm:$0xf]
      %v324 = vld [vmem:[%s315 + $0x20] sm:$0xf]
      %v325 = vld [vmem:[%s315 + $0x24] sm:$0xf]
      %v326 = vld [vmem:[%s315 + $0x28] sm:$0xf]
      %v327 = vld [vmem:[%s315 + $0x2c] sm:$0xf]
      %v328 = vld [vmem:[%s315 + $0x30] sm:$0xf]
      %v329 = vld [vmem:[%s315 + $0x34] sm:$0xf]
      %v330 = vld [vmem:[%s315 + $0x38] sm:$0xf]
      %v331 = vld [vmem:[%s315 + $0x3c] sm:$0xf]
      %v332 = vld [vmem:[%s315 + $0x40] sm:$0xf]
      %v333 = vld [vmem:[%s315 + $0x44] sm:$0xf]
      %v334 = vld [vmem:[%s315 + $0x48] sm:$0xf]
      %v335 = vld [vmem:[%s315 + $0x4c] sm:$0xf]
      %v336 = vld [vmem:[%s315 + $0x50] sm:$0xf]
      %v337 = vld [vmem:[%s315 + $0x54] sm:$0xf]
      %v338 = vld [vmem:[%s315 + $0x58] sm:$0xf]
      %v339 = vld [vmem:[%s315 + $0x5c] sm:$0xf]
      %v340 = vld [vmem:[%s315 + $0x60] sm:$0xf]
      %v341 = vld [vmem:[%s315 + $0x64] sm:$0xf]
      %v342 = vld [vmem:[%s315 + $0x68] sm:$0xf]
      %v343 = vld [vmem:[%s315 + $0x6c] sm:$0xf]
      %v344 = vld [vmem:[%s315 + $0x70] sm:$0xf]
      %v345 = vld [vmem:[%s315 + $0x74] sm:$0xf]
      %v346 = vld [vmem:[%s315 + $0x78] sm:$0xf]
      %v347 = vld [vmem:[%s315 + $0x7c] sm:$0xf]
      %s348 = scalar_lea.vmem %s230, 2
      %v349 = vld [vmem:[%s348] sm:$0x3]
      %v382 = vunpack.c.l.b16 %v316
      %v383 = vunpack.c.l.b16 %v317
      %v384 = vunpack.c.l.b16 %v318
      %v385 = vunpack.c.l.b16 %v319
      %v386 = vunpack.c.l.b16 %v320
      %v387 = vunpack.c.l.b16 %v321
      %v388 = vunpack.c.l.b16 %v322
      %v389 = vunpack.c.l.b16 %v323
      %v390 = vunpack.c.l.b16 %v324
      %v391 = vunpack.c.l.b16 %v325
      %v392 = vunpack.c.l.b16 %v326
      %v393 = vunpack.c.l.b16 %v327
      %v394 = vunpack.c.l.b16 %v328
      %v395 = vunpack.c.l.b16 %v329
      %v396 = vunpack.c.l.b16 %v330
      %v397 = vunpack.c.l.b16 %v331
      %v398 = vunpack.c.l.b16 %v332
      %v399 = vunpack.c.l.b16 %v333
      %v400 = vunpack.c.l.b16 %v334
      %v401 = vunpack.c.l.b16 %v335
      %v402 = vunpack.c.l.b16 %v336
      %v403 = vunpack.c.l.b16 %v337
      %v404 = vunpack.c.l.b16 %v338
      %v405 = vunpack.c.l.b16 %v339
      %v406 = vunpack.c.l.b16 %v340
      %v407 = vunpack.c.l.b16 %v341
      %v408 = vunpack.c.l.b16 %v342
      %v409 = vunpack.c.l.b16 %v343
      %v410 = vunpack.c.l.b16 %v344
      %v411 = vunpack.c.l.b16 %v345
      %v412 = vunpack.c.l.b16 %v346
      %v413 = vunpack.c.l.b16 %v347
      %v414 = vpack.c.b16 %v383, %v382
      %v415 = vpack.c.b16 %v385, %v384
      %v416 = vpack.c.b16 %v387, %v386
      %v417 = vpack.c.b16 %v389, %v388
      %v418 = vpack.c.b16 %v391, %v390
      %v419 = vpack.c.b16 %v393, %v392
      %v420 = vpack.c.b16 %v395, %v394
      %v421 = vpack.c.b16 %v397, %v396
      %v422 = vpack.c.b16 %v399, %v398
      %v423 = vpack.c.b16 %v401, %v400
      %v424 = vpack.c.b16 %v403, %v402
      %v425 = vpack.c.b16 %v405, %v404
      %v426 = vpack.c.b16 %v407, %v406
      %v427 = vpack.c.b16 %v409, %v408
      %v428 = vpack.c.b16 %v411, %v410
      %v429 = vpack.c.b16 %v413, %v412
      %vm430 = vcmask 31744
      %v432 = vsel %vm430, %v414, 0
      %v435 = vsel %vm430, %v415, 0
      %v438 = vsel %vm430, %v416, 0
      %v441 = vsel %vm430, %v417, 0
      %v444 = vsel %vm430, %v418, 0
      %v447 = vsel %vm430, %v419, 0
      %v450 = vsel %vm430, %v420, 0
      %v453 = vsel %vm430, %v421, 0
      %v456 = vsel %vm430, %v422, 0
      %v459 = vsel %vm430, %v423, 0
      %v462 = vsel %vm430, %v424, 0
      %v465 = vsel %vm430, %v425, 0
      %v468 = vsel %vm430, %v426, 0
      %v471 = vsel %vm430, %v427, 0
      %v474 = vsel %vm430, %v428, 0
      %v477 = vsel %vm430, %v429, 0
      %vm479 = vcmask 1041408
      %v481 = vsel %vm479, %v349, 0
      %483 = vmatpush.bf16.msra.mxu0 0
      %484 = vmatpush.bf16.msra.mxu0 0
      %485 = vmatpush.bf16.msra.mxu0 0
      %486 = vmatpush.bf16.msra.mxu0 0
      %487 = vmatpush.bf16.msra.mxu0 0
      %488 = vmatpush.bf16.msra.mxu0 0
      %489 = vmatpush.bf16.msra.mxu0 0
      %490 = vmatpush.bf16.msra.mxu0 %v481
      %491 = vmatmul.bf16.gmra.mxu0 %v432
      %v492 = vpop.f32.mrf.mxu0
      %v493 = vadd.f32 0.0, %v492
      %v494 = vpop.f32.mrf.mxu0
      %v495 = vadd.f32 0.0, %v494
      %496 = vmatmul.bf16.gmra.mxu0 %v435
      %v497 = vpop.f32.mrf.mxu0
      %v498 = vadd.f32 0.0, %v497
      %v499 = vpop.f32.mrf.mxu0
      %v500 = vadd.f32 0.0, %v499
      %501 = vmatmul.bf16.gmra.mxu0 %v438
      %v502 = vpop.f32.mrf.mxu0
      %v503 = vadd.f32 0.0, %v502
      %v504 = vpop.f32.mrf.mxu0
      %v505 = vadd.f32 0.0, %v504
      %506 = vmatmul.bf16.gmra.mxu0 %v441
      %v507 = vpop.f32.mrf.mxu0
      %v508 = vadd.f32 0.0, %v507
      %v509 = vpop.f32.mrf.mxu0
      %v510 = vadd.f32 0.0, %v509
      %511 = vmatmul.bf16.gmra.mxu0 %v444
      %v512 = vpop.f32.mrf.mxu0
      %v513 = vadd.f32 0.0, %v512
      %v514 = vpop.f32.mrf.mxu0
      %v515 = vadd.f32 0.0, %v514
      %516 = vmatmul.bf16.gmra.mxu0 %v447
      %v517 = vpop.f32.mrf.mxu0
      %v518 = vadd.f32 0.0, %v517
      %v519 = vpop.f32.mrf.mxu0
      %v520 = vadd.f32 0.0, %v519
      %521 = vmatmul.bf16.gmra.mxu0 %v450
      %v522 = vpop.f32.mrf.mxu0
      %v523 = vadd.f32 0.0, %v522
      %v524 = vpop.f32.mrf.mxu0
      %v525 = vadd.f32 0.0, %v524
      %526 = vmatmul.bf16.gmra.mxu0 %v453
      %v527 = vpop.f32.mrf.mxu0
      %v528 = vadd.f32 0.0, %v527
      %v529 = vpop.f32.mrf.mxu0
      %v530 = vadd.f32 0.0, %v529
      %531 = vmatmul.bf16.gmra.mxu0 %v456
      %v532 = vpop.f32.mrf.mxu0
      %v533 = vadd.f32 0.0, %v532
      %v534 = vpop.f32.mrf.mxu0
      %v535 = vadd.f32 0.0, %v534
      %536 = vmatmul.bf16.gmra.mxu0 %v459
      %v537 = vpop.f32.mrf.mxu0
      %v538 = vadd.f32 0.0, %v537
      %v539 = vpop.f32.mrf.mxu0
      %v540 = vadd.f32 0.0, %v539
      %541 = vmatmul.bf16.gmra.mxu0 %v462
      %v542 = vpop.f32.mrf.mxu0
      %v543 = vadd.f32 0.0, %v542
      %v544 = vpop.f32.mrf.mxu0
      %v545 = vadd.f32 0.0, %v544
      %546 = vmatmul.bf16.gmra.mxu0 %v465
      %v547 = vpop.f32.mrf.mxu0
      %v548 = vadd.f32 0.0, %v547
      %v549 = vpop.f32.mrf.mxu0
      %v550 = vadd.f32 0.0, %v549
      %551 = vmatmul.bf16.gmra.mxu0 %v468
      %v552 = vpop.f32.mrf.mxu0
      %v553 = vadd.f32 0.0, %v552
      %v554 = vpop.f32.mrf.mxu0
      %v555 = vadd.f32 0.0, %v554
      %556 = vmatmul.bf16.gmra.mxu0 %v471
      %v557 = vpop.f32.mrf.mxu0
      %v558 = vadd.f32 0.0, %v557
      %v559 = vpop.f32.mrf.mxu0
      %v560 = vadd.f32 0.0, %v559
      %561 = vmatmul.bf16.gmra.mxu0 %v474
      %v562 = vpop.f32.mrf.mxu0
      %v563 = vadd.f32 0.0, %v562
      %v564 = vpop.f32.mrf.mxu0
      %v565 = vadd.f32 0.0, %v564
      %566 = vmatmul.bf16.gmra.mxu0 %v477
      %v567 = vpop.f32.mrf.mxu0
      %v568 = vadd.f32 0.0, %v567
      %v569 = vpop.f32.mrf.mxu0
      %v570 = vadd.f32 0.0, %v569
      %571 = vdwg.mxu0
      %v604 = vunpack.c.l.b16 %v282
      %v605 = vunpack.c.l.b16 %v283
      %v606 = vunpack.c.l.b16 %v284
      %v607 = vunpack.c.l.b16 %v285
      %v608 = vunpack.c.l.b16 %v286
      %v609 = vunpack.c.l.b16 %v287
      %v610 = vunpack.c.l.b16 %v288
      %v611 = vunpack.c.l.b16 %v289
      %v612 = vunpack.c.l.b16 %v290
      %v613 = vunpack.c.l.b16 %v291
      %v614 = vunpack.c.l.b16 %v292
      %v615 = vunpack.c.l.b16 %v293
      %v616 = vunpack.c.l.b16 %v294
      %v617 = vunpack.c.l.b16 %v295
      %v618 = vunpack.c.l.b16 %v296
      %v619 = vunpack.c.l.b16 %v297
      %v620 = vunpack.c.l.b16 %v298
      %v621 = vunpack.c.l.b16 %v299
      %v622 = vunpack.c.l.b16 %v300
      %v623 = vunpack.c.l.b16 %v301
      %v624 = vunpack.c.l.b16 %v302
      %v625 = vunpack.c.l.b16 %v303
      %v626 = vunpack.c.l.b16 %v304
      %v627 = vunpack.c.l.b16 %v305
      %v628 = vunpack.c.l.b16 %v306
      %v629 = vunpack.c.l.b16 %v307
      %v630 = vunpack.c.l.b16 %v308
      %v631 = vunpack.c.l.b16 %v309
      %v632 = vunpack.c.l.b16 %v310
      %v633 = vunpack.c.l.b16 %v311
      %v634 = vunpack.c.l.b16 %v312
      %v635 = vunpack.c.l.b16 %v313
      %v636 = vpack.c.b16 %v605, %v604
      %v637 = vpack.c.b16 %v607, %v606
      %v638 = vpack.c.b16 %v609, %v608
      %v639 = vpack.c.b16 %v611, %v610
      %v640 = vpack.c.b16 %v613, %v612
      %v641 = vpack.c.b16 %v615, %v614
      %v642 = vpack.c.b16 %v617, %v616
      %v643 = vpack.c.b16 %v619, %v618
      %v644 = vpack.c.b16 %v621, %v620
      %v645 = vpack.c.b16 %v623, %v622
      %v646 = vpack.c.b16 %v625, %v624
      %v647 = vpack.c.b16 %v627, %v626
      %v648 = vpack.c.b16 %v629, %v628
      %v649 = vpack.c.b16 %v631, %v630
      %v650 = vpack.c.b16 %v633, %v632
      %v651 = vpack.c.b16 %v635, %v634
      %v653 = vsel %vm430, %v636, 0
      %v656 = vsel %vm430, %v637, 0
      %v659 = vsel %vm430, %v638, 0
      %v662 = vsel %vm430, %v639, 0
      %v665 = vsel %vm430, %v640, 0
      %v668 = vsel %vm430, %v641, 0
      %v671 = vsel %vm430, %v642, 0
      %v674 = vsel %vm430, %v643, 0
      %v677 = vsel %vm430, %v644, 0
      %v680 = vsel %vm430, %v645, 0
      %v683 = vsel %vm430, %v646, 0
      %v686 = vsel %vm430, %v647, 0
      %v689 = vsel %vm430, %v648, 0
      %v692 = vsel %vm430, %v649, 0
      %v695 = vsel %vm430, %v650, 0
      %v698 = vsel %vm430, %v651, 0
      %v701 = vsel %vm479, %v314, 0
      %703 = vmatpush.bf16.msra.mxu0 0
      %704 = vmatpush.bf16.msra.mxu0 0
      %705 = vmatpush.bf16.msra.mxu0 0
      %706 = vmatpush.bf16.msra.mxu0 0
      %707 = vmatpush.bf16.msra.mxu0 0
      %708 = vmatpush.bf16.msra.mxu0 0
      %709 = vmatpush.bf16.msra.mxu0 0
      %710 = vmatpush.bf16.msra.mxu0 %v701
      %711 = vmatmul.bf16.gmra.mxu0 %v653
      %v712 = vpop.f32.mrf.mxu0
      %v713 = vadd.f32 %v493, %v712
      %v714 = vpop.f32.mrf.mxu0
      %v715 = vadd.f32 %v495, %v714
      %716 = vmatmul.bf16.gmra.mxu0 %v656
      %v717 = vpop.f32.mrf.mxu0
      %v718 = vadd.f32 %v498, %v717
      %v719 = vpop.f32.mrf.mxu0
      %v720 = vadd.f32 %v500, %v719
      %721 = vmatmul.bf16.gmra.mxu0 %v659
      %v722 = vpop.f32.mrf.mxu0
      %v723 = vadd.f32 %v503, %v722
      %v724 = vpop.f32.mrf.mxu0
      %v725 = vadd.f32 %v505, %v724
      %726 = vmatmul.bf16.gmra.mxu0 %v662
      %v727 = vpop.f32.mrf.mxu0
      %v728 = vadd.f32 %v508, %v727
      %v729 = vpop.f32.mrf.mxu0
      %v730 = vadd.f32 %v510, %v729
      %731 = vmatmul.bf16.gmra.mxu0 %v665
      %v732 = vpop.f32.mrf.mxu0
      %v733 = vadd.f32 %v513, %v732
      %v734 = vpop.f32.mrf.mxu0
      %v735 = vadd.f32 %v515, %v734
      %736 = vmatmul.bf16.gmra.mxu0 %v668
      %v737 = vpop.f32.mrf.mxu0
      %v738 = vadd.f32 %v518, %v737
      %v739 = vpop.f32.mrf.mxu0
      %v740 = vadd.f32 %v520, %v739
      %741 = vmatmul.bf16.gmra.mxu0 %v671
      %v742 = vpop.f32.mrf.mxu0
      %v743 = vadd.f32 %v523, %v742
      %v744 = vpop.f32.mrf.mxu0
      %v745 = vadd.f32 %v525, %v744
      %746 = vmatmul.bf16.gmra.mxu0 %v674
      %v747 = vpop.f32.mrf.mxu0
      %v748 = vadd.f32 %v528, %v747
      %v749 = vpop.f32.mrf.mxu0
      %v750 = vadd.f32 %v530, %v749
      %751 = vmatmul.bf16.gmra.mxu0 %v677
      %v752 = vpop.f32.mrf.mxu0
      %v753 = vadd.f32 %v533, %v752
      %v754 = vpop.f32.mrf.mxu0
      %v755 = vadd.f32 %v535, %v754
      %756 = vmatmul.bf16.gmra.mxu0 %v680
      %v757 = vpop.f32.mrf.mxu0
      %v758 = vadd.f32 %v538, %v757
      %v759 = vpop.f32.mrf.mxu0
      %v760 = vadd.f32 %v540, %v759
      %761 = vmatmul.bf16.gmra.mxu0 %v683
      %v762 = vpop.f32.mrf.mxu0
      %v763 = vadd.f32 %v543, %v762
      %v764 = vpop.f32.mrf.mxu0
      %v765 = vadd.f32 %v545, %v764
      %766 = vmatmul.bf16.gmra.mxu0 %v686
      %v767 = vpop.f32.mrf.mxu0
      %v768 = vadd.f32 %v548, %v767
      %v769 = vpop.f32.mrf.mxu0
      %v770 = vadd.f32 %v550, %v769
      %771 = vmatmul.bf16.gmra.mxu0 %v689
      %v772 = vpop.f32.mrf.mxu0
      %v773 = vadd.f32 %v553, %v772
      %v774 = vpop.f32.mrf.mxu0
      %v775 = vadd.f32 %v555, %v774
      %776 = vmatmul.bf16.gmra.mxu0 %v692
      %v777 = vpop.f32.mrf.mxu0
      %v778 = vadd.f32 %v558, %v777
      %v779 = vpop.f32.mrf.mxu0
      %v780 = vadd.f32 %v560, %v779
      %781 = vmatmul.bf16.gmra.mxu0 %v695
      %v782 = vpop.f32.mrf.mxu0
      %v783 = vadd.f32 %v563, %v782
      %v784 = vpop.f32.mrf.mxu0
      %v785 = vadd.f32 %v565, %v784
      %786 = vmatmul.bf16.gmra.mxu0 %v698
      %v787 = vpop.f32.mrf.mxu0
      %v788 = vadd.f32 %v568, %v787
      %v789 = vpop.f32.mrf.mxu0
      %v790 = vadd.f32 %v570, %v789
      %791 = vdwg.mxu0
      %s792 = scalar_lea.vmem %s222, 16
      %v793 = vld [vmem:[%s792] sm:$0xf]
      %v794 = vld [vmem:[%s792 + $0x4] sm:$0xf]
      %v795 = vld [vmem:[%s792 + $0x8] sm:$0xf]
      %v796 = vld [vmem:[%s792 + $0xc] sm:$0xf]
      %v797 = vld [vmem:[%s792 + $0x10] sm:$0xf]
      %v798 = vld [vmem:[%s792 + $0x14] sm:$0xf]
      %v799 = vld [vmem:[%s792 + $0x18] sm:$0xf]
      %v800 = vld [vmem:[%s792 + $0x1c] sm:$0xf]
      %v801 = vld [vmem:[%s792 + $0x20] sm:$0xf]
      %v802 = vld [vmem:[%s792 + $0x24] sm:$0xf]
      %v803 = vld [vmem:[%s792 + $0x28] sm:$0xf]
      %v804 = vld [vmem:[%s792 + $0x2c] sm:$0xf]
      %v805 = vld [vmem:[%s792 + $0x30] sm:$0xf]
      %v806 = vld [vmem:[%s792 + $0x34] sm:$0xf]
      %v807 = vld [vmem:[%s792 + $0x38] sm:$0xf]
      %v808 = vld [vmem:[%s792 + $0x3c] sm:$0xf]
      %v809 = vld [vmem:[%s792 + $0x40] sm:$0xf]
      %v810 = vld [vmem:[%s792 + $0x44] sm:$0xf]
      %v811 = vld [vmem:[%s792 + $0x48] sm:$0xf]
      %v812 = vld [vmem:[%s792 + $0x4c] sm:$0xf]
      %v813 = vld [vmem:[%s792 + $0x50] sm:$0xf]
      %v814 = vld [vmem:[%s792 + $0x54] sm:$0xf]
      %v815 = vld [vmem:[%s792 + $0x58] sm:$0xf]
      %v816 = vld [vmem:[%s792 + $0x5c] sm:$0xf]
      %v817 = vld [vmem:[%s792 + $0x60] sm:$0xf]
      %v818 = vld [vmem:[%s792 + $0x64] sm:$0xf]
      %v819 = vld [vmem:[%s792 + $0x68] sm:$0xf]
      %v820 = vld [vmem:[%s792 + $0x6c] sm:$0xf]
      %v821 = vld [vmem:[%s792 + $0x70] sm:$0xf]
      %v822 = vld [vmem:[%s792 + $0x74] sm:$0xf]
      %v823 = vld [vmem:[%s792 + $0x78] sm:$0xf]
      %v824 = vld [vmem:[%s792 + $0x7c] sm:$0xf]
      %s825 = scalar_lea.vmem %s230, 4
      %v826 = vld [vmem:[%s825] sm:$0x3]
      %v859 = vunpack.c.l.b16 %v793
      %v860 = vunpack.c.l.b16 %v794
      %v861 = vunpack.c.l.b16 %v795
      %v862 = vunpack.c.l.b16 %v796
      %v863 = vunpack.c.l.b16 %v797
      %v864 = vunpack.c.l.b16 %v798
      %v865 = vunpack.c.l.b16 %v799
      %v866 = vunpack.c.l.b16 %v800
      %v867 = vunpack.c.l.b16 %v801
      %v868 = vunpack.c.l.b16 %v802
      %v869 = vunpack.c.l.b16 %v803
      %v870 = vunpack.c.l.b16 %v804
      %v871 = vunpack.c.l.b16 %v805
      %v872 = vunpack.c.l.b16 %v806
      %v873 = vunpack.c.l.b16 %v807
      %v874 = vunpack.c.l.b16 %v808
      %v875 = vunpack.c.l.b16 %v809
      %v876 = vunpack.c.l.b16 %v810
      %v877 = vunpack.c.l.b16 %v811
      %v878 = vunpack.c.l.b16 %v812
      %v879 = vunpack.c.l.b16 %v813
      %v880 = vunpack.c.l.b16 %v814
      %v881 = vunpack.c.l.b16 %v815
      %v882 = vunpack.c.l.b16 %v816
      %v883 = vunpack.c.l.b16 %v817
      %v884 = vunpack.c.l.b16 %v818
      %v885 = vunpack.c.l.b16 %v819
      %v886 = vunpack.c.l.b16 %v820
      %v887 = vunpack.c.l.b16 %v821
      %v888 = vunpack.c.l.b16 %v822
      %v889 = vunpack.c.l.b16 %v823
      %v890 = vunpack.c.l.b16 %v824
      %v891 = vpack.c.b16 %v860, %v859
      %v892 = vpack.c.b16 %v862, %v861
      %v893 = vpack.c.b16 %v864, %v863
      %v894 = vpack.c.b16 %v866, %v865
      %v895 = vpack.c.b16 %v868, %v867
      %v896 = vpack.c.b16 %v870, %v869
      %v897 = vpack.c.b16 %v872, %v871
      %v898 = vpack.c.b16 %v874, %v873
      %v899 = vpack.c.b16 %v876, %v875
      %v900 = vpack.c.b16 %v878, %v877
      %v901 = vpack.c.b16 %v880, %v879
      %v902 = vpack.c.b16 %v882, %v881
      %v903 = vpack.c.b16 %v884, %v883
      %v904 = vpack.c.b16 %v886, %v885
      %v905 = vpack.c.b16 %v888, %v887
      %v906 = vpack.c.b16 %v890, %v889
      %v908 = vsel %vm430, %v891, 0
      %v911 = vsel %vm430, %v892, 0
      %v914 = vsel %vm430, %v893, 0
      %v917 = vsel %vm430, %v894, 0
      %v920 = vsel %vm430, %v895, 0
      %v923 = vsel %vm430, %v896, 0
      %v926 = vsel %vm430, %v897, 0
      %v929 = vsel %vm430, %v898, 0
      %v932 = vsel %vm430, %v899, 0
      %v935 = vsel %vm430, %v900, 0
      %v938 = vsel %vm430, %v901, 0
      %v941 = vsel %vm430, %v902, 0
      %v944 = vsel %vm430, %v903, 0
      %v947 = vsel %vm430, %v904, 0
      %v950 = vsel %vm430, %v905, 0
      %v953 = vsel %vm430, %v906, 0
      %v956 = vsel %vm479, %v826, 0
      %958 = vmatpush.bf16.msra.mxu0 0
      %959 = vmatpush.bf16.msra.mxu0 0
      %960 = vmatpush.bf16.msra.mxu0 0
      %961 = vmatpush.bf16.msra.mxu0 0
      %962 = vmatpush.bf16.msra.mxu0 0
      %963 = vmatpush.bf16.msra.mxu0 0
      %964 = vmatpush.bf16.msra.mxu0 0
      %965 = vmatpush.bf16.msra.mxu0 %v956
      %966 = vmatmul.bf16.gmra.mxu0 %v908
      %v967 = vpop.f32.mrf.mxu0
      %v968 = vadd.f32 0.0, %v967
      %v969 = vpop.f32.mrf.mxu0
      %v970 = vadd.f32 0.0, %v969
      %971 = vmatmul.bf16.gmra.mxu0 %v911
      %v972 = vpop.f32.mrf.mxu0
      %v973 = vadd.f32 0.0, %v972
      %v974 = vpop.f32.mrf.mxu0
      %v975 = vadd.f32 0.0, %v974
      %976 = vmatmul.bf16.gmra.mxu0 %v914
      %v977 = vpop.f32.mrf.mxu0
      %v978 = vadd.f32 0.0, %v977
      %v979 = vpop.f32.mrf.mxu0
      %v980 = vadd.f32 0.0, %v979
      %981 = vmatmul.bf16.gmra.mxu0 %v917
      %v982 = vpop.f32.mrf.mxu0
      %v983 = vadd.f32 0.0, %v982
      %v984 = vpop.f32.mrf.mxu0
      %v985 = vadd.f32 0.0, %v984
      %986 = vmatmul.bf16.gmra.mxu0 %v920
      %v987 = vpop.f32.mrf.mxu0
      %v988 = vadd.f32 0.0, %v987
      %v989 = vpop.f32.mrf.mxu0
      %v990 = vadd.f32 0.0, %v989
      %991 = vmatmul.bf16.gmra.mxu0 %v923
      %v992 = vpop.f32.mrf.mxu0
      %v993 = vadd.f32 0.0, %v992
      %v994 = vpop.f32.mrf.mxu0
      %v995 = vadd.f32 0.0, %v994
      %996 = vmatmul.bf16.gmra.mxu0 %v926
      %v997 = vpop.f32.mrf.mxu0
      %v998 = vadd.f32 0.0, %v997
      %v999 = vpop.f32.mrf.mxu0
      %v1000 = vadd.f32 0.0, %v999
      %1001 = vmatmul.bf16.gmra.mxu0 %v929
      %v1002 = vpop.f32.mrf.mxu0
      %v1003 = vadd.f32 0.0, %v1002
      %v1004 = vpop.f32.mrf.mxu0
      %v1005 = vadd.f32 0.0, %v1004
      %1006 = vmatmul.bf16.gmra.mxu0 %v932
      %v1007 = vpop.f32.mrf.mxu0
      %v1008 = vadd.f32 0.0, %v1007
      %v1009 = vpop.f32.mrf.mxu0
      %v1010 = vadd.f32 0.0, %v1009
      %1011 = vmatmul.bf16.gmra.mxu0 %v935
      %v1012 = vpop.f32.mrf.mxu0
      %v1013 = vadd.f32 0.0, %v1012
      %v1014 = vpop.f32.mrf.mxu0
      %v1015 = vadd.f32 0.0, %v1014
      %1016 = vmatmul.bf16.gmra.mxu0 %v938
      %v1017 = vpop.f32.mrf.mxu0
      %v1018 = vadd.f32 0.0, %v1017
      %v1019 = vpop.f32.mrf.mxu0
      %v1020 = vadd.f32 0.0, %v1019
      %1021 = vmatmul.bf16.gmra.mxu0 %v941
      %v1022 = vpop.f32.mrf.mxu0
      %v1023 = vadd.f32 0.0, %v1022
      %v1024 = vpop.f32.mrf.mxu0
      %v1025 = vadd.f32 0.0, %v1024
      %1026 = vmatmul.bf16.gmra.mxu0 %v944
      %v1027 = vpop.f32.mrf.mxu0
      %v1028 = vadd.f32 0.0, %v1027
      %v1029 = vpop.f32.mrf.mxu0
      %v1030 = vadd.f32 0.0, %v1029
      %1031 = vmatmul.bf16.gmra.mxu0 %v947
      %v1032 = vpop.f32.mrf.mxu0
      %v1033 = vadd.f32 0.0, %v1032
      %v1034 = vpop.f32.mrf.mxu0
      %v1035 = vadd.f32 0.0, %v1034
      %1036 = vmatmul.bf16.gmra.mxu0 %v950
      %v1037 = vpop.f32.mrf.mxu0
      %v1038 = vadd.f32 0.0, %v1037
      %v1039 = vpop.f32.mrf.mxu0
      %v1040 = vadd.f32 0.0, %v1039
      %1041 = vmatmul.bf16.gmra.mxu0 %v953
      %v1042 = vpop.f32.mrf.mxu0
      %v1043 = vadd.f32 0.0, %v1042
      %v1044 = vpop.f32.mrf.mxu0
      %v1045 = vadd.f32 0.0, %v1044
      %1046 = vdwg.mxu0
      %v1047 = vadd.f32 %v713, %v968
      %v1048 = vadd.f32 %v715, %v970
      %v1049 = vadd.f32 %v718, %v973
      %v1050 = vadd.f32 %v720, %v975
      %v1051 = vadd.f32 %v723, %v978
      %v1052 = vadd.f32 %v725, %v980
      %v1053 = vadd.f32 %v728, %v983
      %v1054 = vadd.f32 %v730, %v985
      %v1055 = vadd.f32 %v733, %v988
      %v1056 = vadd.f32 %v735, %v990
      %v1057 = vadd.f32 %v738, %v993
      %v1058 = vadd.f32 %v740, %v995
      %v1059 = vadd.f32 %v743, %v998
      %v1060 = vadd.f32 %v745, %v1000
      %v1061 = vadd.f32 %v748, %v1003
      %v1062 = vadd.f32 %v750, %v1005
      %v1063 = vadd.f32 %v753, %v1008
      %v1064 = vadd.f32 %v755, %v1010
      %v1065 = vadd.f32 %v758, %v1013
      %v1066 = vadd.f32 %v760, %v1015
      %v1067 = vadd.f32 %v763, %v1018
      %v1068 = vadd.f32 %v765, %v1020
      %v1069 = vadd.f32 %v768, %v1023
      %v1070 = vadd.f32 %v770, %v1025
      %v1071 = vadd.f32 %v773, %v1028
      %v1072 = vadd.f32 %v775, %v1030
      %v1073 = vadd.f32 %v778, %v1033
      %v1074 = vadd.f32 %v780, %v1035
      %v1075 = vadd.f32 %v783, %v1038
      %v1076 = vadd.f32 %v785, %v1040
      %v1077 = vadd.f32 %v788, %v1043
      %v1078 = vadd.f32 %v790, %v1045
      %s1079 = scalar_lea.vmem %s222, 24
      %v1080 = vld [vmem:[%s1079] sm:$0xf]
      %v1081 = vld [vmem:[%s1079 + $0x4] sm:$0xf]
      %v1082 = vld [vmem:[%s1079 + $0x8] sm:$0xf]
      %v1083 = vld [vmem:[%s1079 + $0xc] sm:$0xf]
      %v1084 = vld [vmem:[%s1079 + $0x10] sm:$0xf]
      %v1085 = vld [vmem:[%s1079 + $0x14] sm:$0xf]
      %v1086 = vld [vmem:[%s1079 + $0x18] sm:$0xf]
      %v1087 = vld [vmem:[%s1079 + $0x1c] sm:$0xf]
      %v1088 = vld [vmem:[%s1079 + $0x20] sm:$0xf]
      %v1089 = vld [vmem:[%s1079 + $0x24] sm:$0xf]
      %v1090 = vld [vmem:[%s1079 + $0x28] sm:$0xf]
      %v1091 = vld [vmem:[%s1079 + $0x2c] sm:$0xf]
      %v1092 = vld [vmem:[%s1079 + $0x30] sm:$0xf]
      %v1093 = vld [vmem:[%s1079 + $0x34] sm:$0xf]
      %v1094 = vld [vmem:[%s1079 + $0x38] sm:$0xf]
      %v1095 = vld [vmem:[%s1079 + $0x3c] sm:$0xf]
      %v1096 = vld [vmem:[%s1079 + $0x40] sm:$0xf]
      %v1097 = vld [vmem:[%s1079 + $0x44] sm:$0xf]
      %v1098 = vld [vmem:[%s1079 + $0x48] sm:$0xf]
      %v1099 = vld [vmem:[%s1079 + $0x4c] sm:$0xf]
      %v1100 = vld [vmem:[%s1079 + $0x50] sm:$0xf]
      %v1101 = vld [vmem:[%s1079 + $0x54] sm:$0xf]
      %v1102 = vld [vmem:[%s1079 + $0x58] sm:$0xf]
      %v1103 = vld [vmem:[%s1079 + $0x5c] sm:$0xf]
      %v1104 = vld [vmem:[%s1079 + $0x60] sm:$0xf]
      %v1105 = vld [vmem:[%s1079 + $0x64] sm:$0xf]
      %v1106 = vld [vmem:[%s1079 + $0x68] sm:$0xf]
      %v1107 = vld [vmem:[%s1079 + $0x6c] sm:$0xf]
      %v1108 = vld [vmem:[%s1079 + $0x70] sm:$0xf]
      %v1109 = vld [vmem:[%s1079 + $0x74] sm:$0xf]
      %v1110 = vld [vmem:[%s1079 + $0x78] sm:$0xf]
      %v1111 = vld [vmem:[%s1079 + $0x7c] sm:$0xf]
      %s1112 = scalar_lea.vmem %s230, 6
      %v1113 = vld [vmem:[%s1112] sm:$0x3]
      %v1146 = vunpack.c.l.b16 %v1080
      %v1147 = vunpack.c.l.b16 %v1081
      %v1148 = vunpack.c.l.b16 %v1082
      %v1149 = vunpack.c.l.b16 %v1083
      %v1150 = vunpack.c.l.b16 %v1084
      %v1151 = vunpack.c.l.b16 %v1085
      %v1152 = vunpack.c.l.b16 %v1086
      %v1153 = vunpack.c.l.b16 %v1087
      %v1154 = vunpack.c.l.b16 %v1088
      %v1155 = vunpack.c.l.b16 %v1089
      %v1156 = vunpack.c.l.b16 %v1090
      %v1157 = vunpack.c.l.b16 %v1091
      %v1158 = vunpack.c.l.b16 %v1092
      %v1159 = vunpack.c.l.b16 %v1093
      %v1160 = vunpack.c.l.b16 %v1094
      %v1161 = vunpack.c.l.b16 %v1095
      %v1162 = vunpack.c.l.b16 %v1096
      %v1163 = vunpack.c.l.b16 %v1097
      %v1164 = vunpack.c.l.b16 %v1098
      %v1165 = vunpack.c.l.b16 %v1099
      %v1166 = vunpack.c.l.b16 %v1100
      %v1167 = vunpack.c.l.b16 %v1101
      %v1168 = vunpack.c.l.b16 %v1102
      %v1169 = vunpack.c.l.b16 %v1103
      %v1170 = vunpack.c.l.b16 %v1104
      %v1171 = vunpack.c.l.b16 %v1105
      %v1172 = vunpack.c.l.b16 %v1106
      %v1173 = vunpack.c.l.b16 %v1107
      %v1174 = vunpack.c.l.b16 %v1108
      %v1175 = vunpack.c.l.b16 %v1109
      %v1176 = vunpack.c.l.b16 %v1110
      %v1177 = vunpack.c.l.b16 %v1111
      %v1178 = vpack.c.b16 %v1147, %v1146
      %v1179 = vpack.c.b16 %v1149, %v1148
      %v1180 = vpack.c.b16 %v1151, %v1150
      %v1181 = vpack.c.b16 %v1153, %v1152
      %v1182 = vpack.c.b16 %v1155, %v1154
      %v1183 = vpack.c.b16 %v1157, %v1156
      %v1184 = vpack.c.b16 %v1159, %v1158
      %v1185 = vpack.c.b16 %v1161, %v1160
      %v1186 = vpack.c.b16 %v1163, %v1162
      %v1187 = vpack.c.b16 %v1165, %v1164
      %v1188 = vpack.c.b16 %v1167, %v1166
      %v1189 = vpack.c.b16 %v1169, %v1168
      %v1190 = vpack.c.b16 %v1171, %v1170
      %v1191 = vpack.c.b16 %v1173, %v1172
      %v1192 = vpack.c.b16 %v1175, %v1174
      %v1193 = vpack.c.b16 %v1177, %v1176
      %v1195 = vsel %vm430, %v1178, 0
      %v1198 = vsel %vm430, %v1179, 0
      %v1201 = vsel %vm430, %v1180, 0
      %v1204 = vsel %vm430, %v1181, 0
      %v1207 = vsel %vm430, %v1182, 0
      %v1210 = vsel %vm430, %v1183, 0
      %v1213 = vsel %vm430, %v1184, 0
      %v1216 = vsel %vm430, %v1185, 0
      %v1219 = vsel %vm430, %v1186, 0
      %v1222 = vsel %vm430, %v1187, 0
      %v1225 = vsel %vm430, %v1188, 0
      %v1228 = vsel %vm430, %v1189, 0
      %v1231 = vsel %vm430, %v1190, 0
      %v1234 = vsel %vm430, %v1191, 0
      %v1237 = vsel %vm430, %v1192, 0
      %v1240 = vsel %vm430, %v1193, 0
      %v1243 = vsel %vm479, %v1113, 0
      %1245 = vmatpush.bf16.msra.mxu0 0
      %1246 = vmatpush.bf16.msra.mxu0 0
      %1247 = vmatpush.bf16.msra.mxu0 0
      %1248 = vmatpush.bf16.msra.mxu0 0
      %1249 = vmatpush.bf16.msra.mxu0 0
      %1250 = vmatpush.bf16.msra.mxu0 0
      %1251 = vmatpush.bf16.msra.mxu0 0
      %1252 = vmatpush.bf16.msra.mxu0 %v1243
      %1253 = vmatmul.bf16.gmra.mxu0 %v1195
      %v1254 = vpop.f32.mrf.mxu0
      %v1255 = vadd.f32 0.0, %v1254
      %v1256 = vpop.f32.mrf.mxu0
      %v1257 = vadd.f32 0.0, %v1256
      %1258 = vmatmul.bf16.gmra.mxu0 %v1198
      %v1259 = vpop.f32.mrf.mxu0
      %v1260 = vadd.f32 0.0, %v1259
      %v1261 = vpop.f32.mrf.mxu0
      %v1262 = vadd.f32 0.0, %v1261
      %1263 = vmatmul.bf16.gmra.mxu0 %v1201
      %v1264 = vpop.f32.mrf.mxu0
      %v1265 = vadd.f32 0.0, %v1264
      %v1266 = vpop.f32.mrf.mxu0
      %v1267 = vadd.f32 0.0, %v1266
      %1268 = vmatmul.bf16.gmra.mxu0 %v1204
      %v1269 = vpop.f32.mrf.mxu0
      %v1270 = vadd.f32 0.0, %v1269
      %v1271 = vpop.f32.mrf.mxu0
      %v1272 = vadd.f32 0.0, %v1271
      %1273 = vmatmul.bf16.gmra.mxu0 %v1207
      %v1274 = vpop.f32.mrf.mxu0
      %v1275 = vadd.f32 0.0, %v1274
      %v1276 = vpop.f32.mrf.mxu0
      %v1277 = vadd.f32 0.0, %v1276
      %1278 = vmatmul.bf16.gmra.mxu0 %v1210
      %v1279 = vpop.f32.mrf.mxu0
      %v1280 = vadd.f32 0.0, %v1279
      %v1281 = vpop.f32.mrf.mxu0
      %v1282 = vadd.f32 0.0, %v1281
      %1283 = vmatmul.bf16.gmra.mxu0 %v1213
      %v1284 = vpop.f32.mrf.mxu0
      %v1285 = vadd.f32 0.0, %v1284
      %v1286 = vpop.f32.mrf.mxu0
      %v1287 = vadd.f32 0.0, %v1286
      %1288 = vmatmul.bf16.gmra.mxu0 %v1216
      %v1289 = vpop.f32.mrf.mxu0
      %v1290 = vadd.f32 0.0, %v1289
      %v1291 = vpop.f32.mrf.mxu0
      %v1292 = vadd.f32 0.0, %v1291
      %1293 = vmatmul.bf16.gmra.mxu0 %v1219
      %v1294 = vpop.f32.mrf.mxu0
      %v1295 = vadd.f32 0.0, %v1294
      %v1296 = vpop.f32.mrf.mxu0
      %v1297 = vadd.f32 0.0, %v1296
      %1298 = vmatmul.bf16.gmra.mxu0 %v1222
      %v1299 = vpop.f32.mrf.mxu0
      %v1300 = vadd.f32 0.0, %v1299
      %v1301 = vpop.f32.mrf.mxu0
      %v1302 = vadd.f32 0.0, %v1301
      %1303 = vmatmul.bf16.gmra.mxu0 %v1225
      %v1304 = vpop.f32.mrf.mxu0
      %v1305 = vadd.f32 0.0, %v1304
      %v1306 = vpop.f32.mrf.mxu0
      %v1307 = vadd.f32 0.0, %v1306
      %1308 = vmatmul.bf16.gmra.mxu0 %v1228
      %v1309 = vpop.f32.mrf.mxu0
      %v1310 = vadd.f32 0.0, %v1309
      %v1311 = vpop.f32.mrf.mxu0
      %v1312 = vadd.f32 0.0, %v1311
      %1313 = vmatmul.bf16.gmra.mxu0 %v1231
      %v1314 = vpop.f32.mrf.mxu0
      %v1315 = vadd.f32 0.0, %v1314
      %v1316 = vpop.f32.mrf.mxu0
      %v1317 = vadd.f32 0.0, %v1316
      %1318 = vmatmul.bf16.gmra.mxu0 %v1234
      %v1319 = vpop.f32.mrf.mxu0
      %v1320 = vadd.f32 0.0, %v1319
      %v1321 = vpop.f32.mrf.mxu0
      %v1322 = vadd.f32 0.0, %v1321
      %1323 = vmatmul.bf16.gmra.mxu0 %v1237
      %v1324 = vpop.f32.mrf.mxu0
      %v1325 = vadd.f32 0.0, %v1324
      %v1326 = vpop.f32.mrf.mxu0
      %v1327 = vadd.f32 0.0, %v1326
      %1328 = vmatmul.bf16.gmra.mxu0 %v1240
      %v1329 = vpop.f32.mrf.mxu0
      %v1330 = vadd.f32 0.0, %v1329
      %v1331 = vpop.f32.mrf.mxu0
      %v1332 = vadd.f32 0.0, %v1331
      %1333 = vdwg.mxu0
      %v1334 = vadd.f32 %v1047, %v1255
      %v1335 = vadd.f32 %v1048, %v1257
      %v1336 = vadd.f32 %v1049, %v1260
      %v1337 = vadd.f32 %v1050, %v1262
      %v1338 = vadd.f32 %v1051, %v1265
      %v1339 = vadd.f32 %v1052, %v1267
      %v1340 = vadd.f32 %v1053, %v1270
      %v1341 = vadd.f32 %v1054, %v1272
      %v1342 = vadd.f32 %v1055, %v1275
      %v1343 = vadd.f32 %v1056, %v1277
      %v1344 = vadd.f32 %v1057, %v1280
      %v1345 = vadd.f32 %v1058, %v1282
      %v1346 = vadd.f32 %v1059, %v1285
      %v1347 = vadd.f32 %v1060, %v1287
      %v1348 = vadd.f32 %v1061, %v1290
      %v1349 = vadd.f32 %v1062, %v1292
      %v1350 = vadd.f32 %v1063, %v1295
      %v1351 = vadd.f32 %v1064, %v1297
      %v1352 = vadd.f32 %v1065, %v1300
      %v1353 = vadd.f32 %v1066, %v1302
      %v1354 = vadd.f32 %v1067, %v1305
      %v1355 = vadd.f32 %v1068, %v1307
      %v1356 = vadd.f32 %v1069, %v1310
      %v1357 = vadd.f32 %v1070, %v1312
      %v1358 = vadd.f32 %v1071, %v1315
      %v1359 = vadd.f32 %v1072, %v1317
      %v1360 = vadd.f32 %v1073, %v1320
      %v1361 = vadd.f32 %v1074, %v1322
      %v1362 = vadd.f32 %v1075, %v1325
      %v1363 = vadd.f32 %v1076, %v1327
      %v1364 = vadd.f32 %v1077, %v1330
      %v1365 = vadd.f32 %v1078, %v1332
      %s1366 = scalar_lea.vmem %s222, 32
      %v1367 = vld [vmem:[%s1366] sm:$0xf]
      %v1368 = vld [vmem:[%s1366 + $0x4] sm:$0xf]
      %v1369 = vld [vmem:[%s1366 + $0x8] sm:$0xf]
      %v1370 = vld [vmem:[%s1366 + $0xc] sm:$0xf]
      %v1371 = vld [vmem:[%s1366 + $0x10] sm:$0xf]
      %v1372 = vld [vmem:[%s1366 + $0x14] sm:$0xf]
      %v1373 = vld [vmem:[%s1366 + $0x18] sm:$0xf]
      %v1374 = vld [vmem:[%s1366 + $0x1c] sm:$0xf]
      %v1375 = vld [vmem:[%s1366 + $0x20] sm:$0xf]
      %v1376 = vld [vmem:[%s1366 + $0x24] sm:$0xf]
      %v1377 = vld [vmem:[%s1366 + $0x28] sm:$0xf]
      %v1378 = vld [vmem:[%s1366 + $0x2c] sm:$0xf]
      %v1379 = vld [vmem:[%s1366 + $0x30] sm:$0xf]
      %v1380 = vld [vmem:[%s1366 + $0x34] sm:$0xf]
      %v1381 = vld [vmem:[%s1366 + $0x38] sm:$0xf]
      %v1382 = vld [vmem:[%s1366 + $0x3c] sm:$0xf]
      %v1383 = vld [vmem:[%s1366 + $0x40] sm:$0xf]
      %v1384 = vld [vmem:[%s1366 + $0x44] sm:$0xf]
      %v1385 = vld [vmem:[%s1366 + $0x48] sm:$0xf]
      %v1386 = vld [vmem:[%s1366 + $0x4c] sm:$0xf]
      %v1387 = vld [vmem:[%s1366 + $0x50] sm:$0xf]
      %v1388 = vld [vmem:[%s1366 + $0x54] sm:$0xf]
      %v1389 = vld [vmem:[%s1366 + $0x58] sm:$0xf]
      %v1390 = vld [vmem:[%s1366 + $0x5c] sm:$0xf]
      %v1391 = vld [vmem:[%s1366 + $0x60] sm:$0xf]
      %v1392 = vld [vmem:[%s1366 + $0x64] sm:$0xf]
      %v1393 = vld [vmem:[%s1366 + $0x68] sm:$0xf]
      %v1394 = vld [vmem:[%s1366 + $0x6c] sm:$0xf]
      %v1395 = vld [vmem:[%s1366 + $0x70] sm:$0xf]
      %v1396 = vld [vmem:[%s1366 + $0x74] sm:$0xf]
      %v1397 = vld [vmem:[%s1366 + $0x78] sm:$0xf]
      %v1398 = vld [vmem:[%s1366 + $0x7c] sm:$0xf]
      %s1399 = scalar_lea.vmem %s230, 8
      %v1400 = vld [vmem:[%s1399] sm:$0x3]
      %v1433 = vunpack.c.l.b16 %v1367
      %v1434 = vunpack.c.l.b16 %v1368
      %v1435 = vunpack.c.l.b16 %v1369
      %v1436 = vunpack.c.l.b16 %v1370
      %v1437 = vunpack.c.l.b16 %v1371
      %v1438 = vunpack.c.l.b16 %v1372
      %v1439 = vunpack.c.l.b16 %v1373
      %v1440 = vunpack.c.l.b16 %v1374
      %v1441 = vunpack.c.l.b16 %v1375
      %v1442 = vunpack.c.l.b16 %v1376
      %v1443 = vunpack.c.l.b16 %v1377
      %v1444 = vunpack.c.l.b16 %v1378
      %v1445 = vunpack.c.l.b16 %v1379
      %v1446 = vunpack.c.l.b16 %v1380
      %v1447 = vunpack.c.l.b16 %v1381
      %v1448 = vunpack.c.l.b16 %v1382
      %v1449 = vunpack.c.l.b16 %v1383
      %v1450 = vunpack.c.l.b16 %v1384
      %v1451 = vunpack.c.l.b16 %v1385
      %v1452 = vunpack.c.l.b16 %v1386
      %v1453 = vunpack.c.l.b16 %v1387
      %v1454 = vunpack.c.l.b16 %v1388
      %v1455 = vunpack.c.l.b16 %v1389
      %v1456 = vunpack.c.l.b16 %v1390
      %v1457 = vunpack.c.l.b16 %v1391
      %v1458 = vunpack.c.l.b16 %v1392
      %v1459 = vunpack.c.l.b16 %v1393
      %v1460 = vunpack.c.l.b16 %v1394
      %v1461 = vunpack.c.l.b16 %v1395
      %v1462 = vunpack.c.l.b16 %v1396
      %v1463 = vunpack.c.l.b16 %v1397
      %v1464 = vunpack.c.l.b16 %v1398
      %v1465 = vpack.c.b16 %v1434, %v1433
      %v1466 = vpack.c.b16 %v1436, %v1435
      %v1467 = vpack.c.b16 %v1438, %v1437
      %v1468 = vpack.c.b16 %v1440, %v1439
      %v1469 = vpack.c.b16 %v1442, %v1441
      %v1470 = vpack.c.b16 %v1444, %v1443
      %v1471 = vpack.c.b16 %v1446, %v1445
      %v1472 = vpack.c.b16 %v1448, %v1447
      %v1473 = vpack.c.b16 %v1450, %v1449
      %v1474 = vpack.c.b16 %v1452, %v1451
      %v1475 = vpack.c.b16 %v1454, %v1453
      %v1476 = vpack.c.b16 %v1456, %v1455
      %v1477 = vpack.c.b16 %v1458, %v1457
      %v1478 = vpack.c.b16 %v1460, %v1459
      %v1479 = vpack.c.b16 %v1462, %v1461
      %v1480 = vpack.c.b16 %v1464, %v1463
      %v1482 = vsel %vm430, %v1465, 0
      %v1485 = vsel %vm430, %v1466, 0
      %v1488 = vsel %vm430, %v1467, 0
      %v1491 = vsel %vm430, %v1468, 0
      %v1494 = vsel %vm430, %v1469, 0
      %v1497 = vsel %vm430, %v1470, 0
      %v1500 = vsel %vm430, %v1471, 0
      %v1503 = vsel %vm430, %v1472, 0
      %v1506 = vsel %vm430, %v1473, 0
      %v1509 = vsel %vm430, %v1474, 0
      %v1512 = vsel %vm430, %v1475, 0
      %v1515 = vsel %vm430, %v1476, 0
      %v1518 = vsel %vm430, %v1477, 0
      %v1521 = vsel %vm430, %v1478, 0
      %v1524 = vsel %vm430, %v1479, 0
      %v1527 = vsel %vm430, %v1480, 0
      %v1530 = vsel %vm479, %v1400, 0
      %1532 = vmatpush.bf16.msra.mxu0 0
      %1533 = vmatpush.bf16.msra.mxu0 0
      %1534 = vmatpush.bf16.msra.mxu0 0
      %1535 = vmatpush.bf16.msra.mxu0 0
      %1536 = vmatpush.bf16.msra.mxu0 0
      %1537 = vmatpush.bf16.msra.mxu0 0
      %1538 = vmatpush.bf16.msra.mxu0 0
      %1539 = vmatpush.bf16.msra.mxu0 %v1530
      %1540 = vmatmul.bf16.gmra.mxu0 %v1482
      %v1541 = vpop.f32.mrf.mxu0
      %v1542 = vadd.f32 0.0, %v1541
      %v1543 = vpop.f32.mrf.mxu0
      %v1544 = vadd.f32 0.0, %v1543
      %1545 = vmatmul.bf16.gmra.mxu0 %v1485
      %v1546 = vpop.f32.mrf.mxu0
      %v1547 = vadd.f32 0.0, %v1546
      %v1548 = vpop.f32.mrf.mxu0
      %v1549 = vadd.f32 0.0, %v1548
      %1550 = vmatmul.bf16.gmra.mxu0 %v1488
      %v1551 = vpop.f32.mrf.mxu0
      %v1552 = vadd.f32 0.0, %v1551
      %v1553 = vpop.f32.mrf.mxu0
      %v1554 = vadd.f32 0.0, %v1553
      %1555 = vmatmul.bf16.gmra.mxu0 %v1491
      %v1556 = vpop.f32.mrf.mxu0
      %v1557 = vadd.f32 0.0, %v1556
      %v1558 = vpop.f32.mrf.mxu0
      %v1559 = vadd.f32 0.0, %v1558
      %1560 = vmatmul.bf16.gmra.mxu0 %v1494
      %v1561 = vpop.f32.mrf.mxu0
      %v1562 = vadd.f32 0.0, %v1561
      %v1563 = vpop.f32.mrf.mxu0
      %v1564 = vadd.f32 0.0, %v1563
      %1565 = vmatmul.bf16.gmra.mxu0 %v1497
      %v1566 = vpop.f32.mrf.mxu0
      %v1567 = vadd.f32 0.0, %v1566
      %v1568 = vpop.f32.mrf.mxu0
      %v1569 = vadd.f32 0.0, %v1568
      %1570 = vmatmul.bf16.gmra.mxu0 %v1500
      %v1571 = vpop.f32.mrf.mxu0
      %v1572 = vadd.f32 0.0, %v1571
      %v1573 = vpop.f32.mrf.mxu0
      %v1574 = vadd.f32 0.0, %v1573
      %1575 = vmatmul.bf16.gmra.mxu0 %v1503
      %v1576 = vpop.f32.mrf.mxu0
      %v1577 = vadd.f32 0.0, %v1576
      %v1578 = vpop.f32.mrf.mxu0
      %v1579 = vadd.f32 0.0, %v1578
      %1580 = vmatmul.bf16.gmra.mxu0 %v1506
      %v1581 = vpop.f32.mrf.mxu0
      %v1582 = vadd.f32 0.0, %v1581
      %v1583 = vpop.f32.mrf.mxu0
      %v1584 = vadd.f32 0.0, %v1583
      %1585 = vmatmul.bf16.gmra.mxu0 %v1509
      %v1586 = vpop.f32.mrf.mxu0
      %v1587 = vadd.f32 0.0, %v1586
      %v1588 = vpop.f32.mrf.mxu0
      %v1589 = vadd.f32 0.0, %v1588
      %1590 = vmatmul.bf16.gmra.mxu0 %v1512
      %v1591 = vpop.f32.mrf.mxu0
      %v1592 = vadd.f32 0.0, %v1591
      %v1593 = vpop.f32.mrf.mxu0
      %v1594 = vadd.f32 0.0, %v1593
      %1595 = vmatmul.bf16.gmra.mxu0 %v1515
      %v1596 = vpop.f32.mrf.mxu0
      %v1597 = vadd.f32 0.0, %v1596
      %v1598 = vpop.f32.mrf.mxu0
      %v1599 = vadd.f32 0.0, %v1598
      %1600 = vmatmul.bf16.gmra.mxu0 %v1518
      %v1601 = vpop.f32.mrf.mxu0
      %v1602 = vadd.f32 0.0, %v1601
      %v1603 = vpop.f32.mrf.mxu0
      %v1604 = vadd.f32 0.0, %v1603
      %1605 = vmatmul.bf16.gmra.mxu0 %v1521
      %v1606 = vpop.f32.mrf.mxu0
      %v1607 = vadd.f32 0.0, %v1606
      %v1608 = vpop.f32.mrf.mxu0
      %v1609 = vadd.f32 0.0, %v1608
      %1610 = vmatmul.bf16.gmra.mxu0 %v1524
      %v1611 = vpop.f32.mrf.mxu0
      %v1612 = vadd.f32 0.0, %v1611
      %v1613 = vpop.f32.mrf.mxu0
      %v1614 = vadd.f32 0.0, %v1613
      %1615 = vmatmul.bf16.gmra.mxu0 %v1527
      %v1616 = vpop.f32.mrf.mxu0
      %v1617 = vadd.f32 0.0, %v1616
      %v1618 = vpop.f32.mrf.mxu0
      %v1619 = vadd.f32 0.0, %v1618
      %1620 = vdwg.mxu0
      %v1621 = vadd.f32 %v1334, %v1542
      %v1622 = vadd.f32 %v1335, %v1544
      %v1623 = vadd.f32 %v1336, %v1547
      %v1624 = vadd.f32 %v1337, %v1549
      %v1625 = vadd.f32 %v1338, %v1552
      %v1626 = vadd.f32 %v1339, %v1554
      %v1627 = vadd.f32 %v1340, %v1557
      %v1628 = vadd.f32 %v1341, %v1559
      %v1629 = vadd.f32 %v1342, %v1562
      %v1630 = vadd.f32 %v1343, %v1564
      %v1631 = vadd.f32 %v1344, %v1567
      %v1632 = vadd.f32 %v1345, %v1569
      %v1633 = vadd.f32 %v1346, %v1572
      %v1634 = vadd.f32 %v1347, %v1574
      %v1635 = vadd.f32 %v1348, %v1577
      %v1636 = vadd.f32 %v1349, %v1579
      %v1637 = vadd.f32 %v1350, %v1582
      %v1638 = vadd.f32 %v1351, %v1584
      %v1639 = vadd.f32 %v1352, %v1587
      %v1640 = vadd.f32 %v1353, %v1589
      %v1641 = vadd.f32 %v1354, %v1592
      %v1642 = vadd.f32 %v1355, %v1594
      %v1643 = vadd.f32 %v1356, %v1597
      %v1644 = vadd.f32 %v1357, %v1599
      %v1645 = vadd.f32 %v1358, %v1602
      %v1646 = vadd.f32 %v1359, %v1604
      %v1647 = vadd.f32 %v1360, %v1607
      %v1648 = vadd.f32 %v1361, %v1609
      %v1649 = vadd.f32 %v1362, %v1612
      %v1650 = vadd.f32 %v1363, %v1614
      %v1651 = vadd.f32 %v1364, %v1617
      %v1652 = vadd.f32 %v1365, %v1619
      %s1653 = scalar_lea.vmem %s222, 40
      %v1654 = vld [vmem:[%s1653] sm:$0xf]
      %v1655 = vld [vmem:[%s1653 + $0x4] sm:$0xf]
      %v1656 = vld [vmem:[%s1653 + $0x8] sm:$0xf]
      %v1657 = vld [vmem:[%s1653 + $0xc] sm:$0xf]
      %v1658 = vld [vmem:[%s1653 + $0x10] sm:$0xf]
      %v1659 = vld [vmem:[%s1653 + $0x14] sm:$0xf]
      %v1660 = vld [vmem:[%s1653 + $0x18] sm:$0xf]
      %v1661 = vld [vmem:[%s1653 + $0x1c] sm:$0xf]
      %v1662 = vld [vmem:[%s1653 + $0x20] sm:$0xf]
      %v1663 = vld [vmem:[%s1653 + $0x24] sm:$0xf]
      %v1664 = vld [vmem:[%s1653 + $0x28] sm:$0xf]
      %v1665 = vld [vmem:[%s1653 + $0x2c] sm:$0xf]
      %v1666 = vld [vmem:[%s1653 + $0x30] sm:$0xf]
      %v1667 = vld [vmem:[%s1653 + $0x34] sm:$0xf]
      %v1668 = vld [vmem:[%s1653 + $0x38] sm:$0xf]
      %v1669 = vld [vmem:[%s1653 + $0x3c] sm:$0xf]
      %v1670 = vld [vmem:[%s1653 + $0x40] sm:$0xf]
      %v1671 = vld [vmem:[%s1653 + $0x44] sm:$0xf]
      %v1672 = vld [vmem:[%s1653 + $0x48] sm:$0xf]
      %v1673 = vld [vmem:[%s1653 + $0x4c] sm:$0xf]
      %v1674 = vld [vmem:[%s1653 + $0x50] sm:$0xf]
      %v1675 = vld [vmem:[%s1653 + $0x54] sm:$0xf]
      %v1676 = vld [vmem:[%s1653 + $0x58] sm:$0xf]
      %v1677 = vld [vmem:[%s1653 + $0x5c] sm:$0xf]
      %v1678 = vld [vmem:[%s1653 + $0x60] sm:$0xf]
      %v1679 = vld [vmem:[%s1653 + $0x64] sm:$0xf]
      %v1680 = vld [vmem:[%s1653 + $0x68] sm:$0xf]
      %v1681 = vld [vmem:[%s1653 + $0x6c] sm:$0xf]
      %v1682 = vld [vmem:[%s1653 + $0x70] sm:$0xf]
      %v1683 = vld [vmem:[%s1653 + $0x74] sm:$0xf]
      %v1684 = vld [vmem:[%s1653 + $0x78] sm:$0xf]
      %v1685 = vld [vmem:[%s1653 + $0x7c] sm:$0xf]
      %s1686 = scalar_lea.vmem %s230, 10
      %v1687 = vld [vmem:[%s1686] sm:$0x3]
      %v1720 = vunpack.c.l.b16 %v1654
      %v1721 = vunpack.c.l.b16 %v1655
      %v1722 = vunpack.c.l.b16 %v1656
      %v1723 = vunpack.c.l.b16 %v1657
      %v1724 = vunpack.c.l.b16 %v1658
      %v1725 = vunpack.c.l.b16 %v1659
      %v1726 = vunpack.c.l.b16 %v1660
      %v1727 = vunpack.c.l.b16 %v1661
      %v1728 = vunpack.c.l.b16 %v1662
      %v1729 = vunpack.c.l.b16 %v1663
      %v1730 = vunpack.c.l.b16 %v1664
      %v1731 = vunpack.c.l.b16 %v1665
      %v1732 = vunpack.c.l.b16 %v1666
      %v1733 = vunpack.c.l.b16 %v1667
      %v1734 = vunpack.c.l.b16 %v1668
      %v1735 = vunpack.c.l.b16 %v1669
      %v1736 = vunpack.c.l.b16 %v1670
      %v1737 = vunpack.c.l.b16 %v1671
      %v1738 = vunpack.c.l.b16 %v1672
      %v1739 = vunpack.c.l.b16 %v1673
      %v1740 = vunpack.c.l.b16 %v1674
      %v1741 = vunpack.c.l.b16 %v1675
      %v1742 = vunpack.c.l.b16 %v1676
      %v1743 = vunpack.c.l.b16 %v1677
      %v1744 = vunpack.c.l.b16 %v1678
      %v1745 = vunpack.c.l.b16 %v1679
      %v1746 = vunpack.c.l.b16 %v1680
      %v1747 = vunpack.c.l.b16 %v1681
      %v1748 = vunpack.c.l.b16 %v1682
      %v1749 = vunpack.c.l.b16 %v1683
      %v1750 = vunpack.c.l.b16 %v1684
      %v1751 = vunpack.c.l.b16 %v1685
      %v1752 = vpack.c.b16 %v1721, %v1720
      %v1753 = vpack.c.b16 %v1723, %v1722
      %v1754 = vpack.c.b16 %v1725, %v1724
      %v1755 = vpack.c.b16 %v1727, %v1726
      %v1756 = vpack.c.b16 %v1729, %v1728
      %v1757 = vpack.c.b16 %v1731, %v1730
      %v1758 = vpack.c.b16 %v1733, %v1732
      %v1759 = vpack.c.b16 %v1735, %v1734
      %v1760 = vpack.c.b16 %v1737, %v1736
      %v1761 = vpack.c.b16 %v1739, %v1738
      %v1762 = vpack.c.b16 %v1741, %v1740
      %v1763 = vpack.c.b16 %v1743, %v1742
      %v1764 = vpack.c.b16 %v1745, %v1744
      %v1765 = vpack.c.b16 %v1747, %v1746
      %v1766 = vpack.c.b16 %v1749, %v1748
      %v1767 = vpack.c.b16 %v1751, %v1750
      %v1769 = vsel %vm430, %v1752, 0
      %v1772 = vsel %vm430, %v1753, 0
      %v1775 = vsel %vm430, %v1754, 0
      %v1778 = vsel %vm430, %v1755, 0
      %v1781 = vsel %vm430, %v1756, 0
      %v1784 = vsel %vm430, %v1757, 0
      %v1787 = vsel %vm430, %v1758, 0
      %v1790 = vsel %vm430, %v1759, 0
      %v1793 = vsel %vm430, %v1760, 0
      %v1796 = vsel %vm430, %v1761, 0
      %v1799 = vsel %vm430, %v1762, 0
      %v1802 = vsel %vm430, %v1763, 0
      %v1805 = vsel %vm430, %v1764, 0
      %v1808 = vsel %vm430, %v1765, 0
      %v1811 = vsel %vm430, %v1766, 0
      %v1814 = vsel %vm430, %v1767, 0
      %v1817 = vsel %vm479, %v1687, 0
      %1819 = vmatpush.bf16.msra.mxu0 0
      %1820 = vmatpush.bf16.msra.mxu0 0
      %1821 = vmatpush.bf16.msra.mxu0 0
      %1822 = vmatpush.bf16.msra.mxu0 0
      %1823 = vmatpush.bf16.msra.mxu0 0
      %1824 = vmatpush.bf16.msra.mxu0 0
      %1825 = vmatpush.bf16.msra.mxu0 0
      %1826 = vmatpush.bf16.msra.mxu0 %v1817
      %1827 = vmatmul.bf16.gmra.mxu0 %v1769
      %v1828 = vpop.f32.mrf.mxu0
      %v1829 = vadd.f32 0.0, %v1828
      %v1830 = vpop.f32.mrf.mxu0
      %v1831 = vadd.f32 0.0, %v1830
      %1832 = vmatmul.bf16.gmra.mxu0 %v1772
      %v1833 = vpop.f32.mrf.mxu0
      %v1834 = vadd.f32 0.0, %v1833
      %v1835 = vpop.f32.mrf.mxu0
      %v1836 = vadd.f32 0.0, %v1835
      %1837 = vmatmul.bf16.gmra.mxu0 %v1775
      %v1838 = vpop.f32.mrf.mxu0
      %v1839 = vadd.f32 0.0, %v1838
      %v1840 = vpop.f32.mrf.mxu0
      %v1841 = vadd.f32 0.0, %v1840
      %1842 = vmatmul.bf16.gmra.mxu0 %v1778
      %v1843 = vpop.f32.mrf.mxu0
      %v1844 = vadd.f32 0.0, %v1843
      %v1845 = vpop.f32.mrf.mxu0
      %v1846 = vadd.f32 0.0, %v1845
      %1847 = vmatmul.bf16.gmra.mxu0 %v1781
      %v1848 = vpop.f32.mrf.mxu0
      %v1849 = vadd.f32 0.0, %v1848
      %v1850 = vpop.f32.mrf.mxu0
      %v1851 = vadd.f32 0.0, %v1850
      %1852 = vmatmul.bf16.gmra.mxu0 %v1784
      %v1853 = vpop.f32.mrf.mxu0
      %v1854 = vadd.f32 0.0, %v1853
      %v1855 = vpop.f32.mrf.mxu0
      %v1856 = vadd.f32 0.0, %v1855
      %1857 = vmatmul.bf16.gmra.mxu0 %v1787
      %v1858 = vpop.f32.mrf.mxu0
      %v1859 = vadd.f32 0.0, %v1858
      %v1860 = vpop.f32.mrf.mxu0
      %v1861 = vadd.f32 0.0, %v1860
      %1862 = vmatmul.bf16.gmra.mxu0 %v1790
      %v1863 = vpop.f32.mrf.mxu0
      %v1864 = vadd.f32 0.0, %v1863
      %v1865 = vpop.f32.mrf.mxu0
      %v1866 = vadd.f32 0.0, %v1865
      %1867 = vmatmul.bf16.gmra.mxu0 %v1793
      %v1868 = vpop.f32.mrf.mxu0
      %v1869 = vadd.f32 0.0, %v1868
      %v1870 = vpop.f32.mrf.mxu0
      %v1871 = vadd.f32 0.0, %v1870
      %1872 = vmatmul.bf16.gmra.mxu0 %v1796
      %v1873 = vpop.f32.mrf.mxu0
      %v1874 = vadd.f32 0.0, %v1873
      %v1875 = vpop.f32.mrf.mxu0
      %v1876 = vadd.f32 0.0, %v1875
      %1877 = vmatmul.bf16.gmra.mxu0 %v1799
      %v1878 = vpop.f32.mrf.mxu0
      %v1879 = vadd.f32 0.0, %v1878
      %v1880 = vpop.f32.mrf.mxu0
      %v1881 = vadd.f32 0.0, %v1880
      %1882 = vmatmul.bf16.gmra.mxu0 %v1802
      %v1883 = vpop.f32.mrf.mxu0
      %v1884 = vadd.f32 0.0, %v1883
      %v1885 = vpop.f32.mrf.mxu0
      %v1886 = vadd.f32 0.0, %v1885
      %1887 = vmatmul.bf16.gmra.mxu0 %v1805
      %v1888 = vpop.f32.mrf.mxu0
      %v1889 = vadd.f32 0.0, %v1888
      %v1890 = vpop.f32.mrf.mxu0
      %v1891 = vadd.f32 0.0, %v1890
      %1892 = vmatmul.bf16.gmra.mxu0 %v1808
      %v1893 = vpop.f32.mrf.mxu0
      %v1894 = vadd.f32 0.0, %v1893
      %v1895 = vpop.f32.mrf.mxu0
      %v1896 = vadd.f32 0.0, %v1895
      %1897 = vmatmul.bf16.gmra.mxu0 %v1811
      %v1898 = vpop.f32.mrf.mxu0
      %v1899 = vadd.f32 0.0, %v1898
      %v1900 = vpop.f32.mrf.mxu0
      %v1901 = vadd.f32 0.0, %v1900
      %1902 = vmatmul.bf16.gmra.mxu0 %v1814
      %v1903 = vpop.f32.mrf.mxu0
      %v1904 = vadd.f32 0.0, %v1903
      %v1905 = vpop.f32.mrf.mxu0
      %v1906 = vadd.f32 0.0, %v1905
      %1907 = vdwg.mxu0
      %v1908 = vadd.f32 %v1621, %v1829
      %v1909 = vadd.f32 %v1622, %v1831
      %v1910 = vadd.f32 %v1623, %v1834
      %v1911 = vadd.f32 %v1624, %v1836
      %v1912 = vadd.f32 %v1625, %v1839
      %v1913 = vadd.f32 %v1626, %v1841
      %v1914 = vadd.f32 %v1627, %v1844
      %v1915 = vadd.f32 %v1628, %v1846
      %v1916 = vadd.f32 %v1629, %v1849
      %v1917 = vadd.f32 %v1630, %v1851
      %v1918 = vadd.f32 %v1631, %v1854
      %v1919 = vadd.f32 %v1632, %v1856
      %v1920 = vadd.f32 %v1633, %v1859
      %v1921 = vadd.f32 %v1634, %v1861
      %v1922 = vadd.f32 %v1635, %v1864
      %v1923 = vadd.f32 %v1636, %v1866
      %v1924 = vadd.f32 %v1637, %v1869
      %v1925 = vadd.f32 %v1638, %v1871
      %v1926 = vadd.f32 %v1639, %v1874
      %v1927 = vadd.f32 %v1640, %v1876
      %v1928 = vadd.f32 %v1641, %v1879
      %v1929 = vadd.f32 %v1642, %v1881
      %v1930 = vadd.f32 %v1643, %v1884
      %v1931 = vadd.f32 %v1644, %v1886
      %v1932 = vadd.f32 %v1645, %v1889
      %v1933 = vadd.f32 %v1646, %v1891
      %v1934 = vadd.f32 %v1647, %v1894
      %v1935 = vadd.f32 %v1648, %v1896
      %v1936 = vadd.f32 %v1649, %v1899
      %v1937 = vadd.f32 %v1650, %v1901
      %v1938 = vadd.f32 %v1651, %v1904
      %v1939 = vadd.f32 %v1652, %v1906
      %s1940 = scalar_lea.vmem %s222, 48
      %v1941 = vld [vmem:[%s1940] sm:$0xf]
      %v1942 = vld [vmem:[%s1940 + $0x4] sm:$0xf]
      %v1943 = vld [vmem:[%s1940 + $0x8] sm:$0xf]
      %v1944 = vld [vmem:[%s1940 + $0xc] sm:$0xf]
      %v1945 = vld [vmem:[%s1940 + $0x10] sm:$0xf]
      %v1946 = vld [vmem:[%s1940 + $0x14] sm:$0xf]
      %v1947 = vld [vmem:[%s1940 + $0x18] sm:$0xf]
      %v1948 = vld [vmem:[%s1940 + $0x1c] sm:$0xf]
      %v1949 = vld [vmem:[%s1940 + $0x20] sm:$0xf]
      %v1950 = vld [vmem:[%s1940 + $0x24] sm:$0xf]
      %v1951 = vld [vmem:[%s1940 + $0x28] sm:$0xf]
      %v1952 = vld [vmem:[%s1940 + $0x2c] sm:$0xf]
      %v1953 = vld [vmem:[%s1940 + $0x30] sm:$0xf]
      %v1954 = vld [vmem:[%s1940 + $0x34] sm:$0xf]
      %v1955 = vld [vmem:[%s1940 + $0x38] sm:$0xf]
      %v1956 = vld [vmem:[%s1940 + $0x3c] sm:$0xf]
      %v1957 = vld [vmem:[%s1940 + $0x40] sm:$0xf]
      %v1958 = vld [vmem:[%s1940 + $0x44] sm:$0xf]
      %v1959 = vld [vmem:[%s1940 + $0x48] sm:$0xf]
      %v1960 = vld [vmem:[%s1940 + $0x4c] sm:$0xf]
      %v1961 = vld [vmem:[%s1940 + $0x50] sm:$0xf]
      %v1962 = vld [vmem:[%s1940 + $0x54] sm:$0xf]
      %v1963 = vld [vmem:[%s1940 + $0x58] sm:$0xf]
      %v1964 = vld [vmem:[%s1940 + $0x5c] sm:$0xf]
      %v1965 = vld [vmem:[%s1940 + $0x60] sm:$0xf]
      %v1966 = vld [vmem:[%s1940 + $0x64] sm:$0xf]
      %v1967 = vld [vmem:[%s1940 + $0x68] sm:$0xf]
      %v1968 = vld [vmem:[%s1940 + $0x6c] sm:$0xf]
      %v1969 = vld [vmem:[%s1940 + $0x70] sm:$0xf]
      %v1970 = vld [vmem:[%s1940 + $0x74] sm:$0xf]
      %v1971 = vld [vmem:[%s1940 + $0x78] sm:$0xf]
      %v1972 = vld [vmem:[%s1940 + $0x7c] sm:$0xf]
      %s1973 = scalar_lea.vmem %s230, 12
      %v1974 = vld [vmem:[%s1973] sm:$0x3]
      %v2007 = vunpack.c.l.b16 %v1941
      %v2008 = vunpack.c.l.b16 %v1942
      %v2009 = vunpack.c.l.b16 %v1943
      %v2010 = vunpack.c.l.b16 %v1944
      %v2011 = vunpack.c.l.b16 %v1945
      %v2012 = vunpack.c.l.b16 %v1946
      %v2013 = vunpack.c.l.b16 %v1947
      %v2014 = vunpack.c.l.b16 %v1948
      %v2015 = vunpack.c.l.b16 %v1949
      %v2016 = vunpack.c.l.b16 %v1950
      %v2017 = vunpack.c.l.b16 %v1951
      %v2018 = vunpack.c.l.b16 %v1952
      %v2019 = vunpack.c.l.b16 %v1953
      %v2020 = vunpack.c.l.b16 %v1954
      %v2021 = vunpack.c.l.b16 %v1955
      %v2022 = vunpack.c.l.b16 %v1956
      %v2023 = vunpack.c.l.b16 %v1957
      %v2024 = vunpack.c.l.b16 %v1958
      %v2025 = vunpack.c.l.b16 %v1959
      %v2026 = vunpack.c.l.b16 %v1960
      %v2027 = vunpack.c.l.b16 %v1961
      %v2028 = vunpack.c.l.b16 %v1962
      %v2029 = vunpack.c.l.b16 %v1963
      %v2030 = vunpack.c.l.b16 %v1964
      %v2031 = vunpack.c.l.b16 %v1965
      %v2032 = vunpack.c.l.b16 %v1966
      %v2033 = vunpack.c.l.b16 %v1967
      %v2034 = vunpack.c.l.b16 %v1968
      %v2035 = vunpack.c.l.b16 %v1969
      %v2036 = vunpack.c.l.b16 %v1970
      %v2037 = vunpack.c.l.b16 %v1971
      %v2038 = vunpack.c.l.b16 %v1972
      %v2039 = vpack.c.b16 %v2008, %v2007
      %v2040 = vpack.c.b16 %v2010, %v2009
      %v2041 = vpack.c.b16 %v2012, %v2011
      %v2042 = vpack.c.b16 %v2014, %v2013
      %v2043 = vpack.c.b16 %v2016, %v2015
      %v2044 = vpack.c.b16 %v2018, %v2017
      %v2045 = vpack.c.b16 %v2020, %v2019
      %v2046 = vpack.c.b16 %v2022, %v2021
      %v2047 = vpack.c.b16 %v2024, %v2023
      %v2048 = vpack.c.b16 %v2026, %v2025
      %v2049 = vpack.c.b16 %v2028, %v2027
      %v2050 = vpack.c.b16 %v2030, %v2029
      %v2051 = vpack.c.b16 %v2032, %v2031
      %v2052 = vpack.c.b16 %v2034, %v2033
      %v2053 = vpack.c.b16 %v2036, %v2035
      %v2054 = vpack.c.b16 %v2038, %v2037
      %v2056 = vsel %vm430, %v2039, 0
      %v2059 = vsel %vm430, %v2040, 0
      %v2062 = vsel %vm430, %v2041, 0
      %v2065 = vsel %vm430, %v2042, 0
      %v2068 = vsel %vm430, %v2043, 0
      %v2071 = vsel %vm430, %v2044, 0
      %v2074 = vsel %vm430, %v2045, 0
      %v2077 = vsel %vm430, %v2046, 0
      %v2080 = vsel %vm430, %v2047, 0
      %v2083 = vsel %vm430, %v2048, 0
      %v2086 = vsel %vm430, %v2049, 0
      %v2089 = vsel %vm430, %v2050, 0
      %v2092 = vsel %vm430, %v2051, 0
      %v2095 = vsel %vm430, %v2052, 0
      %v2098 = vsel %vm430, %v2053, 0
      %v2101 = vsel %vm430, %v2054, 0
      %v2104 = vsel %vm479, %v1974, 0
      %2106 = vmatpush.bf16.msra.mxu0 0
      %2107 = vmatpush.bf16.msra.mxu0 0
      %2108 = vmatpush.bf16.msra.mxu0 0
      %2109 = vmatpush.bf16.msra.mxu0 0
      %2110 = vmatpush.bf16.msra.mxu0 0
      %2111 = vmatpush.bf16.msra.mxu0 0
      %2112 = vmatpush.bf16.msra.mxu0 0
      %2113 = vmatpush.bf16.msra.mxu0 %v2104
      %2114 = vmatmul.bf16.gmra.mxu0 %v2056
      %v2115 = vpop.f32.mrf.mxu0
      %v2116 = vadd.f32 0.0, %v2115
      %v2117 = vpop.f32.mrf.mxu0
      %v2118 = vadd.f32 0.0, %v2117
      %2119 = vmatmul.bf16.gmra.mxu0 %v2059
      %v2120 = vpop.f32.mrf.mxu0
      %v2121 = vadd.f32 0.0, %v2120
      %v2122 = vpop.f32.mrf.mxu0
      %v2123 = vadd.f32 0.0, %v2122
      %2124 = vmatmul.bf16.gmra.mxu0 %v2062
      %v2125 = vpop.f32.mrf.mxu0
      %v2126 = vadd.f32 0.0, %v2125
      %v2127 = vpop.f32.mrf.mxu0
      %v2128 = vadd.f32 0.0, %v2127
      %2129 = vmatmul.bf16.gmra.mxu0 %v2065
      %v2130 = vpop.f32.mrf.mxu0
      %v2131 = vadd.f32 0.0, %v2130
      %v2132 = vpop.f32.mrf.mxu0
      %v2133 = vadd.f32 0.0, %v2132
      %2134 = vmatmul.bf16.gmra.mxu0 %v2068
      %v2135 = vpop.f32.mrf.mxu0
      %v2136 = vadd.f32 0.0, %v2135
      %v2137 = vpop.f32.mrf.mxu0
      %v2138 = vadd.f32 0.0, %v2137
      %2139 = vmatmul.bf16.gmra.mxu0 %v2071
      %v2140 = vpop.f32.mrf.mxu0
      %v2141 = vadd.f32 0.0, %v2140
      %v2142 = vpop.f32.mrf.mxu0
      %v2143 = vadd.f32 0.0, %v2142
      %2144 = vmatmul.bf16.gmra.mxu0 %v2074
      %v2145 = vpop.f32.mrf.mxu0
      %v2146 = vadd.f32 0.0, %v2145
      %v2147 = vpop.f32.mrf.mxu0
      %v2148 = vadd.f32 0.0, %v2147
      %2149 = vmatmul.bf16.gmra.mxu0 %v2077
      %v2150 = vpop.f32.mrf.mxu0
      %v2151 = vadd.f32 0.0, %v2150
      %v2152 = vpop.f32.mrf.mxu0
      %v2153 = vadd.f32 0.0, %v2152
      %2154 = vmatmul.bf16.gmra.mxu0 %v2080
      %v2155 = vpop.f32.mrf.mxu0
      %v2156 = vadd.f32 0.0, %v2155
      %v2157 = vpop.f32.mrf.mxu0
      %v2158 = vadd.f32 0.0, %v2157
      %2159 = vmatmul.bf16.gmra.mxu0 %v2083
      %v2160 = vpop.f32.mrf.mxu0
      %v2161 = vadd.f32 0.0, %v2160
      %v2162 = vpop.f32.mrf.mxu0
      %v2163 = vadd.f32 0.0, %v2162
      %2164 = vmatmul.bf16.gmra.mxu0 %v2086
      %v2165 = vpop.f32.mrf.mxu0
      %v2166 = vadd.f32 0.0, %v2165
      %v2167 = vpop.f32.mrf.mxu0
      %v2168 = vadd.f32 0.0, %v2167
      %2169 = vmatmul.bf16.gmra.mxu0 %v2089
      %v2170 = vpop.f32.mrf.mxu0
      %v2171 = vadd.f32 0.0, %v2170
      %v2172 = vpop.f32.mrf.mxu0
      %v2173 = vadd.f32 0.0, %v2172
      %2174 = vmatmul.bf16.gmra.mxu0 %v2092
      %v2175 = vpop.f32.mrf.mxu0
      %v2176 = vadd.f32 0.0, %v2175
      %v2177 = vpop.f32.mrf.mxu0
      %v2178 = vadd.f32 0.0, %v2177
      %2179 = vmatmul.bf16.gmra.mxu0 %v2095
      %v2180 = vpop.f32.mrf.mxu0
      %v2181 = vadd.f32 0.0, %v2180
      %v2182 = vpop.f32.mrf.mxu0
      %v2183 = vadd.f32 0.0, %v2182
      %2184 = vmatmul.bf16.gmra.mxu0 %v2098
      %v2185 = vpop.f32.mrf.mxu0
      %v2186 = vadd.f32 0.0, %v2185
      %v2187 = vpop.f32.mrf.mxu0
      %v2188 = vadd.f32 0.0, %v2187
      %2189 = vmatmul.bf16.gmra.mxu0 %v2101
      %v2190 = vpop.f32.mrf.mxu0
      %v2191 = vadd.f32 0.0, %v2190
      %v2192 = vpop.f32.mrf.mxu0
      %v2193 = vadd.f32 0.0, %v2192
      %2194 = vdwg.mxu0
      %v2195 = vadd.f32 %v1908, %v2116
      %v2196 = vadd.f32 %v1909, %v2118
      %v2197 = vadd.f32 %v1910, %v2121
      %v2198 = vadd.f32 %v1911, %v2123
      %v2199 = vadd.f32 %v1912, %v2126
      %v2200 = vadd.f32 %v1913, %v2128
      %v2201 = vadd.f32 %v1914, %v2131
      %v2202 = vadd.f32 %v1915, %v2133
      %v2203 = vadd.f32 %v1916, %v2136
      %v2204 = vadd.f32 %v1917, %v2138
      %v2205 = vadd.f32 %v1918, %v2141
      %v2206 = vadd.f32 %v1919, %v2143
      %v2207 = vadd.f32 %v1920, %v2146
      %v2208 = vadd.f32 %v1921, %v2148
      %v2209 = vadd.f32 %v1922, %v2151
      %v2210 = vadd.f32 %v1923, %v2153
      %v2211 = vadd.f32 %v1924, %v2156
      %v2212 = vadd.f32 %v1925, %v2158
      %v2213 = vadd.f32 %v1926, %v2161
      %v2214 = vadd.f32 %v1927, %v2163
      %v2215 = vadd.f32 %v1928, %v2166
      %v2216 = vadd.f32 %v1929, %v2168
      %v2217 = vadd.f32 %v1930, %v2171
      %v2218 = vadd.f32 %v1931, %v2173
      %v2219 = vadd.f32 %v1932, %v2176
      %v2220 = vadd.f32 %v1933, %v2178
      %v2221 = vadd.f32 %v1934, %v2181
      %v2222 = vadd.f32 %v1935, %v2183
      %v2223 = vadd.f32 %v1936, %v2186
      %v2224 = vadd.f32 %v1937, %v2188
      %v2225 = vadd.f32 %v1938, %v2191
      %v2226 = vadd.f32 %v1939, %v2193
      %v2227 = vld [vmem:[#allocation2] sm:$0xff]
      %v2228 = vld [vmem:[#allocation2 + $0x8] sm:$0xff]
      %v2229 = vld [vmem:[#allocation2 + $0x10] sm:$0xff]
      %v2230 = vld [vmem:[#allocation2 + $0x18] sm:$0xff]
      %v2231 = vld [vmem:[#allocation2 + $0x20] sm:$0xff]
      %v2232 = vld [vmem:[#allocation2 + $0x28] sm:$0xff]
      %v2233 = vld [vmem:[#allocation2 + $0x30] sm:$0xff]
      %v2234 = vld [vmem:[#allocation2 + $0x38] sm:$0xff]
      %v2235 = vld [vmem:[#allocation2 + $0x40] sm:$0xff]
      %v2236 = vld [vmem:[#allocation2 + $0x48] sm:$0xff]
      %v2237 = vld [vmem:[#allocation2 + $0x50] sm:$0xff]
      %v2238 = vld [vmem:[#allocation2 + $0x58] sm:$0xff]
      %v2239 = vld [vmem:[#allocation2 + $0x60] sm:$0xff]
      %v2240 = vld [vmem:[#allocation2 + $0x68] sm:$0xff]
      %v2241 = vld [vmem:[#allocation2 + $0x70] sm:$0xff]
      %v2242 = vld [vmem:[#allocation2 + $0x78] sm:$0xff]
      %v2243 = vld [vmem:[#allocation2 + $0x80] sm:$0xff]
      %v2244 = vld [vmem:[#allocation2 + $0x88] sm:$0xff]
      %v2245 = vld [vmem:[#allocation2 + $0x90] sm:$0xff]
      %v2246 = vld [vmem:[#allocation2 + $0x98] sm:$0xff]
      %v2247 = vld [vmem:[#allocation2 + $0xa0] sm:$0xff]
      %v2248 = vld [vmem:[#allocation2 + $0xa8] sm:$0xff]
      %v2249 = vld [vmem:[#allocation2 + $0xb0] sm:$0xff]
      %v2250 = vld [vmem:[#allocation2 + $0xb8] sm:$0xff]
      %v2251 = vld [vmem:[#allocation2 + $0xc0] sm:$0xff]
      %v2252 = vld [vmem:[#allocation2 + $0xc8] sm:$0xff]
      %v2253 = vld [vmem:[#allocation2 + $0xd0] sm:$0xff]
      %v2254 = vld [vmem:[#allocation2 + $0xd8] sm:$0xff]
      %v2255 = vld [vmem:[#allocation2 + $0xe0] sm:$0xff]
      %v2256 = vld [vmem:[#allocation2 + $0xe8] sm:$0xff]
      %v2257 = vld [vmem:[#allocation2 + $0xf0] sm:$0xff]
      %v2258 = vld [vmem:[#allocation2 + $0xf8] sm:$0xff]
      %v2259 = vadd.f32 %v2227, %v2195
      %v2260 = vadd.f32 %v2228, %v2196
      %v2261 = vadd.f32 %v2229, %v2197
      %v2262 = vadd.f32 %v2230, %v2198
      %v2263 = vadd.f32 %v2231, %v2199
      %v2264 = vadd.f32 %v2232, %v2200
      %v2265 = vadd.f32 %v2233, %v2201
      %v2266 = vadd.f32 %v2234, %v2202
      %v2267 = vadd.f32 %v2235, %v2203
      %v2268 = vadd.f32 %v2236, %v2204
      %v2269 = vadd.f32 %v2237, %v2205
      %v2270 = vadd.f32 %v2238, %v2206
      %v2271 = vadd.f32 %v2239, %v2207
      %v2272 = vadd.f32 %v2240, %v2208
      %v2273 = vadd.f32 %v2241, %v2209
      %v2274 = vadd.f32 %v2242, %v2210
      %v2275 = vadd.f32 %v2243, %v2211
      %v2276 = vadd.f32 %v2244, %v2212
      %v2277 = vadd.f32 %v2245, %v2213
      %v2278 = vadd.f32 %v2246, %v2214
      %v2279 = vadd.f32 %v2247, %v2215
      %v2280 = vadd.f32 %v2248, %v2216
      %v2281 = vadd.f32 %v2249, %v2217
      %v2282 = vadd.f32 %v2250, %v2218
      %v2283 = vadd.f32 %v2251, %v2219
      %v2284 = vadd.f32 %v2252, %v2220
      %v2285 = vadd.f32 %v2253, %v2221
      %v2286 = vadd.f32 %v2254, %v2222
      %v2287 = vadd.f32 %v2255, %v2223
      %v2288 = vadd.f32 %v2256, %v2224
      %v2289 = vadd.f32 %v2257, %v2225
      %v2290 = vadd.f32 %v2258, %v2226
      %vm2291 = vcmask 64512
      %2292 = vst.msk [vmem:[#allocation2] sm:$0xff] %vm2291, %v2259
      %2293 = vst.msk [vmem:[#allocation2 + $0x8] sm:$0xff] %vm2291, %v2260
      %2294 = vst.msk [vmem:[#allocation2 + $0x10] sm:$0xff] %vm2291, %v2261
      %2295 = vst.msk [vmem:[#allocation2 + $0x18] sm:$0xff] %vm2291, %v2262
      %2296 = vst.msk [vmem:[#allocation2 + $0x20] sm:$0xff] %vm2291, %v2263
      %2297 = vst.msk [vmem:[#allocation2 + $0x28] sm:$0xff] %vm2291, %v2264
      %2298 = vst.msk [vmem:[#allocation2 + $0x30] sm:$0xff] %vm2291, %v2265
      %2299 = vst.msk [vmem:[#allocation2 + $0x38] sm:$0xff] %vm2291, %v2266
      %2300 = vst.msk [vmem:[#allocation2 + $0x40] sm:$0xff] %vm2291, %v2267
      %2301 = vst.msk [vmem:[#allocation2 + $0x48] sm:$0xff] %vm2291, %v2268
      %2302 = vst.msk [vmem:[#allocation2 + $0x50] sm:$0xff] %vm2291, %v2269
      %2303 = vst.msk [vmem:[#allocation2 + $0x58] sm:$0xff] %vm2291, %v2270
      %2304 = vst.msk [vmem:[#allocation2 + $0x60] sm:$0xff] %vm2291, %v2271
      %2305 = vst.msk [vmem:[#allocation2 + $0x68] sm:$0xff] %vm2291, %v2272
      %2306 = vst.msk [vmem:[#allocation2 + $0x70] sm:$0xff] %vm2291, %v2273
      %2307 = vst.msk [vmem:[#allocation2 + $0x78] sm:$0xff] %vm2291, %v2274
      %2308 = vst.msk [vmem:[#allocation2 + $0x80] sm:$0xff] %vm2291, %v2275
      %2309 = vst.msk [vmem:[#allocation2 + $0x88] sm:$0xff] %vm2291, %v2276
      %2310 = vst.msk [vmem:[#allocation2 + $0x90] sm:$0xff] %vm2291, %v2277
      %2311 = vst.msk [vmem:[#allocation2 + $0x98] sm:$0xff] %vm2291, %v2278
      %2312 = vst.msk [vmem:[#allocation2 + $0xa0] sm:$0xff] %vm2291, %v2279
      %2313 = vst.msk [vmem:[#allocation2 + $0xa8] sm:$0xff] %vm2291, %v2280
      %2314 = vst.msk [vmem:[#allocation2 + $0xb0] sm:$0xff] %vm2291, %v2281
      %2315 = vst.msk [vmem:[#allocation2 + $0xb8] sm:$0xff] %vm2291, %v2282
      %2316 = vst.msk [vmem:[#allocation2 + $0xc0] sm:$0xff] %vm2291, %v2283
      %2317 = vst.msk [vmem:[#allocation2 + $0xc8] sm:$0xff] %vm2291, %v2284
      %2318 = vst.msk [vmem:[#allocation2 + $0xd0] sm:$0xff] %vm2291, %v2285
      %2319 = vst.msk [vmem:[#allocation2 + $0xd8] sm:$0xff] %vm2291, %v2286
      %2320 = vst.msk [vmem:[#allocation2 + $0xe0] sm:$0xff] %vm2291, %v2287
      %2321 = vst.msk [vmem:[#allocation2 + $0xe8] sm:$0xff] %vm2291, %v2288
      %2322 = vst.msk [vmem:[#allocation2 + $0xf0] sm:$0xff] %vm2291, %v2289
      %2323 = vst.msk [vmem:[#allocation2 + $0xf8] sm:$0xff] %vm2291, %v2290
      // Predicated region
      $region33: #{global_conv_forward.4} parent=27 // pred_check
        %p2324 = pneg %p245
      $region34: #{global_conv_forward.4} parent=27 // pred_check_branch
        %2326 = sbr.rel (%p2324) target = $region36
      $region35: #{global_conv_forward.4} parent=27 // pred_region
        %v2327 = vld [vmem:[#allocation2] sm:$0xff]
        %v2328 = vld [vmem:[#allocation2 + $0x8] sm:$0xff]
        %v2329 = vld [vmem:[#allocation2 + $0x10] sm:$0xff]
        %v2330 = vld [vmem:[#allocation2 + $0x18] sm:$0xff]
        %v2331 = vld [vmem:[#allocation2 + $0x20] sm:$0xff]
        %v2332 = vld [vmem:[#allocation2 + $0x28] sm:$0xff]
        %v2333 = vld [vmem:[#allocation2 + $0x30] sm:$0xff]
        %v2334 = vld [vmem:[#allocation2 + $0x38] sm:$0xff]
        %v2335 = vld [vmem:[#allocation2 + $0x40] sm:$0xff]
        %v2336 = vld [vmem:[#allocation2 + $0x48] sm:$0xff]
        %v2337 = vld [vmem:[#allocation2 + $0x50] sm:$0xff]
        %v2338 = vld [vmem:[#allocation2 + $0x58] sm:$0xff]
        %v2339 = vld [vmem:[#allocation2 + $0x60] sm:$0xff]
        %v2340 = vld [vmem:[#allocation2 + $0x68] sm:$0xff]
        %v2341 = vld [vmem:[#allocation2 + $0x70] sm:$0xff]
        %v2342 = vld [vmem:[#allocation2 + $0x78] sm:$0xff]
        %v2343 = vld [vmem:[#allocation2 + $0x80] sm:$0xff]
        %v2344 = vld [vmem:[#allocation2 + $0x88] sm:$0xff]
        %v2345 = vld [vmem:[#allocation2 + $0x90] sm:$0xff]
        %v2346 = vld [vmem:[#allocation2 + $0x98] sm:$0xff]
        %v2347 = vld [vmem:[#allocation2 + $0xa0] sm:$0xff]
        %v2348 = vld [vmem:[#allocation2 + $0xa8] sm:$0xff]
        %v2349 = vld [vmem:[#allocation2 + $0xb0] sm:$0xff]
        %v2350 = vld [vmem:[#allocation2 + $0xb8] sm:$0xff]
        %v2351 = vld [vmem:[#allocation2 + $0xc0] sm:$0xff]
        %v2352 = vld [vmem:[#allocation2 + $0xc8] sm:$0xff]
        %v2353 = vld [vmem:[#allocation2 + $0xd0] sm:$0xff]
        %v2354 = vld [vmem:[#allocation2 + $0xd8] sm:$0xff]
        %v2355 = vld [vmem:[#allocation2 + $0xe0] sm:$0xff]
        %v2356 = vld [vmem:[#allocation2 + $0xe8] sm:$0xff]
        %v2357 = vld [vmem:[#allocation2 + $0xf0] sm:$0xff]
        %v2358 = vld [vmem:[#allocation2 + $0xf8] sm:$0xff]
        %v2359 = vpack.c.bf16 %v2327, %v2327
        %v2360 = vpack.c.bf16 %v2328, %v2328
        %v2361 = vpack.c.bf16 %v2329, %v2329
        %v2362 = vpack.c.bf16 %v2330, %v2330
        %v2363 = vpack.c.bf16 %v2331, %v2331
        %v2364 = vpack.c.bf16 %v2332, %v2332
        %v2365 = vpack.c.bf16 %v2333, %v2333
        %v2366 = vpack.c.bf16 %v2334, %v2334
        %v2367 = vpack.c.bf16 %v2335, %v2335
        %v2368 = vpack.c.bf16 %v2336, %v2336
        %v2369 = vpack.c.bf16 %v2337, %v2337
        %v2370 = vpack.c.bf16 %v2338, %v2338
        %v2371 = vpack.c.bf16 %v2339, %v2339
        %v2372 = vpack.c.bf16 %v2340, %v2340
        %v2373 = vpack.c.bf16 %v2341, %v2341
        %v2374 = vpack.c.bf16 %v2342, %v2342
        %v2375 = vpack.c.bf16 %v2343, %v2343
        %v2376 = vpack.c.bf16 %v2344, %v2344
        %v2377 = vpack.c.bf16 %v2345, %v2345
        %v2378 = vpack.c.bf16 %v2346, %v2346
        %v2379 = vpack.c.bf16 %v2347, %v2347
        %v2380 = vpack.c.bf16 %v2348, %v2348
        %v2381 = vpack.c.bf16 %v2349, %v2349
        %v2382 = vpack.c.bf16 %v2350, %v2350
        %v2383 = vpack.c.bf16 %v2351, %v2351
        %v2384 = vpack.c.bf16 %v2352, %v2352
        %v2385 = vpack.c.bf16 %v2353, %v2353
        %v2386 = vpack.c.bf16 %v2354, %v2354
        %v2387 = vpack.c.bf16 %v2355, %v2355
        %v2388 = vpack.c.bf16 %v2356, %v2356
        %v2389 = vpack.c.bf16 %v2357, %v2357
        %v2390 = vpack.c.bf16 %v2358, %v2358
        %vm2391 = vcmask 60416
        %2392 = vst.msk [vmem:[%s242] sm:$0xf] %vm2391, %v2359
        %2393 = vst.msk [vmem:[%s242 + $0x4] sm:$0xf] %vm2391, %v2360
        %2394 = vst.msk [vmem:[%s242 + $0x8] sm:$0xf] %vm2391, %v2361
        %2395 = vst.msk [vmem:[%s242 + $0xc] sm:$0xf] %vm2391, %v2362
        %2396 = vst.msk [vmem:[%s242 + $0x10] sm:$0xf] %vm2391, %v2363
        %2397 = vst.msk [vmem:[%s242 + $0x14] sm:$0xf] %vm2391, %v2364
        %2398 = vst.msk [vmem:[%s242 + $0x18] sm:$0xf] %vm2391, %v2365
        %2399 = vst.msk [vmem:[%s242 + $0x1c] sm:$0xf] %vm2391, %v2366
        %2400 = vst.msk [vmem:[%s242 + $0x20] sm:$0xf] %vm2391, %v2367
        %2401 = vst.msk [vmem:[%s242 + $0x24] sm:$0xf] %vm2391, %v2368
        %2402 = vst.msk [vmem:[%s242 + $0x28] sm:$0xf] %vm2391, %v2369
        %2403 = vst.msk [vmem:[%s242 + $0x2c] sm:$0xf] %vm2391, %v2370
        %2404 = vst.msk [vmem:[%s242 + $0x30] sm:$0xf] %vm2391, %v2371
        %2405 = vst.msk [vmem:[%s242 + $0x34] sm:$0xf] %vm2391, %v2372
        %2406 = vst.msk [vmem:[%s242 + $0x38] sm:$0xf] %vm2391, %v2373
        %2407 = vst.msk [vmem:[%s242 + $0x3c] sm:$0xf] %vm2391, %v2374
        %2408 = vst.msk [vmem:[%s242 + $0x40] sm:$0xf] %vm2391, %v2375
        %2409 = vst.msk [vmem:[%s242 + $0x44] sm:$0xf] %vm2391, %v2376
        %2410 = vst.msk [vmem:[%s242 + $0x48] sm:$0xf] %vm2391, %v2377
        %2411 = vst.msk [vmem:[%s242 + $0x4c] sm:$0xf] %vm2391, %v2378
        %2412 = vst.msk [vmem:[%s242 + $0x50] sm:$0xf] %vm2391, %v2379
        %2413 = vst.msk [vmem:[%s242 + $0x54] sm:$0xf] %vm2391, %v2380
        %2414 = vst.msk [vmem:[%s242 + $0x58] sm:$0xf] %vm2391, %v2381
        %2415 = vst.msk [vmem:[%s242 + $0x5c] sm:$0xf] %vm2391, %v2382
        %2416 = vst.msk [vmem:[%s242 + $0x60] sm:$0xf] %vm2391, %v2383
        %2417 = vst.msk [vmem:[%s242 + $0x64] sm:$0xf] %vm2391, %v2384
        %2418 = vst.msk [vmem:[%s242 + $0x68] sm:$0xf] %vm2391, %v2385
        %2419 = vst.msk [vmem:[%s242 + $0x6c] sm:$0xf] %vm2391, %v2386
        %2420 = vst.msk [vmem:[%s242 + $0x70] sm:$0xf] %vm2391, %v2387
        %2421 = vst.msk [vmem:[%s242 + $0x74] sm:$0xf] %vm2391, %v2388
        %2422 = vst.msk [vmem:[%s242 + $0x78] sm:$0xf] %vm2391, %v2389
        %2423 = vst.msk [vmem:[%s242 + $0x7c] sm:$0xf] %vm2391, %v2390
      $region36: #{global_conv_forward.4} parent=27 // pred_fallthru
        _
      %s2424 = smul.u32 2, %s20
      %p2425 = scmp.lt.s32.totalorder %s19, 1
      %s2426 = scalar_select %p2425, %s19, 1
      %p2427 = scmp.lt.s32.totalorder %s2424, 1
      %s2428 = scalar_select %p2427, %s2424, 1
      %p2429 = scmp.lt.s32.totalorder %s21, 0
      %s2430 = scalar_select %p2429, %s21, 0
      %s2431 = sadd.s32 %s2430, %s2428
      %s2432 = smul.addr %s2426, 32
      %s2433 = sadd.s32 %s2431, %s2432
      %s2434 = smul.addr %s2433, 4
      %s2435 = scalar_lea.vmem %s2, %s2434
      // Predicated region
      $region37: #{global_conv_forward.4} parent=27 // pred_check
        %p2436 = pneg %p119
      $region38: #{global_conv_forward.4} parent=27 // pred_check_branch
        %2438 = sbr.rel (%p2436) target = $region40
      $region39: #{global_conv_forward.4} parent=27 // pred_region
        %s2439 = smul.u32 2, %s20
      $region40: #{global_conv_forward.4} parent=27 // pred_fallthru
        _
    $region28: #{global_conv_forward.4} parent=5 // pred_fallthru
      _
    %p2440 = scmp.le.s32.totalorder 2, %s8
    // Predicated region
    $region41: #{global_conv_forward.4} parent=5 // pred_check
      %p2441 = pneg %p2440
    $region42: #{global_conv_forward.4} parent=5 // pred_check_branch
      %2443 = sbr.rel (%p2441) target = $region44
    $region43: #{global_conv_forward.4} parent=5 // pred_region
      %s2444 = ssub.s32 %s8, 2
      // Predicated region
      $region45: #{global_conv_forward.4} parent=43 // pred_check
        %p2445 = pneg %p125
      $region46: #{global_conv_forward.4} parent=43 // pred_check_branch
        %2447 = sbr.rel (%p2445) target = $region48
      $region47: #{global_conv_forward.4} parent=43 // pred_region
        %s2448 = smul.u32 2, %s24
        %p2449 = scmp.lt.s32.totalorder %s23, 1
        %s2450 = scalar_select %p2449, %s23, 1
        %p2451 = scmp.lt.s32.totalorder %s2448, 1
        %s2452 = scalar_select %p2451, %s2448, 1
        %p2453 = scmp.lt.s32.totalorder %s25, 0
        %s2454 = scalar_select %p2453, %s25, 0
        %s2455 = sadd.s32 %s2454, %s2452
        %s2456 = smul.addr %s2450, 32
        %s2457 = sadd.s32 %s2455, %s2456
        %s2458 = smul.addr %s2457, 4
        %s2459 = scalar_lea.vmem %s2, %s2458
      $region48: #{global_conv_forward.4} parent=43 // pred_fallthru
        _
    $region44: #{global_conv_forward.4} parent=5 // pred_fallthru
      _
  $region6: #{global_conv_forward.4} parent=0 // loop_footer
    %s12 = sadd.s32 1, %s8
  $region7: #{global_conv_forward.4} parent=0 // loop_footer_branch
    %7 = sbr.rel target = $region3
  $region8: #{global_conv_forward.4} parent=0 // loop_exit
    _

// kernel: global_conv_forward.7
$region0: #{global_conv_forward.7}
  #allocation0 [shape = 'u32[]', space=smem, size = 0x4, offset = 0x4, fixed_abs, tag = 'smem constant byte address 0x4 - core index']
  #allocation1 [shape = 'u32[72,128]{1,0:T(1,128)}', space=vmem, size = 0x9000, scoped, tag = 'internal scratch']
  #allocation2 [shape = 'f32[256,8]{1,0:T(8,128)}', space=vmem, size = 0x20000, scoped, tag = 'scratch operand']
  %s0 = inlined_call_operand.vmem [shape: bf16[2,22,16,8], index: 0, kind: input, shape index: {}]
  %s1 = inlined_call_operand.vmem [shape: bf16[7,8,8], index: 1, kind: input, shape index: {}]
  %s2 = inlined_call_operand.vmem [shape: f32[1,8], index: 2, kind: input, shape index: {}]
  %s3 = inlined_call_operand.vmem [shape: f32[1,8], index: 3, kind: input, shape index: {}]
  %s4 = inlined_call_operand.vmem [shape: bf16[2,16,16,8], index: 4, kind: input, shape index: {}]
  %s5 = inlined_call_operand.vmem [shape: f32[2,16,16,8], index: 5, kind: output, shape index: {}]
  %s6 = sld [smem:[#allocation0]]
  $region61: #{global_conv_forward.7} parent=0
    _
  %s8 = ssub.s32 1, %s6
  %s9 = scalar_select 0, %s8, %s6
  loop: start=0, step=1, limit=4
  $region2: #{global_conv_forward.7} parent=0 // loop_pre_header
    _
  $region3: #{global_conv_forward.7} parent=0 // loop_header
    %s11 = sphi 0, %s15
    %p12 = scmp.ge.s32.totalorder %s11, 4
    %s18 = sphi 0, %s44
    %s19 = sphi 0, %s40
    %s20 = sphi 0, %s36
    %s21 = sphi 0, %s32
    %s22 = sphi 0, %s18
    %s23 = sphi 0, %s19
    %s24 = sphi 0, %s20
    %s25 = sphi 0, %s21
    %s26 = sphi 0, %s22
    %s27 = sphi 0, %s23
    %s28 = sphi 0, %s24
    %s29 = sphi 0, %s25
    %s51 = sphi 0, %s53
    %s54 = sphi 0, %s51
    %s55 = sphi 0, %s54
    %s71 = sphi 0, %s55
    %s79 = sphi 0, %s81
    %s82 = sphi 0, %s79
    %s83 = sphi 0, %s82
    %s99 = sphi 0, %s83
    %s105 = sphi 0, %s107
    %s108 = sphi 0, %s105
    %s109 = sphi 0, %s108
    %s125 = sphi 0, %s109
    %s131 = sphi 0, %s133
    %s134 = sphi 0, %s131
    %s135 = sphi 0, %s134
    %s151 = sphi 0, %s135
    %s161 = sphi 0, %s163
    %s164 = sphi 0, %s161
    %s165 = sphi 0, %s164
    %s181 = sphi 0, %s165
    %s191 = sphi 0, %s193
    %s194 = sphi 0, %s191
    %s195 = sphi 0, %s194
    %s211 = sphi 0, %s195
  $region4: #{global_conv_forward.7} parent=0 // loop_header_branch
    %14 = sbr.rel (%p12) target = $region8
  $region5: #{global_conv_forward.7} parent=0 // loop_body
    %s16 = ssub.s32 %s11, 1
    %s17 = ssub.s32 %s11, 2
    %s30 = sadd.s32 1, %s21
    %p31 = scmp.ge.s32.totalorder %s30, 1
    %s32 = scalar_select %p31, 0, %s30
    %s33 = sadd.s32 1, %s20
    %s34 = scalar_select %p31, %s33, %s20
    %p35 = scmp.ge.s32.totalorder %s34, 1
    %s36 = scalar_select %p35, 0, %s34
    %s37 = sadd.s32 1, %s19
    %s38 = scalar_select %p35, %s37, %s19
    %p39 = scmp.ge.s32.totalorder %s38, 1
    %s40 = scalar_select %p39, 0, %s38
    %s41 = sadd.s32 1, %s18
    %s42 = scalar_select %p39, %s41, %s18
    %p43 = scmp.ge.s32.totalorder %s42, 2
    %s44 = scalar_select %p43, 0, %s42
    %s45 = ssub.s32 %s18, %s44
    %s46 = ssub.s32 %s19, %s40
    %s47 = sor.u32 %s45, %s46
    %s48 = ssub.s32 %s21, %s32
    %s49 = sor.u32 %s47, %s48
    %p50 = scmp.eq.s32.totalorder %s49, 0
    %s52 = sadd.s32 %s51, 1
    %s53 = scalar_select %p50, %s51, %s52
    %p56 = pneg %p50
    %p57 = scmp.eq.s32.totalorder %s11, 1
    %p58 = por %p56, %p57
    %p59 = scmp.ne.s32.totalorder %s51, %s54
    %p60 = scmp.eq.s32.totalorder %s11, 0
    %p61 = por %p59, %p60
    %p62 = scmp.ne.s32.totalorder %s51, %s54
    %p63 = scmp.eq.s32.totalorder %s16, 1
    %p64 = por %p62, %p63
    %p65 = scmp.ne.s32.totalorder %s54, %s55
    %p66 = scmp.eq.s32.totalorder %s16, 0
    %p67 = por %p65, %p66
    %p68 = scmp.ne.s32.totalorder %s54, %s55
    %p69 = scmp.eq.s32.totalorder %s17, 1
    %p70 = por %p68, %p69
    %p72 = scmp.ne.s32.totalorder %s55, %s71
    %p73 = scmp.eq.s32.totalorder %s17, 0
    %p74 = por %p72, %p73
    %s75 = ssub.s32 %s21, %s32
    %s76 = ssub.s32 %s20, %s36
    %s77 = sor.u32 %s75, %s76
    %p78 = scmp.eq.s32.totalorder %s77, 0
    %s80 = sadd.s32 %s79, 1
    %s81 = scalar_select %p78, %s79, %s80
    %p84 = pneg %p78
    %p85 = scmp.eq.s32.totalorder %s11, 1
    %p86 = por %p84, %p85
    %p87 = scmp.ne.s32.totalorder %s79, %s82
    %p88 = scmp.eq.s32.totalorder %s11, 0
    %p89 = por %p87, %p88
    %p90 = scmp.ne.s32.totalorder %s79, %s82
    %p91 = scmp.eq.s32.totalorder %s16, 1
    %p92 = por %p90, %p91
    %p93 = scmp.ne.s32.totalorder %s82, %s83
    %p94 = scmp.eq.s32.totalorder %s16, 0
    %p95 = por %p93, %p94
    %p96 = scmp.ne.s32.totalorder %s82, %s83
    %p97 = scmp.eq.s32.totalorder %s17, 1
    %p98 = por %p96, %p97
    %p100 = scmp.ne.s32.totalorder %s83, %s99
    %p101 = scmp.eq.s32.totalorder %s17, 0
    %p102 = por %p100, %p101
    %s103 = ssub.s32 %s20, %s36
    %p104 = scmp.eq.s32.totalorder %s103, 0
    %s106 = sadd.s32 %s105, 1
    %s107 = scalar_select %p104, %s105, %s106
    %p110 = pneg %p104
    %p111 = scmp.eq.s32.totalorder %s11, 1
    %p112 = por %p110, %p111
    %p113 = scmp.ne.s32.totalorder %s105, %s108
    %p114 = scmp.eq.s32.totalorder %s11, 0
    %p115 = por %p113, %p114
    %p116 = scmp.ne.s32.totalorder %s105, %s108
    %p117 = scmp.eq.s32.totalorder %s16, 1
    %p118 = por %p116, %p117
    %p119 = scmp.ne.s32.totalorder %s108, %s109
    %p120 = scmp.eq.s32.totalorder %s16, 0
    %p121 = por %p119, %p120
    %p122 = scmp.ne.s32.totalorder %s108, %s109
    %p123 = scmp.eq.s32.totalorder %s17, 1
    %p124 = por %p122, %p123
    %p126 = scmp.ne.s32.totalorder %s109, %s125
    %p127 = scmp.eq.s32.totalorder %s17, 0
    %p128 = por %p126, %p127
    %s129 = ssub.s32 %s20, %s36
    %p130 = scmp.eq.s32.totalorder %s129, 0
    %s132 = sadd.s32 %s131, 1
    %s133 = scalar_select %p130, %s131, %s132
    %p136 = pneg %p130
    %p137 = scmp.eq.s32.totalorder %s11, 1
    %p138 = por %p136, %p137
    %p139 = scmp.ne.s32.totalorder %s131, %s134
    %p140 = scmp.eq.s32.totalorder %s11, 0
    %p141 = por %p139, %p140
    %p142 = scmp.ne.s32.totalorder %s131, %s134
    %p143 = scmp.eq.s32.totalorder %s16, 1
    %p144 = por %p142, %p143
    %p145 = scmp.ne.s32.totalorder %s134, %s135
    %p146 = scmp.eq.s32.totalorder %s16, 0
    %p147 = por %p145, %p146
    %p148 = scmp.ne.s32.totalorder %s134, %s135
    %p149 = scmp.eq.s32.totalorder %s17, 1
    %p150 = por %p148, %p149
    %p152 = scmp.ne.s32.totalorder %s135, %s151
    %p153 = scmp.eq.s32.totalorder %s17, 0
    %p154 = por %p152, %p153
    %s155 = ssub.s32 %s18, %s44
    %s156 = ssub.s32 %s19, %s40
    %s157 = sor.u32 %s155, %s156
    %s158 = ssub.s32 %s20, %s36
    %s159 = sor.u32 %s157, %s158
    %p160 = scmp.eq.s32.totalorder %s159, 0
    %s162 = sadd.s32 %s161, 1
    %s163 = scalar_select %p160, %s161, %s162
    %p166 = pneg %p160
    %p167 = scmp.eq.s32.totalorder %s11, 1
    %p168 = por %p166, %p167
    %p169 = scmp.ne.s32.totalorder %s161, %s164
    %p170 = scmp.eq.s32.totalorder %s11, 0
    %p171 = por %p169, %p170
    %p172 = scmp.ne.s32.totalorder %s161, %s164
    %p173 = scmp.eq.s32.totalorder %s16, 1
    %p174 = por %p172, %p173
    %p175 = scmp.ne.s32.totalorder %s164, %s165
    %p176 = scmp.eq.s32.totalorder %s16, 0
    %p177 = por %p175, %p176
    %p178 = scmp.ne.s32.totalorder %s164, %s165
    %p179 = scmp.eq.s32.totalorder %s17, 1
    %p180 = por %p178, %p179
    %p182 = scmp.ne.s32.totalorder %s165, %s181
    %p183 = scmp.eq.s32.totalorder %s17, 0
    %p184 = por %p182, %p183
    %s185 = ssub.s32 %s18, %s44
    %s186 = ssub.s32 %s19, %s40
    %s187 = sor.u32 %s185, %s186
    %s188 = ssub.s32 %s20, %s36
    %s189 = sor.u32 %s187, %s188
    %p190 = scmp.eq.s32.totalorder %s189, 0
    %s192 = sadd.s32 %s191, 1
    %s193 = scalar_select %p190, %s191, %s192
    %p196 = pneg %p190
    %p197 = scmp.eq.s32.totalorder %s11, 1
    %p198 = por %p196, %p197
    %p199 = scmp.ne.s32.totalorder %s191, %s194
    %p200 = scmp.eq.s32.totalorder %s11, 0
    %p201 = por %p199, %p200
    %p202 = scmp.ne.s32.totalorder %s191, %s194
    %p203 = scmp.eq.s32.totalorder %s16, 1
    %p204 = por %p202, %p203
    %p205 = scmp.ne.s32.totalorder %s194, %s195
    %p206 = scmp.eq.s32.totalorder %s16, 0
    %p207 = por %p205, %p206
    %p208 = scmp.ne.s32.totalorder %s194, %s195
    %p209 = scmp.eq.s32.totalorder %s17, 1
    %p210 = por %p208, %p209
    %p212 = scmp.ne.s32.totalorder %s195, %s211
    %p213 = scmp.eq.s32.totalorder %s17, 0
    %p214 = por %p212, %p213
    %p215 = scmp.le.s32.totalorder 1, %s11
    %p216 = scmp.lt.s32.totalorder %s11, 3
    %p217 = pnand %p215, %p216
    %p218 = pneg %p217
    // Predicated region
    $region9: #{global_conv_forward.7} parent=5 // pred_check
      _
    $region10: #{global_conv_forward.7} parent=5 // pred_check_branch
      %220 = sbr.rel (%p217) target = $region12
    $region11: #{global_conv_forward.7} parent=5 // pred_region
      %s221 = ssub.s32 %s11, 1
      // Predicated region
      $region13: #{global_conv_forward.7} parent=11 // pred_check
        %p222 = pneg %p95
      $region14: #{global_conv_forward.7} parent=11 // pred_check_branch
        %224 = sbr.rel (%p222) target = $region16
      $region15: #{global_conv_forward.7} parent=11 // pred_region
        %p225 = scmp.lt.s32.totalorder %s25, 0
        %s226 = scalar_select %p225, %s25, 0
        %p227 = scmp.lt.s32.totalorder %s24, 0
        %s228 = scalar_select %p227, %s24, 0
        %s229 = sadd.s32 %s228, %s226
        %s230 = smul.addr %s229, 4
        %s231 = scalar_lea.vmem %s1, %s230
      $region16: #{global_conv_forward.7} parent=11 // pred_fallthru
        _
      // Predicated region
      $region17: #{global_conv_forward.7} parent=11 // pred_check
        %p232 = pneg %p121
      $region18: #{global_conv_forward.7} parent=11 // pred_check_branch
        %234 = sbr.rel (%p232) target = $region20
      $region19: #{global_conv_forward.7} parent=11 // pred_region
        %p235 = scmp.lt.s32.totalorder %s24, 0
        %s236 = scalar_select %p235, %s24, 0
        %s237 = scalar_lea.vmem %s2, %s236
      $region20: #{global_conv_forward.7} parent=11 // pred_fallthru
        _
      // Predicated region
      $region21: #{global_conv_forward.7} parent=11 // pred_check
        %p238 = pneg %p147
      $region22: #{global_conv_forward.7} parent=11 // pred_check_branch
        %240 = sbr.rel (%p238) target = $region24
      $region23: #{global_conv_forward.7} parent=11 // pred_region
        %p241 = scmp.lt.s32.totalorder %s24, 0
        %s242 = scalar_select %p241, %s24, 0
        %s243 = scalar_lea.vmem %s3, %s242
      $region24: #{global_conv_forward.7} parent=11 // pred_fallthru
        _
    $region12: #{global_conv_forward.7} parent=5 // pred_fallthru
      _
    %p244 = scmp.lt.s32.totalorder %s11, 2
    // Predicated region
    $region25: #{global_conv_forward.7} parent=5 // pred_check
      %p245 = pneg %p244
    $region26: #{global_conv_forward.7} parent=5 // pred_check_branch
      %247 = sbr.rel (%p245) target = $region28
    $region27: #{global_conv_forward.7} parent=5 // pred_region
      // Predicated region
      $region29: #{global_conv_forward.7} parent=27 // pred_check
        %p248 = pneg %p61
      $region30: #{global_conv_forward.7} parent=27 // pred_check_branch
        %250 = sbr.rel (%p248) target = $region32
      $region31: #{global_conv_forward.7} parent=27 // pred_region
        %s251 = smul.u32 2, %s19
        %p252 = scmp.lt.s32.totalorder %s18, 1
        %s253 = scalar_select %p252, %s18, 1
        %p254 = scmp.lt.s32.totalorder %s251, 1
        %s255 = scalar_select %p254, %s251, 1
        %p256 = scmp.lt.s32.totalorder %s21, 0
        %s257 = scalar_select %p256, %s21, 0
        %s258 = sadd.s32 %s257, %s255
        %s259 = smul.addr %s253, 44
        %s260 = sadd.s32 %s258, %s259
        %s261 = smul.addr %s260, 4
        %s262 = scalar_lea.vmem %s0, %s261
        %s263 = smul.u32 2, %s19
      $region32: #{global_conv_forward.7} parent=27 // pred_fallthru
        _
      // Predicated region
      $region33: #{global_conv_forward.7} parent=27 // pred_check
        %p264 = pneg %p171
      $region34: #{global_conv_forward.7} parent=27 // pred_check_branch
        %266 = sbr.rel (%p264) target = $region36
      $region35: #{global_conv_forward.7} parent=27 // pred_region
        %s267 = smul.u32 2, %s19
        %p268 = scmp.lt.s32.totalorder %s18, 1
        %s269 = scalar_select %p268, %s18, 1
        %p270 = scmp.lt.s32.totalorder %s267, 1
        %s271 = scalar_select %p270, %s267, 1
        %p272 = scmp.lt.s32.totalorder %s20, 0
        %s273 = scalar_select %p272, %s20, 0
        %s274 = sadd.s32 %s273, %s271
        %s275 = smul.addr %s269, 32
        %s276 = sadd.s32 %s274, %s275
        %s277 = smul.addr %s276, 4
        %s278 = scalar_lea.vmem %s4, %s277
        %s279 = smul.u32 2, %s19
      $region36: #{global_conv_forward.7} parent=27 // pred_fallthru
        _
    $region28: #{global_conv_forward.7} parent=5 // pred_fallthru
      _
    %p280 = scmp.le.s32.totalorder 1, %s11
    %p281 = scmp.lt.s32.totalorder %s11, 3
    %p282 = pnand %p280, %p281
    %p283 = pneg %p282
    // Predicated region
    $region37: #{global_conv_forward.7} parent=5 // pred_check
      _
    $region38: #{global_conv_forward.7} parent=5 // pred_check_branch
      %285 = sbr.rel (%p282) target = $region40
    $region39: #{global_conv_forward.7} parent=5 // pred_region
      %s286 = ssub.s32 %s11, 1
      %s287 = smul.u32 2, %s23
      %p288 = scmp.lt.s32.totalorder %s22, 1
      %s289 = scalar_select %p288, %s22, 1
      %p290 = scmp.lt.s32.totalorder %s287, 1
      %s291 = scalar_select %p290, %s287, 1
      %p292 = scmp.lt.s32.totalorder %s25, 0
      %s293 = scalar_select %p292, %s25, 0
      %s294 = sadd.s32 %s293, %s291
      %s295 = smul.addr %s289, 44
      %s296 = sadd.s32 %s294, %s295
      %s297 = smul.addr %s296, 4
      %s298 = scalar_lea.vmem %s0, %s297
      %p299 = pneg %p67
      %p300 = pneg %p64
      %p301 = scmp.lt.s32.totalorder %s25, 0
      %s302 = scalar_select %p301, %s25, 0
      %p303 = scmp.lt.s32.totalorder %s24, 0
      %s304 = scalar_select %p303, %s24, 0
      %s305 = sadd.s32 %s304, %s302
      %s306 = smul.addr %s305, 4
      %s307 = scalar_lea.vmem %s1, %s306
      %p308 = pneg %p95
      %p309 = pneg %p92
      %p310 = scmp.lt.s32.totalorder %s24, 0
      %s311 = scalar_select %p310, %s24, 0
      %s312 = scalar_lea.vmem %s2, %s311
      %p313 = pneg %p121
      %p314 = pneg %p118
      %p315 = scmp.lt.s32.totalorder %s24, 0
      %s316 = scalar_select %p315, %s24, 0
      %s317 = scalar_lea.vmem %s3, %s316
      %p318 = pneg %p147
      %p319 = pneg %p144
      %s320 = smul.u32 2, %s23
      %p321 = scmp.lt.s32.totalorder %s22, 1
      %s322 = scalar_select %p321, %s22, 1
      %p323 = scmp.lt.s32.totalorder %s320, 1
      %s324 = scalar_select %p323, %s320, 1
      %p325 = scmp.lt.s32.totalorder %s24, 0
      %s326 = scalar_select %p325, %s24, 0
      %s327 = sadd.s32 %s326, %s324
      %s328 = smul.addr %s322, 32
      %s329 = sadd.s32 %s327, %s328
      %s330 = smul.addr %s329, 4
      %s331 = scalar_lea.vmem %s4, %s330
      %p332 = pneg %p177
      %p333 = pneg %p174
      %p334 = pneg %p207
      %p335 = pneg %p204
      %s336 = smul.u32 2, %s23
      %p337 = scmp.lt.s32.totalorder %s22, 1
      %s338 = scalar_select %p337, %s22, 1
      %p339 = scmp.lt.s32.totalorder %s336, 1
      %s340 = scalar_select %p339, %s336, 1
      %p341 = scmp.lt.s32.totalorder %s24, 0
      %s342 = scalar_select %p341, %s24, 0
      %s343 = sadd.s32 %s342, %s340
      %s344 = smul.addr %s338, 32
      %s345 = sadd.s32 %s343, %s344
      %s346 = smul.addr %s345, 8
      %s347 = scalar_lea.vmem %s5, %s346
      %s348 = smul.u32 2, %s23
      %p349 = scmp.lt.s32.totalorder %s22, 1
      %s350 = scalar_select %p349, %s22, 1
      %p351 = scmp.lt.s32.totalorder %s348, 1
      %s352 = scalar_select %p351, %s348, 1
      %p353 = scmp.lt.s32.totalorder %s25, 0
      %s354 = scalar_select %p353, %s25, 0
      %s355 = sadd.s32 %s354, %s352
      %s356 = smul.addr %s350, 44
      %s357 = sadd.s32 %s355, %s356
      %s358 = smul.addr %s357, 4
      %s359 = scalar_lea.vmem %s0, %s358
      %s360 = smul.u32 2, %s23
      %p361 = scmp.lt.s32.totalorder %s25, 0
      %s362 = scalar_select %p361, %s25, 0
      %p363 = scmp.lt.s32.totalorder %s24, 0
      %s364 = scalar_select %p363, %s24, 0
      %s365 = sadd.s32 %s364, %s362
      %s366 = smul.addr %s365, 4
      %s367 = scalar_lea.vmem %s1, %s366
      %p368 = scmp.lt.s32.totalorder %s24, 0
      %s369 = scalar_select %p368, %s24, 0
      %s370 = scalar_lea.vmem %s2, %s369
      %p371 = scmp.lt.s32.totalorder %s24, 0
      %s372 = scalar_select %p371, %s24, 0
      %s373 = scalar_lea.vmem %s3, %s372
      %s374 = smul.u32 2, %s23
      %p375 = scmp.lt.s32.totalorder %s22, 1
      %s376 = scalar_select %p375, %s22, 1
      %p377 = scmp.lt.s32.totalorder %s374, 1
      %s378 = scalar_select %p377, %s374, 1
      %p379 = scmp.lt.s32.totalorder %s24, 0
      %s380 = scalar_select %p379, %s24, 0
      %s381 = sadd.s32 %s380, %s378
      %s382 = smul.addr %s376, 32
      %s383 = sadd.s32 %s381, %s382
      %s384 = smul.addr %s383, 4
      %s385 = scalar_lea.vmem %s4, %s384
      %s386 = smul.u32 2, %s23
      %s387 = smul.u32 2, %s23
      %p388 = scmp.lt.s32.totalorder %s22, 1
      %s389 = scalar_select %p388, %s22, 1
      %p390 = scmp.lt.s32.totalorder %s387, 1
      %s391 = scalar_select %p390, %s387, 1
      %p392 = scmp.lt.s32.totalorder %s24, 0
      %s393 = scalar_select %p392, %s24, 0
      %s394 = sadd.s32 %s393, %s391
      %s395 = smul.addr %s389, 32
      %s396 = sadd.s32 %s394, %s395
      %s397 = smul.addr %s396, 8
      %s398 = scalar_lea.vmem %s5, %s397
      %s399 = smul.u32 2, %s23
      %p401 = scmp.eq.s32.totalorder %s25, 0
      // Predicated region
      $region41: #{global_conv_forward.7} parent=39 // pred_check
        %p402 = pneg %p401
      $region42: #{global_conv_forward.7} parent=39 // pred_check_branch
        %404 = sbr.rel (%p402) target = $region44
      $region43: #{global_conv_forward.7} parent=39 // pred_region
        %vm405 = vcmask 64512
        %406 = vst.msk [vmem:[#allocation2] sm:$0xff] %vm405, 0.0
        %407 = vst.msk [vmem:[#allocation2 + $0x8] sm:$0xff] %vm405, 0.0
        %408 = vst.msk [vmem:[#allocation2 + $0x10] sm:$0xff] %vm405, 0.0
        %409 = vst.msk [vmem:[#allocation2 + $0x18] sm:$0xff] %vm405, 0.0
        %410 = vst.msk [vmem:[#allocation2 + $0x20] sm:$0xff] %vm405, 0.0
        %411 = vst.msk [vmem:[#allocation2 + $0x28] sm:$0xff] %vm405, 0.0
        %412 = vst.msk [vmem:[#allocation2 + $0x30] sm:$0xff] %vm405, 0.0
        %413 = vst.msk [vmem:[#allocation2 + $0x38] sm:$0xff] %vm405, 0.0
        %414 = vst.msk [vmem:[#allocation2 + $0x40] sm:$0xff] %vm405, 0.0
        %415 = vst.msk [vmem:[#allocation2 + $0x48] sm:$0xff] %vm405, 0.0
        %416 = vst.msk [vmem:[#allocation2 + $0x50] sm:$0xff] %vm405, 0.0
        %417 = vst.msk [vmem:[#allocation2 + $0x58] sm:$0xff] %vm405, 0.0
        %418 = vst.msk [vmem:[#allocation2 + $0x60] sm:$0xff] %vm405, 0.0
        %419 = vst.msk [vmem:[#allocation2 + $0x68] sm:$0xff] %vm405, 0.0
        %420 = vst.msk [vmem:[#allocation2 + $0x70] sm:$0xff] %vm405, 0.0
        %421 = vst.msk [vmem:[#allocation2 + $0x78] sm:$0xff] %vm405, 0.0
        %422 = vst.msk [vmem:[#allocation2 + $0x80] sm:$0xff] %vm405, 0.0
        %423 = vst.msk [vmem:[#allocation2 + $0x88] sm:$0xff] %vm405, 0.0
        %424 = vst.msk [vmem:[#allocation2 + $0x90] sm:$0xff] %vm405, 0.0
        %425 = vst.msk [vmem:[#allocation2 + $0x98] sm:$0xff] %vm405, 0.0
        %426 = vst.msk [vmem:[#allocation2 + $0xa0] sm:$0xff] %vm405, 0.0
        %427 = vst.msk [vmem:[#allocation2 + $0xa8] sm:$0xff] %vm405, 0.0
        %428 = vst.msk [vmem:[#allocation2 + $0xb0] sm:$0xff] %vm405, 0.0
        %429 = vst.msk [vmem:[#allocation2 + $0xb8] sm:$0xff] %vm405, 0.0
        %430 = vst.msk [vmem:[#allocation2 + $0xc0] sm:$0xff] %vm405, 0.0
        %431 = vst.msk [vmem:[#allocation2 + $0xc8] sm:$0xff] %vm405, 0.0
        %432 = vst.msk [vmem:[#allocation2 + $0xd0] sm:$0xff] %vm405, 0.0
        %433 = vst.msk [vmem:[#allocation2 + $0xd8] sm:$0xff] %vm405, 0.0
        %434 = vst.msk [vmem:[#allocation2 + $0xe0] sm:$0xff] %vm405, 0.0
        %435 = vst.msk [vmem:[#allocation2 + $0xe8] sm:$0xff] %vm405, 0.0
        %436 = vst.msk [vmem:[#allocation2 + $0xf0] sm:$0xff] %vm405, 0.0
        %437 = vst.msk [vmem:[#allocation2 + $0xf8] sm:$0xff] %vm405, 0.0
      $region44: #{global_conv_forward.7} parent=39 // pred_fallthru
        _
      %v438 = vld [vmem:[%s359] sm:$0xf]
      %v439 = vld [vmem:[%s359 + $0x4] sm:$0xf]
      %v440 = vld [vmem:[%s359 + $0x8] sm:$0xf]
      %v441 = vld [vmem:[%s359 + $0xc] sm:$0xf]
      %v442 = vld [vmem:[%s359 + $0x10] sm:$0xf]
      %v443 = vld [vmem:[%s359 + $0x14] sm:$0xf]
      %v444 = vld [vmem:[%s359 + $0x18] sm:$0xf]
      %v445 = vld [vmem:[%s359 + $0x1c] sm:$0xf]
      %v446 = vld [vmem:[%s359 + $0x20] sm:$0xf]
      %v447 = vld [vmem:[%s359 + $0x24] sm:$0xf]
      %v448 = vld [vmem:[%s359 + $0x28] sm:$0xf]
      %v449 = vld [vmem:[%s359 + $0x2c] sm:$0xf]
      %v450 = vld [vmem:[%s359 + $0x30] sm:$0xf]
      %v451 = vld [vmem:[%s359 + $0x34] sm:$0xf]
      %v452 = vld [vmem:[%s359 + $0x38] sm:$0xf]
      %v453 = vld [vmem:[%s359 + $0x3c] sm:$0xf]
      %v454 = vld [vmem:[%s359 + $0x40] sm:$0xf]
      %v455 = vld [vmem:[%s359 + $0x44] sm:$0xf]
      %v456 = vld [vmem:[%s359 + $0x48] sm:$0xf]
      %v457 = vld [vmem:[%s359 + $0x4c] sm:$0xf]
      %v458 = vld [vmem:[%s359 + $0x50] sm:$0xf]
      %v459 = vld [vmem:[%s359 + $0x54] sm:$0xf]
      %v460 = vld [vmem:[%s359 + $0x58] sm:$0xf]
      %v461 = vld [vmem:[%s359 + $0x5c] sm:$0xf]
      %v462 = vld [vmem:[%s359 + $0x60] sm:$0xf]
      %v463 = vld [vmem:[%s359 + $0x64] sm:$0xf]
      %v464 = vld [vmem:[%s359 + $0x68] sm:$0xf]
      %v465 = vld [vmem:[%s359 + $0x6c] sm:$0xf]
      %v466 = vld [vmem:[%s359 + $0x70] sm:$0xf]
      %v467 = vld [vmem:[%s359 + $0x74] sm:$0xf]
      %v468 = vld [vmem:[%s359 + $0x78] sm:$0xf]
      %v469 = vld [vmem:[%s359 + $0x7c] sm:$0xf]
      %v470 = vld [vmem:[%s367] sm:$0xf]
      %s471 = scalar_lea.vmem %s359, 8
      %v472 = vld [vmem:[%s471] sm:$0xf]
      %v473 = vld [vmem:[%s471 + $0x4] sm:$0xf]
      %v474 = vld [vmem:[%s471 + $0x8] sm:$0xf]
      %v475 = vld [vmem:[%s471 + $0xc] sm:$0xf]
      %v476 = vld [vmem:[%s471 + $0x10] sm:$0xf]
      %v477 = vld [vmem:[%s471 + $0x14] sm:$0xf]
      %v478 = vld [vmem:[%s471 + $0x18] sm:$0xf]
      %v479 = vld [vmem:[%s471 + $0x1c] sm:$0xf]
      %v480 = vld [vmem:[%s471 + $0x20] sm:$0xf]
      %v481 = vld [vmem:[%s471 + $0x24] sm:$0xf]
      %v482 = vld [vmem:[%s471 + $0x28] sm:$0xf]
      %v483 = vld [vmem:[%s471 + $0x2c] sm:$0xf]
      %v484 = vld [vmem:[%s471 + $0x30] sm:$0xf]
      %v485 = vld [vmem:[%s471 + $0x34] sm:$0xf]
      %v486 = vld [vmem:[%s471 + $0x38] sm:$0xf]
      %v487 = vld [vmem:[%s471 + $0x3c] sm:$0xf]
      %v488 = vld [vmem:[%s471 + $0x40] sm:$0xf]
      %v489 = vld [vmem:[%s471 + $0x44] sm:$0xf]
      %v490 = vld [vmem:[%s471 + $0x48] sm:$0xf]
      %v491 = vld [vmem:[%s471 + $0x4c] sm:$0xf]
      %v492 = vld [vmem:[%s471 + $0x50] sm:$0xf]
      %v493 = vld [vmem:[%s471 + $0x54] sm:$0xf]
      %v494 = vld [vmem:[%s471 + $0x58] sm:$0xf]
      %v495 = vld [vmem:[%s471 + $0x5c] sm:$0xf]
      %v496 = vld [vmem:[%s471 + $0x60] sm:$0xf]
      %v497 = vld [vmem:[%s471 + $0x64] sm:$0xf]
      %v498 = vld [vmem:[%s471 + $0x68] sm:$0xf]
      %v499 = vld [vmem:[%s471 + $0x6c] sm:$0xf]
      %v500 = vld [vmem:[%s471 + $0x70] sm:$0xf]
      %v501 = vld [vmem:[%s471 + $0x74] sm:$0xf]
      %v502 = vld [vmem:[%s471 + $0x78] sm:$0xf]
      %v503 = vld [vmem:[%s471 + $0x7c] sm:$0xf]
      %s504 = scalar_lea.vmem %s367, 4
      %v505 = vld [vmem:[%s504] sm:$0xf]
      %v538 = vunpack.c.l.b16 %v472
      %v539 = vunpack.c.l.b16 %v473
      %v540 = vunpack.c.l.b16 %v474
      %v541 = vunpack.c.l.b16 %v475
      %v542 = vunpack.c.l.b16 %v476
      %v543 = vunpack.c.l.b16 %v477
      %v544 = vunpack.c.l.b16 %v478
      %v545 = vunpack.c.l.b16 %v479
      %v546 = vunpack.c.l.b16 %v480
      %v547 = vunpack.c.l.b16 %v481
      %v548 = vunpack.c.l.b16 %v482
      %v549 = vunpack.c.l.b16 %v483
      %v550 = vunpack.c.l.b16 %v484
      %v551 = vunpack.c.l.b16 %v485
      %v552 = vunpack.c.l.b16 %v486
      %v553 = vunpack.c.l.b16 %v487
      %v554 = vunpack.c.l.b16 %v488
      %v555 = vunpack.c.l.b16 %v489
      %v556 = vunpack.c.l.b16 %v490
      %v557 = vunpack.c.l.b16 %v491
      %v558 = vunpack.c.l.b16 %v492
      %v559 = vunpack.c.l.b16 %v493
      %v560 = vunpack.c.l.b16 %v494
      %v561 = vunpack.c.l.b16 %v495
      %v562 = vunpack.c.l.b16 %v496
      %v563 = vunpack.c.l.b16 %v497
      %v564 = vunpack.c.l.b16 %v498
      %v565 = vunpack.c.l.b16 %v499
      %v566 = vunpack.c.l.b16 %v500
      %v567 = vunpack.c.l.b16 %v501
      %v568 = vunpack.c.l.b16 %v502
      %v569 = vunpack.c.l.b16 %v503
      %v570 = vpack.c.b16 %v539, %v538
      %v571 = vpack.c.b16 %v541, %v540
      %v572 = vpack.c.b16 %v543, %v542
      %v573 = vpack.c.b16 %v545, %v544
      %v574 = vpack.c.b16 %v547, %v546
      %v575 = vpack.c.b16 %v549, %v548
      %v576 = vpack.c.b16 %v551, %v550
      %v577 = vpack.c.b16 %v553, %v552
      %v578 = vpack.c.b16 %v555, %v554
      %v579 = vpack.c.b16 %v557, %v556
      %v580 = vpack.c.b16 %v559, %v558
      %v581 = vpack.c.b16 %v561, %v560
      %v582 = vpack.c.b16 %v563, %v562
      %v583 = vpack.c.b16 %v565, %v564
      %v584 = vpack.c.b16 %v567, %v566
      %v585 = vpack.c.b16 %v569, %v568
      %vm586 = vcmask 64512
      %v588 = vsel %vm586, %v570, 0
      %v591 = vsel %vm586, %v571, 0
      %v594 = vsel %vm586, %v572, 0
      %v597 = vsel %vm586, %v573, 0
      %v600 = vsel %vm586, %v574, 0
      %v603 = vsel %vm586, %v575, 0
      %v606 = vsel %vm586, %v576, 0
      %v609 = vsel %vm586, %v577, 0
      %v612 = vsel %vm586, %v578, 0
      %v615 = vsel %vm586, %v579, 0
      %v618 = vsel %vm586, %v580, 0
      %v621 = vsel %vm586, %v581, 0
      %v624 = vsel %vm586, %v582, 0
      %v627 = vsel %vm586, %v583, 0
      %v630 = vsel %vm586, %v584, 0
      %v633 = vsel %vm586, %v585, 0
      %vm635 = vcmask 1043456
      %v637 = vsel %vm635, %v505, 0
      %639 = vmatpush.bf16.msra.mxu0 0
      %640 = vmatpush.bf16.msra.mxu0 0
      %641 = vmatpush.bf16.msra.mxu0 0
      %642 = vmatpush.bf16.msra.mxu0 0
      %643 = vmatpush.bf16.msra.mxu0 0
      %644 = vmatpush.bf16.msra.mxu0 0
      %645 = vmatpush.bf16.msra.mxu0 0
      %646 = vmatpush.bf16.msra.mxu0 %v637
      %647 = vmatmul.bf16.gmra.mxu0 %v588
      %v648 = vpop.f32.mrf.mxu0
      %v649 = vadd.f32 0.0, %v648
      %v650 = vpop.f32.mrf.mxu0
      %v651 = vadd.f32 0.0, %v650
      %652 = vmatmul.bf16.gmra.mxu0 %v591
      %v653 = vpop.f32.mrf.mxu0
      %v654 = vadd.f32 0.0, %v653
      %v655 = vpop.f32.mrf.mxu0
      %v656 = vadd.f32 0.0, %v655
      %657 = vmatmul.bf16.gmra.mxu0 %v594
      %v658 = vpop.f32.mrf.mxu0
      %v659 = vadd.f32 0.0, %v658
      %v660 = vpop.f32.mrf.mxu0
      %v661 = vadd.f32 0.0, %v660
      %662 = vmatmul.bf16.gmra.mxu0 %v597
      %v663 = vpop.f32.mrf.mxu0
      %v664 = vadd.f32 0.0, %v663
      %v665 = vpop.f32.mrf.mxu0
      %v666 = vadd.f32 0.0, %v665
      %667 = vmatmul.bf16.gmra.mxu0 %v600
      %v668 = vpop.f32.mrf.mxu0
      %v669 = vadd.f32 0.0, %v668
      %v670 = vpop.f32.mrf.mxu0
      %v671 = vadd.f32 0.0, %v670
      %672 = vmatmul.bf16.gmra.mxu0 %v603
      %v673 = vpop.f32.mrf.mxu0
      %v674 = vadd.f32 0.0, %v673
      %v675 = vpop.f32.mrf.mxu0
      %v676 = vadd.f32 0.0, %v675
      %677 = vmatmul.bf16.gmra.mxu0 %v606
      %v678 = vpop.f32.mrf.mxu0
      %v679 = vadd.f32 0.0, %v678
      %v680 = vpop.f32.mrf.mxu0
      %v681 = vadd.f32 0.0, %v680
      %682 = vmatmul.bf16.gmra.mxu0 %v609
      %v683 = vpop.f32.mrf.mxu0
      %v684 = vadd.f32 0.0, %v683
      %v685 = vpop.f32.mrf.mxu0
      %v686 = vadd.f32 0.0, %v685
      %687 = vmatmul.bf16.gmra.mxu0 %v612
      %v688 = vpop.f32.mrf.mxu0
      %v689 = vadd.f32 0.0, %v688
      %v690 = vpop.f32.mrf.mxu0
      %v691 = vadd.f32 0.0, %v690
      %692 = vmatmul.bf16.gmra.mxu0 %v615
      %v693 = vpop.f32.mrf.mxu0
      %v694 = vadd.f32 0.0, %v693
      %v695 = vpop.f32.mrf.mxu0
      %v696 = vadd.f32 0.0, %v695
      %697 = vmatmul.bf16.gmra.mxu0 %v618
      %v698 = vpop.f32.mrf.mxu0
      %v699 = vadd.f32 0.0, %v698
      %v700 = vpop.f32.mrf.mxu0
      %v701 = vadd.f32 0.0, %v700
      %702 = vmatmul.bf16.gmra.mxu0 %v621
      %v703 = vpop.f32.mrf.mxu0
      %v704 = vadd.f32 0.0, %v703
      %v705 = vpop.f32.mrf.mxu0
      %v706 = vadd.f32 0.0, %v705
      %707 = vmatmul.bf16.gmra.mxu0 %v624
      %v708 = vpop.f32.mrf.mxu0
      %v709 = vadd.f32 0.0, %v708
      %v710 = vpop.f32.mrf.mxu0
      %v711 = vadd.f32 0.0, %v710
      %712 = vmatmul.bf16.gmra.mxu0 %v627
      %v713 = vpop.f32.mrf.mxu0
      %v714 = vadd.f32 0.0, %v713
      %v715 = vpop.f32.mrf.mxu0
      %v716 = vadd.f32 0.0, %v715
      %717 = vmatmul.bf16.gmra.mxu0 %v630
      %v718 = vpop.f32.mrf.mxu0
      %v719 = vadd.f32 0.0, %v718
      %v720 = vpop.f32.mrf.mxu0
      %v721 = vadd.f32 0.0, %v720
      %722 = vmatmul.bf16.gmra.mxu0 %v633
      %v723 = vpop.f32.mrf.mxu0
      %v724 = vadd.f32 0.0, %v723
      %v725 = vpop.f32.mrf.mxu0
      %v726 = vadd.f32 0.0, %v725
      %727 = vdwg.mxu0
      %v760 = vunpack.c.l.b16 %v438
      %v761 = vunpack.c.l.b16 %v439
      %v762 = vunpack.c.l.b16 %v440
      %v763 = vunpack.c.l.b16 %v441
      %v764 = vunpack.c.l.b16 %v442
      %v765 = vunpack.c.l.b16 %v443
      %v766 = vunpack.c.l.b16 %v444
      %v767 = vunpack.c.l.b16 %v445
      %v768 = vunpack.c.l.b16 %v446
      %v769 = vunpack.c.l.b16 %v447
      %v770 = vunpack.c.l.b16 %v448
      %v771 = vunpack.c.l.b16 %v449
      %v772 = vunpack.c.l.b16 %v450
      %v773 = vunpack.c.l.b16 %v451
      %v774 = vunpack.c.l.b16 %v452
      %v775 = vunpack.c.l.b16 %v453
      %v776 = vunpack.c.l.b16 %v454
      %v777 = vunpack.c.l.b16 %v455
      %v778 = vunpack.c.l.b16 %v456
      %v779 = vunpack.c.l.b16 %v457
      %v780 = vunpack.c.l.b16 %v458
      %v781 = vunpack.c.l.b16 %v459
      %v782 = vunpack.c.l.b16 %v460
      %v783 = vunpack.c.l.b16 %v461
      %v784 = vunpack.c.l.b16 %v462
      %v785 = vunpack.c.l.b16 %v463
      %v786 = vunpack.c.l.b16 %v464
      %v787 = vunpack.c.l.b16 %v465
      %v788 = vunpack.c.l.b16 %v466
      %v789 = vunpack.c.l.b16 %v467
      %v790 = vunpack.c.l.b16 %v468
      %v791 = vunpack.c.l.b16 %v469
      %v792 = vpack.c.b16 %v761, %v760
      %v793 = vpack.c.b16 %v763, %v762
      %v794 = vpack.c.b16 %v765, %v764
      %v795 = vpack.c.b16 %v767, %v766
      %v796 = vpack.c.b16 %v769, %v768
      %v797 = vpack.c.b16 %v771, %v770
      %v798 = vpack.c.b16 %v773, %v772
      %v799 = vpack.c.b16 %v775, %v774
      %v800 = vpack.c.b16 %v777, %v776
      %v801 = vpack.c.b16 %v779, %v778
      %v802 = vpack.c.b16 %v781, %v780
      %v803 = vpack.c.b16 %v783, %v782
      %v804 = vpack.c.b16 %v785, %v784
      %v805 = vpack.c.b16 %v787, %v786
      %v806 = vpack.c.b16 %v789, %v788
      %v807 = vpack.c.b16 %v791, %v790
      %v809 = vsel %vm586, %v792, 0
      %v812 = vsel %vm586, %v793, 0
      %v815 = vsel %vm586, %v794, 0
      %v818 = vsel %vm586, %v795, 0
      %v821 = vsel %vm586, %v796, 0
      %v824 = vsel %vm586, %v797, 0
      %v827 = vsel %vm586, %v798, 0
      %v830 = vsel %vm586, %v799, 0
      %v833 = vsel %vm586, %v800, 0
      %v836 = vsel %vm586, %v801, 0
      %v839 = vsel %vm586, %v802, 0
      %v842 = vsel %vm586, %v803, 0
      %v845 = vsel %vm586, %v804, 0
      %v848 = vsel %vm586, %v805, 0
      %v851 = vsel %vm586, %v806, 0
      %v854 = vsel %vm586, %v807, 0
      %v857 = vsel %vm635, %v470, 0
      %859 = vmatpush.bf16.msra.mxu0 0
      %860 = vmatpush.bf16.msra.mxu0 0
      %861 = vmatpush.bf16.msra.mxu0 0
      %862 = vmatpush.bf16.msra.mxu0 0
      %863 = vmatpush.bf16.msra.mxu0 0
      %864 = vmatpush.bf16.msra.mxu0 0
      %865 = vmatpush.bf16.msra.mxu0 0
      %866 = vmatpush.bf16.msra.mxu0 %v857
      %867 = vmatmul.bf16.gmra.mxu0 %v809
      %v868 = vpop.f32.mrf.mxu0
      %v869 = vadd.f32 %v649, %v868
      %v870 = vpop.f32.mrf.mxu0
      %v871 = vadd.f32 %v651, %v870
      %872 = vmatmul.bf16.gmra.mxu0 %v812
      %v873 = vpop.f32.mrf.mxu0
      %v874 = vadd.f32 %v654, %v873
      %v875 = vpop.f32.mrf.mxu0
      %v876 = vadd.f32 %v656, %v875
      %877 = vmatmul.bf16.gmra.mxu0 %v815
      %v878 = vpop.f32.mrf.mxu0
      %v879 = vadd.f32 %v659, %v878
      %v880 = vpop.f32.mrf.mxu0
      %v881 = vadd.f32 %v661, %v880
      %882 = vmatmul.bf16.gmra.mxu0 %v818
      %v883 = vpop.f32.mrf.mxu0
      %v884 = vadd.f32 %v664, %v883
      %v885 = vpop.f32.mrf.mxu0
      %v886 = vadd.f32 %v666, %v885
      %887 = vmatmul.bf16.gmra.mxu0 %v821
      %v888 = vpop.f32.mrf.mxu0
      %v889 = vadd.f32 %v669, %v888
      %v890 = vpop.f32.mrf.mxu0
      %v891 = vadd.f32 %v671, %v890
      %892 = vmatmul.bf16.gmra.mxu0 %v824
      %v893 = vpop.f32.mrf.mxu0
      %v894 = vadd.f32 %v674, %v893
      %v895 = vpop.f32.mrf.mxu0
      %v896 = vadd.f32 %v676, %v895
      %897 = vmatmul.bf16.gmra.mxu0 %v827
      %v898 = vpop.f32.mrf.mxu0
      %v899 = vadd.f32 %v679, %v898
      %v900 = vpop.f32.mrf.mxu0
      %v901 = vadd.f32 %v681, %v900
      %902 = vmatmul.bf16.gmra.mxu0 %v830
      %v903 = vpop.f32.mrf.mxu0
      %v904 = vadd.f32 %v684, %v903
      %v905 = vpop.f32.mrf.mxu0
      %v906 = vadd.f32 %v686, %v905
      %907 = vmatmul.bf16.gmra.mxu0 %v833
      %v908 = vpop.f32.mrf.mxu0
      %v909 = vadd.f32 %v689, %v908
      %v910 = vpop.f32.mrf.mxu0
      %v911 = vadd.f32 %v691, %v910
      %912 = vmatmul.bf16.gmra.mxu0 %v836
      %v913 = vpop.f32.mrf.mxu0
      %v914 = vadd.f32 %v694, %v913
      %v915 = vpop.f32.mrf.mxu0
      %v916 = vadd.f32 %v696, %v915
      %917 = vmatmul.bf16.gmra.mxu0 %v839
      %v918 = vpop.f32.mrf.mxu0
      %v919 = vadd.f32 %v699, %v918
      %v920 = vpop.f32.mrf.mxu0
      %v921 = vadd.f32 %v701, %v920
      %922 = vmatmul.bf16.gmra.mxu0 %v842
      %v923 = vpop.f32.mrf.mxu0
      %v924 = vadd.f32 %v704, %v923
      %v925 = vpop.f32.mrf.mxu0
      %v926 = vadd.f32 %v706, %v925
      %927 = vmatmul.bf16.gmra.mxu0 %v845
      %v928 = vpop.f32.mrf.mxu0
      %v929 = vadd.f32 %v709, %v928
      %v930 = vpop.f32.mrf.mxu0
      %v931 = vadd.f32 %v711, %v930
      %932 = vmatmul.bf16.gmra.mxu0 %v848
      %v933 = vpop.f32.mrf.mxu0
      %v934 = vadd.f32 %v714, %v933
      %v935 = vpop.f32.mrf.mxu0
      %v936 = vadd.f32 %v716, %v935
      %937 = vmatmul.bf16.gmra.mxu0 %v851
      %v938 = vpop.f32.mrf.mxu0
      %v939 = vadd.f32 %v719, %v938
      %v940 = vpop.f32.mrf.mxu0
      %v941 = vadd.f32 %v721, %v940
      %942 = vmatmul.bf16.gmra.mxu0 %v854
      %v943 = vpop.f32.mrf.mxu0
      %v944 = vadd.f32 %v724, %v943
      %v945 = vpop.f32.mrf.mxu0
      %v946 = vadd.f32 %v726, %v945
      %947 = vdwg.mxu0
      %s948 = scalar_lea.vmem %s359, 16
      %v949 = vld [vmem:[%s948] sm:$0xf]
      %v950 = vld [vmem:[%s948 + $0x4] sm:$0xf]
      %v951 = vld [vmem:[%s948 + $0x8] sm:$0xf]
      %v952 = vld [vmem:[%s948 + $0xc] sm:$0xf]
      %v953 = vld [vmem:[%s948 + $0x10] sm:$0xf]
      %v954 = vld [vmem:[%s948 + $0x14] sm:$0xf]
      %v955 = vld [vmem:[%s948 + $0x18] sm:$0xf]
      %v956 = vld [vmem:[%s948 + $0x1c] sm:$0xf]
      %v957 = vld [vmem:[%s948 + $0x20] sm:$0xf]
      %v958 = vld [vmem:[%s948 + $0x24] sm:$0xf]
      %v959 = vld [vmem:[%s948 + $0x28] sm:$0xf]
      %v960 = vld [vmem:[%s948 + $0x2c] sm:$0xf]
      %v961 = vld [vmem:[%s948 + $0x30] sm:$0xf]
      %v962 = vld [vmem:[%s948 + $0x34] sm:$0xf]
      %v963 = vld [vmem:[%s948 + $0x38] sm:$0xf]
      %v964 = vld [vmem:[%s948 + $0x3c] sm:$0xf]
      %v965 = vld [vmem:[%s948 + $0x40] sm:$0xf]
      %v966 = vld [vmem:[%s948 + $0x44] sm:$0xf]
      %v967 = vld [vmem:[%s948 + $0x48] sm:$0xf]
      %v968 = vld [vmem:[%s948 + $0x4c] sm:$0xf]
      %v969 = vld [vmem:[%s948 + $0x50] sm:$0xf]
      %v970 = vld [vmem:[%s948 + $0x54] sm:$0xf]
      %v971 = vld [vmem:[%s948 + $0x58] sm:$0xf]
      %v972 = vld [vmem:[%s948 + $0x5c] sm:$0xf]
      %v973 = vld [vmem:[%s948 + $0x60] sm:$0xf]
      %v974 = vld [vmem:[%s948 + $0x64] sm:$0xf]
      %v975 = vld [vmem:[%s948 + $0x68] sm:$0xf]
      %v976 = vld [vmem:[%s948 + $0x6c] sm:$0xf]
      %v977 = vld [vmem:[%s948 + $0x70] sm:$0xf]
      %v978 = vld [vmem:[%s948 + $0x74] sm:$0xf]
      %v979 = vld [vmem:[%s948 + $0x78] sm:$0xf]
      %v980 = vld [vmem:[%s948 + $0x7c] sm:$0xf]
      %s981 = scalar_lea.vmem %s367, 8
      %v982 = vld [vmem:[%s981] sm:$0xf]
      %v1015 = vunpack.c.l.b16 %v949
      %v1016 = vunpack.c.l.b16 %v950
      %v1017 = vunpack.c.l.b16 %v951
      %v1018 = vunpack.c.l.b16 %v952
      %v1019 = vunpack.c.l.b16 %v953
      %v1020 = vunpack.c.l.b16 %v954
      %v1021 = vunpack.c.l.b16 %v955
      %v1022 = vunpack.c.l.b16 %v956
      %v1023 = vunpack.c.l.b16 %v957
      %v1024 = vunpack.c.l.b16 %v958
      %v1025 = vunpack.c.l.b16 %v959
      %v1026 = vunpack.c.l.b16 %v960
      %v1027 = vunpack.c.l.b16 %v961
      %v1028 = vunpack.c.l.b16 %v962
      %v1029 = vunpack.c.l.b16 %v963
      %v1030 = vunpack.c.l.b16 %v964
      %v1031 = vunpack.c.l.b16 %v965
      %v1032 = vunpack.c.l.b16 %v966
      %v1033 = vunpack.c.l.b16 %v967
      %v1034 = vunpack.c.l.b16 %v968
      %v1035 = vunpack.c.l.b16 %v969
      %v1036 = vunpack.c.l.b16 %v970
      %v1037 = vunpack.c.l.b16 %v971
      %v1038 = vunpack.c.l.b16 %v972
      %v1039 = vunpack.c.l.b16 %v973
      %v1040 = vunpack.c.l.b16 %v974
      %v1041 = vunpack.c.l.b16 %v975
      %v1042 = vunpack.c.l.b16 %v976
      %v1043 = vunpack.c.l.b16 %v977
      %v1044 = vunpack.c.l.b16 %v978
      %v1045 = vunpack.c.l.b16 %v979
      %v1046 = vunpack.c.l.b16 %v980
      %v1047 = vpack.c.b16 %v1016, %v1015
      %v1048 = vpack.c.b16 %v1018, %v1017
      %v1049 = vpack.c.b16 %v1020, %v1019
      %v1050 = vpack.c.b16 %v1022, %v1021
      %v1051 = vpack.c.b16 %v1024, %v1023
      %v1052 = vpack.c.b16 %v1026, %v1025
      %v1053 = vpack.c.b16 %v1028, %v1027
      %v1054 = vpack.c.b16 %v1030, %v1029
      %v1055 = vpack.c.b16 %v1032, %v1031
      %v1056 = vpack.c.b16 %v1034, %v1033
      %v1057 = vpack.c.b16 %v1036, %v1035
      %v1058 = vpack.c.b16 %v1038, %v1037
      %v1059 = vpack.c.b16 %v1040, %v1039
      %v1060 = vpack.c.b16 %v1042, %v1041
      %v1061 = vpack.c.b16 %v1044, %v1043
      %v1062 = vpack.c.b16 %v1046, %v1045
      %v1064 = vsel %vm586, %v1047, 0
      %v1067 = vsel %vm586, %v1048, 0
      %v1070 = vsel %vm586, %v1049, 0
      %v1073 = vsel %vm586, %v1050, 0
      %v1076 = vsel %vm586, %v1051, 0
      %v1079 = vsel %vm586, %v1052, 0
      %v1082 = vsel %vm586, %v1053, 0
      %v1085 = vsel %vm586, %v1054, 0
      %v1088 = vsel %vm586, %v1055, 0
      %v1091 = vsel %vm586, %v1056, 0
      %v1094 = vsel %vm586, %v1057, 0
      %v1097 = vsel %vm586, %v1058, 0
      %v1100 = vsel %vm586, %v1059, 0
      %v1103 = vsel %vm586, %v1060, 0
      %v1106 = vsel %vm586, %v1061, 0
      %v1109 = vsel %vm586, %v1062, 0
      %v1112 = vsel %vm635, %v982, 0
      %1114 = vmatpush.bf16.msra.mxu0 0
      %1115 = vmatpush.bf16.msra.mxu0 0
      %1116 = vmatpush.bf16.msra.mxu0 0
      %1117 = vmatpush.bf16.msra.mxu0 0
      %1118 = vmatpush.bf16.msra.mxu0 0
      %1119 = vmatpush.bf16.msra.mxu0 0
      %1120 = vmatpush.bf16.msra.mxu0 0
      %1121 = vmatpush.bf16.msra.mxu0 %v1112
      %1122 = vmatmul.bf16.gmra.mxu0 %v1064
      %v1123 = vpop.f32.mrf.mxu0
      %v1124 = vadd.f32 0.0, %v1123
      %v1125 = vpop.f32.mrf.mxu0
      %v1126 = vadd.f32 0.0, %v1125
      %1127 = vmatmul.bf16.gmra.mxu0 %v1067
      %v1128 = vpop.f32.mrf.mxu0
      %v1129 = vadd.f32 0.0, %v1128
      %v1130 = vpop.f32.mrf.mxu0
      %v1131 = vadd.f32 0.0, %v1130
      %1132 = vmatmul.bf16.gmra.mxu0 %v1070
      %v1133 = vpop.f32.mrf.mxu0
      %v1134 = vadd.f32 0.0, %v1133
      %v1135 = vpop.f32.mrf.mxu0
      %v1136 = vadd.f32 0.0, %v1135
      %1137 = vmatmul.bf16.gmra.mxu0 %v1073
      %v1138 = vpop.f32.mrf.mxu0
      %v1139 = vadd.f32 0.0, %v1138
      %v1140 = vpop.f32.mrf.mxu0
      %v1141 = vadd.f32 0.0, %v1140
      %1142 = vmatmul.bf16.gmra.mxu0 %v1076
      %v1143 = vpop.f32.mrf.mxu0
      %v1144 = vadd.f32 0.0, %v1143
      %v1145 = vpop.f32.mrf.mxu0
      %v1146 = vadd.f32 0.0, %v1145
      %1147 = vmatmul.bf16.gmra.mxu0 %v1079
      %v1148 = vpop.f32.mrf.mxu0
      %v1149 = vadd.f32 0.0, %v1148
      %v1150 = vpop.f32.mrf.mxu0
      %v1151 = vadd.f32 0.0, %v1150
      %1152 = vmatmul.bf16.gmra.mxu0 %v1082
      %v1153 = vpop.f32.mrf.mxu0
      %v1154 = vadd.f32 0.0, %v1153
      %v1155 = vpop.f32.mrf.mxu0
      %v1156 = vadd.f32 0.0, %v1155
      %1157 = vmatmul.bf16.gmra.mxu0 %v1085
      %v1158 = vpop.f32.mrf.mxu0
      %v1159 = vadd.f32 0.0, %v1158
      %v1160 = vpop.f32.mrf.mxu0
      %v1161 = vadd.f32 0.0, %v1160
      %1162 = vmatmul.bf16.gmra.mxu0 %v1088
      %v1163 = vpop.f32.mrf.mxu0
      %v1164 = vadd.f32 0.0, %v1163
      %v1165 = vpop.f32.mrf.mxu0
      %v1166 = vadd.f32 0.0, %v1165
      %1167 = vmatmul.bf16.gmra.mxu0 %v1091
      %v1168 = vpop.f32.mrf.mxu0
      %v1169 = vadd.f32 0.0, %v1168
      %v1170 = vpop.f32.mrf.mxu0
      %v1171 = vadd.f32 0.0, %v1170
      %1172 = vmatmul.bf16.gmra.mxu0 %v1094
      %v1173 = vpop.f32.mrf.mxu0
      %v1174 = vadd.f32 0.0, %v1173
      %v1175 = vpop.f32.mrf.mxu0
      %v1176 = vadd.f32 0.0, %v1175
      %1177 = vmatmul.bf16.gmra.mxu0 %v1097
      %v1178 = vpop.f32.mrf.mxu0
      %v1179 = vadd.f32 0.0, %v1178
      %v1180 = vpop.f32.mrf.mxu0
      %v1181 = vadd.f32 0.0, %v1180
      %1182 = vmatmul.bf16.gmra.mxu0 %v1100
      %v1183 = vpop.f32.mrf.mxu0
      %v1184 = vadd.f32 0.0, %v1183
      %v1185 = vpop.f32.mrf.mxu0
      %v1186 = vadd.f32 0.0, %v1185
      %1187 = vmatmul.bf16.gmra.mxu0 %v1103
      %v1188 = vpop.f32.mrf.mxu0
      %v1189 = vadd.f32 0.0, %v1188
      %v1190 = vpop.f32.mrf.mxu0
      %v1191 = vadd.f32 0.0, %v1190
      %1192 = vmatmul.bf16.gmra.mxu0 %v1106
      %v1193 = vpop.f32.mrf.mxu0
      %v1194 = vadd.f32 0.0, %v1193
      %v1195 = vpop.f32.mrf.mxu0
      %v1196 = vadd.f32 0.0, %v1195
      %1197 = vmatmul.bf16.gmra.mxu0 %v1109
      %v1198 = vpop.f32.mrf.mxu0
      %v1199 = vadd.f32 0.0, %v1198
      %v1200 = vpop.f32.mrf.mxu0
      %v1201 = vadd.f32 0.0, %v1200
      %1202 = vdwg.mxu0
      %v1203 = vadd.f32 %v869, %v1124
      %v1204 = vadd.f32 %v871, %v1126
      %v1205 = vadd.f32 %v874, %v1129
      %v1206 = vadd.f32 %v876, %v1131
      %v1207 = vadd.f32 %v879, %v1134
      %v1208 = vadd.f32 %v881, %v1136
      %v1209 = vadd.f32 %v884, %v1139
      %v1210 = vadd.f32 %v886, %v1141
      %v1211 = vadd.f32 %v889, %v1144
      %v1212 = vadd.f32 %v891, %v1146
      %v1213 = vadd.f32 %v894, %v1149
      %v1214 = vadd.f32 %v896, %v1151
      %v1215 = vadd.f32 %v899, %v1154
      %v1216 = vadd.f32 %v901, %v1156
      %v1217 = vadd.f32 %v904, %v1159
      %v1218 = vadd.f32 %v906, %v1161
      %v1219 = vadd.f32 %v909, %v1164
      %v1220 = vadd.f32 %v911, %v1166
      %v1221 = vadd.f32 %v914, %v1169
      %v1222 = vadd.f32 %v916, %v1171
      %v1223 = vadd.f32 %v919, %v1174
      %v1224 = vadd.f32 %v921, %v1176
      %v1225 = vadd.f32 %v924, %v1179
      %v1226 = vadd.f32 %v926, %v1181
      %v1227 = vadd.f32 %v929, %v1184
      %v1228 = vadd.f32 %v931, %v1186
      %v1229 = vadd.f32 %v934, %v1189
      %v1230 = vadd.f32 %v936, %v1191
      %v1231 = vadd.f32 %v939, %v1194
      %v1232 = vadd.f32 %v941, %v1196
      %v1233 = vadd.f32 %v944, %v1199
      %v1234 = vadd.f32 %v946, %v1201
      %s1235 = scalar_lea.vmem %s359, 24
      %v1236 = vld [vmem:[%s1235] sm:$0xf]
      %v1237 = vld [vmem:[%s1235 + $0x4] sm:$0xf]
      %v1238 = vld [vmem:[%s1235 + $0x8] sm:$0xf]
      %v1239 = vld [vmem:[%s1235 + $0xc] sm:$0xf]
      %v1240 = vld [vmem:[%s1235 + $0x10] sm:$0xf]
      %v1241 = vld [vmem:[%s1235 + $0x14] sm:$0xf]
      %v1242 = vld [vmem:[%s1235 + $0x18] sm:$0xf]
      %v1243 = vld [vmem:[%s1235 + $0x1c] sm:$0xf]
      %v1244 = vld [vmem:[%s1235 + $0x20] sm:$0xf]
      %v1245 = vld [vmem:[%s1235 + $0x24] sm:$0xf]
      %v1246 = vld [vmem:[%s1235 + $0x28] sm:$0xf]
      %v1247 = vld [vmem:[%s1235 + $0x2c] sm:$0xf]
      %v1248 = vld [vmem:[%s1235 + $0x30] sm:$0xf]
      %v1249 = vld [vmem:[%s1235 + $0x34] sm:$0xf]
      %v1250 = vld [vmem:[%s1235 + $0x38] sm:$0xf]
      %v1251 = vld [vmem:[%s1235 + $0x3c] sm:$0xf]
      %v1252 = vld [vmem:[%s1235 + $0x40] sm:$0xf]
      %v1253 = vld [vmem:[%s1235 + $0x44] sm:$0xf]
      %v1254 = vld [vmem:[%s1235 + $0x48] sm:$0xf]
      %v1255 = vld [vmem:[%s1235 + $0x4c] sm:$0xf]
      %v1256 = vld [vmem:[%s1235 + $0x50] sm:$0xf]
      %v1257 = vld [vmem:[%s1235 + $0x54] sm:$0xf]
      %v1258 = vld [vmem:[%s1235 + $0x58] sm:$0xf]
      %v1259 = vld [vmem:[%s1235 + $0x5c] sm:$0xf]
      %v1260 = vld [vmem:[%s1235 + $0x60] sm:$0xf]
      %v1261 = vld [vmem:[%s1235 + $0x64] sm:$0xf]
      %v1262 = vld [vmem:[%s1235 + $0x68] sm:$0xf]
      %v1263 = vld [vmem:[%s1235 + $0x6c] sm:$0xf]
      %v1264 = vld [vmem:[%s1235 + $0x70] sm:$0xf]
      %v1265 = vld [vmem:[%s1235 + $0x74] sm:$0xf]
      %v1266 = vld [vmem:[%s1235 + $0x78] sm:$0xf]
      %v1267 = vld [vmem:[%s1235 + $0x7c] sm:$0xf]
      %s1268 = scalar_lea.vmem %s367, 12
      %v1269 = vld [vmem:[%s1268] sm:$0xf]
      %v1302 = vunpack.c.l.b16 %v1236
      %v1303 = vunpack.c.l.b16 %v1237
      %v1304 = vunpack.c.l.b16 %v1238
      %v1305 = vunpack.c.l.b16 %v1239
      %v1306 = vunpack.c.l.b16 %v1240
      %v1307 = vunpack.c.l.b16 %v1241
      %v1308 = vunpack.c.l.b16 %v1242
      %v1309 = vunpack.c.l.b16 %v1243
      %v1310 = vunpack.c.l.b16 %v1244
      %v1311 = vunpack.c.l.b16 %v1245
      %v1312 = vunpack.c.l.b16 %v1246
      %v1313 = vunpack.c.l.b16 %v1247
      %v1314 = vunpack.c.l.b16 %v1248
      %v1315 = vunpack.c.l.b16 %v1249
      %v1316 = vunpack.c.l.b16 %v1250
      %v1317 = vunpack.c.l.b16 %v1251
      %v1318 = vunpack.c.l.b16 %v1252
      %v1319 = vunpack.c.l.b16 %v1253
      %v1320 = vunpack.c.l.b16 %v1254
      %v1321 = vunpack.c.l.b16 %v1255
      %v1322 = vunpack.c.l.b16 %v1256
      %v1323 = vunpack.c.l.b16 %v1257
      %v1324 = vunpack.c.l.b16 %v1258
      %v1325 = vunpack.c.l.b16 %v1259
      %v1326 = vunpack.c.l.b16 %v1260
      %v1327 = vunpack.c.l.b16 %v1261
      %v1328 = vunpack.c.l.b16 %v1262
      %v1329 = vunpack.c.l.b16 %v1263
      %v1330 = vunpack.c.l.b16 %v1264
      %v1331 = vunpack.c.l.b16 %v1265
      %v1332 = vunpack.c.l.b16 %v1266
      %v1333 = vunpack.c.l.b16 %v1267
      %v1334 = vpack.c.b16 %v1303, %v1302
      %v1335 = vpack.c.b16 %v1305, %v1304
      %v1336 = vpack.c.b16 %v1307, %v1306
      %v1337 = vpack.c.b16 %v1309, %v1308
      %v1338 = vpack.c.b16 %v1311, %v1310
      %v1339 = vpack.c.b16 %v1313, %v1312
      %v1340 = vpack.c.b16 %v1315, %v1314
      %v1341 = vpack.c.b16 %v1317, %v1316
      %v1342 = vpack.c.b16 %v1319, %v1318
      %v1343 = vpack.c.b16 %v1321, %v1320
      %v1344 = vpack.c.b16 %v1323, %v1322
      %v1345 = vpack.c.b16 %v1325, %v1324
      %v1346 = vpack.c.b16 %v1327, %v1326
      %v1347 = vpack.c.b16 %v1329, %v1328
      %v1348 = vpack.c.b16 %v1331, %v1330
      %v1349 = vpack.c.b16 %v1333, %v1332
      %v1351 = vsel %vm586, %v1334, 0
      %v1354 = vsel %vm586, %v1335, 0
      %v1357 = vsel %vm586, %v1336, 0
      %v1360 = vsel %vm586, %v1337, 0
      %v1363 = vsel %vm586, %v1338, 0
      %v1366 = vsel %vm586, %v1339, 0
      %v1369 = vsel %vm586, %v1340, 0
      %v1372 = vsel %vm586, %v1341, 0
      %v1375 = vsel %vm586, %v1342, 0
      %v1378 = vsel %vm586, %v1343, 0
      %v1381 = vsel %vm586, %v1344, 0
      %v1384 = vsel %vm586, %v1345, 0
      %v1387 = vsel %vm586, %v1346, 0
      %v1390 = vsel %vm586, %v1347, 0
      %v1393 = vsel %vm586, %v1348, 0
      %v1396 = vsel %vm586, %v1349, 0
      %v1399 = vsel %vm635, %v1269, 0
      %1401 = vmatpush.bf16.msra.mxu0 0
      %1402 = vmatpush.bf16.msra.mxu0 0
      %1403 = vmatpush.bf16.msra.mxu0 0
      %1404 = vmatpush.bf16.msra.mxu0 0
      %1405 = vmatpush.bf16.msra.mxu0 0
      %1406 = vmatpush.bf16.msra.mxu0 0
      %1407 = vmatpush.bf16.msra.mxu0 0
      %1408 = vmatpush.bf16.msra.mxu0 %v1399
      %1409 = vmatmul.bf16.gmra.mxu0 %v1351
      %v1410 = vpop.f32.mrf.mxu0
      %v1411 = vadd.f32 0.0, %v1410
      %v1412 = vpop.f32.mrf.mxu0
      %v1413 = vadd.f32 0.0, %v1412
      %1414 = vmatmul.bf16.gmra.mxu0 %v1354
      %v1415 = vpop.f32.mrf.mxu0
      %v1416 = vadd.f32 0.0, %v1415
      %v1417 = vpop.f32.mrf.mxu0
      %v1418 = vadd.f32 0.0, %v1417
      %1419 = vmatmul.bf16.gmra.mxu0 %v1357
      %v1420 = vpop.f32.mrf.mxu0
      %v1421 = vadd.f32 0.0, %v1420
      %v1422 = vpop.f32.mrf.mxu0
      %v1423 = vadd.f32 0.0, %v1422
      %1424 = vmatmul.bf16.gmra.mxu0 %v1360
      %v1425 = vpop.f32.mrf.mxu0
      %v1426 = vadd.f32 0.0, %v1425
      %v1427 = vpop.f32.mrf.mxu0
      %v1428 = vadd.f32 0.0, %v1427
      %1429 = vmatmul.bf16.gmra.mxu0 %v1363
      %v1430 = vpop.f32.mrf.mxu0
      %v1431 = vadd.f32 0.0, %v1430
      %v1432 = vpop.f32.mrf.mxu0
      %v1433 = vadd.f32 0.0, %v1432
      %1434 = vmatmul.bf16.gmra.mxu0 %v1366
      %v1435 = vpop.f32.mrf.mxu0
      %v1436 = vadd.f32 0.0, %v1435
      %v1437 = vpop.f32.mrf.mxu0
      %v1438 = vadd.f32 0.0, %v1437
      %1439 = vmatmul.bf16.gmra.mxu0 %v1369
      %v1440 = vpop.f32.mrf.mxu0
      %v1441 = vadd.f32 0.0, %v1440
      %v1442 = vpop.f32.mrf.mxu0
      %v1443 = vadd.f32 0.0, %v1442
      %1444 = vmatmul.bf16.gmra.mxu0 %v1372
      %v1445 = vpop.f32.mrf.mxu0
      %v1446 = vadd.f32 0.0, %v1445
      %v1447 = vpop.f32.mrf.mxu0
      %v1448 = vadd.f32 0.0, %v1447
      %1449 = vmatmul.bf16.gmra.mxu0 %v1375
      %v1450 = vpop.f32.mrf.mxu0
      %v1451 = vadd.f32 0.0, %v1450
      %v1452 = vpop.f32.mrf.mxu0
      %v1453 = vadd.f32 0.0, %v1452
      %1454 = vmatmul.bf16.gmra.mxu0 %v1378
      %v1455 = vpop.f32.mrf.mxu0
      %v1456 = vadd.f32 0.0, %v1455
      %v1457 = vpop.f32.mrf.mxu0
      %v1458 = vadd.f32 0.0, %v1457
      %1459 = vmatmul.bf16.gmra.mxu0 %v1381
      %v1460 = vpop.f32.mrf.mxu0
      %v1461 = vadd.f32 0.0, %v1460
      %v1462 = vpop.f32.mrf.mxu0
      %v1463 = vadd.f32 0.0, %v1462
      %1464 = vmatmul.bf16.gmra.mxu0 %v1384
      %v1465 = vpop.f32.mrf.mxu0
      %v1466 = vadd.f32 0.0, %v1465
      %v1467 = vpop.f32.mrf.mxu0
      %v1468 = vadd.f32 0.0, %v1467
      %1469 = vmatmul.bf16.gmra.mxu0 %v1387
      %v1470 = vpop.f32.mrf.mxu0
      %v1471 = vadd.f32 0.0, %v1470
      %v1472 = vpop.f32.mrf.mxu0
      %v1473 = vadd.f32 0.0, %v1472
      %1474 = vmatmul.bf16.gmra.mxu0 %v1390
      %v1475 = vpop.f32.mrf.mxu0
      %v1476 = vadd.f32 0.0, %v1475
      %v1477 = vpop.f32.mrf.mxu0
      %v1478 = vadd.f32 0.0, %v1477
      %1479 = vmatmul.bf16.gmra.mxu0 %v1393
      %v1480 = vpop.f32.mrf.mxu0
      %v1481 = vadd.f32 0.0, %v1480
      %v1482 = vpop.f32.mrf.mxu0
      %v1483 = vadd.f32 0.0, %v1482
      %1484 = vmatmul.bf16.gmra.mxu0 %v1396
      %v1485 = vpop.f32.mrf.mxu0
      %v1486 = vadd.f32 0.0, %v1485
      %v1487 = vpop.f32.mrf.mxu0
      %v1488 = vadd.f32 0.0, %v1487
      %1489 = vdwg.mxu0
      %v1490 = vadd.f32 %v1203, %v1411
      %v1491 = vadd.f32 %v1204, %v1413
      %v1492 = vadd.f32 %v1205, %v1416
      %v1493 = vadd.f32 %v1206, %v1418
      %v1494 = vadd.f32 %v1207, %v1421
      %v1495 = vadd.f32 %v1208, %v1423
      %v1496 = vadd.f32 %v1209, %v1426
      %v1497 = vadd.f32 %v1210, %v1428
      %v1498 = vadd.f32 %v1211, %v1431
      %v1499 = vadd.f32 %v1212, %v1433
      %v1500 = vadd.f32 %v1213, %v1436
      %v1501 = vadd.f32 %v1214, %v1438
      %v1502 = vadd.f32 %v1215, %v1441
      %v1503 = vadd.f32 %v1216, %v1443
      %v1504 = vadd.f32 %v1217, %v1446
      %v1505 = vadd.f32 %v1218, %v1448
      %v1506 = vadd.f32 %v1219, %v1451
      %v1507 = vadd.f32 %v1220, %v1453
      %v1508 = vadd.f32 %v1221, %v1456
      %v1509 = vadd.f32 %v1222, %v1458
      %v1510 = vadd.f32 %v1223, %v1461
      %v1511 = vadd.f32 %v1224, %v1463
      %v1512 = vadd.f32 %v1225, %v1466
      %v1513 = vadd.f32 %v1226, %v1468
      %v1514 = vadd.f32 %v1227, %v1471
      %v1515 = vadd.f32 %v1228, %v1473
      %v1516 = vadd.f32 %v1229, %v1476
      %v1517 = vadd.f32 %v1230, %v1478
      %v1518 = vadd.f32 %v1231, %v1481
      %v1519 = vadd.f32 %v1232, %v1483
      %v1520 = vadd.f32 %v1233, %v1486
      %v1521 = vadd.f32 %v1234, %v1488
      %s1522 = scalar_lea.vmem %s359, 32
      %v1523 = vld [vmem:[%s1522] sm:$0xf]
      %v1524 = vld [vmem:[%s1522 + $0x4] sm:$0xf]
      %v1525 = vld [vmem:[%s1522 + $0x8] sm:$0xf]
      %v1526 = vld [vmem:[%s1522 + $0xc] sm:$0xf]
      %v1527 = vld [vmem:[%s1522 + $0x10] sm:$0xf]
      %v1528 = vld [vmem:[%s1522 + $0x14] sm:$0xf]
      %v1529 = vld [vmem:[%s1522 + $0x18] sm:$0xf]
      %v1530 = vld [vmem:[%s1522 + $0x1c] sm:$0xf]
      %v1531 = vld [vmem:[%s1522 + $0x20] sm:$0xf]
      %v1532 = vld [vmem:[%s1522 + $0x24] sm:$0xf]
      %v1533 = vld [vmem:[%s1522 + $0x28] sm:$0xf]
      %v1534 = vld [vmem:[%s1522 + $0x2c] sm:$0xf]
      %v1535 = vld [vmem:[%s1522 + $0x30] sm:$0xf]
      %v1536 = vld [vmem:[%s1522 + $0x34] sm:$0xf]
      %v1537 = vld [vmem:[%s1522 + $0x38] sm:$0xf]
      %v1538 = vld [vmem:[%s1522 + $0x3c] sm:$0xf]
      %v1539 = vld [vmem:[%s1522 + $0x40] sm:$0xf]
      %v1540 = vld [vmem:[%s1522 + $0x44] sm:$0xf]
      %v1541 = vld [vmem:[%s1522 + $0x48] sm:$0xf]
      %v1542 = vld [vmem:[%s1522 + $0x4c] sm:$0xf]
      %v1543 = vld [vmem:[%s1522 + $0x50] sm:$0xf]
      %v1544 = vld [vmem:[%s1522 + $0x54] sm:$0xf]
      %v1545 = vld [vmem:[%s1522 + $0x58] sm:$0xf]
      %v1546 = vld [vmem:[%s1522 + $0x5c] sm:$0xf]
      %v1547 = vld [vmem:[%s1522 + $0x60] sm:$0xf]
      %v1548 = vld [vmem:[%s1522 + $0x64] sm:$0xf]
      %v1549 = vld [vmem:[%s1522 + $0x68] sm:$0xf]
      %v1550 = vld [vmem:[%s1522 + $0x6c] sm:$0xf]
      %v1551 = vld [vmem:[%s1522 + $0x70] sm:$0xf]
      %v1552 = vld [vmem:[%s1522 + $0x74] sm:$0xf]
      %v1553 = vld [vmem:[%s1522 + $0x78] sm:$0xf]
      %v1554 = vld [vmem:[%s1522 + $0x7c] sm:$0xf]
      %s1555 = scalar_lea.vmem %s367, 16
      %v1556 = vld [vmem:[%s1555] sm:$0xf]
      %v1589 = vunpack.c.l.b16 %v1523
      %v1590 = vunpack.c.l.b16 %v1524
      %v1591 = vunpack.c.l.b16 %v1525
      %v1592 = vunpack.c.l.b16 %v1526
      %v1593 = vunpack.c.l.b16 %v1527
      %v1594 = vunpack.c.l.b16 %v1528
      %v1595 = vunpack.c.l.b16 %v1529
      %v1596 = vunpack.c.l.b16 %v1530
      %v1597 = vunpack.c.l.b16 %v1531
      %v1598 = vunpack.c.l.b16 %v1532
      %v1599 = vunpack.c.l.b16 %v1533
      %v1600 = vunpack.c.l.b16 %v1534
      %v1601 = vunpack.c.l.b16 %v1535
      %v1602 = vunpack.c.l.b16 %v1536
      %v1603 = vunpack.c.l.b16 %v1537
      %v1604 = vunpack.c.l.b16 %v1538
      %v1605 = vunpack.c.l.b16 %v1539
      %v1606 = vunpack.c.l.b16 %v1540
      %v1607 = vunpack.c.l.b16 %v1541
      %v1608 = vunpack.c.l.b16 %v1542
      %v1609 = vunpack.c.l.b16 %v1543
      %v1610 = vunpack.c.l.b16 %v1544
      %v1611 = vunpack.c.l.b16 %v1545
      %v1612 = vunpack.c.l.b16 %v1546
      %v1613 = vunpack.c.l.b16 %v1547
      %v1614 = vunpack.c.l.b16 %v1548
      %v1615 = vunpack.c.l.b16 %v1549
      %v1616 = vunpack.c.l.b16 %v1550
      %v1617 = vunpack.c.l.b16 %v1551
      %v1618 = vunpack.c.l.b16 %v1552
      %v1619 = vunpack.c.l.b16 %v1553
      %v1620 = vunpack.c.l.b16 %v1554
      %v1621 = vpack.c.b16 %v1590, %v1589
      %v1622 = vpack.c.b16 %v1592, %v1591
      %v1623 = vpack.c.b16 %v1594, %v1593
      %v1624 = vpack.c.b16 %v1596, %v1595
      %v1625 = vpack.c.b16 %v1598, %v1597
      %v1626 = vpack.c.b16 %v1600, %v1599
      %v1627 = vpack.c.b16 %v1602, %v1601
      %v1628 = vpack.c.b16 %v1604, %v1603
      %v1629 = vpack.c.b16 %v1606, %v1605
      %v1630 = vpack.c.b16 %v1608, %v1607
      %v1631 = vpack.c.b16 %v1610, %v1609
      %v1632 = vpack.c.b16 %v1612, %v1611
      %v1633 = vpack.c.b16 %v1614, %v1613
      %v1634 = vpack.c.b16 %v1616, %v1615
      %v1635 = vpack.c.b16 %v1618, %v1617
      %v1636 = vpack.c.b16 %v1620, %v1619
      %v1638 = vsel %vm586, %v1621, 0
      %v1641 = vsel %vm586, %v1622, 0
      %v1644 = vsel %vm586, %v1623, 0
      %v1647 = vsel %vm586, %v1624, 0
      %v1650 = vsel %vm586, %v1625, 0
      %v1653 = vsel %vm586, %v1626, 0
      %v1656 = vsel %vm586, %v1627, 0
      %v1659 = vsel %vm586, %v1628, 0
      %v1662 = vsel %vm586, %v1629, 0
      %v1665 = vsel %vm586, %v1630, 0
      %v1668 = vsel %vm586, %v1631, 0
      %v1671 = vsel %vm586, %v1632, 0
      %v1674 = vsel %vm586, %v1633, 0
      %v1677 = vsel %vm586, %v1634, 0
      %v1680 = vsel %vm586, %v1635, 0
      %v1683 = vsel %vm586, %v1636, 0
      %v1686 = vsel %vm635, %v1556, 0
      %1688 = vmatpush.bf16.msra.mxu0 0
      %1689 = vmatpush.bf16.msra.mxu0 0
      %1690 = vmatpush.bf16.msra.mxu0 0
      %1691 = vmatpush.bf16.msra.mxu0 0
      %1692 = vmatpush.bf16.msra.mxu0 0
      %1693 = vmatpush.bf16.msra.mxu0 0
      %1694 = vmatpush.bf16.msra.mxu0 0
      %1695 = vmatpush.bf16.msra.mxu0 %v1686
      %1696 = vmatmul.bf16.gmra.mxu0 %v1638
      %v1697 = vpop.f32.mrf.mxu0
      %v1698 = vadd.f32 0.0, %v1697
      %v1699 = vpop.f32.mrf.mxu0
      %v1700 = vadd.f32 0.0, %v1699
      %1701 = vmatmul.bf16.gmra.mxu0 %v1641
      %v1702 = vpop.f32.mrf.mxu0
      %v1703 = vadd.f32 0.0, %v1702
      %v1704 = vpop.f32.mrf.mxu0
      %v1705 = vadd.f32 0.0, %v1704
      %1706 = vmatmul.bf16.gmra.mxu0 %v1644
      %v1707 = vpop.f32.mrf.mxu0
      %v1708 = vadd.f32 0.0, %v1707
      %v1709 = vpop.f32.mrf.mxu0
      %v1710 = vadd.f32 0.0, %v1709
      %1711 = vmatmul.bf16.gmra.mxu0 %v1647
      %v1712 = vpop.f32.mrf.mxu0
      %v1713 = vadd.f32 0.0, %v1712
      %v1714 = vpop.f32.mrf.mxu0
      %v1715 = vadd.f32 0.0, %v1714
      %1716 = vmatmul.bf16.gmra.mxu0 %v1650
      %v1717 = vpop.f32.mrf.mxu0
      %v1718 = vadd.f32 0.0, %v1717
      %v1719 = vpop.f32.mrf.mxu0
      %v1720 = vadd.f32 0.0, %v1719
      %1721 = vmatmul.bf16.gmra.mxu0 %v1653
      %v1722 = vpop.f32.mrf.mxu0
      %v1723 = vadd.f32 0.0, %v1722
      %v1724 = vpop.f32.mrf.mxu0
      %v1725 = vadd.f32 0.0, %v1724
      %1726 = vmatmul.bf16.gmra.mxu0 %v1656
      %v1727 = vpop.f32.mrf.mxu0
      %v1728 = vadd.f32 0.0, %v1727
      %v1729 = vpop.f32.mrf.mxu0
      %v1730 = vadd.f32 0.0, %v1729
      %1731 = vmatmul.bf16.gmra.mxu0 %v1659
      %v1732 = vpop.f32.mrf.mxu0
      %v1733 = vadd.f32 0.0, %v1732
      %v1734 = vpop.f32.mrf.mxu0
      %v1735 = vadd.f32 0.0, %v1734
      %1736 = vmatmul.bf16.gmra.mxu0 %v1662
      %v1737 = vpop.f32.mrf.mxu0
      %v1738 = vadd.f32 0.0, %v1737
      %v1739 = vpop.f32.mrf.mxu0
      %v1740 = vadd.f32 0.0, %v1739
      %1741 = vmatmul.bf16.gmra.mxu0 %v1665
      %v1742 = vpop.f32.mrf.mxu0
      %v1743 = vadd.f32 0.0, %v1742
      %v1744 = vpop.f32.mrf.mxu0
      %v1745 = vadd.f32 0.0, %v1744
      %1746 = vmatmul.bf16.gmra.mxu0 %v1668
      %v1747 = vpop.f32.mrf.mxu0
      %v1748 = vadd.f32 0.0, %v1747
      %v1749 = vpop.f32.mrf.mxu0
      %v1750 = vadd.f32 0.0, %v1749
      %1751 = vmatmul.bf16.gmra.mxu0 %v1671
      %v1752 = vpop.f32.mrf.mxu0
      %v1753 = vadd.f32 0.0, %v1752
      %v1754 = vpop.f32.mrf.mxu0
      %v1755 = vadd.f32 0.0, %v1754
      %1756 = vmatmul.bf16.gmra.mxu0 %v1674
      %v1757 = vpop.f32.mrf.mxu0
      %v1758 = vadd.f32 0.0, %v1757
      %v1759 = vpop.f32.mrf.mxu0
      %v1760 = vadd.f32 0.0, %v1759
      %1761 = vmatmul.bf16.gmra.mxu0 %v1677
      %v1762 = vpop.f32.mrf.mxu0
      %v1763 = vadd.f32 0.0, %v1762
      %v1764 = vpop.f32.mrf.mxu0
      %v1765 = vadd.f32 0.0, %v1764
      %1766 = vmatmul.bf16.gmra.mxu0 %v1680
      %v1767 = vpop.f32.mrf.mxu0
      %v1768 = vadd.f32 0.0, %v1767
      %v1769 = vpop.f32.mrf.mxu0
      %v1770 = vadd.f32 0.0, %v1769
      %1771 = vmatmul.bf16.gmra.mxu0 %v1683
      %v1772 = vpop.f32.mrf.mxu0
      %v1773 = vadd.f32 0.0, %v1772
      %v1774 = vpop.f32.mrf.mxu0
      %v1775 = vadd.f32 0.0, %v1774
      %1776 = vdwg.mxu0
      %v1777 = vadd.f32 %v1490, %v1698
      %v1778 = vadd.f32 %v1491, %v1700
      %v1779 = vadd.f32 %v1492, %v1703
      %v1780 = vadd.f32 %v1493, %v1705
      %v1781 = vadd.f32 %v1494, %v1708
      %v1782 = vadd.f32 %v1495, %v1710
      %v1783 = vadd.f32 %v1496, %v1713
      %v1784 = vadd.f32 %v1497, %v1715
      %v1785 = vadd.f32 %v1498, %v1718
      %v1786 = vadd.f32 %v1499, %v1720
      %v1787 = vadd.f32 %v1500, %v1723
      %v1788 = vadd.f32 %v1501, %v1725
      %v1789 = vadd.f32 %v1502, %v1728
      %v1790 = vadd.f32 %v1503, %v1730
      %v1791 = vadd.f32 %v1504, %v1733
      %v1792 = vadd.f32 %v1505, %v1735
      %v1793 = vadd.f32 %v1506, %v1738
      %v1794 = vadd.f32 %v1507, %v1740
      %v1795 = vadd.f32 %v1508, %v1743
      %v1796 = vadd.f32 %v1509, %v1745
      %v1797 = vadd.f32 %v1510, %v1748
      %v1798 = vadd.f32 %v1511, %v1750
      %v1799 = vadd.f32 %v1512, %v1753
      %v1800 = vadd.f32 %v1513, %v1755
      %v1801 = vadd.f32 %v1514, %v1758
      %v1802 = vadd.f32 %v1515, %v1760
      %v1803 = vadd.f32 %v1516, %v1763
      %v1804 = vadd.f32 %v1517, %v1765
      %v1805 = vadd.f32 %v1518, %v1768
      %v1806 = vadd.f32 %v1519, %v1770
      %v1807 = vadd.f32 %v1520, %v1773
      %v1808 = vadd.f32 %v1521, %v1775
      %s1809 = scalar_lea.vmem %s359, 40
      %v1810 = vld [vmem:[%s1809] sm:$0xf]
      %v1811 = vld [vmem:[%s1809 + $0x4] sm:$0xf]
      %v1812 = vld [vmem:[%s1809 + $0x8] sm:$0xf]
      %v1813 = vld [vmem:[%s1809 + $0xc] sm:$0xf]
      %v1814 = vld [vmem:[%s1809 + $0x10] sm:$0xf]
      %v1815 = vld [vmem:[%s1809 + $0x14] sm:$0xf]
      %v1816 = vld [vmem:[%s1809 + $0x18] sm:$0xf]
      %v1817 = vld [vmem:[%s1809 + $0x1c] sm:$0xf]
      %v1818 = vld [vmem:[%s1809 + $0x20] sm:$0xf]
      %v1819 = vld [vmem:[%s1809 + $0x24] sm:$0xf]
      %v1820 = vld [vmem:[%s1809 + $0x28] sm:$0xf]
      %v1821 = vld [vmem:[%s1809 + $0x2c] sm:$0xf]
      %v1822 = vld [vmem:[%s1809 + $0x30] sm:$0xf]
      %v1823 = vld [vmem:[%s1809 + $0x34] sm:$0xf]
      %v1824 = vld [vmem:[%s1809 + $0x38] sm:$0xf]
      %v1825 = vld [vmem:[%s1809 + $0x3c] sm:$0xf]
      %v1826 = vld [vmem:[%s1809 + $0x40] sm:$0xf]
      %v1827 = vld [vmem:[%s1809 + $0x44] sm:$0xf]
      %v1828 = vld [vmem:[%s1809 + $0x48] sm:$0xf]
      %v1829 = vld [vmem:[%s1809 + $0x4c] sm:$0xf]
      %v1830 = vld [vmem:[%s1809 + $0x50] sm:$0xf]
      %v1831 = vld [vmem:[%s1809 + $0x54] sm:$0xf]
      %v1832 = vld [vmem:[%s1809 + $0x58] sm:$0xf]
      %v1833 = vld [vmem:[%s1809 + $0x5c] sm:$0xf]
      %v1834 = vld [vmem:[%s1809 + $0x60] sm:$0xf]
      %v1835 = vld [vmem:[%s1809 + $0x64] sm:$0xf]
      %v1836 = vld [vmem:[%s1809 + $0x68] sm:$0xf]
      %v1837 = vld [vmem:[%s1809 + $0x6c] sm:$0xf]
      %v1838 = vld [vmem:[%s1809 + $0x70] sm:$0xf]
      %v1839 = vld [vmem:[%s1809 + $0x74] sm:$0xf]
      %v1840 = vld [vmem:[%s1809 + $0x78] sm:$0xf]
      %v1841 = vld [vmem:[%s1809 + $0x7c] sm:$0xf]
      %s1842 = scalar_lea.vmem %s367, 20
      %v1843 = vld [vmem:[%s1842] sm:$0xf]
      %v1876 = vunpack.c.l.b16 %v1810
      %v1877 = vunpack.c.l.b16 %v1811
      %v1878 = vunpack.c.l.b16 %v1812
      %v1879 = vunpack.c.l.b16 %v1813
      %v1880 = vunpack.c.l.b16 %v1814
      %v1881 = vunpack.c.l.b16 %v1815
      %v1882 = vunpack.c.l.b16 %v1816
      %v1883 = vunpack.c.l.b16 %v1817
      %v1884 = vunpack.c.l.b16 %v1818
      %v1885 = vunpack.c.l.b16 %v1819
      %v1886 = vunpack.c.l.b16 %v1820
      %v1887 = vunpack.c.l.b16 %v1821
      %v1888 = vunpack.c.l.b16 %v1822
      %v1889 = vunpack.c.l.b16 %v1823
      %v1890 = vunpack.c.l.b16 %v1824
      %v1891 = vunpack.c.l.b16 %v1825
      %v1892 = vunpack.c.l.b16 %v1826
      %v1893 = vunpack.c.l.b16 %v1827
      %v1894 = vunpack.c.l.b16 %v1828
      %v1895 = vunpack.c.l.b16 %v1829
      %v1896 = vunpack.c.l.b16 %v1830
      %v1897 = vunpack.c.l.b16 %v1831
      %v1898 = vunpack.c.l.b16 %v1832
      %v1899 = vunpack.c.l.b16 %v1833
      %v1900 = vunpack.c.l.b16 %v1834
      %v1901 = vunpack.c.l.b16 %v1835
      %v1902 = vunpack.c.l.b16 %v1836
      %v1903 = vunpack.c.l.b16 %v1837
      %v1904 = vunpack.c.l.b16 %v1838
      %v1905 = vunpack.c.l.b16 %v1839
      %v1906 = vunpack.c.l.b16 %v1840
      %v1907 = vunpack.c.l.b16 %v1841
      %v1908 = vpack.c.b16 %v1877, %v1876
      %v1909 = vpack.c.b16 %v1879, %v1878
      %v1910 = vpack.c.b16 %v1881, %v1880
      %v1911 = vpack.c.b16 %v1883, %v1882
      %v1912 = vpack.c.b16 %v1885, %v1884
      %v1913 = vpack.c.b16 %v1887, %v1886
      %v1914 = vpack.c.b16 %v1889, %v1888
      %v1915 = vpack.c.b16 %v1891, %v1890
      %v1916 = vpack.c.b16 %v1893, %v1892
      %v1917 = vpack.c.b16 %v1895, %v1894
      %v1918 = vpack.c.b16 %v1897, %v1896
      %v1919 = vpack.c.b16 %v1899, %v1898
      %v1920 = vpack.c.b16 %v1901, %v1900
      %v1921 = vpack.c.b16 %v1903, %v1902
      %v1922 = vpack.c.b16 %v1905, %v1904
      %v1923 = vpack.c.b16 %v1907, %v1906
      %v1925 = vsel %vm586, %v1908, 0
      %v1928 = vsel %vm586, %v1909, 0
      %v1931 = vsel %vm586, %v1910, 0
      %v1934 = vsel %vm586, %v1911, 0
      %v1937 = vsel %vm586, %v1912, 0
      %v1940 = vsel %vm586, %v1913, 0
      %v1943 = vsel %vm586, %v1914, 0
      %v1946 = vsel %vm586, %v1915, 0
      %v1949 = vsel %vm586, %v1916, 0
      %v1952 = vsel %vm586, %v1917, 0
      %v1955 = vsel %vm586, %v1918, 0
      %v1958 = vsel %vm586, %v1919, 0
      %v1961 = vsel %vm586, %v1920, 0
      %v1964 = vsel %vm586, %v1921, 0
      %v1967 = vsel %vm586, %v1922, 0
      %v1970 = vsel %vm586, %v1923, 0
      %v1973 = vsel %vm635, %v1843, 0
      %1975 = vmatpush.bf16.msra.mxu0 0
      %1976 = vmatpush.bf16.msra.mxu0 0
      %1977 = vmatpush.bf16.msra.mxu0 0
      %1978 = vmatpush.bf16.msra.mxu0 0
      %1979 = vmatpush.bf16.msra.mxu0 0
      %1980 = vmatpush.bf16.msra.mxu0 0
      %1981 = vmatpush.bf16.msra.mxu0 0
      %1982 = vmatpush.bf16.msra.mxu0 %v1973
      %1983 = vmatmul.bf16.gmra.mxu0 %v1925
      %v1984 = vpop.f32.mrf.mxu0
      %v1985 = vadd.f32 0.0, %v1984
      %v1986 = vpop.f32.mrf.mxu0
      %v1987 = vadd.f32 0.0, %v1986
      %1988 = vmatmul.bf16.gmra.mxu0 %v1928
      %v1989 = vpop.f32.mrf.mxu0
      %v1990 = vadd.f32 0.0, %v1989
      %v1991 = vpop.f32.mrf.mxu0
      %v1992 = vadd.f32 0.0, %v1991
      %1993 = vmatmul.bf16.gmra.mxu0 %v1931
      %v1994 = vpop.f32.mrf.mxu0
      %v1995 = vadd.f32 0.0, %v1994
      %v1996 = vpop.f32.mrf.mxu0
      %v1997 = vadd.f32 0.0, %v1996
      %1998 = vmatmul.bf16.gmra.mxu0 %v1934
      %v1999 = vpop.f32.mrf.mxu0
      %v2000 = vadd.f32 0.0, %v1999
      %v2001 = vpop.f32.mrf.mxu0
      %v2002 = vadd.f32 0.0, %v2001
      %2003 = vmatmul.bf16.gmra.mxu0 %v1937
      %v2004 = vpop.f32.mrf.mxu0
      %v2005 = vadd.f32 0.0, %v2004
      %v2006 = vpop.f32.mrf.mxu0
      %v2007 = vadd.f32 0.0, %v2006
      %2008 = vmatmul.bf16.gmra.mxu0 %v1940
      %v2009 = vpop.f32.mrf.mxu0
      %v2010 = vadd.f32 0.0, %v2009
      %v2011 = vpop.f32.mrf.mxu0
      %v2012 = vadd.f32 0.0, %v2011
      %2013 = vmatmul.bf16.gmra.mxu0 %v1943
      %v2014 = vpop.f32.mrf.mxu0
      %v2015 = vadd.f32 0.0, %v2014
      %v2016 = vpop.f32.mrf.mxu0
      %v2017 = vadd.f32 0.0, %v2016
      %2018 = vmatmul.bf16.gmra.mxu0 %v1946
      %v2019 = vpop.f32.mrf.mxu0
      %v2020 = vadd.f32 0.0, %v2019
      %v2021 = vpop.f32.mrf.mxu0
      %v2022 = vadd.f32 0.0, %v2021
      %2023 = vmatmul.bf16.gmra.mxu0 %v1949
      %v2024 = vpop.f32.mrf.mxu0
      %v2025 = vadd.f32 0.0, %v2024
      %v2026 = vpop.f32.mrf.mxu0
      %v2027 = vadd.f32 0.0, %v2026
      %2028 = vmatmul.bf16.gmra.mxu0 %v1952
      %v2029 = vpop.f32.mrf.mxu0
      %v2030 = vadd.f32 0.0, %v2029
      %v2031 = vpop.f32.mrf.mxu0
      %v2032 = vadd.f32 0.0, %v2031
      %2033 = vmatmul.bf16.gmra.mxu0 %v1955
      %v2034 = vpop.f32.mrf.mxu0
      %v2035 = vadd.f32 0.0, %v2034
      %v2036 = vpop.f32.mrf.mxu0
      %v2037 = vadd.f32 0.0, %v2036
      %2038 = vmatmul.bf16.gmra.mxu0 %v1958
      %v2039 = vpop.f32.mrf.mxu0
      %v2040 = vadd.f32 0.0, %v2039
      %v2041 = vpop.f32.mrf.mxu0
      %v2042 = vadd.f32 0.0, %v2041
      %2043 = vmatmul.bf16.gmra.mxu0 %v1961
      %v2044 = vpop.f32.mrf.mxu0
      %v2045 = vadd.f32 0.0, %v2044
      %v2046 = vpop.f32.mrf.mxu0
      %v2047 = vadd.f32 0.0, %v2046
      %2048 = vmatmul.bf16.gmra.mxu0 %v1964
      %v2049 = vpop.f32.mrf.mxu0
      %v2050 = vadd.f32 0.0, %v2049
      %v2051 = vpop.f32.mrf.mxu0
      %v2052 = vadd.f32 0.0, %v2051
      %2053 = vmatmul.bf16.gmra.mxu0 %v1967
      %v2054 = vpop.f32.mrf.mxu0
      %v2055 = vadd.f32 0.0, %v2054
      %v2056 = vpop.f32.mrf.mxu0
      %v2057 = vadd.f32 0.0, %v2056
      %2058 = vmatmul.bf16.gmra.mxu0 %v1970
      %v2059 = vpop.f32.mrf.mxu0
      %v2060 = vadd.f32 0.0, %v2059
      %v2061 = vpop.f32.mrf.mxu0
      %v2062 = vadd.f32 0.0, %v2061
      %2063 = vdwg.mxu0
      %v2064 = vadd.f32 %v1777, %v1985
      %v2065 = vadd.f32 %v1778, %v1987
      %v2066 = vadd.f32 %v1779, %v1990
      %v2067 = vadd.f32 %v1780, %v1992
      %v2068 = vadd.f32 %v1781, %v1995
      %v2069 = vadd.f32 %v1782, %v1997
      %v2070 = vadd.f32 %v1783, %v2000
      %v2071 = vadd.f32 %v1784, %v2002
      %v2072 = vadd.f32 %v1785, %v2005
      %v2073 = vadd.f32 %v1786, %v2007
      %v2074 = vadd.f32 %v1787, %v2010
      %v2075 = vadd.f32 %v1788, %v2012
      %v2076 = vadd.f32 %v1789, %v2015
      %v2077 = vadd.f32 %v1790, %v2017
      %v2078 = vadd.f32 %v1791, %v2020
      %v2079 = vadd.f32 %v1792, %v2022
      %v2080 = vadd.f32 %v1793, %v2025
      %v2081 = vadd.f32 %v1794, %v2027
      %v2082 = vadd.f32 %v1795, %v2030
      %v2083 = vadd.f32 %v1796, %v2032
      %v2084 = vadd.f32 %v1797, %v2035
      %v2085 = vadd.f32 %v1798, %v2037
      %v2086 = vadd.f32 %v1799, %v2040
      %v2087 = vadd.f32 %v1800, %v2042
      %v2088 = vadd.f32 %v1801, %v2045
      %v2089 = vadd.f32 %v1802, %v2047
      %v2090 = vadd.f32 %v1803, %v2050
      %v2091 = vadd.f32 %v1804, %v2052
      %v2092 = vadd.f32 %v1805, %v2055
      %v2093 = vadd.f32 %v1806, %v2057
      %v2094 = vadd.f32 %v1807, %v2060
      %v2095 = vadd.f32 %v1808, %v2062
      %s2096 = scalar_lea.vmem %s359, 48
      %v2097 = vld [vmem:[%s2096] sm:$0xf]
      %v2098 = vld [vmem:[%s2096 + $0x4] sm:$0xf]
      %v2099 = vld [vmem:[%s2096 + $0x8] sm:$0xf]
      %v2100 = vld [vmem:[%s2096 + $0xc] sm:$0xf]
      %v2101 = vld [vmem:[%s2096 + $0x10] sm:$0xf]
      %v2102 = vld [vmem:[%s2096 + $0x14] sm:$0xf]
      %v2103 = vld [vmem:[%s2096 + $0x18] sm:$0xf]
      %v2104 = vld [vmem:[%s2096 + $0x1c] sm:$0xf]
      %v2105 = vld [vmem:[%s2096 + $0x20] sm:$0xf]
      %v2106 = vld [vmem:[%s2096 + $0x24] sm:$0xf]
      %v2107 = vld [vmem:[%s2096 + $0x28] sm:$0xf]
      %v2108 = vld [vmem:[%s2096 + $0x2c] sm:$0xf]
      %v2109 = vld [vmem:[%s2096 + $0x30] sm:$0xf]
      %v2110 = vld [vmem:[%s2096 + $0x34] sm:$0xf]
      %v2111 = vld [vmem:[%s2096 + $0x38] sm:$0xf]
      %v2112 = vld [vmem:[%s2096 + $0x3c] sm:$0xf]
      %v2113 = vld [vmem:[%s2096 + $0x40] sm:$0xf]
      %v2114 = vld [vmem:[%s2096 + $0x44] sm:$0xf]
      %v2115 = vld [vmem:[%s2096 + $0x48] sm:$0xf]
      %v2116 = vld [vmem:[%s2096 + $0x4c] sm:$0xf]
      %v2117 = vld [vmem:[%s2096 + $0x50] sm:$0xf]
      %v2118 = vld [vmem:[%s2096 + $0x54] sm:$0xf]
      %v2119 = vld [vmem:[%s2096 + $0x58] sm:$0xf]
      %v2120 = vld [vmem:[%s2096 + $0x5c] sm:$0xf]
      %v2121 = vld [vmem:[%s2096 + $0x60] sm:$0xf]
      %v2122 = vld [vmem:[%s2096 + $0x64] sm:$0xf]
      %v2123 = vld [vmem:[%s2096 + $0x68] sm:$0xf]
      %v2124 = vld [vmem:[%s2096 + $0x6c] sm:$0xf]
      %v2125 = vld [vmem:[%s2096 + $0x70] sm:$0xf]
      %v2126 = vld [vmem:[%s2096 + $0x74] sm:$0xf]
      %v2127 = vld [vmem:[%s2096 + $0x78] sm:$0xf]
      %v2128 = vld [vmem:[%s2096 + $0x7c] sm:$0xf]
      %s2129 = scalar_lea.vmem %s367, 24
      %v2130 = vld [vmem:[%s2129] sm:$0xf]
      %v2163 = vunpack.c.l.b16 %v2097
      %v2164 = vunpack.c.l.b16 %v2098
      %v2165 = vunpack.c.l.b16 %v2099
      %v2166 = vunpack.c.l.b16 %v2100
      %v2167 = vunpack.c.l.b16 %v2101
      %v2168 = vunpack.c.l.b16 %v2102
      %v2169 = vunpack.c.l.b16 %v2103
      %v2170 = vunpack.c.l.b16 %v2104
      %v2171 = vunpack.c.l.b16 %v2105
      %v2172 = vunpack.c.l.b16 %v2106
      %v2173 = vunpack.c.l.b16 %v2107
      %v2174 = vunpack.c.l.b16 %v2108
      %v2175 = vunpack.c.l.b16 %v2109
      %v2176 = vunpack.c.l.b16 %v2110
      %v2177 = vunpack.c.l.b16 %v2111
      %v2178 = vunpack.c.l.b16 %v2112
      %v2179 = vunpack.c.l.b16 %v2113
      %v2180 = vunpack.c.l.b16 %v2114
      %v2181 = vunpack.c.l.b16 %v2115
      %v2182 = vunpack.c.l.b16 %v2116
      %v2183 = vunpack.c.l.b16 %v2117
      %v2184 = vunpack.c.l.b16 %v2118
      %v2185 = vunpack.c.l.b16 %v2119
      %v2186 = vunpack.c.l.b16 %v2120
      %v2187 = vunpack.c.l.b16 %v2121
      %v2188 = vunpack.c.l.b16 %v2122
      %v2189 = vunpack.c.l.b16 %v2123
      %v2190 = vunpack.c.l.b16 %v2124
      %v2191 = vunpack.c.l.b16 %v2125
      %v2192 = vunpack.c.l.b16 %v2126
      %v2193 = vunpack.c.l.b16 %v2127
      %v2194 = vunpack.c.l.b16 %v2128
      %v2195 = vpack.c.b16 %v2164, %v2163
      %v2196 = vpack.c.b16 %v2166, %v2165
      %v2197 = vpack.c.b16 %v2168, %v2167
      %v2198 = vpack.c.b16 %v2170, %v2169
      %v2199 = vpack.c.b16 %v2172, %v2171
      %v2200 = vpack.c.b16 %v2174, %v2173
      %v2201 = vpack.c.b16 %v2176, %v2175
      %v2202 = vpack.c.b16 %v2178, %v2177
      %v2203 = vpack.c.b16 %v2180, %v2179
      %v2204 = vpack.c.b16 %v2182, %v2181
      %v2205 = vpack.c.b16 %v2184, %v2183
      %v2206 = vpack.c.b16 %v2186, %v2185
      %v2207 = vpack.c.b16 %v2188, %v2187
      %v2208 = vpack.c.b16 %v2190, %v2189
      %v2209 = vpack.c.b16 %v2192, %v2191
      %v2210 = vpack.c.b16 %v2194, %v2193
      %v2212 = vsel %vm586, %v2195, 0
      %v2215 = vsel %vm586, %v2196, 0
      %v2218 = vsel %vm586, %v2197, 0
      %v2221 = vsel %vm586, %v2198, 0
      %v2224 = vsel %vm586, %v2199, 0
      %v2227 = vsel %vm586, %v2200, 0
      %v2230 = vsel %vm586, %v2201, 0
      %v2233 = vsel %vm586, %v2202, 0
      %v2236 = vsel %vm586, %v2203, 0
      %v2239 = vsel %vm586, %v2204, 0
      %v2242 = vsel %vm586, %v2205, 0
      %v2245 = vsel %vm586, %v2206, 0
      %v2248 = vsel %vm586, %v2207, 0
      %v2251 = vsel %vm586, %v2208, 0
      %v2254 = vsel %vm586, %v2209, 0
      %v2257 = vsel %vm586, %v2210, 0
      %v2260 = vsel %vm635, %v2130, 0
      %2262 = vmatpush.bf16.msra.mxu0 0
      %2263 = vmatpush.bf16.msra.mxu0 0
      %2264 = vmatpush.bf16.msra.mxu0 0
      %2265 = vmatpush.bf16.msra.mxu0 0
      %2266 = vmatpush.bf16.msra.mxu0 0
      %2267 = vmatpush.bf16.msra.mxu0 0
      %2268 = vmatpush.bf16.msra.mxu0 0
      %2269 = vmatpush.bf16.msra.mxu0 %v2260
      %2270 = vmatmul.bf16.gmra.mxu0 %v2212
      %v2271 = vpop.f32.mrf.mxu0
      %v2272 = vadd.f32 0.0, %v2271
      %v2273 = vpop.f32.mrf.mxu0
      %v2274 = vadd.f32 0.0, %v2273
      %2275 = vmatmul.bf16.gmra.mxu0 %v2215
      %v2276 = vpop.f32.mrf.mxu0
      %v2277 = vadd.f32 0.0, %v2276
      %v2278 = vpop.f32.mrf.mxu0
      %v2279 = vadd.f32 0.0, %v2278
      %2280 = vmatmul.bf16.gmra.mxu0 %v2218
      %v2281 = vpop.f32.mrf.mxu0
      %v2282 = vadd.f32 0.0, %v2281
      %v2283 = vpop.f32.mrf.mxu0
      %v2284 = vadd.f32 0.0, %v2283
      %2285 = vmatmul.bf16.gmra.mxu0 %v2221
      %v2286 = vpop.f32.mrf.mxu0
      %v2287 = vadd.f32 0.0, %v2286
      %v2288 = vpop.f32.mrf.mxu0
      %v2289 = vadd.f32 0.0, %v2288
      %2290 = vmatmul.bf16.gmra.mxu0 %v2224
      %v2291 = vpop.f32.mrf.mxu0
      %v2292 = vadd.f32 0.0, %v2291
      %v2293 = vpop.f32.mrf.mxu0
      %v2294 = vadd.f32 0.0, %v2293
      %2295 = vmatmul.bf16.gmra.mxu0 %v2227
      %v2296 = vpop.f32.mrf.mxu0
      %v2297 = vadd.f32 0.0, %v2296
      %v2298 = vpop.f32.mrf.mxu0
      %v2299 = vadd.f32 0.0, %v2298
      %2300 = vmatmul.bf16.gmra.mxu0 %v2230
      %v2301 = vpop.f32.mrf.mxu0
      %v2302 = vadd.f32 0.0, %v2301
      %v2303 = vpop.f32.mrf.mxu0
      %v2304 = vadd.f32 0.0, %v2303
      %2305 = vmatmul.bf16.gmra.mxu0 %v2233
      %v2306 = vpop.f32.mrf.mxu0
      %v2307 = vadd.f32 0.0, %v2306
      %v2308 = vpop.f32.mrf.mxu0
      %v2309 = vadd.f32 0.0, %v2308
      %2310 = vmatmul.bf16.gmra.mxu0 %v2236
      %v2311 = vpop.f32.mrf.mxu0
      %v2312 = vadd.f32 0.0, %v2311
      %v2313 = vpop.f32.mrf.mxu0
      %v2314 = vadd.f32 0.0, %v2313
      %2315 = vmatmul.bf16.gmra.mxu0 %v2239
      %v2316 = vpop.f32.mrf.mxu0
      %v2317 = vadd.f32 0.0, %v2316
      %v2318 = vpop.f32.mrf.mxu0
      %v2319 = vadd.f32 0.0, %v2318
      %2320 = vmatmul.bf16.gmra.mxu0 %v2242
      %v2321 = vpop.f32.mrf.mxu0
      %v2322 = vadd.f32 0.0, %v2321
      %v2323 = vpop.f32.mrf.mxu0
      %v2324 = vadd.f32 0.0, %v2323
      %2325 = vmatmul.bf16.gmra.mxu0 %v2245
      %v2326 = vpop.f32.mrf.mxu0
      %v2327 = vadd.f32 0.0, %v2326
      %v2328 = vpop.f32.mrf.mxu0
      %v2329 = vadd.f32 0.0, %v2328
      %2330 = vmatmul.bf16.gmra.mxu0 %v2248
      %v2331 = vpop.f32.mrf.mxu0
      %v2332 = vadd.f32 0.0, %v2331
      %v2333 = vpop.f32.mrf.mxu0
      %v2334 = vadd.f32 0.0, %v2333
      %2335 = vmatmul.bf16.gmra.mxu0 %v2251
      %v2336 = vpop.f32.mrf.mxu0
      %v2337 = vadd.f32 0.0, %v2336
      %v2338 = vpop.f32.mrf.mxu0
      %v2339 = vadd.f32 0.0, %v2338
      %2340 = vmatmul.bf16.gmra.mxu0 %v2254
      %v2341 = vpop.f32.mrf.mxu0
      %v2342 = vadd.f32 0.0, %v2341
      %v2343 = vpop.f32.mrf.mxu0
      %v2344 = vadd.f32 0.0, %v2343
      %2345 = vmatmul.bf16.gmra.mxu0 %v2257
      %v2346 = vpop.f32.mrf.mxu0
      %v2347 = vadd.f32 0.0, %v2346
      %v2348 = vpop.f32.mrf.mxu0
      %v2349 = vadd.f32 0.0, %v2348
      %2350 = vdwg.mxu0
      %v2351 = vadd.f32 %v2064, %v2272
      %v2352 = vadd.f32 %v2065, %v2274
      %v2353 = vadd.f32 %v2066, %v2277
      %v2354 = vadd.f32 %v2067, %v2279
      %v2355 = vadd.f32 %v2068, %v2282
      %v2356 = vadd.f32 %v2069, %v2284
      %v2357 = vadd.f32 %v2070, %v2287
      %v2358 = vadd.f32 %v2071, %v2289
      %v2359 = vadd.f32 %v2072, %v2292
      %v2360 = vadd.f32 %v2073, %v2294
      %v2361 = vadd.f32 %v2074, %v2297
      %v2362 = vadd.f32 %v2075, %v2299
      %v2363 = vadd.f32 %v2076, %v2302
      %v2364 = vadd.f32 %v2077, %v2304
      %v2365 = vadd.f32 %v2078, %v2307
      %v2366 = vadd.f32 %v2079, %v2309
      %v2367 = vadd.f32 %v2080, %v2312
      %v2368 = vadd.f32 %v2081, %v2314
      %v2369 = vadd.f32 %v2082, %v2317
      %v2370 = vadd.f32 %v2083, %v2319
      %v2371 = vadd.f32 %v2084, %v2322
      %v2372 = vadd.f32 %v2085, %v2324
      %v2373 = vadd.f32 %v2086, %v2327
      %v2374 = vadd.f32 %v2087, %v2329
      %v2375 = vadd.f32 %v2088, %v2332
      %v2376 = vadd.f32 %v2089, %v2334
      %v2377 = vadd.f32 %v2090, %v2337
      %v2378 = vadd.f32 %v2091, %v2339
      %v2379 = vadd.f32 %v2092, %v2342
      %v2380 = vadd.f32 %v2093, %v2344
      %v2381 = vadd.f32 %v2094, %v2347
      %v2382 = vadd.f32 %v2095, %v2349
      %v2383 = vld [vmem:[#allocation2] sm:$0xff]
      %v2384 = vld [vmem:[#allocation2 + $0x8] sm:$0xff]
      %v2385 = vld [vmem:[#allocation2 + $0x10] sm:$0xff]
      %v2386 = vld [vmem:[#allocation2 + $0x18] sm:$0xff]
      %v2387 = vld [vmem:[#allocation2 + $0x20] sm:$0xff]
      %v2388 = vld [vmem:[#allocation2 + $0x28] sm:$0xff]
      %v2389 = vld [vmem:[#allocation2 + $0x30] sm:$0xff]
      %v2390 = vld [vmem:[#allocation2 + $0x38] sm:$0xff]
      %v2391 = vld [vmem:[#allocation2 + $0x40] sm:$0xff]
      %v2392 = vld [vmem:[#allocation2 + $0x48] sm:$0xff]
      %v2393 = vld [vmem:[#allocation2 + $0x50] sm:$0xff]
      %v2394 = vld [vmem:[#allocation2 + $0x58] sm:$0xff]
      %v2395 = vld [vmem:[#allocation2 + $0x60] sm:$0xff]
      %v2396 = vld [vmem:[#allocation2 + $0x68] sm:$0xff]
      %v2397 = vld [vmem:[#allocation2 + $0x70] sm:$0xff]
      %v2398 = vld [vmem:[#allocation2 + $0x78] sm:$0xff]
      %v2399 = vld [vmem:[#allocation2 + $0x80] sm:$0xff]
      %v2400 = vld [vmem:[#allocation2 + $0x88] sm:$0xff]
      %v2401 = vld [vmem:[#allocation2 + $0x90] sm:$0xff]
      %v2402 = vld [vmem:[#allocation2 + $0x98] sm:$0xff]
      %v2403 = vld [vmem:[#allocation2 + $0xa0] sm:$0xff]
      %v2404 = vld [vmem:[#allocation2 + $0xa8] sm:$0xff]
      %v2405 = vld [vmem:[#allocation2 + $0xb0] sm:$0xff]
      %v2406 = vld [vmem:[#allocation2 + $0xb8] sm:$0xff]
      %v2407 = vld [vmem:[#allocation2 + $0xc0] sm:$0xff]
      %v2408 = vld [vmem:[#allocation2 + $0xc8] sm:$0xff]
      %v2409 = vld [vmem:[#allocation2 + $0xd0] sm:$0xff]
      %v2410 = vld [vmem:[#allocation2 + $0xd8] sm:$0xff]
      %v2411 = vld [vmem:[#allocation2 + $0xe0] sm:$0xff]
      %v2412 = vld [vmem:[#allocation2 + $0xe8] sm:$0xff]
      %v2413 = vld [vmem:[#allocation2 + $0xf0] sm:$0xff]
      %v2414 = vld [vmem:[#allocation2 + $0xf8] sm:$0xff]
      %v2415 = vadd.f32 %v2383, %v2351
      %v2416 = vadd.f32 %v2384, %v2352
      %v2417 = vadd.f32 %v2385, %v2353
      %v2418 = vadd.f32 %v2386, %v2354
      %v2419 = vadd.f32 %v2387, %v2355
      %v2420 = vadd.f32 %v2388, %v2356
      %v2421 = vadd.f32 %v2389, %v2357
      %v2422 = vadd.f32 %v2390, %v2358
      %v2423 = vadd.f32 %v2391, %v2359
      %v2424 = vadd.f32 %v2392, %v2360
      %v2425 = vadd.f32 %v2393, %v2361
      %v2426 = vadd.f32 %v2394, %v2362
      %v2427 = vadd.f32 %v2395, %v2363
      %v2428 = vadd.f32 %v2396, %v2364
      %v2429 = vadd.f32 %v2397, %v2365
      %v2430 = vadd.f32 %v2398, %v2366
      %v2431 = vadd.f32 %v2399, %v2367
      %v2432 = vadd.f32 %v2400, %v2368
      %v2433 = vadd.f32 %v2401, %v2369
      %v2434 = vadd.f32 %v2402, %v2370
      %v2435 = vadd.f32 %v2403, %v2371
      %v2436 = vadd.f32 %v2404, %v2372
      %v2437 = vadd.f32 %v2405, %v2373
      %v2438 = vadd.f32 %v2406, %v2374
      %v2439 = vadd.f32 %v2407, %v2375
      %v2440 = vadd.f32 %v2408, %v2376
      %v2441 = vadd.f32 %v2409, %v2377
      %v2442 = vadd.f32 %v2410, %v2378
      %v2443 = vadd.f32 %v2411, %v2379
      %v2444 = vadd.f32 %v2412, %v2380
      %v2445 = vadd.f32 %v2413, %v2381
      %v2446 = vadd.f32 %v2414, %v2382
      %2447 = vst.msk [vmem:[#allocation2] sm:$0xff] %vm586, %v2415
      %2448 = vst.msk [vmem:[#allocation2 + $0x8] sm:$0xff] %vm586, %v2416
      %2449 = vst.msk [vmem:[#allocation2 + $0x10] sm:$0xff] %vm586, %v2417
      %2450 = vst.msk [vmem:[#allocation2 + $0x18] sm:$0xff] %vm586, %v2418
      %2451 = vst.msk [vmem:[#allocation2 + $0x20] sm:$0xff] %vm586, %v2419
      %2452 = vst.msk [vmem:[#allocation2 + $0x28] sm:$0xff] %vm586, %v2420
      %2453 = vst.msk [vmem:[#allocation2 + $0x30] sm:$0xff] %vm586, %v2421
      %2454 = vst.msk [vmem:[#allocation2 + $0x38] sm:$0xff] %vm586, %v2422
      %2455 = vst.msk [vmem:[#allocation2 + $0x40] sm:$0xff] %vm586, %v2423
      %2456 = vst.msk [vmem:[#allocation2 + $0x48] sm:$0xff] %vm586, %v2424
      %2457 = vst.msk [vmem:[#allocation2 + $0x50] sm:$0xff] %vm586, %v2425
      %2458 = vst.msk [vmem:[#allocation2 + $0x58] sm:$0xff] %vm586, %v2426
      %2459 = vst.msk [vmem:[#allocation2 + $0x60] sm:$0xff] %vm586, %v2427
      %2460 = vst.msk [vmem:[#allocation2 + $0x68] sm:$0xff] %vm586, %v2428
      %2461 = vst.msk [vmem:[#allocation2 + $0x70] sm:$0xff] %vm586, %v2429
      %2462 = vst.msk [vmem:[#allocation2 + $0x78] sm:$0xff] %vm586, %v2430
      %2463 = vst.msk [vmem:[#allocation2 + $0x80] sm:$0xff] %vm586, %v2431
      %2464 = vst.msk [vmem:[#allocation2 + $0x88] sm:$0xff] %vm586, %v2432
      %2465 = vst.msk [vmem:[#allocation2 + $0x90] sm:$0xff] %vm586, %v2433
      %2466 = vst.msk [vmem:[#allocation2 + $0x98] sm:$0xff] %vm586, %v2434
      %2467 = vst.msk [vmem:[#allocation2 + $0xa0] sm:$0xff] %vm586, %v2435
      %2468 = vst.msk [vmem:[#allocation2 + $0xa8] sm:$0xff] %vm586, %v2436
      %2469 = vst.msk [vmem:[#allocation2 + $0xb0] sm:$0xff] %vm586, %v2437
      %2470 = vst.msk [vmem:[#allocation2 + $0xb8] sm:$0xff] %vm586, %v2438
      %2471 = vst.msk [vmem:[#allocation2 + $0xc0] sm:$0xff] %vm586, %v2439
      %2472 = vst.msk [vmem:[#allocation2 + $0xc8] sm:$0xff] %vm586, %v2440
      %2473 = vst.msk [vmem:[#allocation2 + $0xd0] sm:$0xff] %vm586, %v2441
      %2474 = vst.msk [vmem:[#allocation2 + $0xd8] sm:$0xff] %vm586, %v2442
      %2475 = vst.msk [vmem:[#allocation2 + $0xe0] sm:$0xff] %vm586, %v2443
      %2476 = vst.msk [vmem:[#allocation2 + $0xe8] sm:$0xff] %vm586, %v2444
      %2477 = vst.msk [vmem:[#allocation2 + $0xf0] sm:$0xff] %vm586, %v2445
      %2478 = vst.msk [vmem:[#allocation2 + $0xf8] sm:$0xff] %vm586, %v2446
      // Predicated region
      $region45: #{global_conv_forward.7} parent=39 // pred_check
        %p2479 = pneg %p401
      $region46: #{global_conv_forward.7} parent=39 // pred_check_branch
        %2481 = sbr.rel (%p2479) target = $region48
      $region47: #{global_conv_forward.7} parent=39 // pred_region
        %v2482 = vld [vmem:[#allocation2] sm:$0xff]
        %v2483 = vld [vmem:[#allocation2 + $0x8] sm:$0xff]
        %v2484 = vld [vmem:[#allocation2 + $0x10] sm:$0xff]
        %v2485 = vld [vmem:[#allocation2 + $0x18] sm:$0xff]
        %v2486 = vld [vmem:[#allocation2 + $0x20] sm:$0xff]
        %v2487 = vld [vmem:[#allocation2 + $0x28] sm:$0xff]
        %v2488 = vld [vmem:[#allocation2 + $0x30] sm:$0xff]
        %v2489 = vld [vmem:[#allocation2 + $0x38] sm:$0xff]
        %v2490 = vld [vmem:[#allocation2 + $0x40] sm:$0xff]
        %v2491 = vld [vmem:[#allocation2 + $0x48] sm:$0xff]
        %v2492 = vld [vmem:[#allocation2 + $0x50] sm:$0xff]
        %v2493 = vld [vmem:[#allocation2 + $0x58] sm:$0xff]
        %v2494 = vld [vmem:[#allocation2 + $0x60] sm:$0xff]
        %v2495 = vld [vmem:[#allocation2 + $0x68] sm:$0xff]
        %v2496 = vld [vmem:[#allocation2 + $0x70] sm:$0xff]
        %v2497 = vld [vmem:[#allocation2 + $0x78] sm:$0xff]
        %v2498 = vld [vmem:[#allocation2 + $0x80] sm:$0xff]
        %v2499 = vld [vmem:[#allocation2 + $0x88] sm:$0xff]
        %v2500 = vld [vmem:[#allocation2 + $0x90] sm:$0xff]
        %v2501 = vld [vmem:[#allocation2 + $0x98] sm:$0xff]
        %v2502 = vld [vmem:[#allocation2 + $0xa0] sm:$0xff]
        %v2503 = vld [vmem:[#allocation2 + $0xa8] sm:$0xff]
        %v2504 = vld [vmem:[#allocation2 + $0xb0] sm:$0xff]
        %v2505 = vld [vmem:[#allocation2 + $0xb8] sm:$0xff]
        %v2506 = vld [vmem:[#allocation2 + $0xc0] sm:$0xff]
        %v2507 = vld [vmem:[#allocation2 + $0xc8] sm:$0xff]
        %v2508 = vld [vmem:[#allocation2 + $0xd0] sm:$0xff]
        %v2509 = vld [vmem:[#allocation2 + $0xd8] sm:$0xff]
        %v2510 = vld [vmem:[#allocation2 + $0xe0] sm:$0xff]
        %v2511 = vld [vmem:[#allocation2 + $0xe8] sm:$0xff]
        %v2512 = vld [vmem:[#allocation2 + $0xf0] sm:$0xff]
        %v2513 = vld [vmem:[#allocation2 + $0xf8] sm:$0xff]
        %v2514 = vld [vmem:[%s385] sm:$0xf]
        %v2515 = vld [vmem:[%s385 + $0x4] sm:$0xf]
        %v2516 = vld [vmem:[%s385 + $0x8] sm:$0xf]
        %v2517 = vld [vmem:[%s385 + $0xc] sm:$0xf]
        %v2518 = vld [vmem:[%s385 + $0x10] sm:$0xf]
        %v2519 = vld [vmem:[%s385 + $0x14] sm:$0xf]
        %v2520 = vld [vmem:[%s385 + $0x18] sm:$0xf]
        %v2521 = vld [vmem:[%s385 + $0x1c] sm:$0xf]
        %v2522 = vld [vmem:[%s385 + $0x20] sm:$0xf]
        %v2523 = vld [vmem:[%s385 + $0x24] sm:$0xf]
        %v2524 = vld [vmem:[%s385 + $0x28] sm:$0xf]
        %v2525 = vld [vmem:[%s385 + $0x2c] sm:$0xf]
        %v2526 = vld [vmem:[%s385 + $0x30] sm:$0xf]
        %v2527 = vld [vmem:[%s385 + $0x34] sm:$0xf]
        %v2528 = vld [vmem:[%s385 + $0x38] sm:$0xf]
        %v2529 = vld [vmem:[%s385 + $0x3c] sm:$0xf]
        %v2530 = vld [vmem:[%s385 + $0x40] sm:$0xf]
        %v2531 = vld [vmem:[%s385 + $0x44] sm:$0xf]
        %v2532 = vld [vmem:[%s385 + $0x48] sm:$0xf]
        %v2533 = vld [vmem:[%s385 + $0x4c] sm:$0xf]
        %v2534 = vld [vmem:[%s385 + $0x50] sm:$0xf]
        %v2535 = vld [vmem:[%s385 + $0x54] sm:$0xf]
        %v2536 = vld [vmem:[%s385 + $0x58] sm:$0xf]
        %v2537 = vld [vmem:[%s385 + $0x5c] sm:$0xf]
        %v2538 = vld [vmem:[%s385 + $0x60] sm:$0xf]
        %v2539 = vld [vmem:[%s385 + $0x64] sm:$0xf]
        %v2540 = vld [vmem:[%s385 + $0x68] sm:$0xf]
        %v2541 = vld [vmem:[%s385 + $0x6c] sm:$0xf]
        %v2542 = vld [vmem:[%s385 + $0x70] sm:$0xf]
        %v2543 = vld [vmem:[%s385 + $0x74] sm:$0xf]
        %v2544 = vld [vmem:[%s385 + $0x78] sm:$0xf]
        %v2545 = vld [vmem:[%s385 + $0x7c] sm:$0xf]
        %v2546 = vunpack.c.l.bf16 %v2514
        %v2547 = vunpack.c.l.bf16 %v2515
        %v2548 = vunpack.c.l.bf16 %v2516
        %v2549 = vunpack.c.l.bf16 %v2517
        %v2550 = vunpack.c.l.bf16 %v2518
        %v2551 = vunpack.c.l.bf16 %v2519
        %v2552 = vunpack.c.l.bf16 %v2520
        %v2553 = vunpack.c.l.bf16 %v2521
        %v2554 = vunpack.c.l.bf16 %v2522
        %v2555 = vunpack.c.l.bf16 %v2523
        %v2556 = vunpack.c.l.bf16 %v2524
        %v2557 = vunpack.c.l.bf16 %v2525
        %v2558 = vunpack.c.l.bf16 %v2526
        %v2559 = vunpack.c.l.bf16 %v2527
        %v2560 = vunpack.c.l.bf16 %v2528
        %v2561 = vunpack.c.l.bf16 %v2529
        %v2562 = vunpack.c.l.bf16 %v2530
        %v2563 = vunpack.c.l.bf16 %v2531
        %v2564 = vunpack.c.l.bf16 %v2532
        %v2565 = vunpack.c.l.bf16 %v2533
        %v2566 = vunpack.c.l.bf16 %v2534
        %v2567 = vunpack.c.l.bf16 %v2535
        %v2568 = vunpack.c.l.bf16 %v2536
        %v2569 = vunpack.c.l.bf16 %v2537
        %v2570 = vunpack.c.l.bf16 %v2538
        %v2571 = vunpack.c.l.bf16 %v2539
        %v2572 = vunpack.c.l.bf16 %v2540
        %v2573 = vunpack.c.l.bf16 %v2541
        %v2574 = vunpack.c.l.bf16 %v2542
        %v2575 = vunpack.c.l.bf16 %v2543
        %v2576 = vunpack.c.l.bf16 %v2544
        %v2577 = vunpack.c.l.bf16 %v2545
        %v2578 = vadd.f32 %v2482, %v2546
        %v2579 = vadd.f32 %v2483, %v2547
        %v2580 = vadd.f32 %v2484, %v2548
        %v2581 = vadd.f32 %v2485, %v2549
        %v2582 = vadd.f32 %v2486, %v2550
        %v2583 = vadd.f32 %v2487, %v2551
        %v2584 = vadd.f32 %v2488, %v2552
        %v2585 = vadd.f32 %v2489, %v2553
        %v2586 = vadd.f32 %v2490, %v2554
        %v2587 = vadd.f32 %v2491, %v2555
        %v2588 = vadd.f32 %v2492, %v2556
        %v2589 = vadd.f32 %v2493, %v2557
        %v2590 = vadd.f32 %v2494, %v2558
        %v2591 = vadd.f32 %v2495, %v2559
        %v2592 = vadd.f32 %v2496, %v2560
        %v2593 = vadd.f32 %v2497, %v2561
        %v2594 = vadd.f32 %v2498, %v2562
        %v2595 = vadd.f32 %v2499, %v2563
        %v2596 = vadd.f32 %v2500, %v2564
        %v2597 = vadd.f32 %v2501, %v2565
        %v2598 = vadd.f32 %v2502, %v2566
        %v2599 = vadd.f32 %v2503, %v2567
        %v2600 = vadd.f32 %v2504, %v2568
        %v2601 = vadd.f32 %v2505, %v2569
        %v2602 = vadd.f32 %v2506, %v2570
        %v2603 = vadd.f32 %v2507, %v2571
        %v2604 = vadd.f32 %v2508, %v2572
        %v2605 = vadd.f32 %v2509, %v2573
        %v2606 = vadd.f32 %v2510, %v2574
        %v2607 = vadd.f32 %v2511, %v2575
        %v2608 = vadd.f32 %v2512, %v2576
        %v2609 = vadd.f32 %v2513, %v2577
        %v2610 = vld [vmem:[%s370] sm:$0x1]
        %v2612 = vperm.slane %v2610, 0
        %v2614 = vmul.f32 %v2578, %v2612
        %v2615 = vmul.f32 %v2579, %v2612
        %v2616 = vmul.f32 %v2580, %v2612
        %v2617 = vmul.f32 %v2581, %v2612
        %v2618 = vmul.f32 %v2582, %v2612
        %v2619 = vmul.f32 %v2583, %v2612
        %v2620 = vmul.f32 %v2584, %v2612
        %v2621 = vmul.f32 %v2585, %v2612
        %v2622 = vmul.f32 %v2586, %v2612
        %v2623 = vmul.f32 %v2587, %v2612
        %v2624 = vmul.f32 %v2588, %v2612
        %v2625 = vmul.f32 %v2589, %v2612
        %v2626 = vmul.f32 %v2590, %v2612
        %v2627 = vmul.f32 %v2591, %v2612
        %v2628 = vmul.f32 %v2592, %v2612
        %v2629 = vmul.f32 %v2593, %v2612
        %v2630 = vmul.f32 %v2594, %v2612
        %v2631 = vmul.f32 %v2595, %v2612
        %v2632 = vmul.f32 %v2596, %v2612
        %v2633 = vmul.f32 %v2597, %v2612
        %v2634 = vmul.f32 %v2598, %v2612
        %v2635 = vmul.f32 %v2599, %v2612
        %v2636 = vmul.f32 %v2600, %v2612
        %v2637 = vmul.f32 %v2601, %v2612
        %v2638 = vmul.f32 %v2602, %v2612
        %v2639 = vmul.f32 %v2603, %v2612
        %v2640 = vmul.f32 %v2604, %v2612
        %v2641 = vmul.f32 %v2605, %v2612
        %v2642 = vmul.f32 %v2606, %v2612
        %v2643 = vmul.f32 %v2607, %v2612
        %v2644 = vmul.f32 %v2608, %v2612
        %v2645 = vmul.f32 %v2609, %v2612
        %v2646 = vld [vmem:[%s373] sm:$0x1]
        %v2648 = vperm.slane %v2646, 0
        %v2650 = vadd.f32 %v2614, %v2648
        %v2651 = vadd.f32 %v2615, %v2648
        %v2652 = vadd.f32 %v2616, %v2648
        %v2653 = vadd.f32 %v2617, %v2648
        %v2654 = vadd.f32 %v2618, %v2648
        %v2655 = vadd.f32 %v2619, %v2648
        %v2656 = vadd.f32 %v2620, %v2648
        %v2657 = vadd.f32 %v2621, %v2648
        %v2658 = vadd.f32 %v2622, %v2648
        %v2659 = vadd.f32 %v2623, %v2648
        %v2660 = vadd.f32 %v2624, %v2648
        %v2661 = vadd.f32 %v2625, %v2648
        %v2662 = vadd.f32 %v2626, %v2648
        %v2663 = vadd.f32 %v2627, %v2648
        %v2664 = vadd.f32 %v2628, %v2648
        %v2665 = vadd.f32 %v2629, %v2648
        %v2666 = vadd.f32 %v2630, %v2648
        %v2667 = vadd.f32 %v2631, %v2648
        %v2668 = vadd.f32 %v2632, %v2648
        %v2669 = vadd.f32 %v2633, %v2648
        %v2670 = vadd.f32 %v2634, %v2648
        %v2671 = vadd.f32 %v2635, %v2648
        %v2672 = vadd.f32 %v2636, %v2648
        %v2673 = vadd.f32 %v2637, %v2648
        %v2674 = vadd.f32 %v2638, %v2648
        %v2675 = vadd.f32 %v2639, %v2648
        %v2676 = vadd.f32 %v2640, %v2648
        %v2677 = vadd.f32 %v2641, %v2648
        %v2678 = vadd.f32 %v2642, %v2648
        %v2679 = vadd.f32 %v2643, %v2648
        %v2680 = vadd.f32 %v2644, %v2648
        %v2681 = vadd.f32 %v2645, %v2648
        %v2682 = vmax.f32 %v2650, 0.0
        %v2683 = vmax.f32 %v2651, 0.0
        %v2684 = vmax.f32 %v2652, 0.0
        %v2685 = vmax.f32 %v2653, 0.0
        %v2686 = vmax.f32 %v2654, 0.0
        %v2687 = vmax.f32 %v2655, 0.0
        %v2688 = vmax.f32 %v2656, 0.0
        %v2689 = vmax.f32 %v2657, 0.0
        %v2690 = vmax.f32 %v2658, 0.0
        %v2691 = vmax.f32 %v2659, 0.0
        %v2692 = vmax.f32 %v2660, 0.0
        %v2693 = vmax.f32 %v2661, 0.0
        %v2694 = vmax.f32 %v2662, 0.0
        %v2695 = vmax.f32 %v2663, 0.0
        %v2696 = vmax.f32 %v2664, 0.0
        %v2697 = vmax.f32 %v2665, 0.0
        %v2698 = vmax.f32 %v2666, 0.0
        %v2699 = vmax.f32 %v2667, 0.0
        %v2700 = vmax.f32 %v2668, 0.0
        %v2701 = vmax.f32 %v2669, 0.0
        %v2702 = vmax.f32 %v2670, 0.0
        %v2703 = vmax.f32 %v2671, 0.0
        %v2704 = vmax.f32 %v2672, 0.0
        %v2705 = vmax.f32 %v2673, 0.0
        %v2706 = vmax.f32 %v2674, 0.0
        %v2707 = vmax.f32 %v2675, 0.0
        %v2708 = vmax.f32 %v2676, 0.0
        %v2709 = vmax.f32 %v2677, 0.0
        %v2710 = vmax.f32 %v2678, 0.0
        %v2711 = vmax.f32 %v2679, 0.0
        %v2712 = vmax.f32 %v2680, 0.0
        %v2713 = vmax.f32 %v2681, 0.0
        %2714 = vst.msk [vmem:[%s398] sm:$0xff] %vm586, %v2682
        %2715 = vst.msk [vmem:[%s398 + $0x8] sm:$0xff] %vm586, %v2683
        %2716 = vst.msk [vmem:[%s398 + $0x10] sm:$0xff] %vm586, %v2684
        %2717 = vst.msk [vmem:[%s398 + $0x18] sm:$0xff] %vm586, %v2685
        %2718 = vst.msk [vmem:[%s398 + $0x20] sm:$0xff] %vm586, %v2686
        %2719 = vst.msk [vmem:[%s398 + $0x28] sm:$0xff] %vm586, %v2687
        %2720 = vst.msk [vmem:[%s398 + $0x30] sm:$0xff] %vm586, %v2688
        %2721 = vst.msk [vmem:[%s398 + $0x38] sm:$0xff] %vm586, %v2689
        %2722 = vst.msk [vmem:[%s398 + $0x40] sm:$0xff] %vm586, %v2690
        %2723 = vst.msk [vmem:[%s398 + $0x48] sm:$0xff] %vm586, %v2691
        %2724 = vst.msk [vmem:[%s398 + $0x50] sm:$0xff] %vm586, %v2692
        %2725 = vst.msk [vmem:[%s398 + $0x58] sm:$0xff] %vm586, %v2693
        %2726 = vst.msk [vmem:[%s398 + $0x60] sm:$0xff] %vm586, %v2694
        %2727 = vst.msk [vmem:[%s398 + $0x68] sm:$0xff] %vm586, %v2695
        %2728 = vst.msk [vmem:[%s398 + $0x70] sm:$0xff] %vm586, %v2696
        %2729 = vst.msk [vmem:[%s398 + $0x78] sm:$0xff] %vm586, %v2697
        %2730 = vst.msk [vmem:[%s398 + $0x80] sm:$0xff] %vm586, %v2698
        %2731 = vst.msk [vmem:[%s398 + $0x88] sm:$0xff] %vm586, %v2699
        %2732 = vst.msk [vmem:[%s398 + $0x90] sm:$0xff] %vm586, %v2700
        %2733 = vst.msk [vmem:[%s398 + $0x98] sm:$0xff] %vm586, %v2701
        %2734 = vst.msk [vmem:[%s398 + $0xa0] sm:$0xff] %vm586, %v2702
        %2735 = vst.msk [vmem:[%s398 + $0xa8] sm:$0xff] %vm586, %v2703
        %2736 = vst.msk [vmem:[%s398 + $0xb0] sm:$0xff] %vm586, %v2704
        %2737 = vst.msk [vmem:[%s398 + $0xb8] sm:$0xff] %vm586, %v2705
        %2738 = vst.msk [vmem:[%s398 + $0xc0] sm:$0xff] %vm586, %v2706
        %2739 = vst.msk [vmem:[%s398 + $0xc8] sm:$0xff] %vm586, %v2707
        %2740 = vst.msk [vmem:[%s398 + $0xd0] sm:$0xff] %vm586, %v2708
        %2741 = vst.msk [vmem:[%s398 + $0xd8] sm:$0xff] %vm586, %v2709
        %2742 = vst.msk [vmem:[%s398 + $0xe0] sm:$0xff] %vm586, %v2710
        %2743 = vst.msk [vmem:[%s398 + $0xe8] sm:$0xff] %vm586, %v2711
        %2744 = vst.msk [vmem:[%s398 + $0xf0] sm:$0xff] %vm586, %v2712
        %2745 = vst.msk [vmem:[%s398 + $0xf8] sm:$0xff] %vm586, %v2713
      $region48: #{global_conv_forward.7} parent=39 // pred_fallthru
        _
      %s2746 = smul.u32 2, %s23
      %p2747 = scmp.lt.s32.totalorder %s22, 1
      %s2748 = scalar_select %p2747, %s22, 1
      %p2749 = scmp.lt.s32.totalorder %s2746, 1
      %s2750 = scalar_select %p2749, %s2746, 1
      %p2751 = scmp.lt.s32.totalorder %s24, 0
      %s2752 = scalar_select %p2751, %s24, 0
      %s2753 = sadd.s32 %s2752, %s2750
      %s2754 = smul.addr %s2748, 32
      %s2755 = sadd.s32 %s2753, %s2754
      %s2756 = smul.addr %s2755, 8
      %s2757 = scalar_lea.vmem %s5, %s2756
      // Predicated region
      $region49: #{global_conv_forward.7} parent=39 // pred_check
        %p2758 = pneg %p204
      $region50: #{global_conv_forward.7} parent=39 // pred_check_branch
        %2760 = sbr.rel (%p2758) target = $region52
      $region51: #{global_conv_forward.7} parent=39 // pred_region
        %s2761 = smul.u32 2, %s23
      $region52: #{global_conv_forward.7} parent=39 // pred_fallthru
        _
    $region40: #{global_conv_forward.7} parent=5 // pred_fallthru
      _
    %p2762 = scmp.le.s32.totalorder 2, %s11
    // Predicated region
    $region53: #{global_conv_forward.7} parent=5 // pred_check
      %p2763 = pneg %p2762
    $region54: #{global_conv_forward.7} parent=5 // pred_check_branch
      %2765 = sbr.rel (%p2763) target = $region56
    $region55: #{global_conv_forward.7} parent=5 // pred_region
      %s2766 = ssub.s32 %s11, 2
      // Predicated region
      $region57: #{global_conv_forward.7} parent=55 // pred_check
        %p2767 = pneg %p210
      $region58: #{global_conv_forward.7} parent=55 // pred_check_branch
        %2769 = sbr.rel (%p2767) target = $region60
      $region59: #{global_conv_forward.7} parent=55 // pred_region
        %s2770 = smul.u32 2, %s27
        %p2771 = scmp.lt.s32.totalorder %s26, 1
        %s2772 = scalar_select %p2771, %s26, 1
        %p2773 = scmp.lt.s32.totalorder %s2770, 1
        %s2774 = scalar_select %p2773, %s2770, 1
        %p2775 = scmp.lt.s32.totalorder %s28, 0
        %s2776 = scalar_select %p2775, %s28, 0
        %s2777 = sadd.s32 %s2776, %s2774
        %s2778 = smul.addr %s2772, 32
        %s2779 = sadd.s32 %s2777, %s2778
        %s2780 = smul.addr %s2779, 8
        %s2781 = scalar_lea.vmem %s5, %s2780
      $region60: #{global_conv_forward.7} parent=55 // pred_fallthru
        _
    $region56: #{global_conv_forward.7} parent=5 // pred_fallthru
      _
  $region6: #{global_conv_forward.7} parent=0 // loop_footer
    %s15 = sadd.s32 1, %s11
  $region7: #{global_conv_forward.7} parent=0 // loop_footer_branch
    %10 = sbr.rel target = $region3
  $region8: #{global_conv_forward.7} parent=0 // loop_exit
    _

// kernel: global_conv_forward.5
$region0: #{global_conv_forward.5}
  #allocation0 [shape = 'u32[]', space=smem, size = 0x4, offset = 0x4, fixed_abs, tag = 'smem constant byte address 0x4 - core index']
  #allocation1 [shape = 'u32[72,128]{1,0:T(1,128)}', space=vmem, size = 0x9000, scoped, tag = 'internal scratch']
  #allocation2 [shape = 'f32[256,8]{1,0:T(8,128)}', space=vmem, size = 0x20000, scoped, tag = 'scratch operand']
  %s0 = inlined_call_operand.vmem [shape: bf16[2,16,22,8], index: 0, kind: input, shape index: {}]
  %s1 = inlined_call_operand.vmem [shape: bf16[7,8,8], index: 1, kind: input, shape index: {}]
  %s2 = inlined_call_operand.vmem [shape: bf16[2,16,16,8], index: 2, kind: output, shape index: {}]
  %s3 = sld [smem:[#allocation0]]
  $region49: #{global_conv_forward.5} parent=0
    _
  %s5 = ssub.s32 1, %s3
  %s6 = scalar_select 0, %s5, %s3
  loop: start=0, step=1, limit=4
  $region2: #{global_conv_forward.5} parent=0 // loop_pre_header
    _
  $region3: #{global_conv_forward.5} parent=0 // loop_header
    %s8 = sphi 0, %s12
    %p9 = scmp.ge.s32.totalorder %s8, 4
    %s15 = sphi 0, %s41
    %s16 = sphi 0, %s37
    %s17 = sphi 0, %s33
    %s18 = sphi 0, %s29
    %s19 = sphi 0, %s15
    %s20 = sphi 0, %s16
    %s21 = sphi 0, %s17
    %s22 = sphi 0, %s18
    %s23 = sphi 0, %s19
    %s24 = sphi 0, %s20
    %s25 = sphi 0, %s21
    %s26 = sphi 0, %s22
    %s48 = sphi 0, %s50
    %s51 = sphi 0, %s48
    %s52 = sphi 0, %s51
    %s68 = sphi 0, %s52
    %s76 = sphi 0, %s78
    %s79 = sphi 0, %s76
    %s80 = sphi 0, %s79
    %s96 = sphi 0, %s80
    %s106 = sphi 0, %s108
    %s109 = sphi 0, %s106
    %s110 = sphi 0, %s109
    %s126 = sphi 0, %s110
  $region4: #{global_conv_forward.5} parent=0 // loop_header_branch
    %11 = sbr.rel (%p9) target = $region8
  $region5: #{global_conv_forward.5} parent=0 // loop_body
    %s13 = ssub.s32 %s8, 1
    %s14 = ssub.s32 %s8, 2
    %s27 = sadd.s32 1, %s18
    %p28 = scmp.ge.s32.totalorder %s27, 1
    %s29 = scalar_select %p28, 0, %s27
    %s30 = sadd.s32 1, %s17
    %s31 = scalar_select %p28, %s30, %s17
    %p32 = scmp.ge.s32.totalorder %s31, 1
    %s33 = scalar_select %p32, 0, %s31
    %s34 = sadd.s32 1, %s16
    %s35 = scalar_select %p32, %s34, %s16
    %p36 = scmp.ge.s32.totalorder %s35, 1
    %s37 = scalar_select %p36, 0, %s35
    %s38 = sadd.s32 1, %s15
    %s39 = scalar_select %p36, %s38, %s15
    %p40 = scmp.ge.s32.totalorder %s39, 2
    %s41 = scalar_select %p40, 0, %s39
    %s42 = ssub.s32 %s15, %s41
    %s43 = ssub.s32 %s16, %s37
    %s44 = sor.u32 %s42, %s43
    %s45 = ssub.s32 %s18, %s29
    %s46 = sor.u32 %s44, %s45
    %p47 = scmp.eq.s32.totalorder %s46, 0
    %s49 = sadd.s32 %s48, 1
    %s50 = scalar_select %p47, %s48, %s49
    %p53 = pneg %p47
    %p54 = scmp.eq.s32.totalorder %s8, 1
    %p55 = por %p53, %p54
    %p56 = scmp.ne.s32.totalorder %s48, %s51
    %p57 = scmp.eq.s32.totalorder %s8, 0
    %p58 = por %p56, %p57
    %p59 = scmp.ne.s32.totalorder %s48, %s51
    %p60 = scmp.eq.s32.totalorder %s13, 1
    %p61 = por %p59, %p60
    %p62 = scmp.ne.s32.totalorder %s51, %s52
    %p63 = scmp.eq.s32.totalorder %s13, 0
    %p64 = por %p62, %p63
    %p65 = scmp.ne.s32.totalorder %s51, %s52
    %p66 = scmp.eq.s32.totalorder %s14, 1
    %p67 = por %p65, %p66
    %p69 = scmp.ne.s32.totalorder %s52, %s68
    %p70 = scmp.eq.s32.totalorder %s14, 0
    %p71 = por %p69, %p70
    %s72 = ssub.s32 %s18, %s29
    %s73 = ssub.s32 %s17, %s33
    %s74 = sor.u32 %s72, %s73
    %p75 = scmp.eq.s32.totalorder %s74, 0
    %s77 = sadd.s32 %s76, 1
    %s78 = scalar_select %p75, %s76, %s77
    %p81 = pneg %p75
    %p82 = scmp.eq.s32.totalorder %s8, 1
    %p83 = por %p81, %p82
    %p84 = scmp.ne.s32.totalorder %s76, %s79
    %p85 = scmp.eq.s32.totalorder %s8, 0
    %p86 = por %p84, %p85
    %p87 = scmp.ne.s32.totalorder %s76, %s79
    %p88 = scmp.eq.s32.totalorder %s13, 1
    %p89 = por %p87, %p88
    %p90 = scmp.ne.s32.totalorder %s79, %s80
    %p91 = scmp.eq.s32.totalorder %s13, 0
    %p92 = por %p90, %p91
    %p93 = scmp.ne.s32.totalorder %s79, %s80
    %p94 = scmp.eq.s32.totalorder %s14, 1
    %p95 = por %p93, %p94
    %p97 = scmp.ne.s32.totalorder %s80, %s96
    %p98 = scmp.eq.s32.totalorder %s14, 0
    %p99 = por %p97, %p98
    %s100 = ssub.s32 %s15, %s41
    %s101 = ssub.s32 %s16, %s37
    %s102 = sor.u32 %s100, %s101
    %s103 = ssub.s32 %s17, %s33
    %s104 = sor.u32 %s102, %s103
    %p105 = scmp.eq.s32.totalorder %s104, 0
    %s107 = sadd.s32 %s106, 1
    %s108 = scalar_select %p105, %s106, %s107
    %p111 = pneg %p105
    %p112 = scmp.eq.s32.totalorder %s8, 1
    %p113 = por %p111, %p112
    %p114 = scmp.ne.s32.totalorder %s106, %s109
    %p115 = scmp.eq.s32.totalorder %s8, 0
    %p116 = por %p114, %p115
    %p117 = scmp.ne.s32.totalorder %s106, %s109
    %p118 = scmp.eq.s32.totalorder %s13, 1
    %p119 = por %p117, %p118
    %p120 = scmp.ne.s32.totalorder %s109, %s110
    %p121 = scmp.eq.s32.totalorder %s13, 0
    %p122 = por %p120, %p121
    %p123 = scmp.ne.s32.totalorder %s109, %s110
    %p124 = scmp.eq.s32.totalorder %s14, 1
    %p125 = por %p123, %p124
    %p127 = scmp.ne.s32.totalorder %s110, %s126
    %p128 = scmp.eq.s32.totalorder %s14, 0
    %p129 = por %p127, %p128
    %p130 = scmp.le.s32.totalorder 1, %s8
    %p131 = scmp.lt.s32.totalorder %s8, 3
    %p132 = pnand %p130, %p131
    %p133 = pneg %p132
    // Predicated region
    $region9: #{global_conv_forward.5} parent=5 // pred_check
      _
    $region10: #{global_conv_forward.5} parent=5 // pred_check_branch
      %135 = sbr.rel (%p132) target = $region12
    $region11: #{global_conv_forward.5} parent=5 // pred_region
      %s136 = ssub.s32 %s8, 1
      // Predicated region
      $region13: #{global_conv_forward.5} parent=11 // pred_check
        %p137 = pneg %p92
      $region14: #{global_conv_forward.5} parent=11 // pred_check_branch
        %139 = sbr.rel (%p137) target = $region16
      $region15: #{global_conv_forward.5} parent=11 // pred_region
        %p140 = scmp.lt.s32.totalorder %s22, 0
        %s141 = scalar_select %p140, %s22, 0
        %p142 = scmp.lt.s32.totalorder %s21, 0
        %s143 = scalar_select %p142, %s21, 0
        %s144 = sadd.s32 %s143, %s141
        %s145 = smul.addr %s144, 4
        %s146 = scalar_lea.vmem %s1, %s145
      $region16: #{global_conv_forward.5} parent=11 // pred_fallthru
        _
    $region12: #{global_conv_forward.5} parent=5 // pred_fallthru
      _
    %p147 = scmp.lt.s32.totalorder %s8, 2
    // Predicated region
    $region17: #{global_conv_forward.5} parent=5 // pred_check
      %p148 = pneg %p147
    $region18: #{global_conv_forward.5} parent=5 // pred_check_branch
      %150 = sbr.rel (%p148) target = $region20
    $region19: #{global_conv_forward.5} parent=5 // pred_region
      // Predicated region
      $region21: #{global_conv_forward.5} parent=19 // pred_check
        %p151 = pneg %p58
      $region22: #{global_conv_forward.5} parent=19 // pred_check_branch
        %153 = sbr.rel (%p151) target = $region24
      $region23: #{global_conv_forward.5} parent=19 // pred_region
        %s154 = smul.u32 16, %s16
        %p155 = scmp.lt.s32.totalorder %s15, 1
        %s156 = scalar_select %p155, %s15, 1
        %p157 = scmp.lt.s32.totalorder %s154, 15
        %s158 = scalar_select %p157, %s154, 15
        %p159 = scmp.lt.s32.totalorder %s18, 0
        %s160 = scalar_select %p159, %s18, 0
        %s161 = smul.addr %s158, 3
        %s162 = sadd.s32 %s160, %s161
        %s163 = smul.addr %s156, 48
        %s164 = sadd.s32 %s162, %s163
        %s165 = smul.addr %s164, 4
        %s166 = scalar_lea.vmem %s0, %s165
        %s167 = smul.u32 16, %s16
      $region24: #{global_conv_forward.5} parent=19 // pred_fallthru
        _
    $region20: #{global_conv_forward.5} parent=5 // pred_fallthru
      _
    %p168 = scmp.le.s32.totalorder 1, %s8
    %p169 = scmp.lt.s32.totalorder %s8, 3
    %p170 = pnand %p168, %p169
    %p171 = pneg %p170
    // Predicated region
    $region25: #{global_conv_forward.5} parent=5 // pred_check
      _
    $region26: #{global_conv_forward.5} parent=5 // pred_check_branch
      %173 = sbr.rel (%p170) target = $region28
    $region27: #{global_conv_forward.5} parent=5 // pred_region
      %s174 = ssub.s32 %s8, 1
      %s175 = smul.u32 16, %s20
      %p176 = scmp.lt.s32.totalorder %s19, 1
      %s177 = scalar_select %p176, %s19, 1
      %p178 = scmp.lt.s32.totalorder %s175, 15
      %s179 = scalar_select %p178, %s175, 15
      %p180 = scmp.lt.s32.totalorder %s22, 0
      %s181 = scalar_select %p180, %s22, 0
      %s182 = smul.addr %s179, 3
      %s183 = sadd.s32 %s181, %s182
      %s184 = smul.addr %s177, 48
      %s185 = sadd.s32 %s183, %s184
      %s186 = smul.addr %s185, 4
      %s187 = scalar_lea.vmem %s0, %s186
      %p188 = pneg %p64
      %p189 = pneg %p61
      %p190 = scmp.lt.s32.totalorder %s22, 0
      %s191 = scalar_select %p190, %s22, 0
      %p192 = scmp.lt.s32.totalorder %s21, 0
      %s193 = scalar_select %p192, %s21, 0
      %s194 = sadd.s32 %s193, %s191
      %s195 = smul.addr %s194, 4
      %s196 = scalar_lea.vmem %s1, %s195
      %p197 = pneg %p92
      %p198 = pneg %p89
      %p199 = pneg %p122
      %p200 = pneg %p119
      %s201 = smul.u32 16, %s20
      %p202 = scmp.lt.s32.totalorder %s19, 1
      %s203 = scalar_select %p202, %s19, 1
      %p204 = scmp.lt.s32.totalorder %s201, 15
      %s205 = scalar_select %p204, %s201, 15
      %p206 = scmp.lt.s32.totalorder %s21, 0
      %s207 = scalar_select %p206, %s21, 0
      %s208 = smul.addr %s205, 2
      %s209 = sadd.s32 %s207, %s208
      %s210 = smul.addr %s203, 32
      %s211 = sadd.s32 %s209, %s210
      %s212 = smul.addr %s211, 4
      %s213 = scalar_lea.vmem %s2, %s212
      %s214 = smul.u32 16, %s20
      %p215 = scmp.lt.s32.totalorder %s19, 1
      %s216 = scalar_select %p215, %s19, 1
      %p217 = scmp.lt.s32.totalorder %s214, 15
      %s218 = scalar_select %p217, %s214, 15
      %p219 = scmp.lt.s32.totalorder %s22, 0
      %s220 = scalar_select %p219, %s22, 0
      %s221 = smul.addr %s218, 3
      %s222 = sadd.s32 %s220, %s221
      %s223 = smul.addr %s216, 48
      %s224 = sadd.s32 %s222, %s223
      %s225 = smul.addr %s224, 4
      %s226 = scalar_lea.vmem %s0, %s225
      %s227 = smul.u32 16, %s20
      %p228 = scmp.lt.s32.totalorder %s22, 0
      %s229 = scalar_select %p228, %s22, 0
      %p230 = scmp.lt.s32.totalorder %s21, 0
      %s231 = scalar_select %p230, %s21, 0
      %s232 = sadd.s32 %s231, %s229
      %s233 = smul.addr %s232, 4
      %s234 = scalar_lea.vmem %s1, %s233
      %s235 = smul.u32 16, %s20
      %p236 = scmp.lt.s32.totalorder %s19, 1
      %s237 = scalar_select %p236, %s19, 1
      %p238 = scmp.lt.s32.totalorder %s235, 15
      %s239 = scalar_select %p238, %s235, 15
      %p240 = scmp.lt.s32.totalorder %s21, 0
      %s241 = scalar_select %p240, %s21, 0
      %s242 = smul.addr %s239, 2
      %s243 = sadd.s32 %s241, %s242
      %s244 = smul.addr %s237, 32
      %s245 = sadd.s32 %s243, %s244
      %s246 = smul.addr %s245, 4
      %s247 = scalar_lea.vmem %s2, %s246
      %s248 = smul.u32 16, %s20
      %p250 = scmp.eq.s32.totalorder %s22, 0
      // Predicated region
      $region29: #{global_conv_forward.5} parent=27 // pred_check
        %p251 = pneg %p250
      $region30: #{global_conv_forward.5} parent=27 // pred_check_branch
        %253 = sbr.rel (%p251) target = $region32
      $region31: #{global_conv_forward.5} parent=27 // pred_region
        %vm254 = vcmask 64512
        %255 = vst.msk [vmem:[#allocation2] sm:$0xff] %vm254, 0.0
        %256 = vst.msk [vmem:[#allocation2 + $0x8] sm:$0xff] %vm254, 0.0
        %257 = vst.msk [vmem:[#allocation2 + $0x10] sm:$0xff] %vm254, 0.0
        %258 = vst.msk [vmem:[#allocation2 + $0x18] sm:$0xff] %vm254, 0.0
        %259 = vst.msk [vmem:[#allocation2 + $0x20] sm:$0xff] %vm254, 0.0
        %260 = vst.msk [vmem:[#allocation2 + $0x28] sm:$0xff] %vm254, 0.0
        %261 = vst.msk [vmem:[#allocation2 + $0x30] sm:$0xff] %vm254, 0.0
        %262 = vst.msk [vmem:[#allocation2 + $0x38] sm:$0xff] %vm254, 0.0
        %263 = vst.msk [vmem:[#allocation2 + $0x40] sm:$0xff] %vm254, 0.0
        %264 = vst.msk [vmem:[#allocation2 + $0x48] sm:$0xff] %vm254, 0.0
        %265 = vst.msk [vmem:[#allocation2 + $0x50] sm:$0xff] %vm254, 0.0
        %266 = vst.msk [vmem:[#allocation2 + $0x58] sm:$0xff] %vm254, 0.0
        %267 = vst.msk [vmem:[#allocation2 + $0x60] sm:$0xff] %vm254, 0.0
        %268 = vst.msk [vmem:[#allocation2 + $0x68] sm:$0xff] %vm254, 0.0
        %269 = vst.msk [vmem:[#allocation2 + $0x70] sm:$0xff] %vm254, 0.0
        %270 = vst.msk [vmem:[#allocation2 + $0x78] sm:$0xff] %vm254, 0.0
        %271 = vst.msk [vmem:[#allocation2 + $0x80] sm:$0xff] %vm254, 0.0
        %272 = vst.msk [vmem:[#allocation2 + $0x88] sm:$0xff] %vm254, 0.0
        %273 = vst.msk [vmem:[#allocation2 + $0x90] sm:$0xff] %vm254, 0.0
        %274 = vst.msk [vmem:[#allocation2 + $0x98] sm:$0xff] %vm254, 0.0
        %275 = vst.msk [vmem:[#allocation2 + $0xa0] sm:$0xff] %vm254, 0.0
        %276 = vst.msk [vmem:[#allocation2 + $0xa8] sm:$0xff] %vm254, 0.0
        %277 = vst.msk [vmem:[#allocation2 + $0xb0] sm:$0xff] %vm254, 0.0
        %278 = vst.msk [vmem:[#allocation2 + $0xb8] sm:$0xff] %vm254, 0.0
        %279 = vst.msk [vmem:[#allocation2 + $0xc0] sm:$0xff] %vm254, 0.0
        %280 = vst.msk [vmem:[#allocation2 + $0xc8] sm:$0xff] %vm254, 0.0
        %281 = vst.msk [vmem:[#allocation2 + $0xd0] sm:$0xff] %vm254, 0.0
        %282 = vst.msk [vmem:[#allocation2 + $0xd8] sm:$0xff] %vm254, 0.0
        %283 = vst.msk [vmem:[#allocation2 + $0xe0] sm:$0xff] %vm254, 0.0
        %284 = vst.msk [vmem:[#allocation2 + $0xe8] sm:$0xff] %vm254, 0.0
        %285 = vst.msk [vmem:[#allocation2 + $0xf0] sm:$0xff] %vm254, 0.0
        %286 = vst.msk [vmem:[#allocation2 + $0xf8] sm:$0xff] %vm254, 0.0
      $region32: #{global_conv_forward.5} parent=27 // pred_fallthru
        _
      %v287 = vld [vmem:[%s226] sm:$0xf]
      %v288 = vld [vmem:[%s226 + $0x4] sm:$0xf]
      %v289 = vld [vmem:[%s226 + $0xc] sm:$0xf]
      %v290 = vld [vmem:[%s226 + $0x10] sm:$0xf]
      %v291 = vld [vmem:[%s226 + $0x18] sm:$0xf]
      %v292 = vld [vmem:[%s226 + $0x1c] sm:$0xf]
      %v293 = vld [vmem:[%s226 + $0x24] sm:$0xf]
      %v294 = vld [vmem:[%s226 + $0x28] sm:$0xf]
      %v295 = vld [vmem:[%s226 + $0x30] sm:$0xf]
      %v296 = vld [vmem:[%s226 + $0x34] sm:$0xf]
      %v297 = vld [vmem:[%s226 + $0x3c] sm:$0xf]
      %v298 = vld [vmem:[%s226 + $0x40] sm:$0xf]
      %v299 = vld [vmem:[%s226 + $0x48] sm:$0xf]
      %v300 = vld [vmem:[%s226 + $0x4c] sm:$0xf]
      %v301 = vld [vmem:[%s226 + $0x54] sm:$0xf]
      %v302 = vld [vmem:[%s226 + $0x58] sm:$0xf]
      %v303 = vld [vmem:[%s226 + $0x60] sm:$0xf]
      %v304 = vld [vmem:[%s226 + $0x64] sm:$0xf]
      %v305 = vld [vmem:[%s226 + $0x6c] sm:$0xf]
      %v306 = vld [vmem:[%s226 + $0x70] sm:$0xf]
      %v307 = vld [vmem:[%s226 + $0x78] sm:$0xf]
      %v308 = vld [vmem:[%s226 + $0x7c] sm:$0xf]
      %v309 = vld [vmem:[%s226 + $0x84] sm:$0xf]
      %v310 = vld [vmem:[%s226 + $0x88] sm:$0xf]
      %v311 = vld [vmem:[%s226 + $0x90] sm:$0xf]
      %v312 = vld [vmem:[%s226 + $0x94] sm:$0xf]
      %v313 = vld [vmem:[%s226 + $0x9c] sm:$0xf]
      %v314 = vld [vmem:[%s226 + $0xa0] sm:$0xf]
      %v315 = vld [vmem:[%s226 + $0xa8] sm:$0xf]
      %v316 = vld [vmem:[%s226 + $0xac] sm:$0xf]
      %v317 = vld [vmem:[%s226 + $0xb4] sm:$0xf]
      %v318 = vld [vmem:[%s226 + $0xb8] sm:$0xf]
      %v319 = vld [vmem:[%s234] sm:$0xf]
      %v320 = vld [vmem:[%s226 + $0x8] sm:$0x1]
      %v321 = vld [vmem:[%s226 + $0x14] sm:$0x1]
      %v322 = vld [vmem:[%s226 + $0x20] sm:$0x1]
      %v323 = vld [vmem:[%s226 + $0x2c] sm:$0x1]
      %v324 = vld [vmem:[%s226 + $0x38] sm:$0x1]
      %v325 = vld [vmem:[%s226 + $0x44] sm:$0x1]
      %v326 = vld [vmem:[%s226 + $0x50] sm:$0x1]
      %v327 = vld [vmem:[%s226 + $0x5c] sm:$0x1]
      %v328 = vld [vmem:[%s226 + $0x68] sm:$0x1]
      %v329 = vld [vmem:[%s226 + $0x74] sm:$0x1]
      %v330 = vld [vmem:[%s226 + $0x80] sm:$0x1]
      %v331 = vld [vmem:[%s226 + $0x8c] sm:$0x1]
      %v332 = vld [vmem:[%s226 + $0x98] sm:$0x1]
      %v333 = vld [vmem:[%s226 + $0xa4] sm:$0x1]
      %v334 = vld [vmem:[%s226 + $0xb0] sm:$0x1]
      %v335 = vld [vmem:[%s226 + $0xbc] sm:$0x1]
      %vm336 = vsmask.f32 3328
      %vm337 = vsmask.f32 7440
      %vm338 = vmor %vm336, %vm337
      %v340 = vshrl.u32 %v287, 16
      %v342 = vrot.slane %v340, 4
      %v343 = vshll.u32 %v287, 16
      %v345 = vrot.slane %v343, 5
      %v346 = vor.u32 %v342, %v345
      %v347 = vrot.slane %v346, 4
      %v349 = vshll.u32 %v288, 16
      %v351 = vrot.slane %v349, 5
      %v352 = vsel %vm338, %v347, %v351
      %v353 = vshrl.u32 %v288, 16
      %v355 = vrot.slane %v353, 4
      %v356 = vor.u32 %v355, %v351
      %v357 = vrot.slane %v356, 4
      %v359 = vshll.u32 %v320, 16
      %v361 = vrot.slane %v359, 5
      %v362 = vsel %vm338, %v357, %v361
      %v364 = vshrl.u32 %v289, 16
      %v366 = vrot.slane %v364, 4
      %v367 = vshll.u32 %v289, 16
      %v369 = vrot.slane %v367, 5
      %v370 = vor.u32 %v366, %v369
      %v371 = vrot.slane %v370, 4
      %v373 = vshll.u32 %v290, 16
      %v375 = vrot.slane %v373, 5
      %v376 = vsel %vm338, %v371, %v375
      %v377 = vshrl.u32 %v290, 16
      %v379 = vrot.slane %v377, 4
      %v380 = vor.u32 %v379, %v375
      %v381 = vrot.slane %v380, 4
      %v383 = vshll.u32 %v321, 16
      %v385 = vrot.slane %v383, 5
      %v386 = vsel %vm338, %v381, %v385
      %v388 = vshrl.u32 %v291, 16
      %v390 = vrot.slane %v388, 4
      %v391 = vshll.u32 %v291, 16
      %v393 = vrot.slane %v391, 5
      %v394 = vor.u32 %v390, %v393
      %v395 = vrot.slane %v394, 4
      %v397 = vshll.u32 %v292, 16
      %v399 = vrot.slane %v397, 5
      %v400 = vsel %vm338, %v395, %v399
      %v401 = vshrl.u32 %v292, 16
      %v403 = vrot.slane %v401, 4
      %v404 = vor.u32 %v403, %v399
      %v405 = vrot.slane %v404, 4
      %v407 = vshll.u32 %v322, 16
      %v409 = vrot.slane %v407, 5
      %v410 = vsel %vm338, %v405, %v409
      %v412 = vshrl.u32 %v293, 16
      %v414 = vrot.slane %v412, 4
      %v415 = vshll.u32 %v293, 16
      %v417 = vrot.slane %v415, 5
      %v418 = vor.u32 %v414, %v417
      %v419 = vrot.slane %v418, 4
      %v421 = vshll.u32 %v294, 16
      %v423 = vrot.slane %v421, 5
      %v424 = vsel %vm338, %v419, %v423
      %v425 = vshrl.u32 %v294, 16
      %v427 = vrot.slane %v425, 4
      %v428 = vor.u32 %v427, %v423
      %v429 = vrot.slane %v428, 4
      %v431 = vshll.u32 %v323, 16
      %v433 = vrot.slane %v431, 5
      %v434 = vsel %vm338, %v429, %v433
      %v436 = vshrl.u32 %v295, 16
      %v438 = vrot.slane %v436, 4
      %v439 = vshll.u32 %v295, 16
      %v441 = vrot.slane %v439, 5
      %v442 = vor.u32 %v438, %v441
      %v443 = vrot.slane %v442, 4
      %v445 = vshll.u32 %v296, 16
      %v447 = vrot.slane %v445, 5
      %v448 = vsel %vm338, %v443, %v447
      %v449 = vshrl.u32 %v296, 16
      %v451 = vrot.slane %v449, 4
      %v452 = vor.u32 %v451, %v447
      %v453 = vrot.slane %v452, 4
      %v455 = vshll.u32 %v324, 16
      %v457 = vrot.slane %v455, 5
      %v458 = vsel %vm338, %v453, %v457
      %v460 = vshrl.u32 %v297, 16
      %v462 = vrot.slane %v460, 4
      %v463 = vshll.u32 %v297, 16
      %v465 = vrot.slane %v463, 5
      %v466 = vor.u32 %v462, %v465
      %v467 = vrot.slane %v466, 4
      %v469 = vshll.u32 %v298, 16
      %v471 = vrot.slane %v469, 5
      %v472 = vsel %vm338, %v467, %v471
      %v473 = vshrl.u32 %v298, 16
      %v475 = vrot.slane %v473, 4
      %v476 = vor.u32 %v475, %v471
      %v477 = vrot.slane %v476, 4
      %v479 = vshll.u32 %v325, 16
      %v481 = vrot.slane %v479, 5
      %v482 = vsel %vm338, %v477, %v481
      %v484 = vshrl.u32 %v299, 16
      %v486 = vrot.slane %v484, 4
      %v487 = vshll.u32 %v299, 16
      %v489 = vrot.slane %v487, 5
      %v490 = vor.u32 %v486, %v489
      %v491 = vrot.slane %v490, 4
      %v493 = vshll.u32 %v300, 16
      %v495 = vrot.slane %v493, 5
      %v496 = vsel %vm338, %v491, %v495
      %v497 = vshrl.u32 %v300, 16
      %v499 = vrot.slane %v497, 4
      %v500 = vor.u32 %v499, %v495
      %v501 = vrot.slane %v500, 4
      %v503 = vshll.u32 %v326, 16
      %v505 = vrot.slane %v503, 5
      %v506 = vsel %vm338, %v501, %v505
      %v508 = vshrl.u32 %v301, 16
      %v510 = vrot.slane %v508, 4
      %v511 = vshll.u32 %v301, 16
      %v513 = vrot.slane %v511, 5
      %v514 = vor.u32 %v510, %v513
      %v515 = vrot.slane %v514, 4
      %v517 = vshll.u32 %v302, 16
      %v519 = vrot.slane %v517, 5
      %v520 = vsel %vm338, %v515, %v519
      %v521 = vshrl.u32 %v302, 16
      %v523 = vrot.slane %v521, 4
      %v524 = vor.u32 %v523, %v519
      %v525 = vrot.slane %v524, 4
      %v527 = vshll.u32 %v327, 16
      %v529 = vrot.slane %v527, 5
      %v530 = vsel %vm338, %v525, %v529
      %v532 = vshrl.u32 %v303, 16
      %v534 = vrot.slane %v532, 4
      %v535 = vshll.u32 %v303, 16
      %v537 = vrot.slane %v535, 5
      %v538 = vor.u32 %v534, %v537
      %v539 = vrot.slane %v538, 4
      %v541 = vshll.u32 %v304, 16
      %v543 = vrot.slane %v541, 5
      %v544 = vsel %vm338, %v539, %v543
      %v545 = vshrl.u32 %v304, 16
      %v547 = vrot.slane %v545, 4
      %v548 = vor.u32 %v547, %v543
      %v549 = vrot.slane %v548, 4
      %v551 = vshll.u32 %v328, 16
      %v553 = vrot.slane %v551, 5
      %v554 = vsel %vm338, %v549, %v553
      %v556 = vshrl.u32 %v305, 16
      %v558 = vrot.slane %v556, 4
      %v559 = vshll.u32 %v305, 16
      %v561 = vrot.slane %v559, 5
      %v562 = vor.u32 %v558, %v561
      %v563 = vrot.slane %v562, 4
      %v565 = vshll.u32 %v306, 16
      %v567 = vrot.slane %v565, 5
      %v568 = vsel %vm338, %v563, %v567
      %v569 = vshrl.u32 %v306, 16
      %v571 = vrot.slane %v569, 4
      %v572 = vor.u32 %v571, %v567
      %v573 = vrot.slane %v572, 4
      %v575 = vshll.u32 %v329, 16
      %v577 = vrot.slane %v575, 5
      %v578 = vsel %vm338, %v573, %v577
      %v580 = vshrl.u32 %v307, 16
      %v582 = vrot.slane %v580, 4
      %v583 = vshll.u32 %v307, 16
      %v585 = vrot.slane %v583, 5
      %v586 = vor.u32 %v582, %v585
      %v587 = vrot.slane %v586, 4
      %v589 = vshll.u32 %v308, 16
      %v591 = vrot.slane %v589, 5
      %v592 = vsel %vm338, %v587, %v591
      %v593 = vshrl.u32 %v308, 16
      %v595 = vrot.slane %v593, 4
      %v596 = vor.u32 %v595, %v591
      %v597 = vrot.slane %v596, 4
      %v599 = vshll.u32 %v330, 16
      %v601 = vrot.slane %v599, 5
      %v602 = vsel %vm338, %v597, %v601
      %v604 = vshrl.u32 %v309, 16
      %v606 = vrot.slane %v604, 4
      %v607 = vshll.u32 %v309, 16
      %v609 = vrot.slane %v607, 5
      %v610 = vor.u32 %v606, %v609
      %v611 = vrot.slane %v610, 4
      %v613 = vshll.u32 %v310, 16
      %v615 = vrot.slane %v613, 5
      %v616 = vsel %vm338, %v611, %v615
      %v617 = vshrl.u32 %v310, 16
      %v619 = vrot.slane %v617, 4
      %v620 = vor.u32 %v619, %v615
      %v621 = vrot.slane %v620, 4
      %v623 = vshll.u32 %v331, 16
      %v625 = vrot.slane %v623, 5
      %v626 = vsel %vm338, %v621, %v625
      %v628 = vshrl.u32 %v311, 16
      %v630 = vrot.slane %v628, 4
      %v631 = vshll.u32 %v311, 16
      %v633 = vrot.slane %v631, 5
      %v634 = vor.u32 %v630, %v633
      %v635 = vrot.slane %v634, 4
      %v637 = vshll.u32 %v312, 16
      %v639 = vrot.slane %v637, 5
      %v640 = vsel %vm338, %v635, %v639
      %v641 = vshrl.u32 %v312, 16
      %v643 = vrot.slane %v641, 4
      %v644 = vor.u32 %v643, %v639
      %v645 = vrot.slane %v644, 4
      %v647 = vshll.u32 %v332, 16
      %v649 = vrot.slane %v647, 5
      %v650 = vsel %vm338, %v645, %v649
      %v652 = vshrl.u32 %v313, 16
      %v654 = vrot.slane %v652, 4
      %v655 = vshll.u32 %v313, 16
      %v657 = vrot.slane %v655, 5
      %v658 = vor.u32 %v654, %v657
      %v659 = vrot.slane %v658, 4
      %v661 = vshll.u32 %v314, 16
      %v663 = vrot.slane %v661, 5
      %v664 = vsel %vm338, %v659, %v663
      %v665 = vshrl.u32 %v314, 16
      %v667 = vrot.slane %v665, 4
      %v668 = vor.u32 %v667, %v663
      %v669 = vrot.slane %v668, 4
      %v671 = vshll.u32 %v333, 16
      %v673 = vrot.slane %v671, 5
      %v674 = vsel %vm338, %v669, %v673
      %v676 = vshrl.u32 %v315, 16
      %v678 = vrot.slane %v676, 4
      %v679 = vshll.u32 %v315, 16
      %v681 = vrot.slane %v679, 5
      %v682 = vor.u32 %v678, %v681
      %v683 = vrot.slane %v682, 4
      %v685 = vshll.u32 %v316, 16
      %v687 = vrot.slane %v685, 5
      %v688 = vsel %vm338, %v683, %v687
      %v689 = vshrl.u32 %v316, 16
      %v691 = vrot.slane %v689, 4
      %v692 = vor.u32 %v691, %v687
      %v693 = vrot.slane %v692, 4
      %v695 = vshll.u32 %v334, 16
      %v697 = vrot.slane %v695, 5
      %v698 = vsel %vm338, %v693, %v697
      %v700 = vshrl.u32 %v317, 16
      %v702 = vrot.slane %v700, 4
      %v703 = vshll.u32 %v317, 16
      %v705 = vrot.slane %v703, 5
      %v706 = vor.u32 %v702, %v705
      %v707 = vrot.slane %v706, 4
      %v709 = vshll.u32 %v318, 16
      %v711 = vrot.slane %v709, 5
      %v712 = vsel %vm338, %v707, %v711
      %v713 = vshrl.u32 %v318, 16
      %v715 = vrot.slane %v713, 4
      %v716 = vor.u32 %v715, %v711
      %v717 = vrot.slane %v716, 4
      %v719 = vshll.u32 %v335, 16
      %v721 = vrot.slane %v719, 5
      %v722 = vsel %vm338, %v717, %v721
      %s723 = scalar_lea.vmem %s234, 4
      %v724 = vld [vmem:[%s723] sm:$0xf]
      %v725 = vunpack.c.l.b16 %v352
      %v726 = vunpack.c.l.b16 %v362
      %v727 = vunpack.c.l.b16 %v376
      %v728 = vunpack.c.l.b16 %v386
      %v729 = vunpack.c.l.b16 %v400
      %v730 = vunpack.c.l.b16 %v410
      %v731 = vunpack.c.l.b16 %v424
      %v732 = vunpack.c.l.b16 %v434
      %v733 = vunpack.c.l.b16 %v448
      %v734 = vunpack.c.l.b16 %v458
      %v735 = vunpack.c.l.b16 %v472
      %v736 = vunpack.c.l.b16 %v482
      %v737 = vunpack.c.l.b16 %v496
      %v738 = vunpack.c.l.b16 %v506
      %v739 = vunpack.c.l.b16 %v520
      %v740 = vunpack.c.l.b16 %v530
      %v741 = vunpack.c.l.b16 %v544
      %v742 = vunpack.c.l.b16 %v554
      %v743 = vunpack.c.l.b16 %v568
      %v744 = vunpack.c.l.b16 %v578
      %v745 = vunpack.c.l.b16 %v592
      %v746 = vunpack.c.l.b16 %v602
      %v747 = vunpack.c.l.b16 %v616
      %v748 = vunpack.c.l.b16 %v626
      %v749 = vunpack.c.l.b16 %v640
      %v750 = vunpack.c.l.b16 %v650
      %v751 = vunpack.c.l.b16 %v664
      %v752 = vunpack.c.l.b16 %v674
      %v753 = vunpack.c.l.b16 %v688
      %v754 = vunpack.c.l.b16 %v698
      %v755 = vunpack.c.l.b16 %v712
      %v756 = vunpack.c.l.b16 %v722
      %v757 = vpack.c.b16 %v726, %v725
      %v758 = vpack.c.b16 %v728, %v727
      %v759 = vpack.c.b16 %v730, %v729
      %v760 = vpack.c.b16 %v732, %v731
      %v761 = vpack.c.b16 %v734, %v733
      %v762 = vpack.c.b16 %v736, %v735
      %v763 = vpack.c.b16 %v738, %v737
      %v764 = vpack.c.b16 %v740, %v739
      %v765 = vpack.c.b16 %v742, %v741
      %v766 = vpack.c.b16 %v744, %v743
      %v767 = vpack.c.b16 %v746, %v745
      %v768 = vpack.c.b16 %v748, %v747
      %v769 = vpack.c.b16 %v750, %v749
      %v770 = vpack.c.b16 %v752, %v751
      %v771 = vpack.c.b16 %v754, %v753
      %v772 = vpack.c.b16 %v756, %v755
      %vm773 = vcmask 64512
      %v775 = vsel %vm773, %v757, 0
      %v778 = vsel %vm773, %v758, 0
      %v781 = vsel %vm773, %v759, 0
      %v784 = vsel %vm773, %v760, 0
      %v787 = vsel %vm773, %v761, 0
      %v790 = vsel %vm773, %v762, 0
      %v793 = vsel %vm773, %v763, 0
      %v796 = vsel %vm773, %v764, 0
      %v799 = vsel %vm773, %v765, 0
      %v802 = vsel %vm773, %v766, 0
      %v805 = vsel %vm773, %v767, 0
      %v808 = vsel %vm773, %v768, 0
      %v811 = vsel %vm773, %v769, 0
      %v814 = vsel %vm773, %v770, 0
      %v817 = vsel %vm773, %v771, 0
      %v820 = vsel %vm773, %v772, 0
      %vm822 = vcmask 1043456
      %v824 = vsel %vm822, %v724, 0
      %826 = vmatpush.bf16.msra.mxu0 0
      %827 = vmatpush.bf16.msra.mxu0 0
      %828 = vmatpush.bf16.msra.mxu0 0
      %829 = vmatpush.bf16.msra.mxu0 0
      %830 = vmatpush.bf16.msra.mxu0 0
      %831 = vmatpush.bf16.msra.mxu0 0
      %832 = vmatpush.bf16.msra.mxu0 0
      %833 = vmatpush.bf16.msra.mxu0 %v824
      %834 = vmatmul.bf16.gmra.mxu0 %v775
      %v835 = vpop.f32.mrf.mxu0
      %v836 = vadd.f32 0.0, %v835
      %v837 = vpop.f32.mrf.mxu0
      %v838 = vadd.f32 0.0, %v837
      %839 = vmatmul.bf16.gmra.mxu0 %v778
      %v840 = vpop.f32.mrf.mxu0
      %v841 = vadd.f32 0.0, %v840
      %v842 = vpop.f32.mrf.mxu0
      %v843 = vadd.f32 0.0, %v842
      %844 = vmatmul.bf16.gmra.mxu0 %v781
      %v845 = vpop.f32.mrf.mxu0
      %v846 = vadd.f32 0.0, %v845
      %v847 = vpop.f32.mrf.mxu0
      %v848 = vadd.f32 0.0, %v847
      %849 = vmatmul.bf16.gmra.mxu0 %v784
      %v850 = vpop.f32.mrf.mxu0
      %v851 = vadd.f32 0.0, %v850
      %v852 = vpop.f32.mrf.mxu0
      %v853 = vadd.f32 0.0, %v852
      %854 = vmatmul.bf16.gmra.mxu0 %v787
      %v855 = vpop.f32.mrf.mxu0
      %v856 = vadd.f32 0.0, %v855
      %v857 = vpop.f32.mrf.mxu0
      %v858 = vadd.f32 0.0, %v857
      %859 = vmatmul.bf16.gmra.mxu0 %v790
      %v860 = vpop.f32.mrf.mxu0
      %v861 = vadd.f32 0.0, %v860
      %v862 = vpop.f32.mrf.mxu0
      %v863 = vadd.f32 0.0, %v862
      %864 = vmatmul.bf16.gmra.mxu0 %v793
      %v865 = vpop.f32.mrf.mxu0
      %v866 = vadd.f32 0.0, %v865
      %v867 = vpop.f32.mrf.mxu0
      %v868 = vadd.f32 0.0, %v867
      %869 = vmatmul.bf16.gmra.mxu0 %v796
      %v870 = vpop.f32.mrf.mxu0
      %v871 = vadd.f32 0.0, %v870
      %v872 = vpop.f32.mrf.mxu0
      %v873 = vadd.f32 0.0, %v872
      %874 = vmatmul.bf16.gmra.mxu0 %v799
      %v875 = vpop.f32.mrf.mxu0
      %v876 = vadd.f32 0.0, %v875
      %v877 = vpop.f32.mrf.mxu0
      %v878 = vadd.f32 0.0, %v877
      %879 = vmatmul.bf16.gmra.mxu0 %v802
      %v880 = vpop.f32.mrf.mxu0
      %v881 = vadd.f32 0.0, %v880
      %v882 = vpop.f32.mrf.mxu0
      %v883 = vadd.f32 0.0, %v882
      %884 = vmatmul.bf16.gmra.mxu0 %v805
      %v885 = vpop.f32.mrf.mxu0
      %v886 = vadd.f32 0.0, %v885
      %v887 = vpop.f32.mrf.mxu0
      %v888 = vadd.f32 0.0, %v887
      %889 = vmatmul.bf16.gmra.mxu0 %v808
      %v890 = vpop.f32.mrf.mxu0
      %v891 = vadd.f32 0.0, %v890
      %v892 = vpop.f32.mrf.mxu0
      %v893 = vadd.f32 0.0, %v892
      %894 = vmatmul.bf16.gmra.mxu0 %v811
      %v895 = vpop.f32.mrf.mxu0
      %v896 = vadd.f32 0.0, %v895
      %v897 = vpop.f32.mrf.mxu0
      %v898 = vadd.f32 0.0, %v897
      %899 = vmatmul.bf16.gmra.mxu0 %v814
      %v900 = vpop.f32.mrf.mxu0
      %v901 = vadd.f32 0.0, %v900
      %v902 = vpop.f32.mrf.mxu0
      %v903 = vadd.f32 0.0, %v902
      %904 = vmatmul.bf16.gmra.mxu0 %v817
      %v905 = vpop.f32.mrf.mxu0
      %v906 = vadd.f32 0.0, %v905
      %v907 = vpop.f32.mrf.mxu0
      %v908 = vadd.f32 0.0, %v907
      %909 = vmatmul.bf16.gmra.mxu0 %v820
      %v910 = vpop.f32.mrf.mxu0
      %v911 = vadd.f32 0.0, %v910
      %v912 = vpop.f32.mrf.mxu0
      %v913 = vadd.f32 0.0, %v912
      %914 = vdwg.mxu0
      %v947 = vunpack.c.l.b16 %v287
      %v948 = vunpack.c.l.b16 %v288
      %v949 = vunpack.c.l.b16 %v289
      %v950 = vunpack.c.l.b16 %v290
      %v951 = vunpack.c.l.b16 %v291
      %v952 = vunpack.c.l.b16 %v292
      %v953 = vunpack.c.l.b16 %v293
      %v954 = vunpack.c.l.b16 %v294
      %v955 = vunpack.c.l.b16 %v295
      %v956 = vunpack.c.l.b16 %v296
      %v957 = vunpack.c.l.b16 %v297
      %v958 = vunpack.c.l.b16 %v298
      %v959 = vunpack.c.l.b16 %v299
      %v960 = vunpack.c.l.b16 %v300
      %v961 = vunpack.c.l.b16 %v301
      %v962 = vunpack.c.l.b16 %v302
      %v963 = vunpack.c.l.b16 %v303
      %v964 = vunpack.c.l.b16 %v304
      %v965 = vunpack.c.l.b16 %v305
      %v966 = vunpack.c.l.b16 %v306
      %v967 = vunpack.c.l.b16 %v307
      %v968 = vunpack.c.l.b16 %v308
      %v969 = vunpack.c.l.b16 %v309
      %v970 = vunpack.c.l.b16 %v310
      %v971 = vunpack.c.l.b16 %v311
      %v972 = vunpack.c.l.b16 %v312
      %v973 = vunpack.c.l.b16 %v313
      %v974 = vunpack.c.l.b16 %v314
      %v975 = vunpack.c.l.b16 %v315
      %v976 = vunpack.c.l.b16 %v316
      %v977 = vunpack.c.l.b16 %v317
      %v978 = vunpack.c.l.b16 %v318
      %v979 = vpack.c.b16 %v948, %v947
      %v980 = vpack.c.b16 %v950, %v949
      %v981 = vpack.c.b16 %v952, %v951
      %v982 = vpack.c.b16 %v954, %v953
      %v983 = vpack.c.b16 %v956, %v955
      %v984 = vpack.c.b16 %v958, %v957
      %v985 = vpack.c.b16 %v960, %v959
      %v986 = vpack.c.b16 %v962, %v961
      %v987 = vpack.c.b16 %v964, %v963
      %v988 = vpack.c.b16 %v966, %v965
      %v989 = vpack.c.b16 %v968, %v967
      %v990 = vpack.c.b16 %v970, %v969
      %v991 = vpack.c.b16 %v972, %v971
      %v992 = vpack.c.b16 %v974, %v973
      %v993 = vpack.c.b16 %v976, %v975
      %v994 = vpack.c.b16 %v978, %v977
      %v996 = vsel %vm773, %v979, 0
      %v999 = vsel %vm773, %v980, 0
      %v1002 = vsel %vm773, %v981, 0
      %v1005 = vsel %vm773, %v982, 0
      %v1008 = vsel %vm773, %v983, 0
      %v1011 = vsel %vm773, %v984, 0
      %v1014 = vsel %vm773, %v985, 0
      %v1017 = vsel %vm773, %v986, 0
      %v1020 = vsel %vm773, %v987, 0
      %v1023 = vsel %vm773, %v988, 0
      %v1026 = vsel %vm773, %v989, 0
      %v1029 = vsel %vm773, %v990, 0
      %v1032 = vsel %vm773, %v991, 0
      %v1035 = vsel %vm773, %v992, 0
      %v1038 = vsel %vm773, %v993, 0
      %v1041 = vsel %vm773, %v994, 0
      %v1044 = vsel %vm822, %v319, 0
      %1046 = vmatpush.bf16.msra.mxu0 0
      %1047 = vmatpush.bf16.msra.mxu0 0
      %1048 = vmatpush.bf16.msra.mxu0 0
      %1049 = vmatpush.bf16.msra.mxu0 0
      %1050 = vmatpush.bf16.msra.mxu0 0
      %1051 = vmatpush.bf16.msra.mxu0 0
      %1052 = vmatpush.bf16.msra.mxu0 0
      %1053 = vmatpush.bf16.msra.mxu0 %v1044
      %1054 = vmatmul.bf16.gmra.mxu0 %v996
      %v1055 = vpop.f32.mrf.mxu0
      %v1056 = vadd.f32 %v836, %v1055
      %v1057 = vpop.f32.mrf.mxu0
      %v1058 = vadd.f32 %v838, %v1057
      %1059 = vmatmul.bf16.gmra.mxu0 %v999
      %v1060 = vpop.f32.mrf.mxu0
      %v1061 = vadd.f32 %v841, %v1060
      %v1062 = vpop.f32.mrf.mxu0
      %v1063 = vadd.f32 %v843, %v1062
      %1064 = vmatmul.bf16.gmra.mxu0 %v1002
      %v1065 = vpop.f32.mrf.mxu0
      %v1066 = vadd.f32 %v846, %v1065
      %v1067 = vpop.f32.mrf.mxu0
      %v1068 = vadd.f32 %v848, %v1067
      %1069 = vmatmul.bf16.gmra.mxu0 %v1005
      %v1070 = vpop.f32.mrf.mxu0
      %v1071 = vadd.f32 %v851, %v1070
      %v1072 = vpop.f32.mrf.mxu0
      %v1073 = vadd.f32 %v853, %v1072
      %1074 = vmatmul.bf16.gmra.mxu0 %v1008
      %v1075 = vpop.f32.mrf.mxu0
      %v1076 = vadd.f32 %v856, %v1075
      %v1077 = vpop.f32.mrf.mxu0
      %v1078 = vadd.f32 %v858, %v1077
      %1079 = vmatmul.bf16.gmra.mxu0 %v1011
      %v1080 = vpop.f32.mrf.mxu0
      %v1081 = vadd.f32 %v861, %v1080
      %v1082 = vpop.f32.mrf.mxu0
      %v1083 = vadd.f32 %v863, %v1082
      %1084 = vmatmul.bf16.gmra.mxu0 %v1014
      %v1085 = vpop.f32.mrf.mxu0
      %v1086 = vadd.f32 %v866, %v1085
      %v1087 = vpop.f32.mrf.mxu0
      %v1088 = vadd.f32 %v868, %v1087
      %1089 = vmatmul.bf16.gmra.mxu0 %v1017
      %v1090 = vpop.f32.mrf.mxu0
      %v1091 = vadd.f32 %v871, %v1090
      %v1092 = vpop.f32.mrf.mxu0
      %v1093 = vadd.f32 %v873, %v1092
      %1094 = vmatmul.bf16.gmra.mxu0 %v1020
      %v1095 = vpop.f32.mrf.mxu0
      %v1096 = vadd.f32 %v876, %v1095
      %v1097 = vpop.f32.mrf.mxu0
      %v1098 = vadd.f32 %v878, %v1097
      %1099 = vmatmul.bf16.gmra.mxu0 %v1023
      %v1100 = vpop.f32.mrf.mxu0
      %v1101 = vadd.f32 %v881, %v1100
      %v1102 = vpop.f32.mrf.mxu0
      %v1103 = vadd.f32 %v883, %v1102
      %1104 = vmatmul.bf16.gmra.mxu0 %v1026
      %v1105 = vpop.f32.mrf.mxu0
      %v1106 = vadd.f32 %v886, %v1105
      %v1107 = vpop.f32.mrf.mxu0
      %v1108 = vadd.f32 %v888, %v1107
      %1109 = vmatmul.bf16.gmra.mxu0 %v1029
      %v1110 = vpop.f32.mrf.mxu0
      %v1111 = vadd.f32 %v891, %v1110
      %v1112 = vpop.f32.mrf.mxu0
      %v1113 = vadd.f32 %v893, %v1112
      %1114 = vmatmul.bf16.gmra.mxu0 %v1032
      %v1115 = vpop.f32.mrf.mxu0
      %v1116 = vadd.f32 %v896, %v1115
      %v1117 = vpop.f32.mrf.mxu0
      %v1118 = vadd.f32 %v898, %v1117
      %1119 = vmatmul.bf16.gmra.mxu0 %v1035
      %v1120 = vpop.f32.mrf.mxu0
      %v1121 = vadd.f32 %v901, %v1120
      %v1122 = vpop.f32.mrf.mxu0
      %v1123 = vadd.f32 %v903, %v1122
      %1124 = vmatmul.bf16.gmra.mxu0 %v1038
      %v1125 = vpop.f32.mrf.mxu0
      %v1126 = vadd.f32 %v906, %v1125
      %v1127 = vpop.f32.mrf.mxu0
      %v1128 = vadd.f32 %v908, %v1127
      %1129 = vmatmul.bf16.gmra.mxu0 %v1041
      %v1130 = vpop.f32.mrf.mxu0
      %v1131 = vadd.f32 %v911, %v1130
      %v1132 = vpop.f32.mrf.mxu0
      %v1133 = vadd.f32 %v913, %v1132
      %1134 = vdwg.mxu0
      %v1135 = vld [vmem:[%s226] sm:$0xe]
      %v1136 = vld [vmem:[%s226 + $0xc] sm:$0xe]
      %v1137 = vld [vmem:[%s226 + $0x18] sm:$0xe]
      %v1138 = vld [vmem:[%s226 + $0x24] sm:$0xe]
      %v1139 = vld [vmem:[%s226 + $0x30] sm:$0xe]
      %v1140 = vld [vmem:[%s226 + $0x3c] sm:$0xe]
      %v1141 = vld [vmem:[%s226 + $0x48] sm:$0xe]
      %v1142 = vld [vmem:[%s226 + $0x54] sm:$0xe]
      %v1143 = vld [vmem:[%s226 + $0x60] sm:$0xe]
      %v1144 = vld [vmem:[%s226 + $0x6c] sm:$0xe]
      %v1145 = vld [vmem:[%s226 + $0x78] sm:$0xe]
      %v1146 = vld [vmem:[%s226 + $0x84] sm:$0xe]
      %v1147 = vld [vmem:[%s226 + $0x90] sm:$0xe]
      %v1148 = vld [vmem:[%s226 + $0x9c] sm:$0xe]
      %v1149 = vld [vmem:[%s226 + $0xa8] sm:$0xe]
      %v1150 = vld [vmem:[%s226 + $0xb4] sm:$0xe]
      %vm1183 = vcmask 1042432
      %vm1184 = vcmask 1046532
      %vm1185 = vmor %vm1183, %vm1184
      %v1186 = vrot.slane %v1135, 5
      %v1187 = vrot.slane %v1186, 4
      %v1188 = vrot.slane %v288, 5
      %v1189 = vsel %vm1185, %v1187, %v1188
      %v1190 = vrot.slane %v1188, 4
      %v1191 = vrot.slane %v320, 5
      %v1192 = vsel %vm1185, %v1190, %v1191
      %v1193 = vrot.slane %v1136, 5
      %v1194 = vrot.slane %v1193, 4
      %v1195 = vrot.slane %v290, 5
      %v1196 = vsel %vm1185, %v1194, %v1195
      %v1197 = vrot.slane %v1195, 4
      %v1198 = vrot.slane %v321, 5
      %v1199 = vsel %vm1185, %v1197, %v1198
      %v1200 = vrot.slane %v1137, 5
      %v1201 = vrot.slane %v1200, 4
      %v1202 = vrot.slane %v292, 5
      %v1203 = vsel %vm1185, %v1201, %v1202
      %v1204 = vrot.slane %v1202, 4
      %v1205 = vrot.slane %v322, 5
      %v1206 = vsel %vm1185, %v1204, %v1205
      %v1207 = vrot.slane %v1138, 5
      %v1208 = vrot.slane %v1207, 4
      %v1209 = vrot.slane %v294, 5
      %v1210 = vsel %vm1185, %v1208, %v1209
      %v1211 = vrot.slane %v1209, 4
      %v1212 = vrot.slane %v323, 5
      %v1213 = vsel %vm1185, %v1211, %v1212
      %v1214 = vrot.slane %v1139, 5
      %v1215 = vrot.slane %v1214, 4
      %v1216 = vrot.slane %v296, 5
      %v1217 = vsel %vm1185, %v1215, %v1216
      %v1218 = vrot.slane %v1216, 4
      %v1219 = vrot.slane %v324, 5
      %v1220 = vsel %vm1185, %v1218, %v1219
      %v1221 = vrot.slane %v1140, 5
      %v1222 = vrot.slane %v1221, 4
      %v1223 = vrot.slane %v298, 5
      %v1224 = vsel %vm1185, %v1222, %v1223
      %v1225 = vrot.slane %v1223, 4
      %v1226 = vrot.slane %v325, 5
      %v1227 = vsel %vm1185, %v1225, %v1226
      %v1228 = vrot.slane %v1141, 5
      %v1229 = vrot.slane %v1228, 4
      %v1230 = vrot.slane %v300, 5
      %v1231 = vsel %vm1185, %v1229, %v1230
      %v1232 = vrot.slane %v1230, 4
      %v1233 = vrot.slane %v326, 5
      %v1234 = vsel %vm1185, %v1232, %v1233
      %v1235 = vrot.slane %v1142, 5
      %v1236 = vrot.slane %v1235, 4
      %v1237 = vrot.slane %v302, 5
      %v1238 = vsel %vm1185, %v1236, %v1237
      %v1239 = vrot.slane %v1237, 4
      %v1240 = vrot.slane %v327, 5
      %v1241 = vsel %vm1185, %v1239, %v1240
      %v1242 = vrot.slane %v1143, 5
      %v1243 = vrot.slane %v1242, 4
      %v1244 = vrot.slane %v304, 5
      %v1245 = vsel %vm1185, %v1243, %v1244
      %v1246 = vrot.slane %v1244, 4
      %v1247 = vrot.slane %v328, 5
      %v1248 = vsel %vm1185, %v1246, %v1247
      %v1249 = vrot.slane %v1144, 5
      %v1250 = vrot.slane %v1249, 4
      %v1251 = vrot.slane %v306, 5
      %v1252 = vsel %vm1185, %v1250, %v1251
      %v1253 = vrot.slane %v1251, 4
      %v1254 = vrot.slane %v329, 5
      %v1255 = vsel %vm1185, %v1253, %v1254
      %v1256 = vrot.slane %v1145, 5
      %v1257 = vrot.slane %v1256, 4
      %v1258 = vrot.slane %v308, 5
      %v1259 = vsel %vm1185, %v1257, %v1258
      %v1260 = vrot.slane %v1258, 4
      %v1261 = vrot.slane %v330, 5
      %v1262 = vsel %vm1185, %v1260, %v1261
      %v1263 = vrot.slane %v1146, 5
      %v1264 = vrot.slane %v1263, 4
      %v1265 = vrot.slane %v310, 5
      %v1266 = vsel %vm1185, %v1264, %v1265
      %v1267 = vrot.slane %v1265, 4
      %v1268 = vrot.slane %v331, 5
      %v1269 = vsel %vm1185, %v1267, %v1268
      %v1270 = vrot.slane %v1147, 5
      %v1271 = vrot.slane %v1270, 4
      %v1272 = vrot.slane %v312, 5
      %v1273 = vsel %vm1185, %v1271, %v1272
      %v1274 = vrot.slane %v1272, 4
      %v1275 = vrot.slane %v332, 5
      %v1276 = vsel %vm1185, %v1274, %v1275
      %v1277 = vrot.slane %v1148, 5
      %v1278 = vrot.slane %v1277, 4
      %v1279 = vrot.slane %v314, 5
      %v1280 = vsel %vm1185, %v1278, %v1279
      %v1281 = vrot.slane %v1279, 4
      %v1282 = vrot.slane %v333, 5
      %v1283 = vsel %vm1185, %v1281, %v1282
      %v1284 = vrot.slane %v1149, 5
      %v1285 = vrot.slane %v1284, 4
      %v1286 = vrot.slane %v316, 5
      %v1287 = vsel %vm1185, %v1285, %v1286
      %v1288 = vrot.slane %v1286, 4
      %v1289 = vrot.slane %v334, 5
      %v1290 = vsel %vm1185, %v1288, %v1289
      %v1291 = vrot.slane %v1150, 5
      %v1292 = vrot.slane %v1291, 4
      %v1293 = vrot.slane %v318, 5
      %v1294 = vsel %vm1185, %v1292, %v1293
      %v1295 = vrot.slane %v1293, 4
      %v1296 = vrot.slane %v335, 5
      %v1297 = vsel %vm1185, %v1295, %v1296
      %s1298 = scalar_lea.vmem %s234, 8
      %v1299 = vld [vmem:[%s1298] sm:$0xf]
      %v1300 = vunpack.c.l.b16 %v1189
      %v1301 = vunpack.c.l.b16 %v1192
      %v1302 = vunpack.c.l.b16 %v1196
      %v1303 = vunpack.c.l.b16 %v1199
      %v1304 = vunpack.c.l.b16 %v1203
      %v1305 = vunpack.c.l.b16 %v1206
      %v1306 = vunpack.c.l.b16 %v1210
      %v1307 = vunpack.c.l.b16 %v1213
      %v1308 = vunpack.c.l.b16 %v1217
      %v1309 = vunpack.c.l.b16 %v1220
      %v1310 = vunpack.c.l.b16 %v1224
      %v1311 = vunpack.c.l.b16 %v1227
      %v1312 = vunpack.c.l.b16 %v1231
      %v1313 = vunpack.c.l.b16 %v1234
      %v1314 = vunpack.c.l.b16 %v1238
      %v1315 = vunpack.c.l.b16 %v1241
      %v1316 = vunpack.c.l.b16 %v1245
      %v1317 = vunpack.c.l.b16 %v1248
      %v1318 = vunpack.c.l.b16 %v1252
      %v1319 = vunpack.c.l.b16 %v1255
      %v1320 = vunpack.c.l.b16 %v1259
      %v1321 = vunpack.c.l.b16 %v1262
      %v1322 = vunpack.c.l.b16 %v1266
      %v1323 = vunpack.c.l.b16 %v1269
      %v1324 = vunpack.c.l.b16 %v1273
      %v1325 = vunpack.c.l.b16 %v1276
      %v1326 = vunpack.c.l.b16 %v1280
      %v1327 = vunpack.c.l.b16 %v1283
      %v1328 = vunpack.c.l.b16 %v1287
      %v1329 = vunpack.c.l.b16 %v1290
      %v1330 = vunpack.c.l.b16 %v1294
      %v1331 = vunpack.c.l.b16 %v1297
      %v1332 = vpack.c.b16 %v1301, %v1300
      %v1333 = vpack.c.b16 %v1303, %v1302
      %v1334 = vpack.c.b16 %v1305, %v1304
      %v1335 = vpack.c.b16 %v1307, %v1306
      %v1336 = vpack.c.b16 %v1309, %v1308
      %v1337 = vpack.c.b16 %v1311, %v1310
      %v1338 = vpack.c.b16 %v1313, %v1312
      %v1339 = vpack.c.b16 %v1315, %v1314
      %v1340 = vpack.c.b16 %v1317, %v1316
      %v1341 = vpack.c.b16 %v1319, %v1318
      %v1342 = vpack.c.b16 %v1321, %v1320
      %v1343 = vpack.c.b16 %v1323, %v1322
      %v1344 = vpack.c.b16 %v1325, %v1324
      %v1345 = vpack.c.b16 %v1327, %v1326
      %v1346 = vpack.c.b16 %v1329, %v1328
      %v1347 = vpack.c.b16 %v1331, %v1330
      %v1349 = vsel %vm773, %v1332, 0
      %v1352 = vsel %vm773, %v1333, 0
      %v1355 = vsel %vm773, %v1334, 0
      %v1358 = vsel %vm773, %v1335, 0
      %v1361 = vsel %vm773, %v1336, 0
      %v1364 = vsel %vm773, %v1337, 0
      %v1367 = vsel %vm773, %v1338, 0
      %v1370 = vsel %vm773, %v1339, 0
      %v1373 = vsel %vm773, %v1340, 0
      %v1376 = vsel %vm773, %v1341, 0
      %v1379 = vsel %vm773, %v1342, 0
      %v1382 = vsel %vm773, %v1343, 0
      %v1385 = vsel %vm773, %v1344, 0
      %v1388 = vsel %vm773, %v1345, 0
      %v1391 = vsel %vm773, %v1346, 0
      %v1394 = vsel %vm773, %v1347, 0
      %v1397 = vsel %vm822, %v1299, 0
      %1399 = vmatpush.bf16.msra.mxu0 0
      %1400 = vmatpush.bf16.msra.mxu0 0
      %1401 = vmatpush.bf16.msra.mxu0 0
      %1402 = vmatpush.bf16.msra.mxu0 0
      %1403 = vmatpush.bf16.msra.mxu0 0
      %1404 = vmatpush.bf16.msra.mxu0 0
      %1405 = vmatpush.bf16.msra.mxu0 0
      %1406 = vmatpush.bf16.msra.mxu0 %v1397
      %1407 = vmatmul.bf16.gmra.mxu0 %v1349
      %v1408 = vpop.f32.mrf.mxu0
      %v1409 = vadd.f32 0.0, %v1408
      %v1410 = vpop.f32.mrf.mxu0
      %v1411 = vadd.f32 0.0, %v1410
      %1412 = vmatmul.bf16.gmra.mxu0 %v1352
      %v1413 = vpop.f32.mrf.mxu0
      %v1414 = vadd.f32 0.0, %v1413
      %v1415 = vpop.f32.mrf.mxu0
      %v1416 = vadd.f32 0.0, %v1415
      %1417 = vmatmul.bf16.gmra.mxu0 %v1355
      %v1418 = vpop.f32.mrf.mxu0
      %v1419 = vadd.f32 0.0, %v1418
      %v1420 = vpop.f32.mrf.mxu0
      %v1421 = vadd.f32 0.0, %v1420
      %1422 = vmatmul.bf16.gmra.mxu0 %v1358
      %v1423 = vpop.f32.mrf.mxu0
      %v1424 = vadd.f32 0.0, %v1423
      %v1425 = vpop.f32.mrf.mxu0
      %v1426 = vadd.f32 0.0, %v1425
      %1427 = vmatmul.bf16.gmra.mxu0 %v1361
      %v1428 = vpop.f32.mrf.mxu0
      %v1429 = vadd.f32 0.0, %v1428
      %v1430 = vpop.f32.mrf.mxu0
      %v1431 = vadd.f32 0.0, %v1430
      %1432 = vmatmul.bf16.gmra.mxu0 %v1364
      %v1433 = vpop.f32.mrf.mxu0
      %v1434 = vadd.f32 0.0, %v1433
      %v1435 = vpop.f32.mrf.mxu0
      %v1436 = vadd.f32 0.0, %v1435
      %1437 = vmatmul.bf16.gmra.mxu0 %v1367
      %v1438 = vpop.f32.mrf.mxu0
      %v1439 = vadd.f32 0.0, %v1438
      %v1440 = vpop.f32.mrf.mxu0
      %v1441 = vadd.f32 0.0, %v1440
      %1442 = vmatmul.bf16.gmra.mxu0 %v1370
      %v1443 = vpop.f32.mrf.mxu0
      %v1444 = vadd.f32 0.0, %v1443
      %v1445 = vpop.f32.mrf.mxu0
      %v1446 = vadd.f32 0.0, %v1445
      %1447 = vmatmul.bf16.gmra.mxu0 %v1373
      %v1448 = vpop.f32.mrf.mxu0
      %v1449 = vadd.f32 0.0, %v1448
      %v1450 = vpop.f32.mrf.mxu0
      %v1451 = vadd.f32 0.0, %v1450
      %1452 = vmatmul.bf16.gmra.mxu0 %v1376
      %v1453 = vpop.f32.mrf.mxu0
      %v1454 = vadd.f32 0.0, %v1453
      %v1455 = vpop.f32.mrf.mxu0
      %v1456 = vadd.f32 0.0, %v1455
      %1457 = vmatmul.bf16.gmra.mxu0 %v1379
      %v1458 = vpop.f32.mrf.mxu0
      %v1459 = vadd.f32 0.0, %v1458
      %v1460 = vpop.f32.mrf.mxu0
      %v1461 = vadd.f32 0.0, %v1460
      %1462 = vmatmul.bf16.gmra.mxu0 %v1382
      %v1463 = vpop.f32.mrf.mxu0
      %v1464 = vadd.f32 0.0, %v1463
      %v1465 = vpop.f32.mrf.mxu0
      %v1466 = vadd.f32 0.0, %v1465
      %1467 = vmatmul.bf16.gmra.mxu0 %v1385
      %v1468 = vpop.f32.mrf.mxu0
      %v1469 = vadd.f32 0.0, %v1468
      %v1470 = vpop.f32.mrf.mxu0
      %v1471 = vadd.f32 0.0, %v1470
      %1472 = vmatmul.bf16.gmra.mxu0 %v1388
      %v1473 = vpop.f32.mrf.mxu0
      %v1474 = vadd.f32 0.0, %v1473
      %v1475 = vpop.f32.mrf.mxu0
      %v1476 = vadd.f32 0.0, %v1475
      %1477 = vmatmul.bf16.gmra.mxu0 %v1391
      %v1478 = vpop.f32.mrf.mxu0
      %v1479 = vadd.f32 0.0, %v1478
      %v1480 = vpop.f32.mrf.mxu0
      %v1481 = vadd.f32 0.0, %v1480
      %1482 = vmatmul.bf16.gmra.mxu0 %v1394
      %v1483 = vpop.f32.mrf.mxu0
      %v1484 = vadd.f32 0.0, %v1483
      %v1485 = vpop.f32.mrf.mxu0
      %v1486 = vadd.f32 0.0, %v1485
      %1487 = vdwg.mxu0
      %v1488 = vadd.f32 %v1056, %v1409
      %v1489 = vadd.f32 %v1058, %v1411
      %v1490 = vadd.f32 %v1061, %v1414
      %v1491 = vadd.f32 %v1063, %v1416
      %v1492 = vadd.f32 %v1066, %v1419
      %v1493 = vadd.f32 %v1068, %v1421
      %v1494 = vadd.f32 %v1071, %v1424
      %v1495 = vadd.f32 %v1073, %v1426
      %v1496 = vadd.f32 %v1076, %v1429
      %v1497 = vadd.f32 %v1078, %v1431
      %v1498 = vadd.f32 %v1081, %v1434
      %v1499 = vadd.f32 %v1083, %v1436
      %v1500 = vadd.f32 %v1086, %v1439
      %v1501 = vadd.f32 %v1088, %v1441
      %v1502 = vadd.f32 %v1091, %v1444
      %v1503 = vadd.f32 %v1093, %v1446
      %v1504 = vadd.f32 %v1096, %v1449
      %v1505 = vadd.f32 %v1098, %v1451
      %v1506 = vadd.f32 %v1101, %v1454
      %v1507 = vadd.f32 %v1103, %v1456
      %v1508 = vadd.f32 %v1106, %v1459
      %v1509 = vadd.f32 %v1108, %v1461
      %v1510 = vadd.f32 %v1111, %v1464
      %v1511 = vadd.f32 %v1113, %v1466
      %v1512 = vadd.f32 %v1116, %v1469
      %v1513 = vadd.f32 %v1118, %v1471
      %v1514 = vadd.f32 %v1121, %v1474
      %v1515 = vadd.f32 %v1123, %v1476
      %v1516 = vadd.f32 %v1126, %v1479
      %v1517 = vadd.f32 %v1128, %v1481
      %v1518 = vadd.f32 %v1131, %v1484
      %v1519 = vadd.f32 %v1133, %v1486
      %v1520 = vld [vmem:[%s226 + $0x8] sm:$0x3]
      %v1521 = vld [vmem:[%s226 + $0x14] sm:$0x3]
      %v1522 = vld [vmem:[%s226 + $0x20] sm:$0x3]
      %v1523 = vld [vmem:[%s226 + $0x2c] sm:$0x3]
      %v1524 = vld [vmem:[%s226 + $0x38] sm:$0x3]
      %v1525 = vld [vmem:[%s226 + $0x44] sm:$0x3]
      %v1526 = vld [vmem:[%s226 + $0x50] sm:$0x3]
      %v1527 = vld [vmem:[%s226 + $0x5c] sm:$0x3]
      %v1528 = vld [vmem:[%s226 + $0x68] sm:$0x3]
      %v1529 = vld [vmem:[%s226 + $0x74] sm:$0x3]
      %v1530 = vld [vmem:[%s226 + $0x80] sm:$0x3]
      %v1531 = vld [vmem:[%s226 + $0x8c] sm:$0x3]
      %v1532 = vld [vmem:[%s226 + $0x98] sm:$0x3]
      %v1533 = vld [vmem:[%s226 + $0xa4] sm:$0x3]
      %v1534 = vld [vmem:[%s226 + $0xb0] sm:$0x3]
      %v1535 = vld [vmem:[%s226 + $0xbc] sm:$0x3]
      %vm1536 = vsmask.f32 2304
      %vm1537 = vsmask.f32 6416
      %vm1538 = vmor %vm1536, %vm1537
      %v1540 = vshrl.u32 %v1135, 16
      %v1542 = vrot.slane %v1540, 5
      %v1543 = vshll.u32 %v1135, 16
      %v1545 = vrot.slane %v1543, 6
      %v1546 = vor.u32 %v1542, %v1545
      %v1547 = vrot.slane %v1546, 4
      %v1548 = vrot.slane %v353, 5
      %v1549 = vrot.slane %v349, 6
      %v1550 = vor.u32 %v1548, %v1549
      %v1551 = vsel %vm1538, %v1547, %v1550
      %v1552 = vrot.slane %v1550, 4
      %v1554 = vshrl.u32 %v1520, 16
      %v1556 = vrot.slane %v1554, 5
      %v1557 = vshll.u32 %v1520, 16
      %v1559 = vrot.slane %v1557, 6
      %v1560 = vor.u32 %v1556, %v1559
      %v1561 = vsel %vm1538, %v1552, %v1560
      %v1563 = vshrl.u32 %v1136, 16
      %v1565 = vrot.slane %v1563, 5
      %v1566 = vshll.u32 %v1136, 16
      %v1568 = vrot.slane %v1566, 6
      %v1569 = vor.u32 %v1565, %v1568
      %v1570 = vrot.slane %v1569, 4
      %v1571 = vrot.slane %v377, 5
      %v1572 = vrot.slane %v373, 6
      %v1573 = vor.u32 %v1571, %v1572
      %v1574 = vsel %vm1538, %v1570, %v1573
      %v1575 = vrot.slane %v1573, 4
      %v1577 = vshrl.u32 %v1521, 16
      %v1579 = vrot.slane %v1577, 5
      %v1580 = vshll.u32 %v1521, 16
      %v1582 = vrot.slane %v1580, 6
      %v1583 = vor.u32 %v1579, %v1582
      %v1584 = vsel %vm1538, %v1575, %v1583
      %v1586 = vshrl.u32 %v1137, 16
      %v1588 = vrot.slane %v1586, 5
      %v1589 = vshll.u32 %v1137, 16
      %v1591 = vrot.slane %v1589, 6
      %v1592 = vor.u32 %v1588, %v1591
      %v1593 = vrot.slane %v1592, 4
      %v1594 = vrot.slane %v401, 5
      %v1595 = vrot.slane %v397, 6
      %v1596 = vor.u32 %v1594, %v1595
      %v1597 = vsel %vm1538, %v1593, %v1596
      %v1598 = vrot.slane %v1596, 4
      %v1600 = vshrl.u32 %v1522, 16
      %v1602 = vrot.slane %v1600, 5
      %v1603 = vshll.u32 %v1522, 16
      %v1605 = vrot.slane %v1603, 6
      %v1606 = vor.u32 %v1602, %v1605
      %v1607 = vsel %vm1538, %v1598, %v1606
      %v1609 = vshrl.u32 %v1138, 16
      %v1611 = vrot.slane %v1609, 5
      %v1612 = vshll.u32 %v1138, 16
      %v1614 = vrot.slane %v1612, 6
      %v1615 = vor.u32 %v1611, %v1614
      %v1616 = vrot.slane %v1615, 4
      %v1617 = vrot.slane %v425, 5
      %v1618 = vrot.slane %v421, 6
      %v1619 = vor.u32 %v1617, %v1618
      %v1620 = vsel %vm1538, %v1616, %v1619
      %v1621 = vrot.slane %v1619, 4
      %v1623 = vshrl.u32 %v1523, 16
      %v1625 = vrot.slane %v1623, 5
      %v1626 = vshll.u32 %v1523, 16
      %v1628 = vrot.slane %v1626, 6
      %v1629 = vor.u32 %v1625, %v1628
      %v1630 = vsel %vm1538, %v1621, %v1629
      %v1632 = vshrl.u32 %v1139, 16
      %v1634 = vrot.slane %v1632, 5
      %v1635 = vshll.u32 %v1139, 16
      %v1637 = vrot.slane %v1635, 6
      %v1638 = vor.u32 %v1634, %v1637
      %v1639 = vrot.slane %v1638, 4
      %v1640 = vrot.slane %v449, 5
      %v1641 = vrot.slane %v445, 6
      %v1642 = vor.u32 %v1640, %v1641
      %v1643 = vsel %vm1538, %v1639, %v1642
      %v1644 = vrot.slane %v1642, 4
      %v1646 = vshrl.u32 %v1524, 16
      %v1648 = vrot.slane %v1646, 5
      %v1649 = vshll.u32 %v1524, 16
      %v1651 = vrot.slane %v1649, 6
      %v1652 = vor.u32 %v1648, %v1651
      %v1653 = vsel %vm1538, %v1644, %v1652
      %v1655 = vshrl.u32 %v1140, 16
      %v1657 = vrot.slane %v1655, 5
      %v1658 = vshll.u32 %v1140, 16
      %v1660 = vrot.slane %v1658, 6
      %v1661 = vor.u32 %v1657, %v1660
      %v1662 = vrot.slane %v1661, 4
      %v1663 = vrot.slane %v473, 5
      %v1664 = vrot.slane %v469, 6
      %v1665 = vor.u32 %v1663, %v1664
      %v1666 = vsel %vm1538, %v1662, %v1665
      %v1667 = vrot.slane %v1665, 4
      %v1669 = vshrl.u32 %v1525, 16
      %v1671 = vrot.slane %v1669, 5
      %v1672 = vshll.u32 %v1525, 16
      %v1674 = vrot.slane %v1672, 6
      %v1675 = vor.u32 %v1671, %v1674
      %v1676 = vsel %vm1538, %v1667, %v1675
      %v1678 = vshrl.u32 %v1141, 16
      %v1680 = vrot.slane %v1678, 5
      %v1681 = vshll.u32 %v1141, 16
      %v1683 = vrot.slane %v1681, 6
      %v1684 = vor.u32 %v1680, %v1683
      %v1685 = vrot.slane %v1684, 4
      %v1686 = vrot.slane %v497, 5
      %v1687 = vrot.slane %v493, 6
      %v1688 = vor.u32 %v1686, %v1687
      %v1689 = vsel %vm1538, %v1685, %v1688
      %v1690 = vrot.slane %v1688, 4
      %v1692 = vshrl.u32 %v1526, 16
      %v1694 = vrot.slane %v1692, 5
      %v1695 = vshll.u32 %v1526, 16
      %v1697 = vrot.slane %v1695, 6
      %v1698 = vor.u32 %v1694, %v1697
      %v1699 = vsel %vm1538, %v1690, %v1698
      %v1701 = vshrl.u32 %v1142, 16
      %v1703 = vrot.slane %v1701, 5
      %v1704 = vshll.u32 %v1142, 16
      %v1706 = vrot.slane %v1704, 6
      %v1707 = vor.u32 %v1703, %v1706
      %v1708 = vrot.slane %v1707, 4
      %v1709 = vrot.slane %v521, 5
      %v1710 = vrot.slane %v517, 6
      %v1711 = vor.u32 %v1709, %v1710
      %v1712 = vsel %vm1538, %v1708, %v1711
      %v1713 = vrot.slane %v1711, 4
      %v1715 = vshrl.u32 %v1527, 16
      %v1717 = vrot.slane %v1715, 5
      %v1718 = vshll.u32 %v1527, 16
      %v1720 = vrot.slane %v1718, 6
      %v1721 = vor.u32 %v1717, %v1720
      %v1722 = vsel %vm1538, %v1713, %v1721
      %v1724 = vshrl.u32 %v1143, 16
      %v1726 = vrot.slane %v1724, 5
      %v1727 = vshll.u32 %v1143, 16
      %v1729 = vrot.slane %v1727, 6
      %v1730 = vor.u32 %v1726, %v1729
      %v1731 = vrot.slane %v1730, 4
      %v1732 = vrot.slane %v545, 5
      %v1733 = vrot.slane %v541, 6
      %v1734 = vor.u32 %v1732, %v1733
      %v1735 = vsel %vm1538, %v1731, %v1734
      %v1736 = vrot.slane %v1734, 4
      %v1738 = vshrl.u32 %v1528, 16
      %v1740 = vrot.slane %v1738, 5
      %v1741 = vshll.u32 %v1528, 16
      %v1743 = vrot.slane %v1741, 6
      %v1744 = vor.u32 %v1740, %v1743
      %v1745 = vsel %vm1538, %v1736, %v1744
      %v1747 = vshrl.u32 %v1144, 16
      %v1749 = vrot.slane %v1747, 5
      %v1750 = vshll.u32 %v1144, 16
      %v1752 = vrot.slane %v1750, 6
      %v1753 = vor.u32 %v1749, %v1752
      %v1754 = vrot.slane %v1753, 4
      %v1755 = vrot.slane %v569, 5
      %v1756 = vrot.slane %v565, 6
      %v1757 = vor.u32 %v1755, %v1756
      %v1758 = vsel %vm1538, %v1754, %v1757
      %v1759 = vrot.slane %v1757, 4
      %v1761 = vshrl.u32 %v1529, 16
      %v1763 = vrot.slane %v1761, 5
      %v1764 = vshll.u32 %v1529, 16
      %v1766 = vrot.slane %v1764, 6
      %v1767 = vor.u32 %v1763, %v1766
      %v1768 = vsel %vm1538, %v1759, %v1767
      %v1770 = vshrl.u32 %v1145, 16
      %v1772 = vrot.slane %v1770, 5
      %v1773 = vshll.u32 %v1145, 16
      %v1775 = vrot.slane %v1773, 6
      %v1776 = vor.u32 %v1772, %v1775
      %v1777 = vrot.slane %v1776, 4
      %v1778 = vrot.slane %v593, 5
      %v1779 = vrot.slane %v589, 6
      %v1780 = vor.u32 %v1778, %v1779
      %v1781 = vsel %vm1538, %v1777, %v1780
      %v1782 = vrot.slane %v1780, 4
      %v1784 = vshrl.u32 %v1530, 16
      %v1786 = vrot.slane %v1784, 5
      %v1787 = vshll.u32 %v1530, 16
      %v1789 = vrot.slane %v1787, 6
      %v1790 = vor.u32 %v1786, %v1789
      %v1791 = vsel %vm1538, %v1782, %v1790
      %v1793 = vshrl.u32 %v1146, 16
      %v1795 = vrot.slane %v1793, 5
      %v1796 = vshll.u32 %v1146, 16
      %v1798 = vrot.slane %v1796, 6
      %v1799 = vor.u32 %v1795, %v1798
      %v1800 = vrot.slane %v1799, 4
      %v1801 = vrot.slane %v617, 5
      %v1802 = vrot.slane %v613, 6
      %v1803 = vor.u32 %v1801, %v1802
      %v1804 = vsel %vm1538, %v1800, %v1803
      %v1805 = vrot.slane %v1803, 4
      %v1807 = vshrl.u32 %v1531, 16
      %v1809 = vrot.slane %v1807, 5
      %v1810 = vshll.u32 %v1531, 16
      %v1812 = vrot.slane %v1810, 6
      %v1813 = vor.u32 %v1809, %v1812
      %v1814 = vsel %vm1538, %v1805, %v1813
      %v1816 = vshrl.u32 %v1147, 16
      %v1818 = vrot.slane %v1816, 5
      %v1819 = vshll.u32 %v1147, 16
      %v1821 = vrot.slane %v1819, 6
      %v1822 = vor.u32 %v1818, %v1821
      %v1823 = vrot.slane %v1822, 4
      %v1824 = vrot.slane %v641, 5
      %v1825 = vrot.slane %v637, 6
      %v1826 = vor.u32 %v1824, %v1825
      %v1827 = vsel %vm1538, %v1823, %v1826
      %v1828 = vrot.slane %v1826, 4
      %v1830 = vshrl.u32 %v1532, 16
      %v1832 = vrot.slane %v1830, 5
      %v1833 = vshll.u32 %v1532, 16
      %v1835 = vrot.slane %v1833, 6
      %v1836 = vor.u32 %v1832, %v1835
      %v1837 = vsel %vm1538, %v1828, %v1836
      %v1839 = vshrl.u32 %v1148, 16
      %v1841 = vrot.slane %v1839, 5
      %v1842 = vshll.u32 %v1148, 16
      %v1844 = vrot.slane %v1842, 6
      %v1845 = vor.u32 %v1841, %v1844
      %v1846 = vrot.slane %v1845, 4
      %v1847 = vrot.slane %v665, 5
      %v1848 = vrot.slane %v661, 6
      %v1849 = vor.u32 %v1847, %v1848
      %v1850 = vsel %vm1538, %v1846, %v1849
      %v1851 = vrot.slane %v1849, 4
      %v1853 = vshrl.u32 %v1533, 16
      %v1855 = vrot.slane %v1853, 5
      %v1856 = vshll.u32 %v1533, 16
      %v1858 = vrot.slane %v1856, 6
      %v1859 = vor.u32 %v1855, %v1858
      %v1860 = vsel %vm1538, %v1851, %v1859
      %v1862 = vshrl.u32 %v1149, 16
      %v1864 = vrot.slane %v1862, 5
      %v1865 = vshll.u32 %v1149, 16
      %v1867 = vrot.slane %v1865, 6
      %v1868 = vor.u32 %v1864, %v1867
      %v1869 = vrot.slane %v1868, 4
      %v1870 = vrot.slane %v689, 5
      %v1871 = vrot.slane %v685, 6
      %v1872 = vor.u32 %v1870, %v1871
      %v1873 = vsel %vm1538, %v1869, %v1872
      %v1874 = vrot.slane %v1872, 4
      %v1876 = vshrl.u32 %v1534, 16
      %v1878 = vrot.slane %v1876, 5
      %v1879 = vshll.u32 %v1534, 16
      %v1881 = vrot.slane %v1879, 6
      %v1882 = vor.u32 %v1878, %v1881
      %v1883 = vsel %vm1538, %v1874, %v1882
      %v1885 = vshrl.u32 %v1150, 16
      %v1887 = vrot.slane %v1885, 5
      %v1888 = vshll.u32 %v1150, 16
      %v1890 = vrot.slane %v1888, 6
      %v1891 = vor.u32 %v1887, %v1890
      %v1892 = vrot.slane %v1891, 4
      %v1893 = vrot.slane %v713, 5
      %v1894 = vrot.slane %v709, 6
      %v1895 = vor.u32 %v1893, %v1894
      %v1896 = vsel %vm1538, %v1892, %v1895
      %v1897 = vrot.slane %v1895, 4
      %v1899 = vshrl.u32 %v1535, 16
      %v1901 = vrot.slane %v1899, 5
      %v1902 = vshll.u32 %v1535, 16
      %v1904 = vrot.slane %v1902, 6
      %v1905 = vor.u32 %v1901, %v1904
      %v1906 = vsel %vm1538, %v1897, %v1905
      %s1907 = scalar_lea.vmem %s234, 12
      %v1908 = vld [vmem:[%s1907] sm:$0xf]
      %v1909 = vunpack.c.l.b16 %v1551
      %v1910 = vunpack.c.l.b16 %v1561
      %v1911 = vunpack.c.l.b16 %v1574
      %v1912 = vunpack.c.l.b16 %v1584
      %v1913 = vunpack.c.l.b16 %v1597
      %v1914 = vunpack.c.l.b16 %v1607
      %v1915 = vunpack.c.l.b16 %v1620
      %v1916 = vunpack.c.l.b16 %v1630
      %v1917 = vunpack.c.l.b16 %v1643
      %v1918 = vunpack.c.l.b16 %v1653
      %v1919 = vunpack.c.l.b16 %v1666
      %v1920 = vunpack.c.l.b16 %v1676
      %v1921 = vunpack.c.l.b16 %v1689
      %v1922 = vunpack.c.l.b16 %v1699
      %v1923 = vunpack.c.l.b16 %v1712
      %v1924 = vunpack.c.l.b16 %v1722
      %v1925 = vunpack.c.l.b16 %v1735
      %v1926 = vunpack.c.l.b16 %v1745
      %v1927 = vunpack.c.l.b16 %v1758
      %v1928 = vunpack.c.l.b16 %v1768
      %v1929 = vunpack.c.l.b16 %v1781
      %v1930 = vunpack.c.l.b16 %v1791
      %v1931 = vunpack.c.l.b16 %v1804
      %v1932 = vunpack.c.l.b16 %v1814
      %v1933 = vunpack.c.l.b16 %v1827
      %v1934 = vunpack.c.l.b16 %v1837
      %v1935 = vunpack.c.l.b16 %v1850
      %v1936 = vunpack.c.l.b16 %v1860
      %v1937 = vunpack.c.l.b16 %v1873
      %v1938 = vunpack.c.l.b16 %v1883
      %v1939 = vunpack.c.l.b16 %v1896
      %v1940 = vunpack.c.l.b16 %v1906
      %v1941 = vpack.c.b16 %v1910, %v1909
      %v1942 = vpack.c.b16 %v1912, %v1911
      %v1943 = vpack.c.b16 %v1914, %v1913
      %v1944 = vpack.c.b16 %v1916, %v1915
      %v1945 = vpack.c.b16 %v1918, %v1917
      %v1946 = vpack.c.b16 %v1920, %v1919
      %v1947 = vpack.c.b16 %v1922, %v1921
      %v1948 = vpack.c.b16 %v1924, %v1923
      %v1949 = vpack.c.b16 %v1926, %v1925
      %v1950 = vpack.c.b16 %v1928, %v1927
      %v1951 = vpack.c.b16 %v1930, %v1929
      %v1952 = vpack.c.b16 %v1932, %v1931
      %v1953 = vpack.c.b16 %v1934, %v1933
      %v1954 = vpack.c.b16 %v1936, %v1935
      %v1955 = vpack.c.b16 %v1938, %v1937
      %v1956 = vpack.c.b16 %v1940, %v1939
      %v1958 = vsel %vm773, %v1941, 0
      %v1961 = vsel %vm773, %v1942, 0
      %v1964 = vsel %vm773, %v1943, 0
      %v1967 = vsel %vm773, %v1944, 0
      %v1970 = vsel %vm773, %v1945, 0
      %v1973 = vsel %vm773, %v1946, 0
      %v1976 = vsel %vm773, %v1947, 0
      %v1979 = vsel %vm773, %v1948, 0
      %v1982 = vsel %vm773, %v1949, 0
      %v1985 = vsel %vm773, %v1950, 0
      %v1988 = vsel %vm773, %v1951, 0
      %v1991 = vsel %vm773, %v1952, 0
      %v1994 = vsel %vm773, %v1953, 0
      %v1997 = vsel %vm773, %v1954, 0
      %v2000 = vsel %vm773, %v1955, 0
      %v2003 = vsel %vm773, %v1956, 0
      %v2006 = vsel %vm822, %v1908, 0
      %2008 = vmatpush.bf16.msra.mxu0 0
      %2009 = vmatpush.bf16.msra.mxu0 0
      %2010 = vmatpush.bf16.msra.mxu0 0
      %2011 = vmatpush.bf16.msra.mxu0 0
      %2012 = vmatpush.bf16.msra.mxu0 0
      %2013 = vmatpush.bf16.msra.mxu0 0
      %2014 = vmatpush.bf16.msra.mxu0 0
      %2015 = vmatpush.bf16.msra.mxu0 %v2006
      %2016 = vmatmul.bf16.gmra.mxu0 %v1958
      %v2017 = vpop.f32.mrf.mxu0
      %v2018 = vadd.f32 0.0, %v2017
      %v2019 = vpop.f32.mrf.mxu0
      %v2020 = vadd.f32 0.0, %v2019
      %2021 = vmatmul.bf16.gmra.mxu0 %v1961
      %v2022 = vpop.f32.mrf.mxu0
      %v2023 = vadd.f32 0.0, %v2022
      %v2024 = vpop.f32.mrf.mxu0
      %v2025 = vadd.f32 0.0, %v2024
      %2026 = vmatmul.bf16.gmra.mxu0 %v1964
      %v2027 = vpop.f32.mrf.mxu0
      %v2028 = vadd.f32 0.0, %v2027
      %v2029 = vpop.f32.mrf.mxu0
      %v2030 = vadd.f32 0.0, %v2029
      %2031 = vmatmul.bf16.gmra.mxu0 %v1967
      %v2032 = vpop.f32.mrf.mxu0
      %v2033 = vadd.f32 0.0, %v2032
      %v2034 = vpop.f32.mrf.mxu0
      %v2035 = vadd.f32 0.0, %v2034
      %2036 = vmatmul.bf16.gmra.mxu0 %v1970
      %v2037 = vpop.f32.mrf.mxu0
      %v2038 = vadd.f32 0.0, %v2037
      %v2039 = vpop.f32.mrf.mxu0
      %v2040 = vadd.f32 0.0, %v2039
      %2041 = vmatmul.bf16.gmra.mxu0 %v1973
      %v2042 = vpop.f32.mrf.mxu0
      %v2043 = vadd.f32 0.0, %v2042
      %v2044 = vpop.f32.mrf.mxu0
      %v2045 = vadd.f32 0.0, %v2044
      %2046 = vmatmul.bf16.gmra.mxu0 %v1976
      %v2047 = vpop.f32.mrf.mxu0
      %v2048 = vadd.f32 0.0, %v2047
      %v2049 = vpop.f32.mrf.mxu0
      %v2050 = vadd.f32 0.0, %v2049
      %2051 = vmatmul.bf16.gmra.mxu0 %v1979
      %v2052 = vpop.f32.mrf.mxu0
      %v2053 = vadd.f32 0.0, %v2052
      %v2054 = vpop.f32.mrf.mxu0
      %v2055 = vadd.f32 0.0, %v2054
      %2056 = vmatmul.bf16.gmra.mxu0 %v1982
      %v2057 = vpop.f32.mrf.mxu0
      %v2058 = vadd.f32 0.0, %v2057
      %v2059 = vpop.f32.mrf.mxu0
      %v2060 = vadd.f32 0.0, %v2059
      %2061 = vmatmul.bf16.gmra.mxu0 %v1985
      %v2062 = vpop.f32.mrf.mxu0
      %v2063 = vadd.f32 0.0, %v2062
      %v2064 = vpop.f32.mrf.mxu0
      %v2065 = vadd.f32 0.0, %v2064
      %2066 = vmatmul.bf16.gmra.mxu0 %v1988
      %v2067 = vpop.f32.mrf.mxu0
      %v2068 = vadd.f32 0.0, %v2067
      %v2069 = vpop.f32.mrf.mxu0
      %v2070 = vadd.f32 0.0, %v2069
      %2071 = vmatmul.bf16.gmra.mxu0 %v1991
      %v2072 = vpop.f32.mrf.mxu0
      %v2073 = vadd.f32 0.0, %v2072
      %v2074 = vpop.f32.mrf.mxu0
      %v2075 = vadd.f32 0.0, %v2074
      %2076 = vmatmul.bf16.gmra.mxu0 %v1994
      %v2077 = vpop.f32.mrf.mxu0
      %v2078 = vadd.f32 0.0, %v2077
      %v2079 = vpop.f32.mrf.mxu0
      %v2080 = vadd.f32 0.0, %v2079
      %2081 = vmatmul.bf16.gmra.mxu0 %v1997
      %v2082 = vpop.f32.mrf.mxu0
      %v2083 = vadd.f32 0.0, %v2082
      %v2084 = vpop.f32.mrf.mxu0
      %v2085 = vadd.f32 0.0, %v2084
      %2086 = vmatmul.bf16.gmra.mxu0 %v2000
      %v2087 = vpop.f32.mrf.mxu0
      %v2088 = vadd.f32 0.0, %v2087
      %v2089 = vpop.f32.mrf.mxu0
      %v2090 = vadd.f32 0.0, %v2089
      %2091 = vmatmul.bf16.gmra.mxu0 %v2003
      %v2092 = vpop.f32.mrf.mxu0
      %v2093 = vadd.f32 0.0, %v2092
      %v2094 = vpop.f32.mrf.mxu0
      %v2095 = vadd.f32 0.0, %v2094
      %2096 = vdwg.mxu0
      %v2097 = vadd.f32 %v1488, %v2018
      %v2098 = vadd.f32 %v1489, %v2020
      %v2099 = vadd.f32 %v1490, %v2023
      %v2100 = vadd.f32 %v1491, %v2025
      %v2101 = vadd.f32 %v1492, %v2028
      %v2102 = vadd.f32 %v1493, %v2030
      %v2103 = vadd.f32 %v1494, %v2033
      %v2104 = vadd.f32 %v1495, %v2035
      %v2105 = vadd.f32 %v1496, %v2038
      %v2106 = vadd.f32 %v1497, %v2040
      %v2107 = vadd.f32 %v1498, %v2043
      %v2108 = vadd.f32 %v1499, %v2045
      %v2109 = vadd.f32 %v1500, %v2048
      %v2110 = vadd.f32 %v1501, %v2050
      %v2111 = vadd.f32 %v1502, %v2053
      %v2112 = vadd.f32 %v1503, %v2055
      %v2113 = vadd.f32 %v1504, %v2058
      %v2114 = vadd.f32 %v1505, %v2060
      %v2115 = vadd.f32 %v1506, %v2063
      %v2116 = vadd.f32 %v1507, %v2065
      %v2117 = vadd.f32 %v1508, %v2068
      %v2118 = vadd.f32 %v1509, %v2070
      %v2119 = vadd.f32 %v1510, %v2073
      %v2120 = vadd.f32 %v1511, %v2075
      %v2121 = vadd.f32 %v1512, %v2078
      %v2122 = vadd.f32 %v1513, %v2080
      %v2123 = vadd.f32 %v1514, %v2083
      %v2124 = vadd.f32 %v1515, %v2085
      %v2125 = vadd.f32 %v1516, %v2088
      %v2126 = vadd.f32 %v1517, %v2090
      %v2127 = vadd.f32 %v1518, %v2093
      %v2128 = vadd.f32 %v1519, %v2095
      %v2129 = vld [vmem:[%s226] sm:$0xc]
      %v2130 = vld [vmem:[%s226 + $0xc] sm:$0xc]
      %v2131 = vld [vmem:[%s226 + $0x18] sm:$0xc]
      %v2132 = vld [vmem:[%s226 + $0x24] sm:$0xc]
      %v2133 = vld [vmem:[%s226 + $0x30] sm:$0xc]
      %v2134 = vld [vmem:[%s226 + $0x3c] sm:$0xc]
      %v2135 = vld [vmem:[%s226 + $0x48] sm:$0xc]
      %v2136 = vld [vmem:[%s226 + $0x54] sm:$0xc]
      %v2137 = vld [vmem:[%s226 + $0x60] sm:$0xc]
      %v2138 = vld [vmem:[%s226 + $0x6c] sm:$0xc]
      %v2139 = vld [vmem:[%s226 + $0x78] sm:$0xc]
      %v2140 = vld [vmem:[%s226 + $0x84] sm:$0xc]
      %v2141 = vld [vmem:[%s226 + $0x90] sm:$0xc]
      %v2142 = vld [vmem:[%s226 + $0x9c] sm:$0xc]
      %v2143 = vld [vmem:[%s226 + $0xa8] sm:$0xc]
      %v2144 = vld [vmem:[%s226 + $0xb4] sm:$0xc]
      %vm2177 = vcmask 1041408
      %vm2178 = vcmask 1045508
      %vm2179 = vmor %vm2177, %vm2178
      %v2180 = vrot.slane %v2129, 6
      %v2181 = vrot.slane %v2180, 4
      %v2182 = vrot.slane %v288, 6
      %v2183 = vsel %vm2179, %v2181, %v2182
      %v2184 = vrot.slane %v2182, 4
      %v2185 = vrot.slane %v1520, 6
      %v2186 = vsel %vm2179, %v2184, %v2185
      %v2187 = vrot.slane %v2130, 6
      %v2188 = vrot.slane %v2187, 4
      %v2189 = vrot.slane %v290, 6
      %v2190 = vsel %vm2179, %v2188, %v2189
      %v2191 = vrot.slane %v2189, 4
      %v2192 = vrot.slane %v1521, 6
      %v2193 = vsel %vm2179, %v2191, %v2192
      %v2194 = vrot.slane %v2131, 6
      %v2195 = vrot.slane %v2194, 4
      %v2196 = vrot.slane %v292, 6
      %v2197 = vsel %vm2179, %v2195, %v2196
      %v2198 = vrot.slane %v2196, 4
      %v2199 = vrot.slane %v1522, 6
      %v2200 = vsel %vm2179, %v2198, %v2199
      %v2201 = vrot.slane %v2132, 6
      %v2202 = vrot.slane %v2201, 4
      %v2203 = vrot.slane %v294, 6
      %v2204 = vsel %vm2179, %v2202, %v2203
      %v2205 = vrot.slane %v2203, 4
      %v2206 = vrot.slane %v1523, 6
      %v2207 = vsel %vm2179, %v2205, %v2206
      %v2208 = vrot.slane %v2133, 6
      %v2209 = vrot.slane %v2208, 4
      %v2210 = vrot.slane %v296, 6
      %v2211 = vsel %vm2179, %v2209, %v2210
      %v2212 = vrot.slane %v2210, 4
      %v2213 = vrot.slane %v1524, 6
      %v2214 = vsel %vm2179, %v2212, %v2213
      %v2215 = vrot.slane %v2134, 6
      %v2216 = vrot.slane %v2215, 4
      %v2217 = vrot.slane %v298, 6
      %v2218 = vsel %vm2179, %v2216, %v2217
      %v2219 = vrot.slane %v2217, 4
      %v2220 = vrot.slane %v1525, 6
      %v2221 = vsel %vm2179, %v2219, %v2220
      %v2222 = vrot.slane %v2135, 6
      %v2223 = vrot.slane %v2222, 4
      %v2224 = vrot.slane %v300, 6
      %v2225 = vsel %vm2179, %v2223, %v2224
      %v2226 = vrot.slane %v2224, 4
      %v2227 = vrot.slane %v1526, 6
      %v2228 = vsel %vm2179, %v2226, %v2227
      %v2229 = vrot.slane %v2136, 6
      %v2230 = vrot.slane %v2229, 4
      %v2231 = vrot.slane %v302, 6
      %v2232 = vsel %vm2179, %v2230, %v2231
      %v2233 = vrot.slane %v2231, 4
      %v2234 = vrot.slane %v1527, 6
      %v2235 = vsel %vm2179, %v2233, %v2234
      %v2236 = vrot.slane %v2137, 6
      %v2237 = vrot.slane %v2236, 4
      %v2238 = vrot.slane %v304, 6
      %v2239 = vsel %vm2179, %v2237, %v2238
      %v2240 = vrot.slane %v2238, 4
      %v2241 = vrot.slane %v1528, 6
      %v2242 = vsel %vm2179, %v2240, %v2241
      %v2243 = vrot.slane %v2138, 6
      %v2244 = vrot.slane %v2243, 4
      %v2245 = vrot.slane %v306, 6
      %v2246 = vsel %vm2179, %v2244, %v2245
      %v2247 = vrot.slane %v2245, 4
      %v2248 = vrot.slane %v1529, 6
      %v2249 = vsel %vm2179, %v2247, %v2248
      %v2250 = vrot.slane %v2139, 6
      %v2251 = vrot.slane %v2250, 4
      %v2252 = vrot.slane %v308, 6
      %v2253 = vsel %vm2179, %v2251, %v2252
      %v2254 = vrot.slane %v2252, 4
      %v2255 = vrot.slane %v1530, 6
      %v2256 = vsel %vm2179, %v2254, %v2255
      %v2257 = vrot.slane %v2140, 6
      %v2258 = vrot.slane %v2257, 4
      %v2259 = vrot.slane %v310, 6
      %v2260 = vsel %vm2179, %v2258, %v2259
      %v2261 = vrot.slane %v2259, 4
      %v2262 = vrot.slane %v1531, 6
      %v2263 = vsel %vm2179, %v2261, %v2262
      %v2264 = vrot.slane %v2141, 6
      %v2265 = vrot.slane %v2264, 4
      %v2266 = vrot.slane %v312, 6
      %v2267 = vsel %vm2179, %v2265, %v2266
      %v2268 = vrot.slane %v2266, 4
      %v2269 = vrot.slane %v1532, 6
      %v2270 = vsel %vm2179, %v2268, %v2269
      %v2271 = vrot.slane %v2142, 6
      %v2272 = vrot.slane %v2271, 4
      %v2273 = vrot.slane %v314, 6
      %v2274 = vsel %vm2179, %v2272, %v2273
      %v2275 = vrot.slane %v2273, 4
      %v2276 = vrot.slane %v1533, 6
      %v2277 = vsel %vm2179, %v2275, %v2276
      %v2278 = vrot.slane %v2143, 6
      %v2279 = vrot.slane %v2278, 4
      %v2280 = vrot.slane %v316, 6
      %v2281 = vsel %vm2179, %v2279, %v2280
      %v2282 = vrot.slane %v2280, 4
      %v2283 = vrot.slane %v1534, 6
      %v2284 = vsel %vm2179, %v2282, %v2283
      %v2285 = vrot.slane %v2144, 6
      %v2286 = vrot.slane %v2285, 4
      %v2287 = vrot.slane %v318, 6
      %v2288 = vsel %vm2179, %v2286, %v2287
      %v2289 = vrot.slane %v2287, 4
      %v2290 = vrot.slane %v1535, 6
      %v2291 = vsel %vm2179, %v2289, %v2290
      %s2292 = scalar_lea.vmem %s234, 16
      %v2293 = vld [vmem:[%s2292] sm:$0xf]
      %v2294 = vunpack.c.l.b16 %v2183
      %v2295 = vunpack.c.l.b16 %v2186
      %v2296 = vunpack.c.l.b16 %v2190
      %v2297 = vunpack.c.l.b16 %v2193
      %v2298 = vunpack.c.l.b16 %v2197
      %v2299 = vunpack.c.l.b16 %v2200
      %v2300 = vunpack.c.l.b16 %v2204
      %v2301 = vunpack.c.l.b16 %v2207
      %v2302 = vunpack.c.l.b16 %v2211
      %v2303 = vunpack.c.l.b16 %v2214
      %v2304 = vunpack.c.l.b16 %v2218
      %v2305 = vunpack.c.l.b16 %v2221
      %v2306 = vunpack.c.l.b16 %v2225
      %v2307 = vunpack.c.l.b16 %v2228
      %v2308 = vunpack.c.l.b16 %v2232
      %v2309 = vunpack.c.l.b16 %v2235
      %v2310 = vunpack.c.l.b16 %v2239
      %v2311 = vunpack.c.l.b16 %v2242
      %v2312 = vunpack.c.l.b16 %v2246
      %v2313 = vunpack.c.l.b16 %v2249
      %v2314 = vunpack.c.l.b16 %v2253
      %v2315 = vunpack.c.l.b16 %v2256
      %v2316 = vunpack.c.l.b16 %v2260
      %v2317 = vunpack.c.l.b16 %v2263
      %v2318 = vunpack.c.l.b16 %v2267
      %v2319 = vunpack.c.l.b16 %v2270
      %v2320 = vunpack.c.l.b16 %v2274
      %v2321 = vunpack.c.l.b16 %v2277
      %v2322 = vunpack.c.l.b16 %v2281
      %v2323 = vunpack.c.l.b16 %v2284
      %v2324 = vunpack.c.l.b16 %v2288
      %v2325 = vunpack.c.l.b16 %v2291
      %v2326 = vpack.c.b16 %v2295, %v2294
      %v2327 = vpack.c.b16 %v2297, %v2296
      %v2328 = vpack.c.b16 %v2299, %v2298
      %v2329 = vpack.c.b16 %v2301, %v2300
      %v2330 = vpack.c.b16 %v2303, %v2302
      %v2331 = vpack.c.b16 %v2305, %v2304
      %v2332 = vpack.c.b16 %v2307, %v2306
      %v2333 = vpack.c.b16 %v2309, %v2308
      %v2334 = vpack.c.b16 %v2311, %v2310
      %v2335 = vpack.c.b16 %v2313, %v2312
      %v2336 = vpack.c.b16 %v2315, %v2314
      %v2337 = vpack.c.b16 %v2317, %v2316
      %v2338 = vpack.c.b16 %v2319, %v2318
      %v2339 = vpack.c.b16 %v2321, %v2320
      %v2340 = vpack.c.b16 %v2323, %v2322
      %v2341 = vpack.c.b16 %v2325, %v2324
      %v2343 = vsel %vm773, %v2326, 0
      %v2346 = vsel %vm773, %v2327, 0
      %v2349 = vsel %vm773, %v2328, 0
      %v2352 = vsel %vm773, %v2329, 0
      %v2355 = vsel %vm773, %v2330, 0
      %v2358 = vsel %vm773, %v2331, 0
      %v2361 = vsel %vm773, %v2332, 0
      %v2364 = vsel %vm773, %v2333, 0
      %v2367 = vsel %vm773, %v2334, 0
      %v2370 = vsel %vm773, %v2335, 0
      %v2373 = vsel %vm773, %v2336, 0
      %v2376 = vsel %vm773, %v2337, 0
      %v2379 = vsel %vm773, %v2338, 0
      %v2382 = vsel %vm773, %v2339, 0
      %v2385 = vsel %vm773, %v2340, 0
      %v2388 = vsel %vm773, %v2341, 0
      %v2391 = vsel %vm822, %v2293, 0
      %2393 = vmatpush.bf16.msra.mxu0 0
      %2394 = vmatpush.bf16.msra.mxu0 0
      %2395 = vmatpush.bf16.msra.mxu0 0
      %2396 = vmatpush.bf16.msra.mxu0 0
      %2397 = vmatpush.bf16.msra.mxu0 0
      %2398 = vmatpush.bf16.msra.mxu0 0
      %2399 = vmatpush.bf16.msra.mxu0 0
      %2400 = vmatpush.bf16.msra.mxu0 %v2391
      %2401 = vmatmul.bf16.gmra.mxu0 %v2343
      %v2402 = vpop.f32.mrf.mxu0
      %v2403 = vadd.f32 0.0, %v2402
      %v2404 = vpop.f32.mrf.mxu0
      %v2405 = vadd.f32 0.0, %v2404
      %2406 = vmatmul.bf16.gmra.mxu0 %v2346
      %v2407 = vpop.f32.mrf.mxu0
      %v2408 = vadd.f32 0.0, %v2407
      %v2409 = vpop.f32.mrf.mxu0
      %v2410 = vadd.f32 0.0, %v2409
      %2411 = vmatmul.bf16.gmra.mxu0 %v2349
      %v2412 = vpop.f32.mrf.mxu0
      %v2413 = vadd.f32 0.0, %v2412
      %v2414 = vpop.f32.mrf.mxu0
      %v2415 = vadd.f32 0.0, %v2414
      %2416 = vmatmul.bf16.gmra.mxu0 %v2352
      %v2417 = vpop.f32.mrf.mxu0
      %v2418 = vadd.f32 0.0, %v2417
      %v2419 = vpop.f32.mrf.mxu0
      %v2420 = vadd.f32 0.0, %v2419
      %2421 = vmatmul.bf16.gmra.mxu0 %v2355
      %v2422 = vpop.f32.mrf.mxu0
      %v2423 = vadd.f32 0.0, %v2422
      %v2424 = vpop.f32.mrf.mxu0
      %v2425 = vadd.f32 0.0, %v2424
      %2426 = vmatmul.bf16.gmra.mxu0 %v2358
      %v2427 = vpop.f32.mrf.mxu0
      %v2428 = vadd.f32 0.0, %v2427
      %v2429 = vpop.f32.mrf.mxu0
      %v2430 = vadd.f32 0.0, %v2429
      %2431 = vmatmul.bf16.gmra.mxu0 %v2361
      %v2432 = vpop.f32.mrf.mxu0
      %v2433 = vadd.f32 0.0, %v2432
      %v2434 = vpop.f32.mrf.mxu0
      %v2435 = vadd.f32 0.0, %v2434
      %2436 = vmatmul.bf16.gmra.mxu0 %v2364
      %v2437 = vpop.f32.mrf.mxu0
      %v2438 = vadd.f32 0.0, %v2437
      %v2439 = vpop.f32.mrf.mxu0
      %v2440 = vadd.f32 0.0, %v2439
      %2441 = vmatmul.bf16.gmra.mxu0 %v2367
      %v2442 = vpop.f32.mrf.mxu0
      %v2443 = vadd.f32 0.0, %v2442
      %v2444 = vpop.f32.mrf.mxu0
      %v2445 = vadd.f32 0.0, %v2444
      %2446 = vmatmul.bf16.gmra.mxu0 %v2370
      %v2447 = vpop.f32.mrf.mxu0
      %v2448 = vadd.f32 0.0, %v2447
      %v2449 = vpop.f32.mrf.mxu0
      %v2450 = vadd.f32 0.0, %v2449
      %2451 = vmatmul.bf16.gmra.mxu0 %v2373
      %v2452 = vpop.f32.mrf.mxu0
      %v2453 = vadd.f32 0.0, %v2452
      %v2454 = vpop.f32.mrf.mxu0
      %v2455 = vadd.f32 0.0, %v2454
      %2456 = vmatmul.bf16.gmra.mxu0 %v2376
      %v2457 = vpop.f32.mrf.mxu0
      %v2458 = vadd.f32 0.0, %v2457
      %v2459 = vpop.f32.mrf.mxu0
      %v2460 = vadd.f32 0.0, %v2459
      %2461 = vmatmul.bf16.gmra.mxu0 %v2379
      %v2462 = vpop.f32.mrf.mxu0
      %v2463 = vadd.f32 0.0, %v2462
      %v2464 = vpop.f32.mrf.mxu0
      %v2465 = vadd.f32 0.0, %v2464
      %2466 = vmatmul.bf16.gmra.mxu0 %v2382
      %v2467 = vpop.f32.mrf.mxu0
      %v2468 = vadd.f32 0.0, %v2467
      %v2469 = vpop.f32.mrf.mxu0
      %v2470 = vadd.f32 0.0, %v2469
      %2471 = vmatmul.bf16.gmra.mxu0 %v2385
      %v2472 = vpop.f32.mrf.mxu0
      %v2473 = vadd.f32 0.0, %v2472
      %v2474 = vpop.f32.mrf.mxu0
      %v2475 = vadd.f32 0.0, %v2474
      %2476 = vmatmul.bf16.gmra.mxu0 %v2388
      %v2477 = vpop.f32.mrf.mxu0
      %v2478 = vadd.f32 0.0, %v2477
      %v2479 = vpop.f32.mrf.mxu0
      %v2480 = vadd.f32 0.0, %v2479
      %2481 = vdwg.mxu0
      %v2482 = vadd.f32 %v2097, %v2403
      %v2483 = vadd.f32 %v2098, %v2405
      %v2484 = vadd.f32 %v2099, %v2408
      %v2485 = vadd.f32 %v2100, %v2410
      %v2486 = vadd.f32 %v2101, %v2413
      %v2487 = vadd.f32 %v2102, %v2415
      %v2488 = vadd.f32 %v2103, %v2418
      %v2489 = vadd.f32 %v2104, %v2420
      %v2490 = vadd.f32 %v2105, %v2423
      %v2491 = vadd.f32 %v2106, %v2425
      %v2492 = vadd.f32 %v2107, %v2428
      %v2493 = vadd.f32 %v2108, %v2430
      %v2494 = vadd.f32 %v2109, %v2433
      %v2495 = vadd.f32 %v2110, %v2435
      %v2496 = vadd.f32 %v2111, %v2438
      %v2497 = vadd.f32 %v2112, %v2440
      %v2498 = vadd.f32 %v2113, %v2443
      %v2499 = vadd.f32 %v2114, %v2445
      %v2500 = vadd.f32 %v2115, %v2448
      %v2501 = vadd.f32 %v2116, %v2450
      %v2502 = vadd.f32 %v2117, %v2453
      %v2503 = vadd.f32 %v2118, %v2455
      %v2504 = vadd.f32 %v2119, %v2458
      %v2505 = vadd.f32 %v2120, %v2460
      %v2506 = vadd.f32 %v2121, %v2463
      %v2507 = vadd.f32 %v2122, %v2465
      %v2508 = vadd.f32 %v2123, %v2468
      %v2509 = vadd.f32 %v2124, %v2470
      %v2510 = vadd.f32 %v2125, %v2473
      %v2511 = vadd.f32 %v2126, %v2475
      %v2512 = vadd.f32 %v2127, %v2478
      %v2513 = vadd.f32 %v2128, %v2480
      %v2514 = vld [vmem:[%s226 + $0x8] sm:$0x7]
      %v2515 = vld [vmem:[%s226 + $0x14] sm:$0x7]
      %v2516 = vld [vmem:[%s226 + $0x20] sm:$0x7]
      %v2517 = vld [vmem:[%s226 + $0x2c] sm:$0x7]
      %v2518 = vld [vmem:[%s226 + $0x38] sm:$0x7]
      %v2519 = vld [vmem:[%s226 + $0x44] sm:$0x7]
      %v2520 = vld [vmem:[%s226 + $0x50] sm:$0x7]
      %v2521 = vld [vmem:[%s226 + $0x5c] sm:$0x7]
      %v2522 = vld [vmem:[%s226 + $0x68] sm:$0x7]
      %v2523 = vld [vmem:[%s226 + $0x74] sm:$0x7]
      %v2524 = vld [vmem:[%s226 + $0x80] sm:$0x7]
      %v2525 = vld [vmem:[%s226 + $0x8c] sm:$0x7]
      %v2526 = vld [vmem:[%s226 + $0x98] sm:$0x7]
      %v2527 = vld [vmem:[%s226 + $0xa4] sm:$0x7]
      %v2528 = vld [vmem:[%s226 + $0xb0] sm:$0x7]
      %v2529 = vld [vmem:[%s226 + $0xbc] sm:$0x7]
      %vm2530 = vsmask.f32 1280
      %vm2531 = vsmask.f32 5392
      %vm2532 = vmor %vm2530, %vm2531
      %v2534 = vshrl.u32 %v2129, 16
      %v2536 = vrot.slane %v2534, 6
      %v2537 = vshll.u32 %v2129, 16
      %v2539 = vrot.slane %v2537, 7
      %v2540 = vor.u32 %v2536, %v2539
      %v2541 = vrot.slane %v2540, 4
      %v2542 = vrot.slane %v353, 6
      %v2543 = vrot.slane %v349, 7
      %v2544 = vor.u32 %v2542, %v2543
      %v2545 = vsel %vm2532, %v2541, %v2544
      %v2546 = vrot.slane %v2544, 4
      %v2548 = vshrl.u32 %v2514, 16
      %v2550 = vrot.slane %v2548, 6
      %v2551 = vshll.u32 %v2514, 16
      %v2553 = vrot.slane %v2551, 7
      %v2554 = vor.u32 %v2550, %v2553
      %v2555 = vsel %vm2532, %v2546, %v2554
      %v2557 = vshrl.u32 %v2130, 16
      %v2559 = vrot.slane %v2557, 6
      %v2560 = vshll.u32 %v2130, 16
      %v2562 = vrot.slane %v2560, 7
      %v2563 = vor.u32 %v2559, %v2562
      %v2564 = vrot.slane %v2563, 4
      %v2565 = vrot.slane %v377, 6
      %v2566 = vrot.slane %v373, 7
      %v2567 = vor.u32 %v2565, %v2566
      %v2568 = vsel %vm2532, %v2564, %v2567
      %v2569 = vrot.slane %v2567, 4
      %v2571 = vshrl.u32 %v2515, 16
      %v2573 = vrot.slane %v2571, 6
      %v2574 = vshll.u32 %v2515, 16
      %v2576 = vrot.slane %v2574, 7
      %v2577 = vor.u32 %v2573, %v2576
      %v2578 = vsel %vm2532, %v2569, %v2577
      %v2580 = vshrl.u32 %v2131, 16
      %v2582 = vrot.slane %v2580, 6
      %v2583 = vshll.u32 %v2131, 16
      %v2585 = vrot.slane %v2583, 7
      %v2586 = vor.u32 %v2582, %v2585
      %v2587 = vrot.slane %v2586, 4
      %v2588 = vrot.slane %v401, 6
      %v2589 = vrot.slane %v397, 7
      %v2590 = vor.u32 %v2588, %v2589
      %v2591 = vsel %vm2532, %v2587, %v2590
      %v2592 = vrot.slane %v2590, 4
      %v2594 = vshrl.u32 %v2516, 16
      %v2596 = vrot.slane %v2594, 6
      %v2597 = vshll.u32 %v2516, 16
      %v2599 = vrot.slane %v2597, 7
      %v2600 = vor.u32 %v2596, %v2599
      %v2601 = vsel %vm2532, %v2592, %v2600
      %v2603 = vshrl.u32 %v2132, 16
      %v2605 = vrot.slane %v2603, 6
      %v2606 = vshll.u32 %v2132, 16
      %v2608 = vrot.slane %v2606, 7
      %v2609 = vor.u32 %v2605, %v2608
      %v2610 = vrot.slane %v2609, 4
      %v2611 = vrot.slane %v425, 6
      %v2612 = vrot.slane %v421, 7
      %v2613 = vor.u32 %v2611, %v2612
      %v2614 = vsel %vm2532, %v2610, %v2613
      %v2615 = vrot.slane %v2613, 4
      %v2617 = vshrl.u32 %v2517, 16
      %v2619 = vrot.slane %v2617, 6
      %v2620 = vshll.u32 %v2517, 16
      %v2622 = vrot.slane %v2620, 7
      %v2623 = vor.u32 %v2619, %v2622
      %v2624 = vsel %vm2532, %v2615, %v2623
      %v2626 = vshrl.u32 %v2133, 16
      %v2628 = vrot.slane %v2626, 6
      %v2629 = vshll.u32 %v2133, 16
      %v2631 = vrot.slane %v2629, 7
      %v2632 = vor.u32 %v2628, %v2631
      %v2633 = vrot.slane %v2632, 4
      %v2634 = vrot.slane %v449, 6
      %v2635 = vrot.slane %v445, 7
      %v2636 = vor.u32 %v2634, %v2635
      %v2637 = vsel %vm2532, %v2633, %v2636
      %v2638 = vrot.slane %v2636, 4
      %v2640 = vshrl.u32 %v2518, 16
      %v2642 = vrot.slane %v2640, 6
      %v2643 = vshll.u32 %v2518, 16
      %v2645 = vrot.slane %v2643, 7
      %v2646 = vor.u32 %v2642, %v2645
      %v2647 = vsel %vm2532, %v2638, %v2646
      %v2649 = vshrl.u32 %v2134, 16
      %v2651 = vrot.slane %v2649, 6
      %v2652 = vshll.u32 %v2134, 16
      %v2654 = vrot.slane %v2652, 7
      %v2655 = vor.u32 %v2651, %v2654
      %v2656 = vrot.slane %v2655, 4
      %v2657 = vrot.slane %v473, 6
      %v2658 = vrot.slane %v469, 7
      %v2659 = vor.u32 %v2657, %v2658
      %v2660 = vsel %vm2532, %v2656, %v2659
      %v2661 = vrot.slane %v2659, 4
      %v2663 = vshrl.u32 %v2519, 16
      %v2665 = vrot.slane %v2663, 6
      %v2666 = vshll.u32 %v2519, 16
      %v2668 = vrot.slane %v2666, 7
      %v2669 = vor.u32 %v2665, %v2668
      %v2670 = vsel %vm2532, %v2661, %v2669
      %v2672 = vshrl.u32 %v2135, 16
      %v2674 = vrot.slane %v2672, 6
      %v2675 = vshll.u32 %v2135, 16
      %v2677 = vrot.slane %v2675, 7
      %v2678 = vor.u32 %v2674, %v2677
      %v2679 = vrot.slane %v2678, 4
      %v2680 = vrot.slane %v497, 6
      %v2681 = vrot.slane %v493, 7
      %v2682 = vor.u32 %v2680, %v2681
      %v2683 = vsel %vm2532, %v2679, %v2682
      %v2684 = vrot.slane %v2682, 4
      %v2686 = vshrl.u32 %v2520, 16
      %v2688 = vrot.slane %v2686, 6
      %v2689 = vshll.u32 %v2520, 16
      %v2691 = vrot.slane %v2689, 7
      %v2692 = vor.u32 %v2688, %v2691
      %v2693 = vsel %vm2532, %v2684, %v2692
      %v2695 = vshrl.u32 %v2136, 16
      %v2697 = vrot.slane %v2695, 6
      %v2698 = vshll.u32 %v2136, 16
      %v2700 = vrot.slane %v2698, 7
      %v2701 = vor.u32 %v2697, %v2700
      %v2702 = vrot.slane %v2701, 4
      %v2703 = vrot.slane %v521, 6
      %v2704 = vrot.slane %v517, 7
      %v2705 = vor.u32 %v2703, %v2704
      %v2706 = vsel %vm2532, %v2702, %v2705
      %v2707 = vrot.slane %v2705, 4
      %v2709 = vshrl.u32 %v2521, 16
      %v2711 = vrot.slane %v2709, 6
      %v2712 = vshll.u32 %v2521, 16
      %v2714 = vrot.slane %v2712, 7
      %v2715 = vor.u32 %v2711, %v2714
      %v2716 = vsel %vm2532, %v2707, %v2715
      %v2718 = vshrl.u32 %v2137, 16
      %v2720 = vrot.slane %v2718, 6
      %v2721 = vshll.u32 %v2137, 16
      %v2723 = vrot.slane %v2721, 7
      %v2724 = vor.u32 %v2720, %v2723
      %v2725 = vrot.slane %v2724, 4
      %v2726 = vrot.slane %v545, 6
      %v2727 = vrot.slane %v541, 7
      %v2728 = vor.u32 %v2726, %v2727
      %v2729 = vsel %vm2532, %v2725, %v2728
      %v2730 = vrot.slane %v2728, 4
      %v2732 = vshrl.u32 %v2522, 16
      %v2734 = vrot.slane %v2732, 6
      %v2735 = vshll.u32 %v2522, 16
      %v2737 = vrot.slane %v2735, 7
      %v2738 = vor.u32 %v2734, %v2737
      %v2739 = vsel %vm2532, %v2730, %v2738
      %v2741 = vshrl.u32 %v2138, 16
      %v2743 = vrot.slane %v2741, 6
      %v2744 = vshll.u32 %v2138, 16
      %v2746 = vrot.slane %v2744, 7
      %v2747 = vor.u32 %v2743, %v2746
      %v2748 = vrot.slane %v2747, 4
      %v2749 = vrot.slane %v569, 6
      %v2750 = vrot.slane %v565, 7
      %v2751 = vor.u32 %v2749, %v2750
      %v2752 = vsel %vm2532, %v2748, %v2751
      %v2753 = vrot.slane %v2751, 4
      %v2755 = vshrl.u32 %v2523, 16
      %v2757 = vrot.slane %v2755, 6
      %v2758 = vshll.u32 %v2523, 16
      %v2760 = vrot.slane %v2758, 7
      %v2761 = vor.u32 %v2757, %v2760
      %v2762 = vsel %vm2532, %v2753, %v2761
      %v2764 = vshrl.u32 %v2139, 16
      %v2766 = vrot.slane %v2764, 6
      %v2767 = vshll.u32 %v2139, 16
      %v2769 = vrot.slane %v2767, 7
      %v2770 = vor.u32 %v2766, %v2769
      %v2771 = vrot.slane %v2770, 4
      %v2772 = vrot.slane %v593, 6
      %v2773 = vrot.slane %v589, 7
      %v2774 = vor.u32 %v2772, %v2773
      %v2775 = vsel %vm2532, %v2771, %v2774
      %v2776 = vrot.slane %v2774, 4
      %v2778 = vshrl.u32 %v2524, 16
      %v2780 = vrot.slane %v2778, 6
      %v2781 = vshll.u32 %v2524, 16
      %v2783 = vrot.slane %v2781, 7
      %v2784 = vor.u32 %v2780, %v2783
      %v2785 = vsel %vm2532, %v2776, %v2784
      %v2787 = vshrl.u32 %v2140, 16
      %v2789 = vrot.slane %v2787, 6
      %v2790 = vshll.u32 %v2140, 16
      %v2792 = vrot.slane %v2790, 7
      %v2793 = vor.u32 %v2789, %v2792
      %v2794 = vrot.slane %v2793, 4
      %v2795 = vrot.slane %v617, 6
      %v2796 = vrot.slane %v613, 7
      %v2797 = vor.u32 %v2795, %v2796
      %v2798 = vsel %vm2532, %v2794, %v2797
      %v2799 = vrot.slane %v2797, 4
      %v2801 = vshrl.u32 %v2525, 16
      %v2803 = vrot.slane %v2801, 6
      %v2804 = vshll.u32 %v2525, 16
      %v2806 = vrot.slane %v2804, 7
      %v2807 = vor.u32 %v2803, %v2806
      %v2808 = vsel %vm2532, %v2799, %v2807
      %v2810 = vshrl.u32 %v2141, 16
      %v2812 = vrot.slane %v2810, 6
      %v2813 = vshll.u32 %v2141, 16
      %v2815 = vrot.slane %v2813, 7
      %v2816 = vor.u32 %v2812, %v2815
      %v2817 = vrot.slane %v2816, 4
      %v2818 = vrot.slane %v641, 6
      %v2819 = vrot.slane %v637, 7
      %v2820 = vor.u32 %v2818, %v2819
      %v2821 = vsel %vm2532, %v2817, %v2820
      %v2822 = vrot.slane %v2820, 4
      %v2824 = vshrl.u32 %v2526, 16
      %v2826 = vrot.slane %v2824, 6
      %v2827 = vshll.u32 %v2526, 16
      %v2829 = vrot.slane %v2827, 7
      %v2830 = vor.u32 %v2826, %v2829
      %v2831 = vsel %vm2532, %v2822, %v2830
      %v2833 = vshrl.u32 %v2142, 16
      %v2835 = vrot.slane %v2833, 6
      %v2836 = vshll.u32 %v2142, 16
      %v2838 = vrot.slane %v2836, 7
      %v2839 = vor.u32 %v2835, %v2838
      %v2840 = vrot.slane %v2839, 4
      %v2841 = vrot.slane %v665, 6
      %v2842 = vrot.slane %v661, 7
      %v2843 = vor.u32 %v2841, %v2842
      %v2844 = vsel %vm2532, %v2840, %v2843
      %v2845 = vrot.slane %v2843, 4
      %v2847 = vshrl.u32 %v2527, 16
      %v2849 = vrot.slane %v2847, 6
      %v2850 = vshll.u32 %v2527, 16
      %v2852 = vrot.slane %v2850, 7
      %v2853 = vor.u32 %v2849, %v2852
      %v2854 = vsel %vm2532, %v2845, %v2853
      %v2856 = vshrl.u32 %v2143, 16
      %v2858 = vrot.slane %v2856, 6
      %v2859 = vshll.u32 %v2143, 16
      %v2861 = vrot.slane %v2859, 7
      %v2862 = vor.u32 %v2858, %v2861
      %v2863 = vrot.slane %v2862, 4
      %v2864 = vrot.slane %v689, 6
      %v2865 = vrot.slane %v685, 7
      %v2866 = vor.u32 %v2864, %v2865
      %v2867 = vsel %vm2532, %v2863, %v2866
      %v2868 = vrot.slane %v2866, 4
      %v2870 = vshrl.u32 %v2528, 16
      %v2872 = vrot.slane %v2870, 6
      %v2873 = vshll.u32 %v2528, 16
      %v2875 = vrot.slane %v2873, 7
      %v2876 = vor.u32 %v2872, %v2875
      %v2877 = vsel %vm2532, %v2868, %v2876
      %v2879 = vshrl.u32 %v2144, 16
      %v2881 = vrot.slane %v2879, 6
      %v2882 = vshll.u32 %v2144, 16
      %v2884 = vrot.slane %v2882, 7
      %v2885 = vor.u32 %v2881, %v2884
      %v2886 = vrot.slane %v2885, 4
      %v2887 = vrot.slane %v713, 6
      %v2888 = vrot.slane %v709, 7
      %v2889 = vor.u32 %v2887, %v2888
      %v2890 = vsel %vm2532, %v2886, %v2889
      %v2891 = vrot.slane %v2889, 4
      %v2893 = vshrl.u32 %v2529, 16
      %v2895 = vrot.slane %v2893, 6
      %v2896 = vshll.u32 %v2529, 16
      %v2898 = vrot.slane %v2896, 7
      %v2899 = vor.u32 %v2895, %v2898
      %v2900 = vsel %vm2532, %v2891, %v2899
      %s2901 = scalar_lea.vmem %s234, 20
      %v2902 = vld [vmem:[%s2901] sm:$0xf]
      %v2903 = vunpack.c.l.b16 %v2545
      %v2904 = vunpack.c.l.b16 %v2555
      %v2905 = vunpack.c.l.b16 %v2568
      %v2906 = vunpack.c.l.b16 %v2578
      %v2907 = vunpack.c.l.b16 %v2591
      %v2908 = vunpack.c.l.b16 %v2601
      %v2909 = vunpack.c.l.b16 %v2614
      %v2910 = vunpack.c.l.b16 %v2624
      %v2911 = vunpack.c.l.b16 %v2637
      %v2912 = vunpack.c.l.b16 %v2647
      %v2913 = vunpack.c.l.b16 %v2660
      %v2914 = vunpack.c.l.b16 %v2670
      %v2915 = vunpack.c.l.b16 %v2683
      %v2916 = vunpack.c.l.b16 %v2693
      %v2917 = vunpack.c.l.b16 %v2706
      %v2918 = vunpack.c.l.b16 %v2716
      %v2919 = vunpack.c.l.b16 %v2729
      %v2920 = vunpack.c.l.b16 %v2739
      %v2921 = vunpack.c.l.b16 %v2752
      %v2922 = vunpack.c.l.b16 %v2762
      %v2923 = vunpack.c.l.b16 %v2775
      %v2924 = vunpack.c.l.b16 %v2785
      %v2925 = vunpack.c.l.b16 %v2798
      %v2926 = vunpack.c.l.b16 %v2808
      %v2927 = vunpack.c.l.b16 %v2821
      %v2928 = vunpack.c.l.b16 %v2831
      %v2929 = vunpack.c.l.b16 %v2844
      %v2930 = vunpack.c.l.b16 %v2854
      %v2931 = vunpack.c.l.b16 %v2867
      %v2932 = vunpack.c.l.b16 %v2877
      %v2933 = vunpack.c.l.b16 %v2890
      %v2934 = vunpack.c.l.b16 %v2900
      %v2935 = vpack.c.b16 %v2904, %v2903
      %v2936 = vpack.c.b16 %v2906, %v2905
      %v2937 = vpack.c.b16 %v2908, %v2907
      %v2938 = vpack.c.b16 %v2910, %v2909
      %v2939 = vpack.c.b16 %v2912, %v2911
      %v2940 = vpack.c.b16 %v2914, %v2913
      %v2941 = vpack.c.b16 %v2916, %v2915
      %v2942 = vpack.c.b16 %v2918, %v2917
      %v2943 = vpack.c.b16 %v2920, %v2919
      %v2944 = vpack.c.b16 %v2922, %v2921
      %v2945 = vpack.c.b16 %v2924, %v2923
      %v2946 = vpack.c.b16 %v2926, %v2925
      %v2947 = vpack.c.b16 %v2928, %v2927
      %v2948 = vpack.c.b16 %v2930, %v2929
      %v2949 = vpack.c.b16 %v2932, %v2931
      %v2950 = vpack.c.b16 %v2934, %v2933
      %v2952 = vsel %vm773, %v2935, 0
      %v2955 = vsel %vm773, %v2936, 0
      %v2958 = vsel %vm773, %v2937, 0
      %v2961 = vsel %vm773, %v2938, 0
      %v2964 = vsel %vm773, %v2939, 0
      %v2967 = vsel %vm773, %v2940, 0
      %v2970 = vsel %vm773, %v2941, 0
      %v2973 = vsel %vm773, %v2942, 0
      %v2976 = vsel %vm773, %v2943, 0
      %v2979 = vsel %vm773, %v2944, 0
      %v2982 = vsel %vm773, %v2945, 0
      %v2985 = vsel %vm773, %v2946, 0
      %v2988 = vsel %vm773, %v2947, 0
      %v2991 = vsel %vm773, %v2948, 0
      %v2994 = vsel %vm773, %v2949, 0
      %v2997 = vsel %vm773, %v2950, 0
      %v3000 = vsel %vm822, %v2902, 0
      %3002 = vmatpush.bf16.msra.mxu0 0
      %3003 = vmatpush.bf16.msra.mxu0 0
      %3004 = vmatpush.bf16.msra.mxu0 0
      %3005 = vmatpush.bf16.msra.mxu0 0
      %3006 = vmatpush.bf16.msra.mxu0 0
      %3007 = vmatpush.bf16.msra.mxu0 0
      %3008 = vmatpush.bf16.msra.mxu0 0
      %3009 = vmatpush.bf16.msra.mxu0 %v3000
      %3010 = vmatmul.bf16.gmra.mxu0 %v2952
      %v3011 = vpop.f32.mrf.mxu0
      %v3012 = vadd.f32 0.0, %v3011
      %v3013 = vpop.f32.mrf.mxu0
      %v3014 = vadd.f32 0.0, %v3013
      %3015 = vmatmul.bf16.gmra.mxu0 %v2955
      %v3016 = vpop.f32.mrf.mxu0
      %v3017 = vadd.f32 0.0, %v3016
      %v3018 = vpop.f32.mrf.mxu0
      %v3019 = vadd.f32 0.0, %v3018
      %3020 = vmatmul.bf16.gmra.mxu0 %v2958
      %v3021 = vpop.f32.mrf.mxu0
      %v3022 = vadd.f32 0.0, %v3021
      %v3023 = vpop.f32.mrf.mxu0
      %v3024 = vadd.f32 0.0, %v3023
      %3025 = vmatmul.bf16.gmra.mxu0 %v2961
      %v3026 = vpop.f32.mrf.mxu0
      %v3027 = vadd.f32 0.0, %v3026
      %v3028 = vpop.f32.mrf.mxu0
      %v3029 = vadd.f32 0.0, %v3028
      %3030 = vmatmul.bf16.gmra.mxu0 %v2964
      %v3031 = vpop.f32.mrf.mxu0
      %v3032 = vadd.f32 0.0, %v3031
      %v3033 = vpop.f32.mrf.mxu0
      %v3034 = vadd.f32 0.0, %v3033
      %3035 = vmatmul.bf16.gmra.mxu0 %v2967
      %v3036 = vpop.f32.mrf.mxu0
      %v3037 = vadd.f32 0.0, %v3036
      %v3038 = vpop.f32.mrf.mxu0
      %v3039 = vadd.f32 0.0, %v3038
      %3040 = vmatmul.bf16.gmra.mxu0 %v2970
      %v3041 = vpop.f32.mrf.mxu0
      %v3042 = vadd.f32 0.0, %v3041
      %v3043 = vpop.f32.mrf.mxu0
      %v3044 = vadd.f32 0.0, %v3043
      %3045 = vmatmul.bf16.gmra.mxu0 %v2973
      %v3046 = vpop.f32.mrf.mxu0
      %v3047 = vadd.f32 0.0, %v3046
      %v3048 = vpop.f32.mrf.mxu0
      %v3049 = vadd.f32 0.0, %v3048
      %3050 = vmatmul.bf16.gmra.mxu0 %v2976
      %v3051 = vpop.f32.mrf.mxu0
      %v3052 = vadd.f32 0.0, %v3051
      %v3053 = vpop.f32.mrf.mxu0
      %v3054 = vadd.f32 0.0, %v3053
      %3055 = vmatmul.bf16.gmra.mxu0 %v2979
      %v3056 = vpop.f32.mrf.mxu0
      %v3057 = vadd.f32 0.0, %v3056
      %v3058 = vpop.f32.mrf.mxu0
      %v3059 = vadd.f32 0.0, %v3058
      %3060 = vmatmul.bf16.gmra.mxu0 %v2982
      %v3061 = vpop.f32.mrf.mxu0
      %v3062 = vadd.f32 0.0, %v3061
      %v3063 = vpop.f32.mrf.mxu0
      %v3064 = vadd.f32 0.0, %v3063
      %3065 = vmatmul.bf16.gmra.mxu0 %v2985
      %v3066 = vpop.f32.mrf.mxu0
      %v3067 = vadd.f32 0.0, %v3066
      %v3068 = vpop.f32.mrf.mxu0
      %v3069 = vadd.f32 0.0, %v3068
      %3070 = vmatmul.bf16.gmra.mxu0 %v2988
      %v3071 = vpop.f32.mrf.mxu0
      %v3072 = vadd.f32 0.0, %v3071
      %v3073 = vpop.f32.mrf.mxu0
      %v3074 = vadd.f32 0.0, %v3073
      %3075 = vmatmul.bf16.gmra.mxu0 %v2991
      %v3076 = vpop.f32.mrf.mxu0
      %v3077 = vadd.f32 0.0, %v3076
      %v3078 = vpop.f32.mrf.mxu0
      %v3079 = vadd.f32 0.0, %v3078
      %3080 = vmatmul.bf16.gmra.mxu0 %v2994
      %v3081 = vpop.f32.mrf.mxu0
      %v3082 = vadd.f32 0.0, %v3081
      %v3083 = vpop.f32.mrf.mxu0
      %v3084 = vadd.f32 0.0, %v3083
      %3085 = vmatmul.bf16.gmra.mxu0 %v2997
      %v3086 = vpop.f32.mrf.mxu0
      %v3087 = vadd.f32 0.0, %v3086
      %v3088 = vpop.f32.mrf.mxu0
      %v3089 = vadd.f32 0.0, %v3088
      %3090 = vdwg.mxu0
      %v3091 = vadd.f32 %v2482, %v3012
      %v3092 = vadd.f32 %v2483, %v3014
      %v3093 = vadd.f32 %v2484, %v3017
      %v3094 = vadd.f32 %v2485, %v3019
      %v3095 = vadd.f32 %v2486, %v3022
      %v3096 = vadd.f32 %v2487, %v3024
      %v3097 = vadd.f32 %v2488, %v3027
      %v3098 = vadd.f32 %v2489, %v3029
      %v3099 = vadd.f32 %v2490, %v3032
      %v3100 = vadd.f32 %v2491, %v3034
      %v3101 = vadd.f32 %v2492, %v3037
      %v3102 = vadd.f32 %v2493, %v3039
      %v3103 = vadd.f32 %v2494, %v3042
      %v3104 = vadd.f32 %v2495, %v3044
      %v3105 = vadd.f32 %v2496, %v3047
      %v3106 = vadd.f32 %v2497, %v3049
      %v3107 = vadd.f32 %v2498, %v3052
      %v3108 = vadd.f32 %v2499, %v3054
      %v3109 = vadd.f32 %v2500, %v3057
      %v3110 = vadd.f32 %v2501, %v3059
      %v3111 = vadd.f32 %v2502, %v3062
      %v3112 = vadd.f32 %v2503, %v3064
      %v3113 = vadd.f32 %v2504, %v3067
      %v3114 = vadd.f32 %v2505, %v3069
      %v3115 = vadd.f32 %v2506, %v3072
      %v3116 = vadd.f32 %v2507, %v3074
      %v3117 = vadd.f32 %v2508, %v3077
      %v3118 = vadd.f32 %v2509, %v3079
      %v3119 = vadd.f32 %v2510, %v3082
      %v3120 = vadd.f32 %v2511, %v3084
      %v3121 = vadd.f32 %v2512, %v3087
      %v3122 = vadd.f32 %v2513, %v3089
      %v3123 = vld [vmem:[%s226] sm:$0x8]
      %v3124 = vld [vmem:[%s226 + $0xc] sm:$0x8]
      %v3125 = vld [vmem:[%s226 + $0x18] sm:$0x8]
      %v3126 = vld [vmem:[%s226 + $0x24] sm:$0x8]
      %v3127 = vld [vmem:[%s226 + $0x30] sm:$0x8]
      %v3128 = vld [vmem:[%s226 + $0x3c] sm:$0x8]
      %v3129 = vld [vmem:[%s226 + $0x48] sm:$0x8]
      %v3130 = vld [vmem:[%s226 + $0x54] sm:$0x8]
      %v3131 = vld [vmem:[%s226 + $0x60] sm:$0x8]
      %v3132 = vld [vmem:[%s226 + $0x6c] sm:$0x8]
      %v3133 = vld [vmem:[%s226 + $0x78] sm:$0x8]
      %v3134 = vld [vmem:[%s226 + $0x84] sm:$0x8]
      %v3135 = vld [vmem:[%s226 + $0x90] sm:$0x8]
      %v3136 = vld [vmem:[%s226 + $0x9c] sm:$0x8]
      %v3137 = vld [vmem:[%s226 + $0xa8] sm:$0x8]
      %v3138 = vld [vmem:[%s226 + $0xb4] sm:$0x8]
      %vm3171 = vcmask 1040384
      %vm3172 = vcmask 1044484
      %vm3173 = vmor %vm3171, %vm3172
      %v3174 = vrot.slane %v3123, 7
      %v3175 = vrot.slane %v3174, 4
      %v3176 = vrot.slane %v288, 7
      %v3177 = vsel %vm3173, %v3175, %v3176
      %v3178 = vrot.slane %v3176, 4
      %v3179 = vrot.slane %v2514, 7
      %v3180 = vsel %vm3173, %v3178, %v3179
      %v3181 = vrot.slane %v3124, 7
      %v3182 = vrot.slane %v3181, 4
      %v3183 = vrot.slane %v290, 7
      %v3184 = vsel %vm3173, %v3182, %v3183
      %v3185 = vrot.slane %v3183, 4
      %v3186 = vrot.slane %v2515, 7
      %v3187 = vsel %vm3173, %v3185, %v3186
      %v3188 = vrot.slane %v3125, 7
      %v3189 = vrot.slane %v3188, 4
      %v3190 = vrot.slane %v292, 7
      %v3191 = vsel %vm3173, %v3189, %v3190
      %v3192 = vrot.slane %v3190, 4
      %v3193 = vrot.slane %v2516, 7
      %v3194 = vsel %vm3173, %v3192, %v3193
      %v3195 = vrot.slane %v3126, 7
      %v3196 = vrot.slane %v3195, 4
      %v3197 = vrot.slane %v294, 7
      %v3198 = vsel %vm3173, %v3196, %v3197
      %v3199 = vrot.slane %v3197, 4
      %v3200 = vrot.slane %v2517, 7
      %v3201 = vsel %vm3173, %v3199, %v3200
      %v3202 = vrot.slane %v3127, 7
      %v3203 = vrot.slane %v3202, 4
      %v3204 = vrot.slane %v296, 7
      %v3205 = vsel %vm3173, %v3203, %v3204
      %v3206 = vrot.slane %v3204, 4
      %v3207 = vrot.slane %v2518, 7
      %v3208 = vsel %vm3173, %v3206, %v3207
      %v3209 = vrot.slane %v3128, 7
      %v3210 = vrot.slane %v3209, 4
      %v3211 = vrot.slane %v298, 7
      %v3212 = vsel %vm3173, %v3210, %v3211
      %v3213 = vrot.slane %v3211, 4
      %v3214 = vrot.slane %v2519, 7
      %v3215 = vsel %vm3173, %v3213, %v3214
      %v3216 = vrot.slane %v3129, 7
      %v3217 = vrot.slane %v3216, 4
      %v3218 = vrot.slane %v300, 7
      %v3219 = vsel %vm3173, %v3217, %v3218
      %v3220 = vrot.slane %v3218, 4
      %v3221 = vrot.slane %v2520, 7
      %v3222 = vsel %vm3173, %v3220, %v3221
      %v3223 = vrot.slane %v3130, 7
      %v3224 = vrot.slane %v3223, 4
      %v3225 = vrot.slane %v302, 7
      %v3226 = vsel %vm3173, %v3224, %v3225
      %v3227 = vrot.slane %v3225, 4
      %v3228 = vrot.slane %v2521, 7
      %v3229 = vsel %vm3173, %v3227, %v3228
      %v3230 = vrot.slane %v3131, 7
      %v3231 = vrot.slane %v3230, 4
      %v3232 = vrot.slane %v304, 7
      %v3233 = vsel %vm3173, %v3231, %v3232
      %v3234 = vrot.slane %v3232, 4
      %v3235 = vrot.slane %v2522, 7
      %v3236 = vsel %vm3173, %v3234, %v3235
      %v3237 = vrot.slane %v3132, 7
      %v3238 = vrot.slane %v3237, 4
      %v3239 = vrot.slane %v306, 7
      %v3240 = vsel %vm3173, %v3238, %v3239
      %v3241 = vrot.slane %v3239, 4
      %v3242 = vrot.slane %v2523, 7
      %v3243 = vsel %vm3173, %v3241, %v3242
      %v3244 = vrot.slane %v3133, 7
      %v3245 = vrot.slane %v3244, 4
      %v3246 = vrot.slane %v308, 7
      %v3247 = vsel %vm3173, %v3245, %v3246
      %v3248 = vrot.slane %v3246, 4
      %v3249 = vrot.slane %v2524, 7
      %v3250 = vsel %vm3173, %v3248, %v3249
      %v3251 = vrot.slane %v3134, 7
      %v3252 = vrot.slane %v3251, 4
      %v3253 = vrot.slane %v310, 7
      %v3254 = vsel %vm3173, %v3252, %v3253
      %v3255 = vrot.slane %v3253, 4
      %v3256 = vrot.slane %v2525, 7
      %v3257 = vsel %vm3173, %v3255, %v3256
      %v3258 = vrot.slane %v3135, 7
      %v3259 = vrot.slane %v3258, 4
      %v3260 = vrot.slane %v312, 7
      %v3261 = vsel %vm3173, %v3259, %v3260
      %v3262 = vrot.slane %v3260, 4
      %v3263 = vrot.slane %v2526, 7
      %v3264 = vsel %vm3173, %v3262, %v3263
      %v3265 = vrot.slane %v3136, 7
      %v3266 = vrot.slane %v3265, 4
      %v3267 = vrot.slane %v314, 7
      %v3268 = vsel %vm3173, %v3266, %v3267
      %v3269 = vrot.slane %v3267, 4
      %v3270 = vrot.slane %v2527, 7
      %v3271 = vsel %vm3173, %v3269, %v3270
      %v3272 = vrot.slane %v3137, 7
      %v3273 = vrot.slane %v3272, 4
      %v3274 = vrot.slane %v316, 7
      %v3275 = vsel %vm3173, %v3273, %v3274
      %v3276 = vrot.slane %v3274, 4
      %v3277 = vrot.slane %v2528, 7
      %v3278 = vsel %vm3173, %v3276, %v3277
      %v3279 = vrot.slane %v3138, 7
      %v3280 = vrot.slane %v3279, 4
      %v3281 = vrot.slane %v318, 7
      %v3282 = vsel %vm3173, %v3280, %v3281
      %v3283 = vrot.slane %v3281, 4
      %v3284 = vrot.slane %v2529, 7
      %v3285 = vsel %vm3173, %v3283, %v3284
      %s3286 = scalar_lea.vmem %s234, 24
      %v3287 = vld [vmem:[%s3286] sm:$0xf]
      %v3288 = vunpack.c.l.b16 %v3177
      %v3289 = vunpack.c.l.b16 %v3180
      %v3290 = vunpack.c.l.b16 %v3184
      %v3291 = vunpack.c.l.b16 %v3187
      %v3292 = vunpack.c.l.b16 %v3191
      %v3293 = vunpack.c.l.b16 %v3194
      %v3294 = vunpack.c.l.b16 %v3198
      %v3295 = vunpack.c.l.b16 %v3201
      %v3296 = vunpack.c.l.b16 %v3205
      %v3297 = vunpack.c.l.b16 %v3208
      %v3298 = vunpack.c.l.b16 %v3212
      %v3299 = vunpack.c.l.b16 %v3215
      %v3300 = vunpack.c.l.b16 %v3219
      %v3301 = vunpack.c.l.b16 %v3222
      %v3302 = vunpack.c.l.b16 %v3226
      %v3303 = vunpack.c.l.b16 %v3229
      %v3304 = vunpack.c.l.b16 %v3233
      %v3305 = vunpack.c.l.b16 %v3236
      %v3306 = vunpack.c.l.b16 %v3240
      %v3307 = vunpack.c.l.b16 %v3243
      %v3308 = vunpack.c.l.b16 %v3247
      %v3309 = vunpack.c.l.b16 %v3250
      %v3310 = vunpack.c.l.b16 %v3254
      %v3311 = vunpack.c.l.b16 %v3257
      %v3312 = vunpack.c.l.b16 %v3261
      %v3313 = vunpack.c.l.b16 %v3264
      %v3314 = vunpack.c.l.b16 %v3268
      %v3315 = vunpack.c.l.b16 %v3271
      %v3316 = vunpack.c.l.b16 %v3275
      %v3317 = vunpack.c.l.b16 %v3278
      %v3318 = vunpack.c.l.b16 %v3282
      %v3319 = vunpack.c.l.b16 %v3285
      %v3320 = vpack.c.b16 %v3289, %v3288
      %v3321 = vpack.c.b16 %v3291, %v3290
      %v3322 = vpack.c.b16 %v3293, %v3292
      %v3323 = vpack.c.b16 %v3295, %v3294
      %v3324 = vpack.c.b16 %v3297, %v3296
      %v3325 = vpack.c.b16 %v3299, %v3298
      %v3326 = vpack.c.b16 %v3301, %v3300
      %v3327 = vpack.c.b16 %v3303, %v3302
      %v3328 = vpack.c.b16 %v3305, %v3304
      %v3329 = vpack.c.b16 %v3307, %v3306
      %v3330 = vpack.c.b16 %v3309, %v3308
      %v3331 = vpack.c.b16 %v3311, %v3310
      %v3332 = vpack.c.b16 %v3313, %v3312
      %v3333 = vpack.c.b16 %v3315, %v3314
      %v3334 = vpack.c.b16 %v3317, %v3316
      %v3335 = vpack.c.b16 %v3319, %v3318
      %v3337 = vsel %vm773, %v3320, 0
      %v3340 = vsel %vm773, %v3321, 0
      %v3343 = vsel %vm773, %v3322, 0
      %v3346 = vsel %vm773, %v3323, 0
      %v3349 = vsel %vm773, %v3324, 0
      %v3352 = vsel %vm773, %v3325, 0
      %v3355 = vsel %vm773, %v3326, 0
      %v3358 = vsel %vm773, %v3327, 0
      %v3361 = vsel %vm773, %v3328, 0
      %v3364 = vsel %vm773, %v3329, 0
      %v3367 = vsel %vm773, %v3330, 0
      %v3370 = vsel %vm773, %v3331, 0
      %v3373 = vsel %vm773, %v3332, 0
      %v3376 = vsel %vm773, %v3333, 0
      %v3379 = vsel %vm773, %v3334, 0
      %v3382 = vsel %vm773, %v3335, 0
      %v3385 = vsel %vm822, %v3287, 0
      %3387 = vmatpush.bf16.msra.mxu0 0
      %3388 = vmatpush.bf16.msra.mxu0 0
      %3389 = vmatpush.bf16.msra.mxu0 0
      %3390 = vmatpush.bf16.msra.mxu0 0
      %3391 = vmatpush.bf16.msra.mxu0 0
      %3392 = vmatpush.bf16.msra.mxu0 0
      %3393 = vmatpush.bf16.msra.mxu0 0
      %3394 = vmatpush.bf16.msra.mxu0 %v3385
      %3395 = vmatmul.bf16.gmra.mxu0 %v3337
      %v3396 = vpop.f32.mrf.mxu0
      %v3397 = vadd.f32 0.0, %v3396
      %v3398 = vpop.f32.mrf.mxu0
      %v3399 = vadd.f32 0.0, %v3398
      %3400 = vmatmul.bf16.gmra.mxu0 %v3340
      %v3401 = vpop.f32.mrf.mxu0
      %v3402 = vadd.f32 0.0, %v3401
      %v3403 = vpop.f32.mrf.mxu0
      %v3404 = vadd.f32 0.0, %v3403
      %3405 = vmatmul.bf16.gmra.mxu0 %v3343
      %v3406 = vpop.f32.mrf.mxu0
      %v3407 = vadd.f32 0.0, %v3406
      %v3408 = vpop.f32.mrf.mxu0
      %v3409 = vadd.f32 0.0, %v3408
      %3410 = vmatmul.bf16.gmra.mxu0 %v3346
      %v3411 = vpop.f32.mrf.mxu0
      %v3412 = vadd.f32 0.0, %v3411
      %v3413 = vpop.f32.mrf.mxu0
      %v3414 = vadd.f32 0.0, %v3413
      %3415 = vmatmul.bf16.gmra.mxu0 %v3349
      %v3416 = vpop.f32.mrf.mxu0
      %v3417 = vadd.f32 0.0, %v3416
      %v3418 = vpop.f32.mrf.mxu0
      %v3419 = vadd.f32 0.0, %v3418
      %3420 = vmatmul.bf16.gmra.mxu0 %v3352
      %v3421 = vpop.f32.mrf.mxu0
      %v3422 = vadd.f32 0.0, %v3421
      %v3423 = vpop.f32.mrf.mxu0
      %v3424 = vadd.f32 0.0, %v3423
      %3425 = vmatmul.bf16.gmra.mxu0 %v3355
      %v3426 = vpop.f32.mrf.mxu0
      %v3427 = vadd.f32 0.0, %v3426
      %v3428 = vpop.f32.mrf.mxu0
      %v3429 = vadd.f32 0.0, %v3428
      %3430 = vmatmul.bf16.gmra.mxu0 %v3358
      %v3431 = vpop.f32.mrf.mxu0
      %v3432 = vadd.f32 0.0, %v3431
      %v3433 = vpop.f32.mrf.mxu0
      %v3434 = vadd.f32 0.0, %v3433
      %3435 = vmatmul.bf16.gmra.mxu0 %v3361
      %v3436 = vpop.f32.mrf.mxu0
      %v3437 = vadd.f32 0.0, %v3436
      %v3438 = vpop.f32.mrf.mxu0
      %v3439 = vadd.f32 0.0, %v3438
      %3440 = vmatmul.bf16.gmra.mxu0 %v3364
      %v3441 = vpop.f32.mrf.mxu0
      %v3442 = vadd.f32 0.0, %v3441
      %v3443 = vpop.f32.mrf.mxu0
      %v3444 = vadd.f32 0.0, %v3443
      %3445 = vmatmul.bf16.gmra.mxu0 %v3367
      %v3446 = vpop.f32.mrf.mxu0
      %v3447 = vadd.f32 0.0, %v3446
      %v3448 = vpop.f32.mrf.mxu0
      %v3449 = vadd.f32 0.0, %v3448
      %3450 = vmatmul.bf16.gmra.mxu0 %v3370
      %v3451 = vpop.f32.mrf.mxu0
      %v3452 = vadd.f32 0.0, %v3451
      %v3453 = vpop.f32.mrf.mxu0
      %v3454 = vadd.f32 0.0, %v3453
      %3455 = vmatmul.bf16.gmra.mxu0 %v3373
      %v3456 = vpop.f32.mrf.mxu0
      %v3457 = vadd.f32 0.0, %v3456
      %v3458 = vpop.f32.mrf.mxu0
      %v3459 = vadd.f32 0.0, %v3458
      %3460 = vmatmul.bf16.gmra.mxu0 %v3376
      %v3461 = vpop.f32.mrf.mxu0
      %v3462 = vadd.f32 0.0, %v3461
      %v3463 = vpop.f32.mrf.mxu0
      %v3464 = vadd.f32 0.0, %v3463
      %3465 = vmatmul.bf16.gmra.mxu0 %v3379
      %v3466 = vpop.f32.mrf.mxu0
      %v3467 = vadd.f32 0.0, %v3466
      %v3468 = vpop.f32.mrf.mxu0
      %v3469 = vadd.f32 0.0, %v3468
      %3470 = vmatmul.bf16.gmra.mxu0 %v3382
      %v3471 = vpop.f32.mrf.mxu0
      %v3472 = vadd.f32 0.0, %v3471
      %v3473 = vpop.f32.mrf.mxu0
      %v3474 = vadd.f32 0.0, %v3473
      %3475 = vdwg.mxu0
      %v3476 = vadd.f32 %v3091, %v3397
      %v3477 = vadd.f32 %v3092, %v3399
      %v3478 = vadd.f32 %v3093, %v3402
      %v3479 = vadd.f32 %v3094, %v3404
      %v3480 = vadd.f32 %v3095, %v3407
      %v3481 = vadd.f32 %v3096, %v3409
      %v3482 = vadd.f32 %v3097, %v3412
      %v3483 = vadd.f32 %v3098, %v3414
      %v3484 = vadd.f32 %v3099, %v3417
      %v3485 = vadd.f32 %v3100, %v3419
      %v3486 = vadd.f32 %v3101, %v3422
      %v3487 = vadd.f32 %v3102, %v3424
      %v3488 = vadd.f32 %v3103, %v3427
      %v3489 = vadd.f32 %v3104, %v3429
      %v3490 = vadd.f32 %v3105, %v3432
      %v3491 = vadd.f32 %v3106, %v3434
      %v3492 = vadd.f32 %v3107, %v3437
      %v3493 = vadd.f32 %v3108, %v3439
      %v3494 = vadd.f32 %v3109, %v3442
      %v3495 = vadd.f32 %v3110, %v3444
      %v3496 = vadd.f32 %v3111, %v3447
      %v3497 = vadd.f32 %v3112, %v3449
      %v3498 = vadd.f32 %v3113, %v3452
      %v3499 = vadd.f32 %v3114, %v3454
      %v3500 = vadd.f32 %v3115, %v3457
      %v3501 = vadd.f32 %v3116, %v3459
      %v3502 = vadd.f32 %v3117, %v3462
      %v3503 = vadd.f32 %v3118, %v3464
      %v3504 = vadd.f32 %v3119, %v3467
      %v3505 = vadd.f32 %v3120, %v3469
      %v3506 = vadd.f32 %v3121, %v3472
      %v3507 = vadd.f32 %v3122, %v3474
      %v3508 = vld [vmem:[#allocation2] sm:$0xff]
      %v3509 = vld [vmem:[#allocation2 + $0x8] sm:$0xff]
      %v3510 = vld [vmem:[#allocation2 + $0x10] sm:$0xff]
      %v3511 = vld [vmem:[#allocation2 + $0x18] sm:$0xff]
      %v3512 = vld [vmem:[#allocation2 + $0x20] sm:$0xff]
      %v3513 = vld [vmem:[#allocation2 + $0x28] sm:$0xff]
      %v3514 = vld [vmem:[#allocation2 + $0x30] sm:$0xff]
      %v3515 = vld [vmem:[#allocation2 + $0x38] sm:$0xff]
      %v3516 = vld [vmem:[#allocation2 + $0x40] sm:$0xff]
      %v3517 = vld [vmem:[#allocation2 + $0x48] sm:$0xff]
      %v3518 = vld [vmem:[#allocation2 + $0x50] sm:$0xff]
      %v3519 = vld [vmem:[#allocation2 + $0x58] sm:$0xff]
      %v3520 = vld [vmem:[#allocation2 + $0x60] sm:$0xff]
      %v3521 = vld [vmem:[#allocation2 + $0x68] sm:$0xff]
      %v3522 = vld [vmem:[#allocation2 + $0x70] sm:$0xff]
      %v3523 = vld [vmem:[#allocation2 + $0x78] sm:$0xff]
      %v3524 = vld [vmem:[#allocation2 + $0x80] sm:$0xff]
      %v3525 = vld [vmem:[#allocation2 + $0x88] sm:$0xff]
      %v3526 = vld [vmem:[#allocation2 + $0x90] sm:$0xff]
      %v3527 = vld [vmem:[#allocation2 + $0x98] sm:$0xff]
      %v3528 = vld [vmem:[#allocation2 + $0xa0] sm:$0xff]
      %v3529 = vld [vmem:[#allocation2 + $0xa8] sm:$0xff]
      %v3530 = vld [vmem:[#allocation2 + $0xb0] sm:$0xff]
      %v3531 = vld [vmem:[#allocation2 + $0xb8] sm:$0xff]
      %v3532 = vld [vmem:[#allocation2 + $0xc0] sm:$0xff]
      %v3533 = vld [vmem:[#allocation2 + $0xc8] sm:$0xff]
      %v3534 = vld [vmem:[#allocation2 + $0xd0] sm:$0xff]
      %v3535 = vld [vmem:[#allocation2 + $0xd8] sm:$0xff]
      %v3536 = vld [vmem:[#allocation2 + $0xe0] sm:$0xff]
      %v3537 = vld [vmem:[#allocation2 + $0xe8] sm:$0xff]
      %v3538 = vld [vmem:[#allocation2 + $0xf0] sm:$0xff]
      %v3539 = vld [vmem:[#allocation2 + $0xf8] sm:$0xff]
      %v3540 = vadd.f32 %v3508, %v3476
      %v3541 = vadd.f32 %v3509, %v3477
      %v3542 = vadd.f32 %v3510, %v3478
      %v3543 = vadd.f32 %v3511, %v3479
      %v3544 = vadd.f32 %v3512, %v3480
      %v3545 = vadd.f32 %v3513, %v3481
      %v3546 = vadd.f32 %v3514, %v3482
      %v3547 = vadd.f32 %v3515, %v3483
      %v3548 = vadd.f32 %v3516, %v3484
      %v3549 = vadd.f32 %v3517, %v3485
      %v3550 = vadd.f32 %v3518, %v3486
      %v3551 = vadd.f32 %v3519, %v3487
      %v3552 = vadd.f32 %v3520, %v3488
      %v3553 = vadd.f32 %v3521, %v3489
      %v3554 = vadd.f32 %v3522, %v3490
      %v3555 = vadd.f32 %v3523, %v3491
      %v3556 = vadd.f32 %v3524, %v3492
      %v3557 = vadd.f32 %v3525, %v3493
      %v3558 = vadd.f32 %v3526, %v3494
      %v3559 = vadd.f32 %v3527, %v3495
      %v3560 = vadd.f32 %v3528, %v3496
      %v3561 = vadd.f32 %v3529, %v3497
      %v3562 = vadd.f32 %v3530, %v3498
      %v3563 = vadd.f32 %v3531, %v3499
      %v3564 = vadd.f32 %v3532, %v3500
      %v3565 = vadd.f32 %v3533, %v3501
      %v3566 = vadd.f32 %v3534, %v3502
      %v3567 = vadd.f32 %v3535, %v3503
      %v3568 = vadd.f32 %v3536, %v3504
      %v3569 = vadd.f32 %v3537, %v3505
      %v3570 = vadd.f32 %v3538, %v3506
      %v3571 = vadd.f32 %v3539, %v3507
      %3572 = vst.msk [vmem:[#allocation2] sm:$0xff] %vm773, %v3540
      %3573 = vst.msk [vmem:[#allocation2 + $0x8] sm:$0xff] %vm773, %v3541
      %3574 = vst.msk [vmem:[#allocation2 + $0x10] sm:$0xff] %vm773, %v3542
      %3575 = vst.msk [vmem:[#allocation2 + $0x18] sm:$0xff] %vm773, %v3543
      %3576 = vst.msk [vmem:[#allocation2 + $0x20] sm:$0xff] %vm773, %v3544
      %3577 = vst.msk [vmem:[#allocation2 + $0x28] sm:$0xff] %vm773, %v3545
      %3578 = vst.msk [vmem:[#allocation2 + $0x30] sm:$0xff] %vm773, %v3546
      %3579 = vst.msk [vmem:[#allocation2 + $0x38] sm:$0xff] %vm773, %v3547
      %3580 = vst.msk [vmem:[#allocation2 + $0x40] sm:$0xff] %vm773, %v3548
      %3581 = vst.msk [vmem:[#allocation2 + $0x48] sm:$0xff] %vm773, %v3549
      %3582 = vst.msk [vmem:[#allocation2 + $0x50] sm:$0xff] %vm773, %v3550
      %3583 = vst.msk [vmem:[#allocation2 + $0x58] sm:$0xff] %vm773, %v3551
      %3584 = vst.msk [vmem:[#allocation2 + $0x60] sm:$0xff] %vm773, %v3552
      %3585 = vst.msk [vmem:[#allocation2 + $0x68] sm:$0xff] %vm773, %v3553
      %3586 = vst.msk [vmem:[#allocation2 + $0x70] sm:$0xff] %vm773, %v3554
      %3587 = vst.msk [vmem:[#allocation2 + $0x78] sm:$0xff] %vm773, %v3555
      %3588 = vst.msk [vmem:[#allocation2 + $0x80] sm:$0xff] %vm773, %v3556
      %3589 = vst.msk [vmem:[#allocation2 + $0x88] sm:$0xff] %vm773, %v3557
      %3590 = vst.msk [vmem:[#allocation2 + $0x90] sm:$0xff] %vm773, %v3558
      %3591 = vst.msk [vmem:[#allocation2 + $0x98] sm:$0xff] %vm773, %v3559
      %3592 = vst.msk [vmem:[#allocation2 + $0xa0] sm:$0xff] %vm773, %v3560
      %3593 = vst.msk [vmem:[#allocation2 + $0xa8] sm:$0xff] %vm773, %v3561
      %3594 = vst.msk [vmem:[#allocation2 + $0xb0] sm:$0xff] %vm773, %v3562
      %3595 = vst.msk [vmem:[#allocation2 + $0xb8] sm:$0xff] %vm773, %v3563
      %3596 = vst.msk [vmem:[#allocation2 + $0xc0] sm:$0xff] %vm773, %v3564
      %3597 = vst.msk [vmem:[#allocation2 + $0xc8] sm:$0xff] %vm773, %v3565
      %3598 = vst.msk [vmem:[#allocation2 + $0xd0] sm:$0xff] %vm773, %v3566
      %3599 = vst.msk [vmem:[#allocation2 + $0xd8] sm:$0xff] %vm773, %v3567
      %3600 = vst.msk [vmem:[#allocation2 + $0xe0] sm:$0xff] %vm773, %v3568
      %3601 = vst.msk [vmem:[#allocation2 + $0xe8] sm:$0xff] %vm773, %v3569
      %3602 = vst.msk [vmem:[#allocation2 + $0xf0] sm:$0xff] %vm773, %v3570
      %3603 = vst.msk [vmem:[#allocation2 + $0xf8] sm:$0xff] %vm773, %v3571
      // Predicated region
      $region33: #{global_conv_forward.5} parent=27 // pred_check
        %p3604 = pneg %p250
      $region34: #{global_conv_forward.5} parent=27 // pred_check_branch
        %3606 = sbr.rel (%p3604) target = $region36
      $region35: #{global_conv_forward.5} parent=27 // pred_region
        %v3607 = vld [vmem:[#allocation2] sm:$0xff]
        %v3608 = vld [vmem:[#allocation2 + $0x8] sm:$0xff]
        %v3609 = vld [vmem:[#allocation2 + $0x10] sm:$0xff]
        %v3610 = vld [vmem:[#allocation2 + $0x18] sm:$0xff]
        %v3611 = vld [vmem:[#allocation2 + $0x20] sm:$0xff]
        %v3612 = vld [vmem:[#allocation2 + $0x28] sm:$0xff]
        %v3613 = vld [vmem:[#allocation2 + $0x30] sm:$0xff]
        %v3614 = vld [vmem:[#allocation2 + $0x38] sm:$0xff]
        %v3615 = vld [vmem:[#allocation2 + $0x40] sm:$0xff]
        %v3616 = vld [vmem:[#allocation2 + $0x48] sm:$0xff]
        %v3617 = vld [vmem:[#allocation2 + $0x50] sm:$0xff]
        %v3618 = vld [vmem:[#allocation2 + $0x58] sm:$0xff]
        %v3619 = vld [vmem:[#allocation2 + $0x60] sm:$0xff]
        %v3620 = vld [vmem:[#allocation2 + $0x68] sm:$0xff]
        %v3621 = vld [vmem:[#allocation2 + $0x70] sm:$0xff]
        %v3622 = vld [vmem:[#allocation2 + $0x78] sm:$0xff]
        %v3623 = vld [vmem:[#allocation2 + $0x80] sm:$0xff]
        %v3624 = vld [vmem:[#allocation2 + $0x88] sm:$0xff]
        %v3625 = vld [vmem:[#allocation2 + $0x90] sm:$0xff]
        %v3626 = vld [vmem:[#allocation2 + $0x98] sm:$0xff]
        %v3627 = vld [vmem:[#allocation2 + $0xa0] sm:$0xff]
        %v3628 = vld [vmem:[#allocation2 + $0xa8] sm:$0xff]
        %v3629 = vld [vmem:[#allocation2 + $0xb0] sm:$0xff]
        %v3630 = vld [vmem:[#allocation2 + $0xb8] sm:$0xff]
        %v3631 = vld [vmem:[#allocation2 + $0xc0] sm:$0xff]
        %v3632 = vld [vmem:[#allocation2 + $0xc8] sm:$0xff]
        %v3633 = vld [vmem:[#allocation2 + $0xd0] sm:$0xff]
        %v3634 = vld [vmem:[#allocation2 + $0xd8] sm:$0xff]
        %v3635 = vld [vmem:[#allocation2 + $0xe0] sm:$0xff]
        %v3636 = vld [vmem:[#allocation2 + $0xe8] sm:$0xff]
        %v3637 = vld [vmem:[#allocation2 + $0xf0] sm:$0xff]
        %v3638 = vld [vmem:[#allocation2 + $0xf8] sm:$0xff]
        %v3639 = vpack.c.bf16 %v3607, %v3607
        %v3640 = vpack.c.bf16 %v3608, %v3608
        %v3641 = vpack.c.bf16 %v3609, %v3609
        %v3642 = vpack.c.bf16 %v3610, %v3610
        %v3643 = vpack.c.bf16 %v3611, %v3611
        %v3644 = vpack.c.bf16 %v3612, %v3612
        %v3645 = vpack.c.bf16 %v3613, %v3613
        %v3646 = vpack.c.bf16 %v3614, %v3614
        %v3647 = vpack.c.bf16 %v3615, %v3615
        %v3648 = vpack.c.bf16 %v3616, %v3616
        %v3649 = vpack.c.bf16 %v3617, %v3617
        %v3650 = vpack.c.bf16 %v3618, %v3618
        %v3651 = vpack.c.bf16 %v3619, %v3619
        %v3652 = vpack.c.bf16 %v3620, %v3620
        %v3653 = vpack.c.bf16 %v3621, %v3621
        %v3654 = vpack.c.bf16 %v3622, %v3622
        %v3655 = vpack.c.bf16 %v3623, %v3623
        %v3656 = vpack.c.bf16 %v3624, %v3624
        %v3657 = vpack.c.bf16 %v3625, %v3625
        %v3658 = vpack.c.bf16 %v3626, %v3626
        %v3659 = vpack.c.bf16 %v3627, %v3627
        %v3660 = vpack.c.bf16 %v3628, %v3628
        %v3661 = vpack.c.bf16 %v3629, %v3629
        %v3662 = vpack.c.bf16 %v3630, %v3630
        %v3663 = vpack.c.bf16 %v3631, %v3631
        %v3664 = vpack.c.bf16 %v3632, %v3632
        %v3665 = vpack.c.bf16 %v3633, %v3633
        %v3666 = vpack.c.bf16 %v3634, %v3634
        %v3667 = vpack.c.bf16 %v3635, %v3635
        %v3668 = vpack.c.bf16 %v3636, %v3636
        %v3669 = vpack.c.bf16 %v3637, %v3637
        %v3670 = vpack.c.bf16 %v3638, %v3638
        %vm3671 = vcmask 60416
        %3672 = vst.msk [vmem:[%s247] sm:$0xf] %vm3671, %v3639
        %3673 = vst.msk [vmem:[%s247 + $0x4] sm:$0xf] %vm3671, %v3640
        %3674 = vst.msk [vmem:[%s247 + $0x8] sm:$0xf] %vm3671, %v3641
        %3675 = vst.msk [vmem:[%s247 + $0xc] sm:$0xf] %vm3671, %v3642
        %3676 = vst.msk [vmem:[%s247 + $0x10] sm:$0xf] %vm3671, %v3643
        %3677 = vst.msk [vmem:[%s247 + $0x14] sm:$0xf] %vm3671, %v3644
        %3678 = vst.msk [vmem:[%s247 + $0x18] sm:$0xf] %vm3671, %v3645
        %3679 = vst.msk [vmem:[%s247 + $0x1c] sm:$0xf] %vm3671, %v3646
        %3680 = vst.msk [vmem:[%s247 + $0x20] sm:$0xf] %vm3671, %v3647
        %3681 = vst.msk [vmem:[%s247 + $0x24] sm:$0xf] %vm3671, %v3648
        %3682 = vst.msk [vmem:[%s247 + $0x28] sm:$0xf] %vm3671, %v3649
        %3683 = vst.msk [vmem:[%s247 + $0x2c] sm:$0xf] %vm3671, %v3650
        %3684 = vst.msk [vmem:[%s247 + $0x30] sm:$0xf] %vm3671, %v3651
        %3685 = vst.msk [vmem:[%s247 + $0x34] sm:$0xf] %vm3671, %v3652
        %3686 = vst.msk [vmem:[%s247 + $0x38] sm:$0xf] %vm3671, %v3653
        %3687 = vst.msk [vmem:[%s247 + $0x3c] sm:$0xf] %vm3671, %v3654
        %3688 = vst.msk [vmem:[%s247 + $0x40] sm:$0xf] %vm3671, %v3655
        %3689 = vst.msk [vmem:[%s247 + $0x44] sm:$0xf] %vm3671, %v3656
        %3690 = vst.msk [vmem:[%s247 + $0x48] sm:$0xf] %vm3671, %v3657
        %3691 = vst.msk [vmem:[%s247 + $0x4c] sm:$0xf] %vm3671, %v3658
        %3692 = vst.msk [vmem:[%s247 + $0x50] sm:$0xf] %vm3671, %v3659
        %3693 = vst.msk [vmem:[%s247 + $0x54] sm:$0xf] %vm3671, %v3660
        %3694 = vst.msk [vmem:[%s247 + $0x58] sm:$0xf] %vm3671, %v3661
        %3695 = vst.msk [vmem:[%s247 + $0x5c] sm:$0xf] %vm3671, %v3662
        %3696 = vst.msk [vmem:[%s247 + $0x60] sm:$0xf] %vm3671, %v3663
        %3697 = vst.msk [vmem:[%s247 + $0x64] sm:$0xf] %vm3671, %v3664
        %3698 = vst.msk [vmem:[%s247 + $0x68] sm:$0xf] %vm3671, %v3665
        %3699 = vst.msk [vmem:[%s247 + $0x6c] sm:$0xf] %vm3671, %v3666
        %3700 = vst.msk [vmem:[%s247 + $0x70] sm:$0xf] %vm3671, %v3667
        %3701 = vst.msk [vmem:[%s247 + $0x74] sm:$0xf] %vm3671, %v3668
        %3702 = vst.msk [vmem:[%s247 + $0x78] sm:$0xf] %vm3671, %v3669
        %3703 = vst.msk [vmem:[%s247 + $0x7c] sm:$0xf] %vm3671, %v3670
      $region36: #{global_conv_forward.5} parent=27 // pred_fallthru
        _
      %s3704 = smul.u32 16, %s20
      %p3705 = scmp.lt.s32.totalorder %s19, 1
      %s3706 = scalar_select %p3705, %s19, 1
      %p3707 = scmp.lt.s32.totalorder %s3704, 15
      %s3708 = scalar_select %p3707, %s3704, 15
      %p3709 = scmp.lt.s32.totalorder %s21, 0
      %s3710 = scalar_select %p3709, %s21, 0
      %s3711 = smul.addr %s3708, 2
      %s3712 = sadd.s32 %s3710, %s3711
      %s3713 = smul.addr %s3706, 32
      %s3714 = sadd.s32 %s3712, %s3713
      %s3715 = smul.addr %s3714, 4
      %s3716 = scalar_lea.vmem %s2, %s3715
      // Predicated region
      $region37: #{global_conv_forward.5} parent=27 // pred_check
        %p3717 = pneg %p119
      $region38: #{global_conv_forward.5} parent=27 // pred_check_branch
        %3719 = sbr.rel (%p3717) target = $region40
      $region39: #{global_conv_forward.5} parent=27 // pred_region
        %s3720 = smul.u32 16, %s20
      $region40: #{global_conv_forward.5} parent=27 // pred_fallthru
        _
    $region28: #{global_conv_forward.5} parent=5 // pred_fallthru
      _
    %p3721 = scmp.le.s32.totalorder 2, %s8
    // Predicated region
    $region41: #{global_conv_forward.5} parent=5 // pred_check
      %p3722 = pneg %p3721
    $region42: #{global_conv_forward.5} parent=5 // pred_check_branch
      %3724 = sbr.rel (%p3722) target = $region44
    $region43: #{global_conv_forward.5} parent=5 // pred_region
      %s3725 = ssub.s32 %s8, 2
      // Predicated region
      $region45: #{global_conv_forward.5} parent=43 // pred_check
        %p3726 = pneg %p125
      $region46: #{global_conv_forward.5} parent=43 // pred_check_branch
        %3728 = sbr.rel (%p3726) target = $region48
      $region47: #{global_conv_forward.5} parent=43 // pred_region
        %s3729 = smul.u32 16, %s24
        %p3730 = scmp.lt.s32.totalorder %s23, 1
        %s3731 = scalar_select %p3730, %s23, 1
        %p3732 = scmp.lt.s32.totalorder %s3729, 15
        %s3733 = scalar_select %p3732, %s3729, 15
        %p3734 = scmp.lt.s32.totalorder %s25, 0
        %s3735 = scalar_select %p3734, %s25, 0
        %s3736 = smul.addr %s3733, 2
        %s3737 = sadd.s32 %s3735, %s3736
        %s3738 = smul.addr %s3731, 32
        %s3739 = sadd.s32 %s3737, %s3738
        %s3740 = smul.addr %s3739, 4
        %s3741 = scalar_lea.vmem %s2, %s3740
      $region48: #{global_conv_forward.5} parent=43 // pred_fallthru
        _
    $region44: #{global_conv_forward.5} parent=5 // pred_fallthru
      _
  $region6: #{global_conv_forward.5} parent=0 // loop_footer
    %s12 = sadd.s32 1, %s8
  $region7: #{global_conv_forward.5} parent=0 // loop_footer_branch
    %7 = sbr.rel target = $region3
  $region8: #{global_conv_forward.5} parent=0 // loop_exit
    _

// kernel: global_conv_forward.6
$region0: #{global_conv_forward.6}
  #allocation0 [shape = 'u32[]', space=smem, size = 0x4, offset = 0x4, fixed_abs, tag = 'smem constant byte address 0x4 - core index']
  #allocation1 [shape = 'u32[72,128]{1,0:T(1,128)}', space=vmem, size = 0x9000, scoped, tag = 'internal scratch']
  #allocation2 [shape = 'f32[256,8]{1,0:T(8,128)}', space=vmem, size = 0x20000, scoped, tag = 'scratch operand']
  %s0 = inlined_call_operand.vmem [shape: bf16[2,16,22,4], index: 0, kind: input, shape index: {}]
  %s1 = inlined_call_operand.vmem [shape: bf16[7,4,8], index: 1, kind: input, shape index: {}]
  %s2 = inlined_call_operand.vmem [shape: bf16[2,16,16,8], index: 2, kind: output, shape index: {}]
  %s3 = sld [smem:[#allocation0]]
  $region49: #{global_conv_forward.6} parent=0
    _
  %s5 = ssub.s32 1, %s3
  %s6 = scalar_select 0, %s5, %s3
  loop: start=0, step=1, limit=4
  $region2: #{global_conv_forward.6} parent=0 // loop_pre_header
    _
  $region3: #{global_conv_forward.6} parent=0 // loop_header
    %s8 = sphi 0, %s12
    %p9 = scmp.ge.s32.totalorder %s8, 4
    %s15 = sphi 0, %s41
    %s16 = sphi 0, %s37
    %s17 = sphi 0, %s33
    %s18 = sphi 0, %s29
    %s19 = sphi 0, %s15
    %s20 = sphi 0, %s16
    %s21 = sphi 0, %s17
    %s22 = sphi 0, %s18
    %s23 = sphi 0, %s19
    %s24 = sphi 0, %s20
    %s25 = sphi 0, %s21
    %s26 = sphi 0, %s22
    %s48 = sphi 0, %s50
    %s51 = sphi 0, %s48
    %s52 = sphi 0, %s51
    %s68 = sphi 0, %s52
    %s76 = sphi 0, %s78
    %s79 = sphi 0, %s76
    %s80 = sphi 0, %s79
    %s96 = sphi 0, %s80
    %s106 = sphi 0, %s108
    %s109 = sphi 0, %s106
    %s110 = sphi 0, %s109
    %s126 = sphi 0, %s110
  $region4: #{global_conv_forward.6} parent=0 // loop_header_branch
    %11 = sbr.rel (%p9) target = $region8
  $region5: #{global_conv_forward.6} parent=0 // loop_body
    %s13 = ssub.s32 %s8, 1
    %s14 = ssub.s32 %s8, 2
    %s27 = sadd.s32 1, %s18
    %p28 = scmp.ge.s32.totalorder %s27, 1
    %s29 = scalar_select %p28, 0, %s27
    %s30 = sadd.s32 1, %s17
    %s31 = scalar_select %p28, %s30, %s17
    %p32 = scmp.ge.s32.totalorder %s31, 1
    %s33 = scalar_select %p32, 0, %s31
    %s34 = sadd.s32 1, %s16
    %s35 = scalar_select %p32, %s34, %s16
    %p36 = scmp.ge.s32.totalorder %s35, 1
    %s37 = scalar_select %p36, 0, %s35
    %s38 = sadd.s32 1, %s15
    %s39 = scalar_select %p36, %s38, %s15
    %p40 = scmp.ge.s32.totalorder %s39, 2
    %s41 = scalar_select %p40, 0, %s39
    %s42 = ssub.s32 %s15, %s41
    %s43 = ssub.s32 %s16, %s37
    %s44 = sor.u32 %s42, %s43
    %s45 = ssub.s32 %s18, %s29
    %s46 = sor.u32 %s44, %s45
    %p47 = scmp.eq.s32.totalorder %s46, 0
    %s49 = sadd.s32 %s48, 1
    %s50 = scalar_select %p47, %s48, %s49
    %p53 = pneg %p47
    %p54 = scmp.eq.s32.totalorder %s8, 1
    %p55 = por %p53, %p54
    %p56 = scmp.ne.s32.totalorder %s48, %s51
    %p57 = scmp.eq.s32.totalorder %s8, 0
    %p58 = por %p56, %p57
    %p59 = scmp.ne.s32.totalorder %s48, %s51
    %p60 = scmp.eq.s32.totalorder %s13, 1
    %p61 = por %p59, %p60
    %p62 = scmp.ne.s32.totalorder %s51, %s52
    %p63 = scmp.eq.s32.totalorder %s13, 0
    %p64 = por %p62, %p63
    %p65 = scmp.ne.s32.totalorder %s51, %s52
    %p66 = scmp.eq.s32.totalorder %s14, 1
    %p67 = por %p65, %p66
    %p69 = scmp.ne.s32.totalorder %s52, %s68
    %p70 = scmp.eq.s32.totalorder %s14, 0
    %p71 = por %p69, %p70
    %s72 = ssub.s32 %s18, %s29
    %s73 = ssub.s32 %s17, %s33
    %s74 = sor.u32 %s72, %s73
    %p75 = scmp.eq.s32.totalorder %s74, 0
    %s77 = sadd.s32 %s76, 1
    %s78 = scalar_select %p75, %s76, %s77
    %p81 = pneg %p75
    %p82 = scmp.eq.s32.totalorder %s8, 1
    %p83 = por %p81, %p82
    %p84 = scmp.ne.s32.totalorder %s76, %s79
    %p85 = scmp.eq.s32.totalorder %s8, 0
    %p86 = por %p84, %p85
    %p87 = scmp.ne.s32.totalorder %s76, %s79
    %p88 = scmp.eq.s32.totalorder %s13, 1
    %p89 = por %p87, %p88
    %p90 = scmp.ne.s32.totalorder %s79, %s80
    %p91 = scmp.eq.s32.totalorder %s13, 0
    %p92 = por %p90, %p91
    %p93 = scmp.ne.s32.totalorder %s79, %s80
    %p94 = scmp.eq.s32.totalorder %s14, 1
    %p95 = por %p93, %p94
    %p97 = scmp.ne.s32.totalorder %s80, %s96
    %p98 = scmp.eq.s32.totalorder %s14, 0
    %p99 = por %p97, %p98
    %s100 = ssub.s32 %s15, %s41
    %s101 = ssub.s32 %s16, %s37
    %s102 = sor.u32 %s100, %s101
    %s103 = ssub.s32 %s17, %s33
    %s104 = sor.u32 %s102, %s103
    %p105 = scmp.eq.s32.totalorder %s104, 0
    %s107 = sadd.s32 %s106, 1
    %s108 = scalar_select %p105, %s106, %s107
    %p111 = pneg %p105
    %p112 = scmp.eq.s32.totalorder %s8, 1
    %p113 = por %p111, %p112
    %p114 = scmp.ne.s32.totalorder %s106, %s109
    %p115 = scmp.eq.s32.totalorder %s8, 0
    %p116 = por %p114, %p115
    %p117 = scmp.ne.s32.totalorder %s106, %s109
    %p118 = scmp.eq.s32.totalorder %s13, 1
    %p119 = por %p117, %p118
    %p120 = scmp.ne.s32.totalorder %s109, %s110
    %p121 = scmp.eq.s32.totalorder %s13, 0
    %p122 = por %p120, %p121
    %p123 = scmp.ne.s32.totalorder %s109, %s110
    %p124 = scmp.eq.s32.totalorder %s14, 1
    %p125 = por %p123, %p124
    %p127 = scmp.ne.s32.totalorder %s110, %s126
    %p128 = scmp.eq.s32.totalorder %s14, 0
    %p129 = por %p127, %p128
    %p130 = scmp.le.s32.totalorder 1, %s8
    %p131 = scmp.lt.s32.totalorder %s8, 3
    %p132 = pnand %p130, %p131
    %p133 = pneg %p132
    // Predicated region
    $region9: #{global_conv_forward.6} parent=5 // pred_check
      _
    $region10: #{global_conv_forward.6} parent=5 // pred_check_branch
      %135 = sbr.rel (%p132) target = $region12
    $region11: #{global_conv_forward.6} parent=5 // pred_region
      %s136 = ssub.s32 %s8, 1
      // Predicated region
      $region13: #{global_conv_forward.6} parent=11 // pred_check
        %p137 = pneg %p92
      $region14: #{global_conv_forward.6} parent=11 // pred_check_branch
        %139 = sbr.rel (%p137) target = $region16
      $region15: #{global_conv_forward.6} parent=11 // pred_region
        %p140 = scmp.lt.s32.totalorder %s22, 0
        %s141 = scalar_select %p140, %s22, 0
        %p142 = scmp.lt.s32.totalorder %s21, 0
        %s143 = scalar_select %p142, %s21, 0
        %s144 = sadd.s32 %s143, %s141
        %s145 = smul.addr %s144, 2
        %s146 = scalar_lea.vmem %s1, %s145
      $region16: #{global_conv_forward.6} parent=11 // pred_fallthru
        _
    $region12: #{global_conv_forward.6} parent=5 // pred_fallthru
      _
    %p147 = scmp.lt.s32.totalorder %s8, 2
    // Predicated region
    $region17: #{global_conv_forward.6} parent=5 // pred_check
      %p148 = pneg %p147
    $region18: #{global_conv_forward.6} parent=5 // pred_check_branch
      %150 = sbr.rel (%p148) target = $region20
    $region19: #{global_conv_forward.6} parent=5 // pred_region
      // Predicated region
      $region21: #{global_conv_forward.6} parent=19 // pred_check
        %p151 = pneg %p58
      $region22: #{global_conv_forward.6} parent=19 // pred_check_branch
        %153 = sbr.rel (%p151) target = $region24
      $region23: #{global_conv_forward.6} parent=19 // pred_region
        %s154 = smul.u32 16, %s16
        %p155 = scmp.lt.s32.totalorder %s15, 1
        %s156 = scalar_select %p155, %s15, 1
        %p157 = scmp.lt.s32.totalorder %s154, 15
        %s158 = scalar_select %p157, %s154, 15
        %p159 = scmp.lt.s32.totalorder %s18, 0
        %s160 = scalar_select %p159, %s18, 0
        %s161 = smul.addr %s158, 3
        %s162 = sadd.s32 %s160, %s161
        %s163 = smul.addr %s156, 48
        %s164 = sadd.s32 %s162, %s163
        %s165 = smul.addr %s164, 4
        %s166 = scalar_lea.vmem %s0, %s165
        %s167 = smul.u32 16, %s16
      $region24: #{global_conv_forward.6} parent=19 // pred_fallthru
        _
    $region20: #{global_conv_forward.6} parent=5 // pred_fallthru
      _
    %p168 = scmp.le.s32.totalorder 1, %s8
    %p169 = scmp.lt.s32.totalorder %s8, 3
    %p170 = pnand %p168, %p169
    %p171 = pneg %p170
    // Predicated region
    $region25: #{global_conv_forward.6} parent=5 // pred_check
      _
    $region26: #{global_conv_forward.6} parent=5 // pred_check_branch
      %173 = sbr.rel (%p170) target = $region28
    $region27: #{global_conv_forward.6} parent=5 // pred_region
      %s174 = ssub.s32 %s8, 1
      %s175 = smul.u32 16, %s20
      %p176 = scmp.lt.s32.totalorder %s19, 1
      %s177 = scalar_select %p176, %s19, 1
      %p178 = scmp.lt.s32.totalorder %s175, 15
      %s179 = scalar_select %p178, %s175, 15
      %p180 = scmp.lt.s32.totalorder %s22, 0
      %s181 = scalar_select %p180, %s22, 0
      %s182 = smul.addr %s179, 3
      %s183 = sadd.s32 %s181, %s182
      %s184 = smul.addr %s177, 48
      %s185 = sadd.s32 %s183, %s184
      %s186 = smul.addr %s185, 4
      %s187 = scalar_lea.vmem %s0, %s186
      %p188 = pneg %p64
      %p189 = pneg %p61
      %p190 = scmp.lt.s32.totalorder %s22, 0
      %s191 = scalar_select %p190, %s22, 0
      %p192 = scmp.lt.s32.totalorder %s21, 0
      %s193 = scalar_select %p192, %s21, 0
      %s194 = sadd.s32 %s193, %s191
      %s195 = smul.addr %s194, 2
      %s196 = scalar_lea.vmem %s1, %s195
      %p197 = pneg %p92
      %p198 = pneg %p89
      %p199 = pneg %p122
      %p200 = pneg %p119
      %s201 = smul.u32 16, %s20
      %p202 = scmp.lt.s32.totalorder %s19, 1
      %s203 = scalar_select %p202, %s19, 1
      %p204 = scmp.lt.s32.totalorder %s201, 15
      %s205 = scalar_select %p204, %s201, 15
      %p206 = scmp.lt.s32.totalorder %s21, 0
      %s207 = scalar_select %p206, %s21, 0
      %s208 = smul.addr %s205, 2
      %s209 = sadd.s32 %s207, %s208
      %s210 = smul.addr %s203, 32
      %s211 = sadd.s32 %s209, %s210
      %s212 = smul.addr %s211, 4
      %s213 = scalar_lea.vmem %s2, %s212
      %s214 = smul.u32 16, %s20
      %p215 = scmp.lt.s32.totalorder %s19, 1
      %s216 = scalar_select %p215, %s19, 1
      %p217 = scmp.lt.s32.totalorder %s214, 15
      %s218 = scalar_select %p217, %s214, 15
      %p219 = scmp.lt.s32.totalorder %s22, 0
      %s220 = scalar_select %p219, %s22, 0
      %s221 = smul.addr %s218, 3
      %s222 = sadd.s32 %s220, %s221
      %s223 = smul.addr %s216, 48
      %s224 = sadd.s32 %s222, %s223
      %s225 = smul.addr %s224, 4
      %s226 = scalar_lea.vmem %s0, %s225
      %s227 = smul.u32 16, %s20
      %p228 = scmp.lt.s32.totalorder %s22, 0
      %s229 = scalar_select %p228, %s22, 0
      %p230 = scmp.lt.s32.totalorder %s21, 0
      %s231 = scalar_select %p230, %s21, 0
      %s232 = sadd.s32 %s231, %s229
      %s233 = smul.addr %s232, 2
      %s234 = scalar_lea.vmem %s1, %s233
      %s235 = smul.u32 16, %s20
      %p236 = scmp.lt.s32.totalorder %s19, 1
      %s237 = scalar_select %p236, %s19, 1
      %p238 = scmp.lt.s32.totalorder %s235, 15
      %s239 = scalar_select %p238, %s235, 15
      %p240 = scmp.lt.s32.totalorder %s21, 0
      %s241 = scalar_select %p240, %s21, 0
      %s242 = smul.addr %s239, 2
      %s243 = sadd.s32 %s241, %s242
      %s244 = smul.addr %s237, 32
      %s245 = sadd.s32 %s243, %s244
      %s246 = smul.addr %s245, 4
      %s247 = scalar_lea.vmem %s2, %s246
      %s248 = smul.u32 16, %s20
      %p250 = scmp.eq.s32.totalorder %s22, 0
      // Predicated region
      $region29: #{global_conv_forward.6} parent=27 // pred_check
        %p251 = pneg %p250
      $region30: #{global_conv_forward.6} parent=27 // pred_check_branch
        %253 = sbr.rel (%p251) target = $region32
      $region31: #{global_conv_forward.6} parent=27 // pred_region
        %vm254 = vcmask 64512
        %255 = vst.msk [vmem:[#allocation2] sm:$0xff] %vm254, 0.0
        %256 = vst.msk [vmem:[#allocation2 + $0x8] sm:$0xff] %vm254, 0.0
        %257 = vst.msk [vmem:[#allocation2 + $0x10] sm:$0xff] %vm254, 0.0
        %258 = vst.msk [vmem:[#allocation2 + $0x18] sm:$0xff] %vm254, 0.0
        %259 = vst.msk [vmem:[#allocation2 + $0x20] sm:$0xff] %vm254, 0.0
        %260 = vst.msk [vmem:[#allocation2 + $0x28] sm:$0xff] %vm254, 0.0
        %261 = vst.msk [vmem:[#allocation2 + $0x30] sm:$0xff] %vm254, 0.0
        %262 = vst.msk [vmem:[#allocation2 + $0x38] sm:$0xff] %vm254, 0.0
        %263 = vst.msk [vmem:[#allocation2 + $0x40] sm:$0xff] %vm254, 0.0
        %264 = vst.msk [vmem:[#allocation2 + $0x48] sm:$0xff] %vm254, 0.0
        %265 = vst.msk [vmem:[#allocation2 + $0x50] sm:$0xff] %vm254, 0.0
        %266 = vst.msk [vmem:[#allocation2 + $0x58] sm:$0xff] %vm254, 0.0
        %267 = vst.msk [vmem:[#allocation2 + $0x60] sm:$0xff] %vm254, 0.0
        %268 = vst.msk [vmem:[#allocation2 + $0x68] sm:$0xff] %vm254, 0.0
        %269 = vst.msk [vmem:[#allocation2 + $0x70] sm:$0xff] %vm254, 0.0
        %270 = vst.msk [vmem:[#allocation2 + $0x78] sm:$0xff] %vm254, 0.0
        %271 = vst.msk [vmem:[#allocation2 + $0x80] sm:$0xff] %vm254, 0.0
        %272 = vst.msk [vmem:[#allocation2 + $0x88] sm:$0xff] %vm254, 0.0
        %273 = vst.msk [vmem:[#allocation2 + $0x90] sm:$0xff] %vm254, 0.0
        %274 = vst.msk [vmem:[#allocation2 + $0x98] sm:$0xff] %vm254, 0.0
        %275 = vst.msk [vmem:[#allocation2 + $0xa0] sm:$0xff] %vm254, 0.0
        %276 = vst.msk [vmem:[#allocation2 + $0xa8] sm:$0xff] %vm254, 0.0
        %277 = vst.msk [vmem:[#allocation2 + $0xb0] sm:$0xff] %vm254, 0.0
        %278 = vst.msk [vmem:[#allocation2 + $0xb8] sm:$0xff] %vm254, 0.0
        %279 = vst.msk [vmem:[#allocation2 + $0xc0] sm:$0xff] %vm254, 0.0
        %280 = vst.msk [vmem:[#allocation2 + $0xc8] sm:$0xff] %vm254, 0.0
        %281 = vst.msk [vmem:[#allocation2 + $0xd0] sm:$0xff] %vm254, 0.0
        %282 = vst.msk [vmem:[#allocation2 + $0xd8] sm:$0xff] %vm254, 0.0
        %283 = vst.msk [vmem:[#allocation2 + $0xe0] sm:$0xff] %vm254, 0.0
        %284 = vst.msk [vmem:[#allocation2 + $0xe8] sm:$0xff] %vm254, 0.0
        %285 = vst.msk [vmem:[#allocation2 + $0xf0] sm:$0xff] %vm254, 0.0
        %286 = vst.msk [vmem:[#allocation2 + $0xf8] sm:$0xff] %vm254, 0.0
      $region32: #{global_conv_forward.6} parent=27 // pred_fallthru
        _
      %v287 = vld [vmem:[%s226] sm:$0xf]
      %v288 = vld [vmem:[%s226 + $0x4] sm:$0xf]
      %v289 = vld [vmem:[%s226 + $0xc] sm:$0xf]
      %v290 = vld [vmem:[%s226 + $0x10] sm:$0xf]
      %v291 = vld [vmem:[%s226 + $0x18] sm:$0xf]
      %v292 = vld [vmem:[%s226 + $0x1c] sm:$0xf]
      %v293 = vld [vmem:[%s226 + $0x24] sm:$0xf]
      %v294 = vld [vmem:[%s226 + $0x28] sm:$0xf]
      %v295 = vld [vmem:[%s226 + $0x30] sm:$0xf]
      %v296 = vld [vmem:[%s226 + $0x34] sm:$0xf]
      %v297 = vld [vmem:[%s226 + $0x3c] sm:$0xf]
      %v298 = vld [vmem:[%s226 + $0x40] sm:$0xf]
      %v299 = vld [vmem:[%s226 + $0x48] sm:$0xf]
      %v300 = vld [vmem:[%s226 + $0x4c] sm:$0xf]
      %v301 = vld [vmem:[%s226 + $0x54] sm:$0xf]
      %v302 = vld [vmem:[%s226 + $0x58] sm:$0xf]
      %v303 = vld [vmem:[%s226 + $0x60] sm:$0xf]
      %v304 = vld [vmem:[%s226 + $0x64] sm:$0xf]
      %v305 = vld [vmem:[%s226 + $0x6c] sm:$0xf]
      %v306 = vld [vmem:[%s226 + $0x70] sm:$0xf]
      %v307 = vld [vmem:[%s226 + $0x78] sm:$0xf]
      %v308 = vld [vmem:[%s226 + $0x7c] sm:$0xf]
      %v309 = vld [vmem:[%s226 + $0x84] sm:$0xf]
      %v310 = vld [vmem:[%s226 + $0x88] sm:$0xf]
      %v311 = vld [vmem:[%s226 + $0x90] sm:$0xf]
      %v312 = vld [vmem:[%s226 + $0x94] sm:$0xf]
      %v313 = vld [vmem:[%s226 + $0x9c] sm:$0xf]
      %v314 = vld [vmem:[%s226 + $0xa0] sm:$0xf]
      %v315 = vld [vmem:[%s226 + $0xa8] sm:$0xf]
      %v316 = vld [vmem:[%s226 + $0xac] sm:$0xf]
      %v317 = vld [vmem:[%s226 + $0xb4] sm:$0xf]
      %v318 = vld [vmem:[%s226 + $0xb8] sm:$0xf]
      %v319 = vld [vmem:[%s234] sm:$0x3]
      %v320 = vld [vmem:[%s226 + $0x8] sm:$0x1]
      %v321 = vld [vmem:[%s226 + $0x14] sm:$0x1]
      %v322 = vld [vmem:[%s226 + $0x20] sm:$0x1]
      %v323 = vld [vmem:[%s226 + $0x2c] sm:$0x1]
      %v324 = vld [vmem:[%s226 + $0x38] sm:$0x1]
      %v325 = vld [vmem:[%s226 + $0x44] sm:$0x1]
      %v326 = vld [vmem:[%s226 + $0x50] sm:$0x1]
      %v327 = vld [vmem:[%s226 + $0x5c] sm:$0x1]
      %v328 = vld [vmem:[%s226 + $0x68] sm:$0x1]
      %v329 = vld [vmem:[%s226 + $0x74] sm:$0x1]
      %v330 = vld [vmem:[%s226 + $0x80] sm:$0x1]
      %v331 = vld [vmem:[%s226 + $0x8c] sm:$0x1]
      %v332 = vld [vmem:[%s226 + $0x98] sm:$0x1]
      %v333 = vld [vmem:[%s226 + $0xa4] sm:$0x1]
      %v334 = vld [vmem:[%s226 + $0xb0] sm:$0x1]
      %v335 = vld [vmem:[%s226 + $0xbc] sm:$0x1]
      %vm336 = vsmask.f32 3328
      %vm337 = vsmask.f32 7440
      %vm338 = vmor %vm336, %vm337
      %v340 = vshrl.u32 %v287, 16
      %v342 = vrot.slane %v340, 4
      %v343 = vshll.u32 %v287, 16
      %v345 = vrot.slane %v343, 5
      %v346 = vor.u32 %v342, %v345
      %v347 = vrot.slane %v346, 4
      %v349 = vshll.u32 %v288, 16
      %v351 = vrot.slane %v349, 5
      %v352 = vsel %vm338, %v347, %v351
      %v353 = vshrl.u32 %v288, 16
      %v355 = vrot.slane %v353, 4
      %v356 = vor.u32 %v355, %v351
      %v357 = vrot.slane %v356, 4
      %v359 = vshll.u32 %v320, 16
      %v361 = vrot.slane %v359, 5
      %v362 = vsel %vm338, %v357, %v361
      %v364 = vshrl.u32 %v289, 16
      %v366 = vrot.slane %v364, 4
      %v367 = vshll.u32 %v289, 16
      %v369 = vrot.slane %v367, 5
      %v370 = vor.u32 %v366, %v369
      %v371 = vrot.slane %v370, 4
      %v373 = vshll.u32 %v290, 16
      %v375 = vrot.slane %v373, 5
      %v376 = vsel %vm338, %v371, %v375
      %v377 = vshrl.u32 %v290, 16
      %v379 = vrot.slane %v377, 4
      %v380 = vor.u32 %v379, %v375
      %v381 = vrot.slane %v380, 4
      %v383 = vshll.u32 %v321, 16
      %v385 = vrot.slane %v383, 5
      %v386 = vsel %vm338, %v381, %v385
      %v388 = vshrl.u32 %v291, 16
      %v390 = vrot.slane %v388, 4
      %v391 = vshll.u32 %v291, 16
      %v393 = vrot.slane %v391, 5
      %v394 = vor.u32 %v390, %v393
      %v395 = vrot.slane %v394, 4
      %v397 = vshll.u32 %v292, 16
      %v399 = vrot.slane %v397, 5
      %v400 = vsel %vm338, %v395, %v399
      %v401 = vshrl.u32 %v292, 16
      %v403 = vrot.slane %v401, 4
      %v404 = vor.u32 %v403, %v399
      %v405 = vrot.slane %v404, 4
      %v407 = vshll.u32 %v322, 16
      %v409 = vrot.slane %v407, 5
      %v410 = vsel %vm338, %v405, %v409
      %v412 = vshrl.u32 %v293, 16
      %v414 = vrot.slane %v412, 4
      %v415 = vshll.u32 %v293, 16
      %v417 = vrot.slane %v415, 5
      %v418 = vor.u32 %v414, %v417
      %v419 = vrot.slane %v418, 4
      %v421 = vshll.u32 %v294, 16
      %v423 = vrot.slane %v421, 5
      %v424 = vsel %vm338, %v419, %v423
      %v425 = vshrl.u32 %v294, 16
      %v427 = vrot.slane %v425, 4
      %v428 = vor.u32 %v427, %v423
      %v429 = vrot.slane %v428, 4
      %v431 = vshll.u32 %v323, 16
      %v433 = vrot.slane %v431, 5
      %v434 = vsel %vm338, %v429, %v433
      %v436 = vshrl.u32 %v295, 16
      %v438 = vrot.slane %v436, 4
      %v439 = vshll.u32 %v295, 16
      %v441 = vrot.slane %v439, 5
      %v442 = vor.u32 %v438, %v441
      %v443 = vrot.slane %v442, 4
      %v445 = vshll.u32 %v296, 16
      %v447 = vrot.slane %v445, 5
      %v448 = vsel %vm338, %v443, %v447
      %v449 = vshrl.u32 %v296, 16
      %v451 = vrot.slane %v449, 4
      %v452 = vor.u32 %v451, %v447
      %v453 = vrot.slane %v452, 4
      %v455 = vshll.u32 %v324, 16
      %v457 = vrot.slane %v455, 5
      %v458 = vsel %vm338, %v453, %v457
      %v460 = vshrl.u32 %v297, 16
      %v462 = vrot.slane %v460, 4
      %v463 = vshll.u32 %v297, 16
      %v465 = vrot.slane %v463, 5
      %v466 = vor.u32 %v462, %v465
      %v467 = vrot.slane %v466, 4
      %v469 = vshll.u32 %v298, 16
      %v471 = vrot.slane %v469, 5
      %v472 = vsel %vm338, %v467, %v471
      %v473 = vshrl.u32 %v298, 16
      %v475 = vrot.slane %v473, 4
      %v476 = vor.u32 %v475, %v471
      %v477 = vrot.slane %v476, 4
      %v479 = vshll.u32 %v325, 16
      %v481 = vrot.slane %v479, 5
      %v482 = vsel %vm338, %v477, %v481
      %v484 = vshrl.u32 %v299, 16
      %v486 = vrot.slane %v484, 4
      %v487 = vshll.u32 %v299, 16
      %v489 = vrot.slane %v487, 5
      %v490 = vor.u32 %v486, %v489
      %v491 = vrot.slane %v490, 4
      %v493 = vshll.u32 %v300, 16
      %v495 = vrot.slane %v493, 5
      %v496 = vsel %vm338, %v491, %v495
      %v497 = vshrl.u32 %v300, 16
      %v499 = vrot.slane %v497, 4
      %v500 = vor.u32 %v499, %v495
      %v501 = vrot.slane %v500, 4
      %v503 = vshll.u32 %v326, 16
      %v505 = vrot.slane %v503, 5
      %v506 = vsel %vm338, %v501, %v505
      %v508 = vshrl.u32 %v301, 16
      %v510 = vrot.slane %v508, 4
      %v511 = vshll.u32 %v301, 16
      %v513 = vrot.slane %v511, 5
      %v514 = vor.u32 %v510, %v513
      %v515 = vrot.slane %v514, 4
      %v517 = vshll.u32 %v302, 16
      %v519 = vrot.slane %v517, 5
      %v520 = vsel %vm338, %v515, %v519
      %v521 = vshrl.u32 %v302, 16
      %v523 = vrot.slane %v521, 4
      %v524 = vor.u32 %v523, %v519
      %v525 = vrot.slane %v524, 4
      %v527 = vshll.u32 %v327, 16
      %v529 = vrot.slane %v527, 5
      %v530 = vsel %vm338, %v525, %v529
      %v532 = vshrl.u32 %v303, 16
      %v534 = vrot.slane %v532, 4
      %v535 = vshll.u32 %v303, 16
      %v537 = vrot.slane %v535, 5
      %v538 = vor.u32 %v534, %v537
      %v539 = vrot.slane %v538, 4
      %v541 = vshll.u32 %v304, 16
      %v543 = vrot.slane %v541, 5
      %v544 = vsel %vm338, %v539, %v543
      %v545 = vshrl.u32 %v304, 16
      %v547 = vrot.slane %v545, 4
      %v548 = vor.u32 %v547, %v543
      %v549 = vrot.slane %v548, 4
      %v551 = vshll.u32 %v328, 16
      %v553 = vrot.slane %v551, 5
      %v554 = vsel %vm338, %v549, %v553
      %v556 = vshrl.u32 %v305, 16
      %v558 = vrot.slane %v556, 4
      %v559 = vshll.u32 %v305, 16
      %v561 = vrot.slane %v559, 5
      %v562 = vor.u32 %v558, %v561
      %v563 = vrot.slane %v562, 4
      %v565 = vshll.u32 %v306, 16
      %v567 = vrot.slane %v565, 5
      %v568 = vsel %vm338, %v563, %v567
      %v569 = vshrl.u32 %v306, 16
      %v571 = vrot.slane %v569, 4
      %v572 = vor.u32 %v571, %v567
      %v573 = vrot.slane %v572, 4
      %v575 = vshll.u32 %v329, 16
      %v577 = vrot.slane %v575, 5
      %v578 = vsel %vm338, %v573, %v577
      %v580 = vshrl.u32 %v307, 16
      %v582 = vrot.slane %v580, 4
      %v583 = vshll.u32 %v307, 16
      %v585 = vrot.slane %v583, 5
      %v586 = vor.u32 %v582, %v585
      %v587 = vrot.slane %v586, 4
      %v589 = vshll.u32 %v308, 16
      %v591 = vrot.slane %v589, 5
      %v592 = vsel %vm338, %v587, %v591
      %v593 = vshrl.u32 %v308, 16
      %v595 = vrot.slane %v593, 4
      %v596 = vor.u32 %v595, %v591
      %v597 = vrot.slane %v596, 4
      %v599 = vshll.u32 %v330, 16
      %v601 = vrot.slane %v599, 5
      %v602 = vsel %vm338, %v597, %v601
      %v604 = vshrl.u32 %v309, 16
      %v606 = vrot.slane %v604, 4
      %v607 = vshll.u32 %v309, 16
      %v609 = vrot.slane %v607, 5
      %v610 = vor.u32 %v606, %v609
      %v611 = vrot.slane %v610, 4
      %v613 = vshll.u32 %v310, 16
      %v615 = vrot.slane %v613, 5
      %v616 = vsel %vm338, %v611, %v615
      %v617 = vshrl.u32 %v310, 16
      %v619 = vrot.slane %v617, 4
      %v620 = vor.u32 %v619, %v615
      %v621 = vrot.slane %v620, 4
      %v623 = vshll.u32 %v331, 16
      %v625 = vrot.slane %v623, 5
      %v626 = vsel %vm338, %v621, %v625
      %v628 = vshrl.u32 %v311, 16
      %v630 = vrot.slane %v628, 4
      %v631 = vshll.u32 %v311, 16
      %v633 = vrot.slane %v631, 5
      %v634 = vor.u32 %v630, %v633
      %v635 = vrot.slane %v634, 4
      %v637 = vshll.u32 %v312, 16
      %v639 = vrot.slane %v637, 5
      %v640 = vsel %vm338, %v635, %v639
      %v641 = vshrl.u32 %v312, 16
      %v643 = vrot.slane %v641, 4
      %v644 = vor.u32 %v643, %v639
      %v645 = vrot.slane %v644, 4
      %v647 = vshll.u32 %v332, 16
      %v649 = vrot.slane %v647, 5
      %v650 = vsel %vm338, %v645, %v649
      %v652 = vshrl.u32 %v313, 16
      %v654 = vrot.slane %v652, 4
      %v655 = vshll.u32 %v313, 16
      %v657 = vrot.slane %v655, 5
      %v658 = vor.u32 %v654, %v657
      %v659 = vrot.slane %v658, 4
      %v661 = vshll.u32 %v314, 16
      %v663 = vrot.slane %v661, 5
      %v664 = vsel %vm338, %v659, %v663
      %v665 = vshrl.u32 %v314, 16
      %v667 = vrot.slane %v665, 4
      %v668 = vor.u32 %v667, %v663
      %v669 = vrot.slane %v668, 4
      %v671 = vshll.u32 %v333, 16
      %v673 = vrot.slane %v671, 5
      %v674 = vsel %vm338, %v669, %v673
      %v676 = vshrl.u32 %v315, 16
      %v678 = vrot.slane %v676, 4
      %v679 = vshll.u32 %v315, 16
      %v681 = vrot.slane %v679, 5
      %v682 = vor.u32 %v678, %v681
      %v683 = vrot.slane %v682, 4
      %v685 = vshll.u32 %v316, 16
      %v687 = vrot.slane %v685, 5
      %v688 = vsel %vm338, %v683, %v687
      %v689 = vshrl.u32 %v316, 16
      %v691 = vrot.slane %v689, 4
      %v692 = vor.u32 %v691, %v687
      %v693 = vrot.slane %v692, 4
      %v695 = vshll.u32 %v334, 16
      %v697 = vrot.slane %v695, 5
      %v698 = vsel %vm338, %v693, %v697
      %v700 = vshrl.u32 %v317, 16
      %v702 = vrot.slane %v700, 4
      %v703 = vshll.u32 %v317, 16
      %v705 = vrot.slane %v703, 5
      %v706 = vor.u32 %v702, %v705
      %v707 = vrot.slane %v706, 4
      %v709 = vshll.u32 %v318, 16
      %v711 = vrot.slane %v709, 5
      %v712 = vsel %vm338, %v707, %v711
      %v713 = vshrl.u32 %v318, 16
      %v715 = vrot.slane %v713, 4
      %v716 = vor.u32 %v715, %v711
      %v717 = vrot.slane %v716, 4
      %v719 = vshll.u32 %v335, 16
      %v721 = vrot.slane %v719, 5
      %v722 = vsel %vm338, %v717, %v721
      %s723 = scalar_lea.vmem %s234, 2
      %v724 = vld [vmem:[%s723] sm:$0x3]
      %v725 = vunpack.c.l.b16 %v352
      %v726 = vunpack.c.l.b16 %v362
      %v727 = vunpack.c.l.b16 %v376
      %v728 = vunpack.c.l.b16 %v386
      %v729 = vunpack.c.l.b16 %v400
      %v730 = vunpack.c.l.b16 %v410
      %v731 = vunpack.c.l.b16 %v424
      %v732 = vunpack.c.l.b16 %v434
      %v733 = vunpack.c.l.b16 %v448
      %v734 = vunpack.c.l.b16 %v458
      %v735 = vunpack.c.l.b16 %v472
      %v736 = vunpack.c.l.b16 %v482
      %v737 = vunpack.c.l.b16 %v496
      %v738 = vunpack.c.l.b16 %v506
      %v739 = vunpack.c.l.b16 %v520
      %v740 = vunpack.c.l.b16 %v530
      %v741 = vunpack.c.l.b16 %v544
      %v742 = vunpack.c.l.b16 %v554
      %v743 = vunpack.c.l.b16 %v568
      %v744 = vunpack.c.l.b16 %v578
      %v745 = vunpack.c.l.b16 %v592
      %v746 = vunpack.c.l.b16 %v602
      %v747 = vunpack.c.l.b16 %v616
      %v748 = vunpack.c.l.b16 %v626
      %v749 = vunpack.c.l.b16 %v640
      %v750 = vunpack.c.l.b16 %v650
      %v751 = vunpack.c.l.b16 %v664
      %v752 = vunpack.c.l.b16 %v674
      %v753 = vunpack.c.l.b16 %v688
      %v754 = vunpack.c.l.b16 %v698
      %v755 = vunpack.c.l.b16 %v712
      %v756 = vunpack.c.l.b16 %v722
      %v757 = vpack.c.b16 %v726, %v725
      %v758 = vpack.c.b16 %v728, %v727
      %v759 = vpack.c.b16 %v730, %v729
      %v760 = vpack.c.b16 %v732, %v731
      %v761 = vpack.c.b16 %v734, %v733
      %v762 = vpack.c.b16 %v736, %v735
      %v763 = vpack.c.b16 %v738, %v737
      %v764 = vpack.c.b16 %v740, %v739
      %v765 = vpack.c.b16 %v742, %v741
      %v766 = vpack.c.b16 %v744, %v743
      %v767 = vpack.c.b16 %v746, %v745
      %v768 = vpack.c.b16 %v748, %v747
      %v769 = vpack.c.b16 %v750, %v749
      %v770 = vpack.c.b16 %v752, %v751
      %v771 = vpack.c.b16 %v754, %v753
      %v772 = vpack.c.b16 %v756, %v755
      %vm773 = vcmask 31744
      %v775 = vsel %vm773, %v757, 0
      %v778 = vsel %vm773, %v758, 0
      %v781 = vsel %vm773, %v759, 0
      %v784 = vsel %vm773, %v760, 0
      %v787 = vsel %vm773, %v761, 0
      %v790 = vsel %vm773, %v762, 0
      %v793 = vsel %vm773, %v763, 0
      %v796 = vsel %vm773, %v764, 0
      %v799 = vsel %vm773, %v765, 0
      %v802 = vsel %vm773, %v766, 0
      %v805 = vsel %vm773, %v767, 0
      %v808 = vsel %vm773, %v768, 0
      %v811 = vsel %vm773, %v769, 0
      %v814 = vsel %vm773, %v770, 0
      %v817 = vsel %vm773, %v771, 0
      %v820 = vsel %vm773, %v772, 0
      %vm822 = vcmask 1041408
      %v824 = vsel %vm822, %v724, 0
      %826 = vmatpush.bf16.msra.mxu0 0
      %827 = vmatpush.bf16.msra.mxu0 0
      %828 = vmatpush.bf16.msra.mxu0 0
      %829 = vmatpush.bf16.msra.mxu0 0
      %830 = vmatpush.bf16.msra.mxu0 0
      %831 = vmatpush.bf16.msra.mxu0 0
      %832 = vmatpush.bf16.msra.mxu0 0
      %833 = vmatpush.bf16.msra.mxu0 %v824
      %834 = vmatmul.bf16.gmra.mxu0 %v775
      %v835 = vpop.f32.mrf.mxu0
      %v836 = vadd.f32 0.0, %v835
      %v837 = vpop.f32.mrf.mxu0
      %v838 = vadd.f32 0.0, %v837
      %839 = vmatmul.bf16.gmra.mxu0 %v778
      %v840 = vpop.f32.mrf.mxu0
      %v841 = vadd.f32 0.0, %v840
      %v842 = vpop.f32.mrf.mxu0
      %v843 = vadd.f32 0.0, %v842
      %844 = vmatmul.bf16.gmra.mxu0 %v781
      %v845 = vpop.f32.mrf.mxu0
      %v846 = vadd.f32 0.0, %v845
      %v847 = vpop.f32.mrf.mxu0
      %v848 = vadd.f32 0.0, %v847
      %849 = vmatmul.bf16.gmra.mxu0 %v784
      %v850 = vpop.f32.mrf.mxu0
      %v851 = vadd.f32 0.0, %v850
      %v852 = vpop.f32.mrf.mxu0
      %v853 = vadd.f32 0.0, %v852
      %854 = vmatmul.bf16.gmra.mxu0 %v787
      %v855 = vpop.f32.mrf.mxu0
      %v856 = vadd.f32 0.0, %v855
      %v857 = vpop.f32.mrf.mxu0
      %v858 = vadd.f32 0.0, %v857
      %859 = vmatmul.bf16.gmra.mxu0 %v790
      %v860 = vpop.f32.mrf.mxu0
      %v861 = vadd.f32 0.0, %v860
      %v862 = vpop.f32.mrf.mxu0
      %v863 = vadd.f32 0.0, %v862
      %864 = vmatmul.bf16.gmra.mxu0 %v793
      %v865 = vpop.f32.mrf.mxu0
      %v866 = vadd.f32 0.0, %v865
      %v867 = vpop.f32.mrf.mxu0
      %v868 = vadd.f32 0.0, %v867
      %869 = vmatmul.bf16.gmra.mxu0 %v796
      %v870 = vpop.f32.mrf.mxu0
      %v871 = vadd.f32 0.0, %v870
      %v872 = vpop.f32.mrf.mxu0
      %v873 = vadd.f32 0.0, %v872
      %874 = vmatmul.bf16.gmra.mxu0 %v799
      %v875 = vpop.f32.mrf.mxu0
      %v876 = vadd.f32 0.0, %v875
      %v877 = vpop.f32.mrf.mxu0
      %v878 = vadd.f32 0.0, %v877
      %879 = vmatmul.bf16.gmra.mxu0 %v802
      %v880 = vpop.f32.mrf.mxu0
      %v881 = vadd.f32 0.0, %v880
      %v882 = vpop.f32.mrf.mxu0
      %v883 = vadd.f32 0.0, %v882
      %884 = vmatmul.bf16.gmra.mxu0 %v805
      %v885 = vpop.f32.mrf.mxu0
      %v886 = vadd.f32 0.0, %v885
      %v887 = vpop.f32.mrf.mxu0
      %v888 = vadd.f32 0.0, %v887
      %889 = vmatmul.bf16.gmra.mxu0 %v808
      %v890 = vpop.f32.mrf.mxu0
      %v891 = vadd.f32 0.0, %v890
      %v892 = vpop.f32.mrf.mxu0
      %v893 = vadd.f32 0.0, %v892
      %894 = vmatmul.bf16.gmra.mxu0 %v811
      %v895 = vpop.f32.mrf.mxu0
      %v896 = vadd.f32 0.0, %v895
      %v897 = vpop.f32.mrf.mxu0
      %v898 = vadd.f32 0.0, %v897
      %899 = vmatmul.bf16.gmra.mxu0 %v814
      %v900 = vpop.f32.mrf.mxu0
      %v901 = vadd.f32 0.0, %v900
      %v902 = vpop.f32.mrf.mxu0
      %v903 = vadd.f32 0.0, %v902
      %904 = vmatmul.bf16.gmra.mxu0 %v817
      %v905 = vpop.f32.mrf.mxu0
      %v906 = vadd.f32 0.0, %v905
      %v907 = vpop.f32.mrf.mxu0
      %v908 = vadd.f32 0.0, %v907
      %909 = vmatmul.bf16.gmra.mxu0 %v820
      %v910 = vpop.f32.mrf.mxu0
      %v911 = vadd.f32 0.0, %v910
      %v912 = vpop.f32.mrf.mxu0
      %v913 = vadd.f32 0.0, %v912
      %914 = vdwg.mxu0
      %v947 = vunpack.c.l.b16 %v287
      %v948 = vunpack.c.l.b16 %v288
      %v949 = vunpack.c.l.b16 %v289
      %v950 = vunpack.c.l.b16 %v290
      %v951 = vunpack.c.l.b16 %v291
      %v952 = vunpack.c.l.b16 %v292
      %v953 = vunpack.c.l.b16 %v293
      %v954 = vunpack.c.l.b16 %v294
      %v955 = vunpack.c.l.b16 %v295
      %v956 = vunpack.c.l.b16 %v296
      %v957 = vunpack.c.l.b16 %v297
      %v958 = vunpack.c.l.b16 %v298
      %v959 = vunpack.c.l.b16 %v299
      %v960 = vunpack.c.l.b16 %v300
      %v961 = vunpack.c.l.b16 %v301
      %v962 = vunpack.c.l.b16 %v302
      %v963 = vunpack.c.l.b16 %v303
      %v964 = vunpack.c.l.b16 %v304
      %v965 = vunpack.c.l.b16 %v305
      %v966 = vunpack.c.l.b16 %v306
      %v967 = vunpack.c.l.b16 %v307
      %v968 = vunpack.c.l.b16 %v308
      %v969 = vunpack.c.l.b16 %v309
      %v970 = vunpack.c.l.b16 %v310
      %v971 = vunpack.c.l.b16 %v311
      %v972 = vunpack.c.l.b16 %v312
      %v973 = vunpack.c.l.b16 %v313
      %v974 = vunpack.c.l.b16 %v314
      %v975 = vunpack.c.l.b16 %v315
      %v976 = vunpack.c.l.b16 %v316
      %v977 = vunpack.c.l.b16 %v317
      %v978 = vunpack.c.l.b16 %v318
      %v979 = vpack.c.b16 %v948, %v947
      %v980 = vpack.c.b16 %v950, %v949
      %v981 = vpack.c.b16 %v952, %v951
      %v982 = vpack.c.b16 %v954, %v953
      %v983 = vpack.c.b16 %v956, %v955
      %v984 = vpack.c.b16 %v958, %v957
      %v985 = vpack.c.b16 %v960, %v959
      %v986 = vpack.c.b16 %v962, %v961
      %v987 = vpack.c.b16 %v964, %v963
      %v988 = vpack.c.b16 %v966, %v965
      %v989 = vpack.c.b16 %v968, %v967
      %v990 = vpack.c.b16 %v970, %v969
      %v991 = vpack.c.b16 %v972, %v971
      %v992 = vpack.c.b16 %v974, %v973
      %v993 = vpack.c.b16 %v976, %v975
      %v994 = vpack.c.b16 %v978, %v977
      %v996 = vsel %vm773, %v979, 0
      %v999 = vsel %vm773, %v980, 0
      %v1002 = vsel %vm773, %v981, 0
      %v1005 = vsel %vm773, %v982, 0
      %v1008 = vsel %vm773, %v983, 0
      %v1011 = vsel %vm773, %v984, 0
      %v1014 = vsel %vm773, %v985, 0
      %v1017 = vsel %vm773, %v986, 0
      %v1020 = vsel %vm773, %v987, 0
      %v1023 = vsel %vm773, %v988, 0
      %v1026 = vsel %vm773, %v989, 0
      %v1029 = vsel %vm773, %v990, 0
      %v1032 = vsel %vm773, %v991, 0
      %v1035 = vsel %vm773, %v992, 0
      %v1038 = vsel %vm773, %v993, 0
      %v1041 = vsel %vm773, %v994, 0
      %v1044 = vsel %vm822, %v319, 0
      %1046 = vmatpush.bf16.msra.mxu0 0
      %1047 = vmatpush.bf16.msra.mxu0 0
      %1048 = vmatpush.bf16.msra.mxu0 0
      %1049 = vmatpush.bf16.msra.mxu0 0
      %1050 = vmatpush.bf16.msra.mxu0 0
      %1051 = vmatpush.bf16.msra.mxu0 0
      %1052 = vmatpush.bf16.msra.mxu0 0
      %1053 = vmatpush.bf16.msra.mxu0 %v1044
      %1054 = vmatmul.bf16.gmra.mxu0 %v996
      %v1055 = vpop.f32.mrf.mxu0
      %v1056 = vadd.f32 %v836, %v1055
      %v1057 = vpop.f32.mrf.mxu0
      %v1058 = vadd.f32 %v838, %v1057
      %1059 = vmatmul.bf16.gmra.mxu0 %v999
      %v1060 = vpop.f32.mrf.mxu0
      %v1061 = vadd.f32 %v841, %v1060
      %v1062 = vpop.f32.mrf.mxu0
      %v1063 = vadd.f32 %v843, %v1062
      %1064 = vmatmul.bf16.gmra.mxu0 %v1002
      %v1065 = vpop.f32.mrf.mxu0
      %v1066 = vadd.f32 %v846, %v1065
      %v1067 = vpop.f32.mrf.mxu0
      %v1068 = vadd.f32 %v848, %v1067
      %1069 = vmatmul.bf16.gmra.mxu0 %v1005
      %v1070 = vpop.f32.mrf.mxu0
      %v1071 = vadd.f32 %v851, %v1070
      %v1072 = vpop.f32.mrf.mxu0
      %v1073 = vadd.f32 %v853, %v1072
      %1074 = vmatmul.bf16.gmra.mxu0 %v1008
      %v1075 = vpop.f32.mrf.mxu0
      %v1076 = vadd.f32 %v856, %v1075
      %v1077 = vpop.f32.mrf.mxu0
      %v1078 = vadd.f32 %v858, %v1077
      %1079 = vmatmul.bf16.gmra.mxu0 %v1011
      %v1080 = vpop.f32.mrf.mxu0
      %v1081 = vadd.f32 %v861, %v1080
      %v1082 = vpop.f32.mrf.mxu0
      %v1083 = vadd.f32 %v863, %v1082
      %1084 = vmatmul.bf16.gmra.mxu0 %v1014
      %v1085 = vpop.f32.mrf.mxu0
      %v1086 = vadd.f32 %v866, %v1085
      %v1087 = vpop.f32.mrf.mxu0
      %v1088 = vadd.f32 %v868, %v1087
      %1089 = vmatmul.bf16.gmra.mxu0 %v1017
      %v1090 = vpop.f32.mrf.mxu0
      %v1091 = vadd.f32 %v871, %v1090
      %v1092 = vpop.f32.mrf.mxu0
      %v1093 = vadd.f32 %v873, %v1092
      %1094 = vmatmul.bf16.gmra.mxu0 %v1020
      %v1095 = vpop.f32.mrf.mxu0
      %v1096 = vadd.f32 %v876, %v1095
      %v1097 = vpop.f32.mrf.mxu0
      %v1098 = vadd.f32 %v878, %v1097
      %1099 = vmatmul.bf16.gmra.mxu0 %v1023
      %v1100 = vpop.f32.mrf.mxu0
      %v1101 = vadd.f32 %v881, %v1100
      %v1102 = vpop.f32.mrf.mxu0
      %v1103 = vadd.f32 %v883, %v1102
      %1104 = vmatmul.bf16.gmra.mxu0 %v1026
      %v1105 = vpop.f32.mrf.mxu0
      %v1106 = vadd.f32 %v886, %v1105
      %v1107 = vpop.f32.mrf.mxu0
      %v1108 = vadd.f32 %v888, %v1107
      %1109 = vmatmul.bf16.gmra.mxu0 %v1029
      %v1110 = vpop.f32.mrf.mxu0
      %v1111 = vadd.f32 %v891, %v1110
      %v1112 = vpop.f32.mrf.mxu0
      %v1113 = vadd.f32 %v893, %v1112
      %1114 = vmatmul.bf16.gmra.mxu0 %v1032
      %v1115 = vpop.f32.mrf.mxu0
      %v1116 = vadd.f32 %v896, %v1115
      %v1117 = vpop.f32.mrf.mxu0
      %v1118 = vadd.f32 %v898, %v1117
      %1119 = vmatmul.bf16.gmra.mxu0 %v1035
      %v1120 = vpop.f32.mrf.mxu0
      %v1121 = vadd.f32 %v901, %v1120
      %v1122 = vpop.f32.mrf.mxu0
      %v1123 = vadd.f32 %v903, %v1122
      %1124 = vmatmul.bf16.gmra.mxu0 %v1038
      %v1125 = vpop.f32.mrf.mxu0
      %v1126 = vadd.f32 %v906, %v1125
      %v1127 = vpop.f32.mrf.mxu0
      %v1128 = vadd.f32 %v908, %v1127
      %1129 = vmatmul.bf16.gmra.mxu0 %v1041
      %v1130 = vpop.f32.mrf.mxu0
      %v1131 = vadd.f32 %v911, %v1130
      %v1132 = vpop.f32.mrf.mxu0
      %v1133 = vadd.f32 %v913, %v1132
      %1134 = vdwg.mxu0
      %v1135 = vld [vmem:[%s226] sm:$0xe]
      %v1136 = vld [vmem:[%s226 + $0xc] sm:$0xe]
      %v1137 = vld [vmem:[%s226 + $0x18] sm:$0xe]
      %v1138 = vld [vmem:[%s226 + $0x24] sm:$0xe]
      %v1139 = vld [vmem:[%s226 + $0x30] sm:$0xe]
      %v1140 = vld [vmem:[%s226 + $0x3c] sm:$0xe]
      %v1141 = vld [vmem:[%s226 + $0x48] sm:$0xe]
      %v1142 = vld [vmem:[%s226 + $0x54] sm:$0xe]
      %v1143 = vld [vmem:[%s226 + $0x60] sm:$0xe]
      %v1144 = vld [vmem:[%s226 + $0x6c] sm:$0xe]
      %v1145 = vld [vmem:[%s226 + $0x78] sm:$0xe]
      %v1146 = vld [vmem:[%s226 + $0x84] sm:$0xe]
      %v1147 = vld [vmem:[%s226 + $0x90] sm:$0xe]
      %v1148 = vld [vmem:[%s226 + $0x9c] sm:$0xe]
      %v1149 = vld [vmem:[%s226 + $0xa8] sm:$0xe]
      %v1150 = vld [vmem:[%s226 + $0xb4] sm:$0xe]
      %vm1183 = vcmask 1042432
      %vm1184 = vcmask 1046532
      %vm1185 = vmor %vm1183, %vm1184
      %v1186 = vrot.slane %v1135, 5
      %v1187 = vrot.slane %v1186, 4
      %v1188 = vrot.slane %v288, 5
      %v1189 = vsel %vm1185, %v1187, %v1188
      %v1190 = vrot.slane %v1188, 4
      %v1191 = vrot.slane %v320, 5
      %v1192 = vsel %vm1185, %v1190, %v1191
      %v1193 = vrot.slane %v1136, 5
      %v1194 = vrot.slane %v1193, 4
      %v1195 = vrot.slane %v290, 5
      %v1196 = vsel %vm1185, %v1194, %v1195
      %v1197 = vrot.slane %v1195, 4
      %v1198 = vrot.slane %v321, 5
      %v1199 = vsel %vm1185, %v1197, %v1198
      %v1200 = vrot.slane %v1137, 5
      %v1201 = vrot.slane %v1200, 4
      %v1202 = vrot.slane %v292, 5
      %v1203 = vsel %vm1185, %v1201, %v1202
      %v1204 = vrot.slane %v1202, 4
      %v1205 = vrot.slane %v322, 5
      %v1206 = vsel %vm1185, %v1204, %v1205
      %v1207 = vrot.slane %v1138, 5
      %v1208 = vrot.slane %v1207, 4
      %v1209 = vrot.slane %v294, 5
      %v1210 = vsel %vm1185, %v1208, %v1209
      %v1211 = vrot.slane %v1209, 4
      %v1212 = vrot.slane %v323, 5
      %v1213 = vsel %vm1185, %v1211, %v1212
      %v1214 = vrot.slane %v1139, 5
      %v1215 = vrot.slane %v1214, 4
      %v1216 = vrot.slane %v296, 5
      %v1217 = vsel %vm1185, %v1215, %v1216
      %v1218 = vrot.slane %v1216, 4
      %v1219 = vrot.slane %v324, 5
      %v1220 = vsel %vm1185, %v1218, %v1219
      %v1221 = vrot.slane %v1140, 5
      %v1222 = vrot.slane %v1221, 4
      %v1223 = vrot.slane %v298, 5
      %v1224 = vsel %vm1185, %v1222, %v1223
      %v1225 = vrot.slane %v1223, 4
      %v1226 = vrot.slane %v325, 5
      %v1227 = vsel %vm1185, %v1225, %v1226
      %v1228 = vrot.slane %v1141, 5
      %v1229 = vrot.slane %v1228, 4
      %v1230 = vrot.slane %v300, 5
      %v1231 = vsel %vm1185, %v1229, %v1230
      %v1232 = vrot.slane %v1230, 4
      %v1233 = vrot.slane %v326, 5
      %v1234 = vsel %vm1185, %v1232, %v1233
      %v1235 = vrot.slane %v1142, 5
      %v1236 = vrot.slane %v1235, 4
      %v1237 = vrot.slane %v302, 5
      %v1238 = vsel %vm1185, %v1236, %v1237
      %v1239 = vrot.slane %v1237, 4
      %v1240 = vrot.slane %v327, 5
      %v1241 = vsel %vm1185, %v1239, %v1240
      %v1242 = vrot.slane %v1143, 5
      %v1243 = vrot.slane %v1242, 4
      %v1244 = vrot.slane %v304, 5
      %v1245 = vsel %vm1185, %v1243, %v1244
      %v1246 = vrot.slane %v1244, 4
      %v1247 = vrot.slane %v328, 5
      %v1248 = vsel %vm1185, %v1246, %v1247
      %v1249 = vrot.slane %v1144, 5
      %v1250 = vrot.slane %v1249, 4
      %v1251 = vrot.slane %v306, 5
      %v1252 = vsel %vm1185, %v1250, %v1251
      %v1253 = vrot.slane %v1251, 4
      %v1254 = vrot.slane %v329, 5
      %v1255 = vsel %vm1185, %v1253, %v1254
      %v1256 = vrot.slane %v1145, 5
      %v1257 = vrot.slane %v1256, 4
      %v1258 = vrot.slane %v308, 5
      %v1259 = vsel %vm1185, %v1257, %v1258
      %v1260 = vrot.slane %v1258, 4
      %v1261 = vrot.slane %v330, 5
      %v1262 = vsel %vm1185, %v1260, %v1261
      %v1263 = vrot.slane %v1146, 5
      %v1264 = vrot.slane %v1263, 4
      %v1265 = vrot.slane %v310, 5
      %v1266 = vsel %vm1185, %v1264, %v1265
      %v1267 = vrot.slane %v1265, 4
      %v1268 = vrot.slane %v331, 5
      %v1269 = vsel %vm1185, %v1267, %v1268
      %v1270 = vrot.slane %v1147, 5
      %v1271 = vrot.slane %v1270, 4
      %v1272 = vrot.slane %v312, 5
      %v1273 = vsel %vm1185, %v1271, %v1272
      %v1274 = vrot.slane %v1272, 4
      %v1275 = vrot.slane %v332, 5
      %v1276 = vsel %vm1185, %v1274, %v1275
      %v1277 = vrot.slane %v1148, 5
      %v1278 = vrot.slane %v1277, 4
      %v1279 = vrot.slane %v314, 5
      %v1280 = vsel %vm1185, %v1278, %v1279
      %v1281 = vrot.slane %v1279, 4
      %v1282 = vrot.slane %v333, 5
      %v1283 = vsel %vm1185, %v1281, %v1282
      %v1284 = vrot.slane %v1149, 5
      %v1285 = vrot.slane %v1284, 4
      %v1286 = vrot.slane %v316, 5
      %v1287 = vsel %vm1185, %v1285, %v1286
      %v1288 = vrot.slane %v1286, 4
      %v1289 = vrot.slane %v334, 5
      %v1290 = vsel %vm1185, %v1288, %v1289
      %v1291 = vrot.slane %v1150, 5
      %v1292 = vrot.slane %v1291, 4
      %v1293 = vrot.slane %v318, 5
      %v1294 = vsel %vm1185, %v1292, %v1293
      %v1295 = vrot.slane %v1293, 4
      %v1296 = vrot.slane %v335, 5
      %v1297 = vsel %vm1185, %v1295, %v1296
      %s1298 = scalar_lea.vmem %s234, 4
      %v1299 = vld [vmem:[%s1298] sm:$0x3]
      %v1300 = vunpack.c.l.b16 %v1189
      %v1301 = vunpack.c.l.b16 %v1192
      %v1302 = vunpack.c.l.b16 %v1196
      %v1303 = vunpack.c.l.b16 %v1199
      %v1304 = vunpack.c.l.b16 %v1203
      %v1305 = vunpack.c.l.b16 %v1206
      %v1306 = vunpack.c.l.b16 %v1210
      %v1307 = vunpack.c.l.b16 %v1213
      %v1308 = vunpack.c.l.b16 %v1217
      %v1309 = vunpack.c.l.b16 %v1220
      %v1310 = vunpack.c.l.b16 %v1224
      %v1311 = vunpack.c.l.b16 %v1227
      %v1312 = vunpack.c.l.b16 %v1231
      %v1313 = vunpack.c.l.b16 %v1234
      %v1314 = vunpack.c.l.b16 %v1238
      %v1315 = vunpack.c.l.b16 %v1241
      %v1316 = vunpack.c.l.b16 %v1245
      %v1317 = vunpack.c.l.b16 %v1248
      %v1318 = vunpack.c.l.b16 %v1252
      %v1319 = vunpack.c.l.b16 %v1255
      %v1320 = vunpack.c.l.b16 %v1259
      %v1321 = vunpack.c.l.b16 %v1262
      %v1322 = vunpack.c.l.b16 %v1266
      %v1323 = vunpack.c.l.b16 %v1269
      %v1324 = vunpack.c.l.b16 %v1273
      %v1325 = vunpack.c.l.b16 %v1276
      %v1326 = vunpack.c.l.b16 %v1280
      %v1327 = vunpack.c.l.b16 %v1283
      %v1328 = vunpack.c.l.b16 %v1287
      %v1329 = vunpack.c.l.b16 %v1290
      %v1330 = vunpack.c.l.b16 %v1294
      %v1331 = vunpack.c.l.b16 %v1297
      %v1332 = vpack.c.b16 %v1301, %v1300
      %v1333 = vpack.c.b16 %v1303, %v1302
      %v1334 = vpack.c.b16 %v1305, %v1304
      %v1335 = vpack.c.b16 %v1307, %v1306
      %v1336 = vpack.c.b16 %v1309, %v1308
      %v1337 = vpack.c.b16 %v1311, %v1310
      %v1338 = vpack.c.b16 %v1313, %v1312
      %v1339 = vpack.c.b16 %v1315, %v1314
      %v1340 = vpack.c.b16 %v1317, %v1316
      %v1341 = vpack.c.b16 %v1319, %v1318
      %v1342 = vpack.c.b16 %v1321, %v1320
      %v1343 = vpack.c.b16 %v1323, %v1322
      %v1344 = vpack.c.b16 %v1325, %v1324
      %v1345 = vpack.c.b16 %v1327, %v1326
      %v1346 = vpack.c.b16 %v1329, %v1328
      %v1347 = vpack.c.b16 %v1331, %v1330
      %v1349 = vsel %vm773, %v1332, 0
      %v1352 = vsel %vm773, %v1333, 0
      %v1355 = vsel %vm773, %v1334, 0
      %v1358 = vsel %vm773, %v1335, 0
      %v1361 = vsel %vm773, %v1336, 0
      %v1364 = vsel %vm773, %v1337, 0
      %v1367 = vsel %vm773, %v1338, 0
      %v1370 = vsel %vm773, %v1339, 0
      %v1373 = vsel %vm773, %v1340, 0
      %v1376 = vsel %vm773, %v1341, 0
      %v1379 = vsel %vm773, %v1342, 0
      %v1382 = vsel %vm773, %v1343, 0
      %v1385 = vsel %vm773, %v1344, 0
      %v1388 = vsel %vm773, %v1345, 0
      %v1391 = vsel %vm773, %v1346, 0
      %v1394 = vsel %vm773, %v1347, 0
      %v1397 = vsel %vm822, %v1299, 0
      %1399 = vmatpush.bf16.msra.mxu0 0
      %1400 = vmatpush.bf16.msra.mxu0 0
      %1401 = vmatpush.bf16.msra.mxu0 0
      %1402 = vmatpush.bf16.msra.mxu0 0
      %1403 = vmatpush.bf16.msra.mxu0 0
      %1404 = vmatpush.bf16.msra.mxu0 0
      %1405 = vmatpush.bf16.msra.mxu0 0
      %1406 = vmatpush.bf16.msra.mxu0 %v1397
      %1407 = vmatmul.bf16.gmra.mxu0 %v1349
      %v1408 = vpop.f32.mrf.mxu0
      %v1409 = vadd.f32 0.0, %v1408
      %v1410 = vpop.f32.mrf.mxu0
      %v1411 = vadd.f32 0.0, %v1410
      %1412 = vmatmul.bf16.gmra.mxu0 %v1352
      %v1413 = vpop.f32.mrf.mxu0
      %v1414 = vadd.f32 0.0, %v1413
      %v1415 = vpop.f32.mrf.mxu0
      %v1416 = vadd.f32 0.0, %v1415
      %1417 = vmatmul.bf16.gmra.mxu0 %v1355
      %v1418 = vpop.f32.mrf.mxu0
      %v1419 = vadd.f32 0.0, %v1418
      %v1420 = vpop.f32.mrf.mxu0
      %v1421 = vadd.f32 0.0, %v1420
      %1422 = vmatmul.bf16.gmra.mxu0 %v1358
      %v1423 = vpop.f32.mrf.mxu0
      %v1424 = vadd.f32 0.0, %v1423
      %v1425 = vpop.f32.mrf.mxu0
      %v1426 = vadd.f32 0.0, %v1425
      %1427 = vmatmul.bf16.gmra.mxu0 %v1361
      %v1428 = vpop.f32.mrf.mxu0
      %v1429 = vadd.f32 0.0, %v1428
      %v1430 = vpop.f32.mrf.mxu0
      %v1431 = vadd.f32 0.0, %v1430
      %1432 = vmatmul.bf16.gmra.mxu0 %v1364
      %v1433 = vpop.f32.mrf.mxu0
      %v1434 = vadd.f32 0.0, %v1433
      %v1435 = vpop.f32.mrf.mxu0
      %v1436 = vadd.f32 0.0, %v1435
      %1437 = vmatmul.bf16.gmra.mxu0 %v1367
      %v1438 = vpop.f32.mrf.mxu0
      %v1439 = vadd.f32 0.0, %v1438
      %v1440 = vpop.f32.mrf.mxu0
      %v1441 = vadd.f32 0.0, %v1440
      %1442 = vmatmul.bf16.gmra.mxu0 %v1370
      %v1443 = vpop.f32.mrf.mxu0
      %v1444 = vadd.f32 0.0, %v1443
      %v1445 = vpop.f32.mrf.mxu0
      %v1446 = vadd.f32 0.0, %v1445
      %1447 = vmatmul.bf16.gmra.mxu0 %v1373
      %v1448 = vpop.f32.mrf.mxu0
      %v1449 = vadd.f32 0.0, %v1448
      %v1450 = vpop.f32.mrf.mxu0
      %v1451 = vadd.f32 0.0, %v1450
      %1452 = vmatmul.bf16.gmra.mxu0 %v1376
      %v1453 = vpop.f32.mrf.mxu0
      %v1454 = vadd.f32 0.0, %v1453
      %v1455 = vpop.f32.mrf.mxu0
      %v1456 = vadd.f32 0.0, %v1455
      %1457 = vmatmul.bf16.gmra.mxu0 %v1379
      %v1458 = vpop.f32.mrf.mxu0
      %v1459 = vadd.f32 0.0, %v1458
      %v1460 = vpop.f32.mrf.mxu0
      %v1461 = vadd.f32 0.0, %v1460
      %1462 = vmatmul.bf16.gmra.mxu0 %v1382
      %v1463 = vpop.f32.mrf.mxu0
      %v1464 = vadd.f32 0.0, %v1463
      %v1465 = vpop.f32.mrf.mxu0
      %v1466 = vadd.f32 0.0, %v1465
      %1467 = vmatmul.bf16.gmra.mxu0 %v1385
      %v1468 = vpop.f32.mrf.mxu0
      %v1469 = vadd.f32 0.0, %v1468
      %v1470 = vpop.f32.mrf.mxu0
      %v1471 = vadd.f32 0.0, %v1470
      %1472 = vmatmul.bf16.gmra.mxu0 %v1388
      %v1473 = vpop.f32.mrf.mxu0
      %v1474 = vadd.f32 0.0, %v1473
      %v1475 = vpop.f32.mrf.mxu0
      %v1476 = vadd.f32 0.0, %v1475
      %1477 = vmatmul.bf16.gmra.mxu0 %v1391
      %v1478 = vpop.f32.mrf.mxu0
      %v1479 = vadd.f32 0.0, %v1478
      %v1480 = vpop.f32.mrf.mxu0
      %v1481 = vadd.f32 0.0, %v1480
      %1482 = vmatmul.bf16.gmra.mxu0 %v1394
      %v1483 = vpop.f32.mrf.mxu0
      %v1484 = vadd.f32 0.0, %v1483
      %v1485 = vpop.f32.mrf.mxu0
      %v1486 = vadd.f32 0.0, %v1485
      %1487 = vdwg.mxu0
      %v1488 = vadd.f32 %v1056, %v1409
      %v1489 = vadd.f32 %v1058, %v1411
      %v1490 = vadd.f32 %v1061, %v1414
      %v1491 = vadd.f32 %v1063, %v1416
      %v1492 = vadd.f32 %v1066, %v1419
      %v1493 = vadd.f32 %v1068, %v1421
      %v1494 = vadd.f32 %v1071, %v1424
      %v1495 = vadd.f32 %v1073, %v1426
      %v1496 = vadd.f32 %v1076, %v1429
      %v1497 = vadd.f32 %v1078, %v1431
      %v1498 = vadd.f32 %v1081, %v1434
      %v1499 = vadd.f32 %v1083, %v1436
      %v1500 = vadd.f32 %v1086, %v1439
      %v1501 = vadd.f32 %v1088, %v1441
      %v1502 = vadd.f32 %v1091, %v1444
      %v1503 = vadd.f32 %v1093, %v1446
      %v1504 = vadd.f32 %v1096, %v1449
      %v1505 = vadd.f32 %v1098, %v1451
      %v1506 = vadd.f32 %v1101, %v1454
      %v1507 = vadd.f32 %v1103, %v1456
      %v1508 = vadd.f32 %v1106, %v1459
      %v1509 = vadd.f32 %v1108, %v1461
      %v1510 = vadd.f32 %v1111, %v1464
      %v1511 = vadd.f32 %v1113, %v1466
      %v1512 = vadd.f32 %v1116, %v1469
      %v1513 = vadd.f32 %v1118, %v1471
      %v1514 = vadd.f32 %v1121, %v1474
      %v1515 = vadd.f32 %v1123, %v1476
      %v1516 = vadd.f32 %v1126, %v1479
      %v1517 = vadd.f32 %v1128, %v1481
      %v1518 = vadd.f32 %v1131, %v1484
      %v1519 = vadd.f32 %v1133, %v1486
      %v1520 = vld [vmem:[%s226 + $0x8] sm:$0x3]
      %v1521 = vld [vmem:[%s226 + $0x14] sm:$0x3]
      %v1522 = vld [vmem:[%s226 + $0x20] sm:$0x3]
      %v1523 = vld [vmem:[%s226 + $0x2c] sm:$0x3]
      %v1524 = vld [vmem:[%s226 + $0x38] sm:$0x3]
      %v1525 = vld [vmem:[%s226 + $0x44] sm:$0x3]
      %v1526 = vld [vmem:[%s226 + $0x50] sm:$0x3]
      %v1527 = vld [vmem:[%s226 + $0x5c] sm:$0x3]
      %v1528 = vld [vmem:[%s226 + $0x68] sm:$0x3]
      %v1529 = vld [vmem:[%s226 + $0x74] sm:$0x3]
      %v1530 = vld [vmem:[%s226 + $0x80] sm:$0x3]
      %v1531 = vld [vmem:[%s226 + $0x8c] sm:$0x3]
      %v1532 = vld [vmem:[%s226 + $0x98] sm:$0x3]
      %v1533 = vld [vmem:[%s226 + $0xa4] sm:$0x3]
      %v1534 = vld [vmem:[%s226 + $0xb0] sm:$0x3]
      %v1535 = vld [vmem:[%s226 + $0xbc] sm:$0x3]
      %vm1536 = vsmask.f32 2304
      %vm1537 = vsmask.f32 6416
      %vm1538 = vmor %vm1536, %vm1537
      %v1540 = vshrl.u32 %v1135, 16
      %v1542 = vrot.slane %v1540, 5
      %v1543 = vshll.u32 %v1135, 16
      %v1545 = vrot.slane %v1543, 6
      %v1546 = vor.u32 %v1542, %v1545
      %v1547 = vrot.slane %v1546, 4
      %v1548 = vrot.slane %v353, 5
      %v1549 = vrot.slane %v349, 6
      %v1550 = vor.u32 %v1548, %v1549
      %v1551 = vsel %vm1538, %v1547, %v1550
      %v1552 = vrot.slane %v1550, 4
      %v1554 = vshrl.u32 %v1520, 16
      %v1556 = vrot.slane %v1554, 5
      %v1557 = vshll.u32 %v1520, 16
      %v1559 = vrot.slane %v1557, 6
      %v1560 = vor.u32 %v1556, %v1559
      %v1561 = vsel %vm1538, %v1552, %v1560
      %v1563 = vshrl.u32 %v1136, 16
      %v1565 = vrot.slane %v1563, 5
      %v1566 = vshll.u32 %v1136, 16
      %v1568 = vrot.slane %v1566, 6
      %v1569 = vor.u32 %v1565, %v1568
      %v1570 = vrot.slane %v1569, 4
      %v1571 = vrot.slane %v377, 5
      %v1572 = vrot.slane %v373, 6
      %v1573 = vor.u32 %v1571, %v1572
      %v1574 = vsel %vm1538, %v1570, %v1573
      %v1575 = vrot.slane %v1573, 4
      %v1577 = vshrl.u32 %v1521, 16
      %v1579 = vrot.slane %v1577, 5
      %v1580 = vshll.u32 %v1521, 16
      %v1582 = vrot.slane %v1580, 6
      %v1583 = vor.u32 %v1579, %v1582
      %v1584 = vsel %vm1538, %v1575, %v1583
      %v1586 = vshrl.u32 %v1137, 16
      %v1588 = vrot.slane %v1586, 5
      %v1589 = vshll.u32 %v1137, 16
      %v1591 = vrot.slane %v1589, 6
      %v1592 = vor.u32 %v1588, %v1591
      %v1593 = vrot.slane %v1592, 4
      %v1594 = vrot.slane %v401, 5
      %v1595 = vrot.slane %v397, 6
      %v1596 = vor.u32 %v1594, %v1595
      %v1597 = vsel %vm1538, %v1593, %v1596
      %v1598 = vrot.slane %v1596, 4
      %v1600 = vshrl.u32 %v1522, 16
      %v1602 = vrot.slane %v1600, 5
      %v1603 = vshll.u32 %v1522, 16
      %v1605 = vrot.slane %v1603, 6
      %v1606 = vor.u32 %v1602, %v1605
      %v1607 = vsel %vm1538, %v1598, %v1606
      %v1609 = vshrl.u32 %v1138, 16
      %v1611 = vrot.slane %v1609, 5
      %v1612 = vshll.u32 %v1138, 16
      %v1614 = vrot.slane %v1612, 6
      %v1615 = vor.u32 %v1611, %v1614
      %v1616 = vrot.slane %v1615, 4
      %v1617 = vrot.slane %v425, 5
      %v1618 = vrot.slane %v421, 6
      %v1619 = vor.u32 %v1617, %v1618
      %v1620 = vsel %vm1538, %v1616, %v1619
      %v1621 = vrot.slane %v1619, 4
      %v1623 = vshrl.u32 %v1523, 16
      %v1625 = vrot.slane %v1623, 5
      %v1626 = vshll.u32 %v1523, 16
      %v1628 = vrot.slane %v1626, 6
      %v1629 = vor.u32 %v1625, %v1628
      %v1630 = vsel %vm1538, %v1621, %v1629
      %v1632 = vshrl.u32 %v1139, 16
      %v1634 = vrot.slane %v1632, 5
      %v1635 = vshll.u32 %v1139, 16
      %v1637 = vrot.slane %v1635, 6
      %v1638 = vor.u32 %v1634, %v1637
      %v1639 = vrot.slane %v1638, 4
      %v1640 = vrot.slane %v449, 5
      %v1641 = vrot.slane %v445, 6
      %v1642 = vor.u32 %v1640, %v1641
      %v1643 = vsel %vm1538, %v1639, %v1642
      %v1644 = vrot.slane %v1642, 4
      %v1646 = vshrl.u32 %v1524, 16
      %v1648 = vrot.slane %v1646, 5
      %v1649 = vshll.u32 %v1524, 16
      %v1651 = vrot.slane %v1649, 6
      %v1652 = vor.u32 %v1648, %v1651
      %v1653 = vsel %vm1538, %v1644, %v1652
      %v1655 = vshrl.u32 %v1140, 16
      %v1657 = vrot.slane %v1655, 5
      %v1658 = vshll.u32 %v1140, 16
      %v1660 = vrot.slane %v1658, 6
      %v1661 = vor.u32 %v1657, %v1660
      %v1662 = vrot.slane %v1661, 4
      %v1663 = vrot.slane %v473, 5
      %v1664 = vrot.slane %v469, 6
      %v1665 = vor.u32 %v1663, %v1664
      %v1666 = vsel %vm1538, %v1662, %v1665
      %v1667 = vrot.slane %v1665, 4
      %v1669 = vshrl.u32 %v1525, 16
      %v1671 = vrot.slane %v1669, 5
      %v1672 = vshll.u32 %v1525, 16
      %v1674 = vrot.slane %v1672, 6
      %v1675 = vor.u32 %v1671, %v1674
      %v1676 = vsel %vm1538, %v1667, %v1675
      %v1678 = vshrl.u32 %v1141, 16
      %v1680 = vrot.slane %v1678, 5
      %v1681 = vshll.u32 %v1141, 16
      %v1683 = vrot.slane %v1681, 6
      %v1684 = vor.u32 %v1680, %v1683
      %v1685 = vrot.slane %v1684, 4
      %v1686 = vrot.slane %v497, 5
      %v1687 = vrot.slane %v493, 6
      %v1688 = vor.u32 %v1686, %v1687
      %v1689 = vsel %vm1538, %v1685, %v1688
      %v1690 = vrot.slane %v1688, 4
      %v1692 = vshrl.u32 %v1526, 16
      %v1694 = vrot.slane %v1692, 5
      %v1695 = vshll.u32 %v1526, 16
      %v1697 = vrot.slane %v1695, 6
      %v1698 = vor.u32 %v1694, %v1697
      %v1699 = vsel %vm1538, %v1690, %v1698
      %v1701 = vshrl.u32 %v1142, 16
      %v1703 = vrot.slane %v1701, 5
      %v1704 = vshll.u32 %v1142, 16
      %v1706 = vrot.slane %v1704, 6
      %v1707 = vor.u32 %v1703, %v1706
      %v1708 = vrot.slane %v1707, 4
      %v1709 = vrot.slane %v521, 5
      %v1710 = vrot.slane %v517, 6
      %v1711 = vor.u32 %v1709, %v1710
      %v1712 = vsel %vm1538, %v1708, %v1711
      %v1713 = vrot.slane %v1711, 4
      %v1715 = vshrl.u32 %v1527, 16
      %v1717 = vrot.slane %v1715, 5
      %v1718 = vshll.u32 %v1527, 16
      %v1720 = vrot.slane %v1718, 6
      %v1721 = vor.u32 %v1717, %v1720
      %v1722 = vsel %vm1538, %v1713, %v1721
      %v1724 = vshrl.u32 %v1143, 16
      %v1726 = vrot.slane %v1724, 5
      %v1727 = vshll.u32 %v1143, 16
      %v1729 = vrot.slane %v1727, 6
      %v1730 = vor.u32 %v1726, %v1729
      %v1731 = vrot.slane %v1730, 4
      %v1732 = vrot.slane %v545, 5
      %v1733 = vrot.slane %v541, 6
      %v1734 = vor.u32 %v1732, %v1733
      %v1735 = vsel %vm1538, %v1731, %v1734
      %v1736 = vrot.slane %v1734, 4
      %v1738 = vshrl.u32 %v1528, 16
      %v1740 = vrot.slane %v1738, 5
      %v1741 = vshll.u32 %v1528, 16
      %v1743 = vrot.slane %v1741, 6
      %v1744 = vor.u32 %v1740, %v1743
      %v1745 = vsel %vm1538, %v1736, %v1744
      %v1747 = vshrl.u32 %v1144, 16
      %v1749 = vrot.slane %v1747, 5
      %v1750 = vshll.u32 %v1144, 16
      %v1752 = vrot.slane %v1750, 6
      %v1753 = vor.u32 %v1749, %v1752
      %v1754 = vrot.slane %v1753, 4
      %v1755 = vrot.slane %v569, 5
      %v1756 = vrot.slane %v565, 6
      %v1757 = vor.u32 %v1755, %v1756
      %v1758 = vsel %vm1538, %v1754, %v1757
      %v1759 = vrot.slane %v1757, 4
      %v1761 = vshrl.u32 %v1529, 16
      %v1763 = vrot.slane %v1761, 5
      %v1764 = vshll.u32 %v1529, 16
      %v1766 = vrot.slane %v1764, 6
      %v1767 = vor.u32 %v1763, %v1766
      %v1768 = vsel %vm1538, %v1759, %v1767
      %v1770 = vshrl.u32 %v1145, 16
      %v1772 = vrot.slane %v1770, 5
      %v1773 = vshll.u32 %v1145, 16
      %v1775 = vrot.slane %v1773, 6
      %v1776 = vor.u32 %v1772, %v1775
      %v1777 = vrot.slane %v1776, 4
      %v1778 = vrot.slane %v593, 5
      %v1779 = vrot.slane %v589, 6
      %v1780 = vor.u32 %v1778, %v1779
      %v1781 = vsel %vm1538, %v1777, %v1780
      %v1782 = vrot.slane %v1780, 4
      %v1784 = vshrl.u32 %v1530, 16
      %v1786 = vrot.slane %v1784, 5
      %v1787 = vshll.u32 %v1530, 16
      %v1789 = vrot.slane %v1787, 6
      %v1790 = vor.u32 %v1786, %v1789
      %v1791 = vsel %vm1538, %v1782, %v1790
      %v1793 = vshrl.u32 %v1146, 16
      %v1795 = vrot.slane %v1793, 5
      %v1796 = vshll.u32 %v1146, 16
      %v1798 = vrot.slane %v1796, 6
      %v1799 = vor.u32 %v1795, %v1798
      %v1800 = vrot.slane %v1799, 4
      %v1801 = vrot.slane %v617, 5
      %v1802 = vrot.slane %v613, 6
      %v1803 = vor.u32 %v1801, %v1802
      %v1804 = vsel %vm1538, %v1800, %v1803
      %v1805 = vrot.slane %v1803, 4
      %v1807 = vshrl.u32 %v1531, 16
      %v1809 = vrot.slane %v1807, 5
      %v1810 = vshll.u32 %v1531, 16
      %v1812 = vrot.slane %v1810, 6
      %v1813 = vor.u32 %v1809, %v1812
      %v1814 = vsel %vm1538, %v1805, %v1813
      %v1816 = vshrl.u32 %v1147, 16
      %v1818 = vrot.slane %v1816, 5
      %v1819 = vshll.u32 %v1147, 16
      %v1821 = vrot.slane %v1819, 6
      %v1822 = vor.u32 %v1818, %v1821
      %v1823 = vrot.slane %v1822, 4
      %v1824 = vrot.slane %v641, 5
      %v1825 = vrot.slane %v637, 6
      %v1826 = vor.u32 %v1824, %v1825
      %v1827 = vsel %vm1538, %v1823, %v1826
      %v1828 = vrot.slane %v1826, 4
      %v1830 = vshrl.u32 %v1532, 16
      %v1832 = vrot.slane %v1830, 5
      %v1833 = vshll.u32 %v1532, 16
      %v1835 = vrot.slane %v1833, 6
      %v1836 = vor.u32 %v1832, %v1835
      %v1837 = vsel %vm1538, %v1828, %v1836
      %v1839 = vshrl.u32 %v1148, 16
      %v1841 = vrot.slane %v1839, 5
      %v1842 = vshll.u32 %v1148, 16
      %v1844 = vrot.slane %v1842, 6
      %v1845 = vor.u32 %v1841, %v1844
      %v1846 = vrot.slane %v1845, 4
      %v1847 = vrot.slane %v665, 5
      %v1848 = vrot.slane %v661, 6
      %v1849 = vor.u32 %v1847, %v1848
      %v1850 = vsel %vm1538, %v1846, %v1849
      %v1851 = vrot.slane %v1849, 4
      %v1853 = vshrl.u32 %v1533, 16
      %v1855 = vrot.slane %v1853, 5
      %v1856 = vshll.u32 %v1533, 16
      %v1858 = vrot.slane %v1856, 6
      %v1859 = vor.u32 %v1855, %v1858
      %v1860 = vsel %vm1538, %v1851, %v1859
      %v1862 = vshrl.u32 %v1149, 16
      %v1864 = vrot.slane %v1862, 5
      %v1865 = vshll.u32 %v1149, 16
      %v1867 = vrot.slane %v1865, 6
      %v1868 = vor.u32 %v1864, %v1867
      %v1869 = vrot.slane %v1868, 4
      %v1870 = vrot.slane %v689, 5
      %v1871 = vrot.slane %v685, 6
      %v1872 = vor.u32 %v1870, %v1871
      %v1873 = vsel %vm1538, %v1869, %v1872
      %v1874 = vrot.slane %v1872, 4
      %v1876 = vshrl.u32 %v1534, 16
      %v1878 = vrot.slane %v1876, 5
      %v1879 = vshll.u32 %v1534, 16
      %v1881 = vrot.slane %v1879, 6
      %v1882 = vor.u32 %v1878, %v1881
      %v1883 = vsel %vm1538, %v1874, %v1882
      %v1885 = vshrl.u32 %v1150, 16
      %v1887 = vrot.slane %v1885, 5
      %v1888 = vshll.u32 %v1150, 16
      %v1890 = vrot.slane %v1888, 6
      %v1891 = vor.u32 %v1887, %v1890
      %v1892 = vrot.slane %v1891, 4
      %v1893 = vrot.slane %v713, 5
      %v1894 = vrot.slane %v709, 6
      %v1895 = vor.u32 %v1893, %v1894
      %v1896 = vsel %vm1538, %v1892, %v1895
      %v1897 = vrot.slane %v1895, 4
      %v1899 = vshrl.u32 %v1535, 16
      %v1901 = vrot.slane %v1899, 5
      %v1902 = vshll.u32 %v1535, 16
      %v1904 = vrot.slane %v1902, 6
      %v1905 = vor.u32 %v1901, %v1904
      %v1906 = vsel %vm1538, %v1897, %v1905
      %s1907 = scalar_lea.vmem %s234, 6
      %v1908 = vld [vmem:[%s1907] sm:$0x3]
      %v1909 = vunpack.c.l.b16 %v1551
      %v1910 = vunpack.c.l.b16 %v1561
      %v1911 = vunpack.c.l.b16 %v1574
      %v1912 = vunpack.c.l.b16 %v1584
      %v1913 = vunpack.c.l.b16 %v1597
      %v1914 = vunpack.c.l.b16 %v1607
      %v1915 = vunpack.c.l.b16 %v1620
      %v1916 = vunpack.c.l.b16 %v1630
      %v1917 = vunpack.c.l.b16 %v1643
      %v1918 = vunpack.c.l.b16 %v1653
      %v1919 = vunpack.c.l.b16 %v1666
      %v1920 = vunpack.c.l.b16 %v1676
      %v1921 = vunpack.c.l.b16 %v1689
      %v1922 = vunpack.c.l.b16 %v1699
      %v1923 = vunpack.c.l.b16 %v1712
      %v1924 = vunpack.c.l.b16 %v1722
      %v1925 = vunpack.c.l.b16 %v1735
      %v1926 = vunpack.c.l.b16 %v1745
      %v1927 = vunpack.c.l.b16 %v1758
      %v1928 = vunpack.c.l.b16 %v1768
      %v1929 = vunpack.c.l.b16 %v1781
      %v1930 = vunpack.c.l.b16 %v1791
      %v1931 = vunpack.c.l.b16 %v1804
      %v1932 = vunpack.c.l.b16 %v1814
      %v1933 = vunpack.c.l.b16 %v1827
      %v1934 = vunpack.c.l.b16 %v1837
      %v1935 = vunpack.c.l.b16 %v1850
      %v1936 = vunpack.c.l.b16 %v1860
      %v1937 = vunpack.c.l.b16 %v1873
      %v1938 = vunpack.c.l.b16 %v1883
      %v1939 = vunpack.c.l.b16 %v1896
      %v1940 = vunpack.c.l.b16 %v1906
      %v1941 = vpack.c.b16 %v1910, %v1909
      %v1942 = vpack.c.b16 %v1912, %v1911
      %v1943 = vpack.c.b16 %v1914, %v1913
      %v1944 = vpack.c.b16 %v1916, %v1915
      %v1945 = vpack.c.b16 %v1918, %v1917
      %v1946 = vpack.c.b16 %v1920, %v1919
      %v1947 = vpack.c.b16 %v1922, %v1921
      %v1948 = vpack.c.b16 %v1924, %v1923
      %v1949 = vpack.c.b16 %v1926, %v1925
      %v1950 = vpack.c.b16 %v1928, %v1927
      %v1951 = vpack.c.b16 %v1930, %v1929
      %v1952 = vpack.c.b16 %v1932, %v1931
      %v1953 = vpack.c.b16 %v1934, %v1933
      %v1954 = vpack.c.b16 %v1936, %v1935
      %v1955 = vpack.c.b16 %v1938, %v1937
      %v1956 = vpack.c.b16 %v1940, %v1939
      %v1958 = vsel %vm773, %v1941, 0
      %v1961 = vsel %vm773, %v1942, 0
      %v1964 = vsel %vm773, %v1943, 0
      %v1967 = vsel %vm773, %v1944, 0
      %v1970 = vsel %vm773, %v1945, 0
      %v1973 = vsel %vm773, %v1946, 0
      %v1976 = vsel %vm773, %v1947, 0
      %v1979 = vsel %vm773, %v1948, 0
      %v1982 = vsel %vm773, %v1949, 0
      %v1985 = vsel %vm773, %v1950, 0
      %v1988 = vsel %vm773, %v1951, 0
      %v1991 = vsel %vm773, %v1952, 0
      %v1994 = vsel %vm773, %v1953, 0
      %v1997 = vsel %vm773, %v1954, 0
      %v2000 = vsel %vm773, %v1955, 0
      %v2003 = vsel %vm773, %v1956, 0
      %v2006 = vsel %vm822, %v1908, 0
      %2008 = vmatpush.bf16.msra.mxu0 0
      %2009 = vmatpush.bf16.msra.mxu0 0
      %2010 = vmatpush.bf16.msra.mxu0 0
      %2011 = vmatpush.bf16.msra.mxu0 0
      %2012 = vmatpush.bf16.msra.mxu0 0
      %2013 = vmatpush.bf16.msra.mxu0 0
      %2014 = vmatpush.bf16.msra.mxu0 0
      %2015 = vmatpush.bf16.msra.mxu0 %v2006
      %2016 = vmatmul.bf16.gmra.mxu0 %v1958
      %v2017 = vpop.f32.mrf.mxu0
      %v2018 = vadd.f32 0.0, %v2017
      %v2019 = vpop.f32.mrf.mxu0
      %v2020 = vadd.f32 0.0, %v2019
      %2021 = vmatmul.bf16.gmra.mxu0 %v1961
      %v2022 = vpop.f32.mrf.mxu0
      %v2023 = vadd.f32 0.0, %v2022
      %v2024 = vpop.f32.mrf.mxu0
      %v2025 = vadd.f32 0.0, %v2024
      %2026 = vmatmul.bf16.gmra.mxu0 %v1964
      %v2027 = vpop.f32.mrf.mxu0
      %v2028 = vadd.f32 0.0, %v2027
      %v2029 = vpop.f32.mrf.mxu0
      %v2030 = vadd.f32 0.0, %v2029
      %2031 = vmatmul.bf16.gmra.mxu0 %v1967
      %v2032 = vpop.f32.mrf.mxu0
      %v2033 = vadd.f32 0.0, %v2032
      %v2034 = vpop.f32.mrf.mxu0
      %v2035 = vadd.f32 0.0, %v2034
      %2036 = vmatmul.bf16.gmra.mxu0 %v1970
      %v2037 = vpop.f32.mrf.mxu0
      %v2038 = vadd.f32 0.0, %v2037
      %v2039 = vpop.f32.mrf.mxu0
      %v2040 = vadd.f32 0.0, %v2039
      %2041 = vmatmul.bf16.gmra.mxu0 %v1973
      %v2042 = vpop.f32.mrf.mxu0
      %v2043 = vadd.f32 0.0, %v2042
      %v2044 = vpop.f32.mrf.mxu0
      %v2045 = vadd.f32 0.0, %v2044
      %2046 = vmatmul.bf16.gmra.mxu0 %v1976
      %v2047 = vpop.f32.mrf.mxu0
      %v2048 = vadd.f32 0.0, %v2047
      %v2049 = vpop.f32.mrf.mxu0
      %v2050 = vadd.f32 0.0, %v2049
      %2051 = vmatmul.bf16.gmra.mxu0 %v1979
      %v2052 = vpop.f32.mrf.mxu0
      %v2053 = vadd.f32 0.0, %v2052
      %v2054 = vpop.f32.mrf.mxu0
      %v2055 = vadd.f32 0.0, %v2054
      %2056 = vmatmul.bf16.gmra.mxu0 %v1982
      %v2057 = vpop.f32.mrf.mxu0
      %v2058 = vadd.f32 0.0, %v2057
      %v2059 = vpop.f32.mrf.mxu0
      %v2060 = vadd.f32 0.0, %v2059
      %2061 = vmatmul.bf16.gmra.mxu0 %v1985
      %v2062 = vpop.f32.mrf.mxu0
      %v2063 = vadd.f32 0.0, %v2062
      %v2064 = vpop.f32.mrf.mxu0
      %v2065 = vadd.f32 0.0, %v2064
      %2066 = vmatmul.bf16.gmra.mxu0 %v1988
      %v2067 = vpop.f32.mrf.mxu0
      %v2068 = vadd.f32 0.0, %v2067
      %v2069 = vpop.f32.mrf.mxu0
      %v2070 = vadd.f32 0.0, %v2069
      %2071 = vmatmul.bf16.gmra.mxu0 %v1991
      %v2072 = vpop.f32.mrf.mxu0
      %v2073 = vadd.f32 0.0, %v2072
      %v2074 = vpop.f32.mrf.mxu0
      %v2075 = vadd.f32 0.0, %v2074
      %2076 = vmatmul.bf16.gmra.mxu0 %v1994
      %v2077 = vpop.f32.mrf.mxu0
      %v2078 = vadd.f32 0.0, %v2077
      %v2079 = vpop.f32.mrf.mxu0
      %v2080 = vadd.f32 0.0, %v2079
      %2081 = vmatmul.bf16.gmra.mxu0 %v1997
      %v2082 = vpop.f32.mrf.mxu0
      %v2083 = vadd.f32 0.0, %v2082
      %v2084 = vpop.f32.mrf.mxu0
      %v2085 = vadd.f32 0.0, %v2084
      %2086 = vmatmul.bf16.gmra.mxu0 %v2000
      %v2087 = vpop.f32.mrf.mxu0
      %v2088 = vadd.f32 0.0, %v2087
      %v2089 = vpop.f32.mrf.mxu0
      %v2090 = vadd.f32 0.0, %v2089
      %2091 = vmatmul.bf16.gmra.mxu0 %v2003
      %v2092 = vpop.f32.mrf.mxu0
      %v2093 = vadd.f32 0.0, %v2092
      %v2094 = vpop.f32.mrf.mxu0
      %v2095 = vadd.f32 0.0, %v2094
      %2096 = vdwg.mxu0
      %v2097 = vadd.f32 %v1488, %v2018
      %v2098 = vadd.f32 %v1489, %v2020
      %v2099 = vadd.f32 %v1490, %v2023
      %v2100 = vadd.f32 %v1491, %v2025
      %v2101 = vadd.f32 %v1492, %v2028
      %v2102 = vadd.f32 %v1493, %v2030
      %v2103 = vadd.f32 %v1494, %v2033
      %v2104 = vadd.f32 %v1495, %v2035
      %v2105 = vadd.f32 %v1496, %v2038
      %v2106 = vadd.f32 %v1497, %v2040
      %v2107 = vadd.f32 %v1498, %v2043
      %v2108 = vadd.f32 %v1499, %v2045
      %v2109 = vadd.f32 %v1500, %v2048
      %v2110 = vadd.f32 %v1501, %v2050
      %v2111 = vadd.f32 %v1502, %v2053
      %v2112 = vadd.f32 %v1503, %v2055
      %v2113 = vadd.f32 %v1504, %v2058
      %v2114 = vadd.f32 %v1505, %v2060
      %v2115 = vadd.f32 %v1506, %v2063
      %v2116 = vadd.f32 %v1507, %v2065
      %v2117 = vadd.f32 %v1508, %v2068
      %v2118 = vadd.f32 %v1509, %v2070
      %v2119 = vadd.f32 %v1510, %v2073
      %v2120 = vadd.f32 %v1511, %v2075
      %v2121 = vadd.f32 %v1512, %v2078
      %v2122 = vadd.f32 %v1513, %v2080
      %v2123 = vadd.f32 %v1514, %v2083
      %v2124 = vadd.f32 %v1515, %v2085
      %v2125 = vadd.f32 %v1516, %v2088
      %v2126 = vadd.f32 %v1517, %v2090
      %v2127 = vadd.f32 %v1518, %v2093
      %v2128 = vadd.f32 %v1519, %v2095
      %v2129 = vld [vmem:[%s226] sm:$0xc]
      %v2130 = vld [vmem:[%s226 + $0xc] sm:$0xc]
      %v2131 = vld [vmem:[%s226 + $0x18] sm:$0xc]
      %v2132 = vld [vmem:[%s226 + $0x24] sm:$0xc]
      %v2133 = vld [vmem:[%s226 + $0x30] sm:$0xc]
      %v2134 = vld [vmem:[%s226 + $0x3c] sm:$0xc]
      %v2135 = vld [vmem:[%s226 + $0x48] sm:$0xc]
      %v2136 = vld [vmem:[%s226 + $0x54] sm:$0xc]
      %v2137 = vld [vmem:[%s226 + $0x60] sm:$0xc]
      %v2138 = vld [vmem:[%s226 + $0x6c] sm:$0xc]
      %v2139 = vld [vmem:[%s226 + $0x78] sm:$0xc]
      %v2140 = vld [vmem:[%s226 + $0x84] sm:$0xc]
      %v2141 = vld [vmem:[%s226 + $0x90] sm:$0xc]
      %v2142 = vld [vmem:[%s226 + $0x9c] sm:$0xc]
      %v2143 = vld [vmem:[%s226 + $0xa8] sm:$0xc]
      %v2144 = vld [vmem:[%s226 + $0xb4] sm:$0xc]
      %vm2177 = vcmask 1041408
      %vm2178 = vcmask 1045508
      %vm2179 = vmor %vm2177, %vm2178
      %v2180 = vrot.slane %v2129, 6
      %v2181 = vrot.slane %v2180, 4
      %v2182 = vrot.slane %v288, 6
      %v2183 = vsel %vm2179, %v2181, %v2182
      %v2184 = vrot.slane %v2182, 4
      %v2185 = vrot.slane %v1520, 6
      %v2186 = vsel %vm2179, %v2184, %v2185
      %v2187 = vrot.slane %v2130, 6
      %v2188 = vrot.slane %v2187, 4
      %v2189 = vrot.slane %v290, 6
      %v2190 = vsel %vm2179, %v2188, %v2189
      %v2191 = vrot.slane %v2189, 4
      %v2192 = vrot.slane %v1521, 6
      %v2193 = vsel %vm2179, %v2191, %v2192
      %v2194 = vrot.slane %v2131, 6
      %v2195 = vrot.slane %v2194, 4
      %v2196 = vrot.slane %v292, 6
      %v2197 = vsel %vm2179, %v2195, %v2196
      %v2198 = vrot.slane %v2196, 4
      %v2199 = vrot.slane %v1522, 6
      %v2200 = vsel %vm2179, %v2198, %v2199
      %v2201 = vrot.slane %v2132, 6
      %v2202 = vrot.slane %v2201, 4
      %v2203 = vrot.slane %v294, 6
      %v2204 = vsel %vm2179, %v2202, %v2203
      %v2205 = vrot.slane %v2203, 4
      %v2206 = vrot.slane %v1523, 6
      %v2207 = vsel %vm2179, %v2205, %v2206
      %v2208 = vrot.slane %v2133, 6
      %v2209 = vrot.slane %v2208, 4
      %v2210 = vrot.slane %v296, 6
      %v2211 = vsel %vm2179, %v2209, %v2210
      %v2212 = vrot.slane %v2210, 4
      %v2213 = vrot.slane %v1524, 6
      %v2214 = vsel %vm2179, %v2212, %v2213
      %v2215 = vrot.slane %v2134, 6
      %v2216 = vrot.slane %v2215, 4
      %v2217 = vrot.slane %v298, 6
      %v2218 = vsel %vm2179, %v2216, %v2217
      %v2219 = vrot.slane %v2217, 4
      %v2220 = vrot.slane %v1525, 6
      %v2221 = vsel %vm2179, %v2219, %v2220
      %v2222 = vrot.slane %v2135, 6
      %v2223 = vrot.slane %v2222, 4
      %v2224 = vrot.slane %v300, 6
      %v2225 = vsel %vm2179, %v2223, %v2224
      %v2226 = vrot.slane %v2224, 4
      %v2227 = vrot.slane %v1526, 6
      %v2228 = vsel %vm2179, %v2226, %v2227
      %v2229 = vrot.slane %v2136, 6
      %v2230 = vrot.slane %v2229, 4
      %v2231 = vrot.slane %v302, 6
      %v2232 = vsel %vm2179, %v2230, %v2231
      %v2233 = vrot.slane %v2231, 4
      %v2234 = vrot.slane %v1527, 6
      %v2235 = vsel %vm2179, %v2233, %v2234
      %v2236 = vrot.slane %v2137, 6
      %v2237 = vrot.slane %v2236, 4
      %v2238 = vrot.slane %v304, 6
      %v2239 = vsel %vm2179, %v2237, %v2238
      %v2240 = vrot.slane %v2238, 4
      %v2241 = vrot.slane %v1528, 6
      %v2242 = vsel %vm2179, %v2240, %v2241
      %v2243 = vrot.slane %v2138, 6
      %v2244 = vrot.slane %v2243, 4
      %v2245 = vrot.slane %v306, 6
      %v2246 = vsel %vm2179, %v2244, %v2245
      %v2247 = vrot.slane %v2245, 4
      %v2248 = vrot.slane %v1529, 6
      %v2249 = vsel %vm2179, %v2247, %v2248
      %v2250 = vrot.slane %v2139, 6
      %v2251 = vrot.slane %v2250, 4
      %v2252 = vrot.slane %v308, 6
      %v2253 = vsel %vm2179, %v2251, %v2252
      %v2254 = vrot.slane %v2252, 4
      %v2255 = vrot.slane %v1530, 6
      %v2256 = vsel %vm2179, %v2254, %v2255
      %v2257 = vrot.slane %v2140, 6
      %v2258 = vrot.slane %v2257, 4
      %v2259 = vrot.slane %v310, 6
      %v2260 = vsel %vm2179, %v2258, %v2259
      %v2261 = vrot.slane %v2259, 4
      %v2262 = vrot.slane %v1531, 6
      %v2263 = vsel %vm2179, %v2261, %v2262
      %v2264 = vrot.slane %v2141, 6
      %v2265 = vrot.slane %v2264, 4
      %v2266 = vrot.slane %v312, 6
      %v2267 = vsel %vm2179, %v2265, %v2266
      %v2268 = vrot.slane %v2266, 4
      %v2269 = vrot.slane %v1532, 6
      %v2270 = vsel %vm2179, %v2268, %v2269
      %v2271 = vrot.slane %v2142, 6
      %v2272 = vrot.slane %v2271, 4
      %v2273 = vrot.slane %v314, 6
      %v2274 = vsel %vm2179, %v2272, %v2273
      %v2275 = vrot.slane %v2273, 4
      %v2276 = vrot.slane %v1533, 6
      %v2277 = vsel %vm2179, %v2275, %v2276
      %v2278 = vrot.slane %v2143, 6
      %v2279 = vrot.slane %v2278, 4
      %v2280 = vrot.slane %v316, 6
      %v2281 = vsel %vm2179, %v2279, %v2280
      %v2282 = vrot.slane %v2280, 4
      %v2283 = vrot.slane %v1534, 6
      %v2284 = vsel %vm2179, %v2282, %v2283
      %v2285 = vrot.slane %v2144, 6
      %v2286 = vrot.slane %v2285, 4
      %v2287 = vrot.slane %v318, 6
      %v2288 = vsel %vm2179, %v2286, %v2287
      %v2289 = vrot.slane %v2287, 4
      %v2290 = vrot.slane %v1535, 6
      %v2291 = vsel %vm2179, %v2289, %v2290
      %s2292 = scalar_lea.vmem %s234, 8
      %v2293 = vld [vmem:[%s2292] sm:$0x3]
      %v2294 = vunpack.c.l.b16 %v2183
      %v2295 = vunpack.c.l.b16 %v2186
      %v2296 = vunpack.c.l.b16 %v2190
      %v2297 = vunpack.c.l.b16 %v2193
      %v2298 = vunpack.c.l.b16 %v2197
      %v2299 = vunpack.c.l.b16 %v2200
      %v2300 = vunpack.c.l.b16 %v2204
      %v2301 = vunpack.c.l.b16 %v2207
      %v2302 = vunpack.c.l.b16 %v2211
      %v2303 = vunpack.c.l.b16 %v2214
      %v2304 = vunpack.c.l.b16 %v2218
      %v2305 = vunpack.c.l.b16 %v2221
      %v2306 = vunpack.c.l.b16 %v2225
      %v2307 = vunpack.c.l.b16 %v2228
      %v2308 = vunpack.c.l.b16 %v2232
      %v2309 = vunpack.c.l.b16 %v2235
      %v2310 = vunpack.c.l.b16 %v2239
      %v2311 = vunpack.c.l.b16 %v2242
      %v2312 = vunpack.c.l.b16 %v2246
      %v2313 = vunpack.c.l.b16 %v2249
      %v2314 = vunpack.c.l.b16 %v2253
      %v2315 = vunpack.c.l.b16 %v2256
      %v2316 = vunpack.c.l.b16 %v2260
      %v2317 = vunpack.c.l.b16 %v2263
      %v2318 = vunpack.c.l.b16 %v2267
      %v2319 = vunpack.c.l.b16 %v2270
      %v2320 = vunpack.c.l.b16 %v2274
      %v2321 = vunpack.c.l.b16 %v2277
      %v2322 = vunpack.c.l.b16 %v2281
      %v2323 = vunpack.c.l.b16 %v2284
      %v2324 = vunpack.c.l.b16 %v2288
      %v2325 = vunpack.c.l.b16 %v2291
      %v2326 = vpack.c.b16 %v2295, %v2294
      %v2327 = vpack.c.b16 %v2297, %v2296
      %v2328 = vpack.c.b16 %v2299, %v2298
      %v2329 = vpack.c.b16 %v2301, %v2300
      %v2330 = vpack.c.b16 %v2303, %v2302
      %v2331 = vpack.c.b16 %v2305, %v2304
      %v2332 = vpack.c.b16 %v2307, %v2306
      %v2333 = vpack.c.b16 %v2309, %v2308
      %v2334 = vpack.c.b16 %v2311, %v2310
      %v2335 = vpack.c.b16 %v2313, %v2312
      %v2336 = vpack.c.b16 %v2315, %v2314
      %v2337 = vpack.c.b16 %v2317, %v2316
      %v2338 = vpack.c.b16 %v2319, %v2318
      %v2339 = vpack.c.b16 %v2321, %v2320
      %v2340 = vpack.c.b16 %v2323, %v2322
      %v2341 = vpack.c.b16 %v2325, %v2324
      %v2343 = vsel %vm773, %v2326, 0
      %v2346 = vsel %vm773, %v2327, 0
      %v2349 = vsel %vm773, %v2328, 0
      %v2352 = vsel %vm773, %v2329, 0
      %v2355 = vsel %vm773, %v2330, 0
      %v2358 = vsel %vm773, %v2331, 0
      %v2361 = vsel %vm773, %v2332, 0
      %v2364 = vsel %vm773, %v2333, 0
      %v2367 = vsel %vm773, %v2334, 0
      %v2370 = vsel %vm773, %v2335, 0
      %v2373 = vsel %vm773, %v2336, 0
      %v2376 = vsel %vm773, %v2337, 0
      %v2379 = vsel %vm773, %v2338, 0
      %v2382 = vsel %vm773, %v2339, 0
      %v2385 = vsel %vm773, %v2340, 0
      %v2388 = vsel %vm773, %v2341, 0
      %v2391 = vsel %vm822, %v2293, 0
      %2393 = vmatpush.bf16.msra.mxu0 0
      %2394 = vmatpush.bf16.msra.mxu0 0
      %2395 = vmatpush.bf16.msra.mxu0 0
      %2396 = vmatpush.bf16.msra.mxu0 0
      %2397 = vmatpush.bf16.msra.mxu0 0
      %2398 = vmatpush.bf16.msra.mxu0 0
      %2399 = vmatpush.bf16.msra.mxu0 0
      %2400 = vmatpush.bf16.msra.mxu0 %v2391
      %2401 = vmatmul.bf16.gmra.mxu0 %v2343
      %v2402 = vpop.f32.mrf.mxu0
      %v2403 = vadd.f32 0.0, %v2402
      %v2404 = vpop.f32.mrf.mxu0
      %v2405 = vadd.f32 0.0, %v2404
      %2406 = vmatmul.bf16.gmra.mxu0 %v2346
      %v2407 = vpop.f32.mrf.mxu0
      %v2408 = vadd.f32 0.0, %v2407
      %v2409 = vpop.f32.mrf.mxu0
      %v2410 = vadd.f32 0.0, %v2409
      %2411 = vmatmul.bf16.gmra.mxu0 %v2349
      %v2412 = vpop.f32.mrf.mxu0
      %v2413 = vadd.f32 0.0, %v2412
      %v2414 = vpop.f32.mrf.mxu0
      %v2415 = vadd.f32 0.0, %v2414
      %2416 = vmatmul.bf16.gmra.mxu0 %v2352
      %v2417 = vpop.f32.mrf.mxu0
      %v2418 = vadd.f32 0.0, %v2417
      %v2419 = vpop.f32.mrf.mxu0
      %v2420 = vadd.f32 0.0, %v2419
      %2421 = vmatmul.bf16.gmra.mxu0 %v2355
      %v2422 = vpop.f32.mrf.mxu0
      %v2423 = vadd.f32 0.0, %v2422
      %v2424 = vpop.f32.mrf.mxu0
      %v2425 = vadd.f32 0.0, %v2424
      %2426 = vmatmul.bf16.gmra.mxu0 %v2358
      %v2427 = vpop.f32.mrf.mxu0
      %v2428 = vadd.f32 0.0, %v2427
      %v2429 = vpop.f32.mrf.mxu0
      %v2430 = vadd.f32 0.0, %v2429
      %2431 = vmatmul.bf16.gmra.mxu0 %v2361
      %v2432 = vpop.f32.mrf.mxu0
      %v2433 = vadd.f32 0.0, %v2432
      %v2434 = vpop.f32.mrf.mxu0
      %v2435 = vadd.f32 0.0, %v2434
      %2436 = vmatmul.bf16.gmra.mxu0 %v2364
      %v2437 = vpop.f32.mrf.mxu0
      %v2438 = vadd.f32 0.0, %v2437
      %v2439 = vpop.f32.mrf.mxu0
      %v2440 = vadd.f32 0.0, %v2439
      %2441 = vmatmul.bf16.gmra.mxu0 %v2367
      %v2442 = vpop.f32.mrf.mxu0
      %v2443 = vadd.f32 0.0, %v2442
      %v2444 = vpop.f32.mrf.mxu0
      %v2445 = vadd.f32 0.0, %v2444
      %2446 = vmatmul.bf16.gmra.mxu0 %v2370
      %v2447 = vpop.f32.mrf.mxu0
      %v2448 = vadd.f32 0.0, %v2447
      %v2449 = vpop.f32.mrf.mxu0
      %v2450 = vadd.f32 0.0, %v2449
      %2451 = vmatmul.bf16.gmra.mxu0 %v2373
      %v2452 = vpop.f32.mrf.mxu0
      %v2453 = vadd.f32 0.0, %v2452
      %v2454 = vpop.f32.mrf.mxu0
      %v2455 = vadd.f32 0.0, %v2454
      %2456 = vmatmul.bf16.gmra.mxu0 %v2376
      %v2457 = vpop.f32.mrf.mxu0
      %v2458 = vadd.f32 0.0, %v2457
      %v2459 = vpop.f32.mrf.mxu0
      %v2460 = vadd.f32 0.0, %v2459
      %2461 = vmatmul.bf16.gmra.mxu0 %v2379
      %v2462 = vpop.f32.mrf.mxu0
      %v2463 = vadd.f32 0.0, %v2462
      %v2464 = vpop.f32.mrf.mxu0
      %v2465 = vadd.f32 0.0, %v2464
      %2466 = vmatmul.bf16.gmra.mxu0 %v2382
      %v2467 = vpop.f32.mrf.mxu0
      %v2468 = vadd.f32 0.0, %v2467
      %v2469 = vpop.f32.mrf.mxu0
      %v2470 = vadd.f32 0.0, %v2469
      %2471 = vmatmul.bf16.gmra.mxu0 %v2385
      %v2472 = vpop.f32.mrf.mxu0
      %v2473 = vadd.f32 0.0, %v2472
      %v2474 = vpop.f32.mrf.mxu0
      %v2475 = vadd.f32 0.0, %v2474
      %2476 = vmatmul.bf16.gmra.mxu0 %v2388
      %v2477 = vpop.f32.mrf.mxu0
      %v2478 = vadd.f32 0.0, %v2477
      %v2479 = vpop.f32.mrf.mxu0
      %v2480 = vadd.f32 0.0, %v2479
      %2481 = vdwg.mxu0
      %v2482 = vadd.f32 %v2097, %v2403
      %v2483 = vadd.f32 %v2098, %v2405
      %v2484 = vadd.f32 %v2099, %v2408
      %v2485 = vadd.f32 %v2100, %v2410
      %v2486 = vadd.f32 %v2101, %v2413
      %v2487 = vadd.f32 %v2102, %v2415
      %v2488 = vadd.f32 %v2103, %v2418
      %v2489 = vadd.f32 %v2104, %v2420
      %v2490 = vadd.f32 %v2105, %v2423
      %v2491 = vadd.f32 %v2106, %v2425
      %v2492 = vadd.f32 %v2107, %v2428
      %v2493 = vadd.f32 %v2108, %v2430
      %v2494 = vadd.f32 %v2109, %v2433
      %v2495 = vadd.f32 %v2110, %v2435
      %v2496 = vadd.f32 %v2111, %v2438
      %v2497 = vadd.f32 %v2112, %v2440
      %v2498 = vadd.f32 %v2113, %v2443
      %v2499 = vadd.f32 %v2114, %v2445
      %v2500 = vadd.f32 %v2115, %v2448
      %v2501 = vadd.f32 %v2116, %v2450
      %v2502 = vadd.f32 %v2117, %v2453
      %v2503 = vadd.f32 %v2118, %v2455
      %v2504 = vadd.f32 %v2119, %v2458
      %v2505 = vadd.f32 %v2120, %v2460
      %v2506 = vadd.f32 %v2121, %v2463
      %v2507 = vadd.f32 %v2122, %v2465
      %v2508 = vadd.f32 %v2123, %v2468
      %v2509 = vadd.f32 %v2124, %v2470
      %v2510 = vadd.f32 %v2125, %v2473
      %v2511 = vadd.f32 %v2126, %v2475
      %v2512 = vadd.f32 %v2127, %v2478
      %v2513 = vadd.f32 %v2128, %v2480
      %v2514 = vld [vmem:[%s226 + $0x8] sm:$0x7]
      %v2515 = vld [vmem:[%s226 + $0x14] sm:$0x7]
      %v2516 = vld [vmem:[%s226 + $0x20] sm:$0x7]
      %v2517 = vld [vmem:[%s226 + $0x2c] sm:$0x7]
      %v2518 = vld [vmem:[%s226 + $0x38] sm:$0x7]
      %v2519 = vld [vmem:[%s226 + $0x44] sm:$0x7]
      %v2520 = vld [vmem:[%s226 + $0x50] sm:$0x7]
      %v2521 = vld [vmem:[%s226 + $0x5c] sm:$0x7]
      %v2522 = vld [vmem:[%s226 + $0x68] sm:$0x7]
      %v2523 = vld [vmem:[%s226 + $0x74] sm:$0x7]
      %v2524 = vld [vmem:[%s226 + $0x80] sm:$0x7]
      %v2525 = vld [vmem:[%s226 + $0x8c] sm:$0x7]
      %v2526 = vld [vmem:[%s226 + $0x98] sm:$0x7]
      %v2527 = vld [vmem:[%s226 + $0xa4] sm:$0x7]
      %v2528 = vld [vmem:[%s226 + $0xb0] sm:$0x7]
      %v2529 = vld [vmem:[%s226 + $0xbc] sm:$0x7]
      %vm2530 = vsmask.f32 1280
      %vm2531 = vsmask.f32 5392
      %vm2532 = vmor %vm2530, %vm2531
      %v2534 = vshrl.u32 %v2129, 16
      %v2536 = vrot.slane %v2534, 6
      %v2537 = vshll.u32 %v2129, 16
      %v2539 = vrot.slane %v2537, 7
      %v2540 = vor.u32 %v2536, %v2539
      %v2541 = vrot.slane %v2540, 4
      %v2542 = vrot.slane %v353, 6
      %v2543 = vrot.slane %v349, 7
      %v2544 = vor.u32 %v2542, %v2543
      %v2545 = vsel %vm2532, %v2541, %v2544
      %v2546 = vrot.slane %v2544, 4
      %v2548 = vshrl.u32 %v2514, 16
      %v2550 = vrot.slane %v2548, 6
      %v2551 = vshll.u32 %v2514, 16
      %v2553 = vrot.slane %v2551, 7
      %v2554 = vor.u32 %v2550, %v2553
      %v2555 = vsel %vm2532, %v2546, %v2554
      %v2557 = vshrl.u32 %v2130, 16
      %v2559 = vrot.slane %v2557, 6
      %v2560 = vshll.u32 %v2130, 16
      %v2562 = vrot.slane %v2560, 7
      %v2563 = vor.u32 %v2559, %v2562
      %v2564 = vrot.slane %v2563, 4
      %v2565 = vrot.slane %v377, 6
      %v2566 = vrot.slane %v373, 7
      %v2567 = vor.u32 %v2565, %v2566
      %v2568 = vsel %vm2532, %v2564, %v2567
      %v2569 = vrot.slane %v2567, 4
      %v2571 = vshrl.u32 %v2515, 16
      %v2573 = vrot.slane %v2571, 6
      %v2574 = vshll.u32 %v2515, 16
      %v2576 = vrot.slane %v2574, 7
      %v2577 = vor.u32 %v2573, %v2576
      %v2578 = vsel %vm2532, %v2569, %v2577
      %v2580 = vshrl.u32 %v2131, 16
      %v2582 = vrot.slane %v2580, 6
      %v2583 = vshll.u32 %v2131, 16
      %v2585 = vrot.slane %v2583, 7
      %v2586 = vor.u32 %v2582, %v2585
      %v2587 = vrot.slane %v2586, 4
      %v2588 = vrot.slane %v401, 6
      %v2589 = vrot.slane %v397, 7
      %v2590 = vor.u32 %v2588, %v2589
      %v2591 = vsel %vm2532, %v2587, %v2590
      %v2592 = vrot.slane %v2590, 4
      %v2594 = vshrl.u32 %v2516, 16
      %v2596 = vrot.slane %v2594, 6
      %v2597 = vshll.u32 %v2516, 16
      %v2599 = vrot.slane %v2597, 7
      %v2600 = vor.u32 %v2596, %v2599
      %v2601 = vsel %vm2532, %v2592, %v2600
      %v2603 = vshrl.u32 %v2132, 16
      %v2605 = vrot.slane %v2603, 6
      %v2606 = vshll.u32 %v2132, 16
      %v2608 = vrot.slane %v2606, 7
      %v2609 = vor.u32 %v2605, %v2608
      %v2610 = vrot.slane %v2609, 4
      %v2611 = vrot.slane %v425, 6
      %v2612 = vrot.slane %v421, 7
      %v2613 = vor.u32 %v2611, %v2612
      %v2614 = vsel %vm2532, %v2610, %v2613
      %v2615 = vrot.slane %v2613, 4
      %v2617 = vshrl.u32 %v2517, 16
      %v2619 = vrot.slane %v2617, 6
      %v2620 = vshll.u32 %v2517, 16
      %v2622 = vrot.slane %v2620, 7
      %v2623 = vor.u32 %v2619, %v2622
      %v2624 = vsel %vm2532, %v2615, %v2623
      %v2626 = vshrl.u32 %v2133, 16
      %v2628 = vrot.slane %v2626, 6
      %v2629 = vshll.u32 %v2133, 16
      %v2631 = vrot.slane %v2629, 7
      %v2632 = vor.u32 %v2628, %v2631
      %v2633 = vrot.slane %v2632, 4
      %v2634 = vrot.slane %v449, 6
      %v2635 = vrot.slane %v445, 7
      %v2636 = vor.u32 %v2634, %v2635
      %v2637 = vsel %vm2532, %v2633, %v2636
      %v2638 = vrot.slane %v2636, 4
      %v2640 = vshrl.u32 %v2518, 16
      %v2642 = vrot.slane %v2640, 6
      %v2643 = vshll.u32 %v2518, 16
      %v2645 = vrot.slane %v2643, 7
      %v2646 = vor.u32 %v2642, %v2645
      %v2647 = vsel %vm2532, %v2638, %v2646
      %v2649 = vshrl.u32 %v2134, 16
      %v2651 = vrot.slane %v2649, 6
      %v2652 = vshll.u32 %v2134, 16
      %v2654 = vrot.slane %v2652, 7
      %v2655 = vor.u32 %v2651, %v2654
      %v2656 = vrot.slane %v2655, 4
      %v2657 = vrot.slane %v473, 6
      %v2658 = vrot.slane %v469, 7
      %v2659 = vor.u32 %v2657, %v2658
      %v2660 = vsel %vm2532, %v2656, %v2659
      %v2661 = vrot.slane %v2659, 4
      %v2663 = vshrl.u32 %v2519, 16
      %v2665 = vrot.slane %v2663, 6
      %v2666 = vshll.u32 %v2519, 16
      %v2668 = vrot.slane %v2666, 7
      %v2669 = vor.u32 %v2665, %v2668
      %v2670 = vsel %vm2532, %v2661, %v2669
      %v2672 = vshrl.u32 %v2135, 16
      %v2674 = vrot.slane %v2672, 6
      %v2675 = vshll.u32 %v2135, 16
      %v2677 = vrot.slane %v2675, 7
      %v2678 = vor.u32 %v2674, %v2677
      %v2679 = vrot.slane %v2678, 4
      %v2680 = vrot.slane %v497, 6
      %v2681 = vrot.slane %v493, 7
      %v2682 = vor.u32 %v2680, %v2681
      %v2683 = vsel %vm2532, %v2679, %v2682
      %v2684 = vrot.slane %v2682, 4
      %v2686 = vshrl.u32 %v2520, 16
      %v2688 = vrot.slane %v2686, 6
      %v2689 = vshll.u32 %v2520, 16
      %v2691 = vrot.slane %v2689, 7
      %v2692 = vor.u32 %v2688, %v2691
      %v2693 = vsel %vm2532, %v2684, %v2692
      %v2695 = vshrl.u32 %v2136, 16
      %v2697 = vrot.slane %v2695, 6
      %v2698 = vshll.u32 %v2136, 16
      %v2700 = vrot.slane %v2698, 7
      %v2701 = vor.u32 %v2697, %v2700
      %v2702 = vrot.slane %v2701, 4
      %v2703 = vrot.slane %v521, 6
      %v2704 = vrot.slane %v517, 7
      %v2705 = vor.u32 %v2703, %v2704
      %v2706 = vsel %vm2532, %v2702, %v2705
      %v2707 = vrot.slane %v2705, 4
      %v2709 = vshrl.u32 %v2521, 16
      %v2711 = vrot.slane %v2709, 6
      %v2712 = vshll.u32 %v2521, 16
      %v2714 = vrot.slane %v2712, 7
      %v2715 = vor.u32 %v2711, %v2714
      %v2716 = vsel %vm2532, %v2707, %v2715
      %v2718 = vshrl.u32 %v2137, 16
      %v2720 = vrot.slane %v2718, 6
      %v2721 = vshll.u32 %v2137, 16
      %v2723 = vrot.slane %v2721, 7
      %v2724 = vor.u32 %v2720, %v2723
      %v2725 = vrot.slane %v2724, 4
      %v2726 = vrot.slane %v545, 6
      %v2727 = vrot.slane %v541, 7
      %v2728 = vor.u32 %v2726, %v2727
      %v2729 = vsel %vm2532, %v2725, %v2728
      %v2730 = vrot.slane %v2728, 4
      %v2732 = vshrl.u32 %v2522, 16
      %v2734 = vrot.slane %v2732, 6
      %v2735 = vshll.u32 %v2522, 16
      %v2737 = vrot.slane %v2735, 7
      %v2738 = vor.u32 %v2734, %v2737
      %v2739 = vsel %vm2532, %v2730, %v2738
      %v2741 = vshrl.u32 %v2138, 16
      %v2743 = vrot.slane %v2741, 6
      %v2744 = vshll.u32 %v2138, 16
      %v2746 = vrot.slane %v2744, 7
      %v2747 = vor.u32 %v2743, %v2746
      %v2748 = vrot.slane %v2747, 4
      %v2749 = vrot.slane %v569, 6
      %v2750 = vrot.slane %v565, 7
      %v2751 = vor.u32 %v2749, %v2750
      %v2752 = vsel %vm2532, %v2748, %v2751
      %v2753 = vrot.slane %v2751, 4
      %v2755 = vshrl.u32 %v2523, 16
      %v2757 = vrot.slane %v2755, 6
      %v2758 = vshll.u32 %v2523, 16
      %v2760 = vrot.slane %v2758, 7
      %v2761 = vor.u32 %v2757, %v2760
      %v2762 = vsel %vm2532, %v2753, %v2761
      %v2764 = vshrl.u32 %v2139, 16
      %v2766 = vrot.slane %v2764, 6
      %v2767 = vshll.u32 %v2139, 16
      %v2769 = vrot.slane %v2767, 7
      %v2770 = vor.u32 %v2766, %v2769
      %v2771 = vrot.slane %v2770, 4
      %v2772 = vrot.slane %v593, 6
      %v2773 = vrot.slane %v589, 7
      %v2774 = vor.u32 %v2772, %v2773
      %v2775 = vsel %vm2532, %v2771, %v2774
      %v2776 = vrot.slane %v2774, 4
      %v2778 = vshrl.u32 %v2524, 16
      %v2780 = vrot.slane %v2778, 6
      %v2781 = vshll.u32 %v2524, 16
      %v2783 = vrot.slane %v2781, 7
      %v2784 = vor.u32 %v2780, %v2783
      %v2785 = vsel %vm2532, %v2776, %v2784
      %v2787 = vshrl.u32 %v2140, 16
      %v2789 = vrot.slane %v2787, 6
      %v2790 = vshll.u32 %v2140, 16
      %v2792 = vrot.slane %v2790, 7
      %v2793 = vor.u32 %v2789, %v2792
      %v2794 = vrot.slane %v2793, 4
      %v2795 = vrot.slane %v617, 6
      %v2796 = vrot.slane %v613, 7
      %v2797 = vor.u32 %v2795, %v2796
      %v2798 = vsel %vm2532, %v2794, %v2797
      %v2799 = vrot.slane %v2797, 4
      %v2801 = vshrl.u32 %v2525, 16
      %v2803 = vrot.slane %v2801, 6
      %v2804 = vshll.u32 %v2525, 16
      %v2806 = vrot.slane %v2804, 7
      %v2807 = vor.u32 %v2803, %v2806
      %v2808 = vsel %vm2532, %v2799, %v2807
      %v2810 = vshrl.u32 %v2141, 16
      %v2812 = vrot.slane %v2810, 6
      %v2813 = vshll.u32 %v2141, 16
      %v2815 = vrot.slane %v2813, 7
      %v2816 = vor.u32 %v2812, %v2815
      %v2817 = vrot.slane %v2816, 4
      %v2818 = vrot.slane %v641, 6
      %v2819 = vrot.slane %v637, 7
      %v2820 = vor.u32 %v2818, %v2819
      %v2821 = vsel %vm2532, %v2817, %v2820
      %v2822 = vrot.slane %v2820, 4
      %v2824 = vshrl.u32 %v2526, 16
      %v2826 = vrot.slane %v2824, 6
      %v2827 = vshll.u32 %v2526, 16
      %v2829 = vrot.slane %v2827, 7
      %v2830 = vor.u32 %v2826, %v2829
      %v2831 = vsel %vm2532, %v2822, %v2830
      %v2833 = vshrl.u32 %v2142, 16
      %v2835 = vrot.slane %v2833, 6
      %v2836 = vshll.u32 %v2142, 16
      %v2838 = vrot.slane %v2836, 7
      %v2839 = vor.u32 %v2835, %v2838
      %v2840 = vrot.slane %v2839, 4
      %v2841 = vrot.slane %v665, 6
      %v2842 = vrot.slane %v661, 7
      %v2843 = vor.u32 %v2841, %v2842
      %v2844 = vsel %vm2532, %v2840, %v2843
      %v2845 = vrot.slane %v2843, 4
      %v2847 = vshrl.u32 %v2527, 16
      %v2849 = vrot.slane %v2847, 6
      %v2850 = vshll.u32 %v2527, 16
      %v2852 = vrot.slane %v2850, 7
      %v2853 = vor.u32 %v2849, %v2852
      %v2854 = vsel %vm2532, %v2845, %v2853
      %v2856 = vshrl.u32 %v2143, 16
      %v2858 = vrot.slane %v2856, 6
      %v2859 = vshll.u32 %v2143, 16
      %v2861 = vrot.slane %v2859, 7
      %v2862 = vor.u32 %v2858, %v2861
      %v2863 = vrot.slane %v2862, 4
      %v2864 = vrot.slane %v689, 6
      %v2865 = vrot.slane %v685, 7
      %v2866 = vor.u32 %v2864, %v2865
      %v2867 = vsel %vm2532, %v2863, %v2866
      %v2868 = vrot.slane %v2866, 4
      %v2870 = vshrl.u32 %v2528, 16
      %v2872 = vrot.slane %v2870, 6
      %v2873 = vshll.u32 %v2528, 16
      %v2875 = vrot.slane %v2873, 7
      %v2876 = vor.u32 %v2872, %v2875
      %v2877 = vsel %vm2532, %v2868, %v2876
      %v2879 = vshrl.u32 %v2144, 16
      %v2881 = vrot.slane %v2879, 6
      %v2882 = vshll.u32 %v2144, 16
      %v2884 = vrot.slane %v2882, 7
      %v2885 = vor.u32 %v2881, %v2884
      %v2886 = vrot.slane %v2885, 4
      %v2887 = vrot.slane %v713, 6
      %v2888 = vrot.slane %v709, 7
      %v2889 = vor.u32 %v2887, %v2888
      %v2890 = vsel %vm2532, %v2886, %v2889
      %v2891 = vrot.slane %v2889, 4
      %v2893 = vshrl.u32 %v2529, 16
      %v2895 = vrot.slane %v2893, 6
      %v2896 = vshll.u32 %v2529, 16
      %v2898 = vrot.slane %v2896, 7
      %v2899 = vor.u32 %v2895, %v2898
      %v2900 = vsel %vm2532, %v2891, %v2899
      %s2901 = scalar_lea.vmem %s234, 10
      %v2902 = vld [vmem:[%s2901] sm:$0x3]
      %v2903 = vunpack.c.l.b16 %v2545
      %v2904 = vunpack.c.l.b16 %v2555
      %v2905 = vunpack.c.l.b16 %v2568
      %v2906 = vunpack.c.l.b16 %v2578
      %v2907 = vunpack.c.l.b16 %v2591
      %v2908 = vunpack.c.l.b16 %v2601
      %v2909 = vunpack.c.l.b16 %v2614
      %v2910 = vunpack.c.l.b16 %v2624
      %v2911 = vunpack.c.l.b16 %v2637
      %v2912 = vunpack.c.l.b16 %v2647
      %v2913 = vunpack.c.l.b16 %v2660
      %v2914 = vunpack.c.l.b16 %v2670
      %v2915 = vunpack.c.l.b16 %v2683
      %v2916 = vunpack.c.l.b16 %v2693
      %v2917 = vunpack.c.l.b16 %v2706
      %v2918 = vunpack.c.l.b16 %v2716
      %v2919 = vunpack.c.l.b16 %v2729
      %v2920 = vunpack.c.l.b16 %v2739
      %v2921 = vunpack.c.l.b16 %v2752
      %v2922 = vunpack.c.l.b16 %v2762
      %v2923 = vunpack.c.l.b16 %v2775
      %v2924 = vunpack.c.l.b16 %v2785
      %v2925 = vunpack.c.l.b16 %v2798
      %v2926 = vunpack.c.l.b16 %v2808
      %v2927 = vunpack.c.l.b16 %v2821
      %v2928 = vunpack.c.l.b16 %v2831
      %v2929 = vunpack.c.l.b16 %v2844
      %v2930 = vunpack.c.l.b16 %v2854
      %v2931 = vunpack.c.l.b16 %v2867
      %v2932 = vunpack.c.l.b16 %v2877
      %v2933 = vunpack.c.l.b16 %v2890
      %v2934 = vunpack.c.l.b16 %v2900
      %v2935 = vpack.c.b16 %v2904, %v2903
      %v2936 = vpack.c.b16 %v2906, %v2905
      %v2937 = vpack.c.b16 %v2908, %v2907
      %v2938 = vpack.c.b16 %v2910, %v2909
      %v2939 = vpack.c.b16 %v2912, %v2911
      %v2940 = vpack.c.b16 %v2914, %v2913
      %v2941 = vpack.c.b16 %v2916, %v2915
      %v2942 = vpack.c.b16 %v2918, %v2917
      %v2943 = vpack.c.b16 %v2920, %v2919
      %v2944 = vpack.c.b16 %v2922, %v2921
      %v2945 = vpack.c.b16 %v2924, %v2923
      %v2946 = vpack.c.b16 %v2926, %v2925
      %v2947 = vpack.c.b16 %v2928, %v2927
      %v2948 = vpack.c.b16 %v2930, %v2929
      %v2949 = vpack.c.b16 %v2932, %v2931
      %v2950 = vpack.c.b16 %v2934, %v2933
      %v2952 = vsel %vm773, %v2935, 0
      %v2955 = vsel %vm773, %v2936, 0
      %v2958 = vsel %vm773, %v2937, 0
      %v2961 = vsel %vm773, %v2938, 0
      %v2964 = vsel %vm773, %v2939, 0
      %v2967 = vsel %vm773, %v2940, 0
      %v2970 = vsel %vm773, %v2941, 0
      %v2973 = vsel %vm773, %v2942, 0
      %v2976 = vsel %vm773, %v2943, 0
      %v2979 = vsel %vm773, %v2944, 0
      %v2982 = vsel %vm773, %v2945, 0
      %v2985 = vsel %vm773, %v2946, 0
      %v2988 = vsel %vm773, %v2947, 0
      %v2991 = vsel %vm773, %v2948, 0
      %v2994 = vsel %vm773, %v2949, 0
      %v2997 = vsel %vm773, %v2950, 0
      %v3000 = vsel %vm822, %v2902, 0
      %3002 = vmatpush.bf16.msra.mxu0 0
      %3003 = vmatpush.bf16.msra.mxu0 0
      %3004 = vmatpush.bf16.msra.mxu0 0
      %3005 = vmatpush.bf16.msra.mxu0 0
      %3006 = vmatpush.bf16.msra.mxu0 0
      %3007 = vmatpush.bf16.msra.mxu0 0
      %3008 = vmatpush.bf16.msra.mxu0 0
      %3009 = vmatpush.bf16.msra.mxu0 %v3000
      %3010 = vmatmul.bf16.gmra.mxu0 %v2952
      %v3011 = vpop.f32.mrf.mxu0
      %v3012 = vadd.f32 0.0, %v3011
      %v3013 = vpop.f32.mrf.mxu0
      %v3014 = vadd.f32 0.0, %v3013
      %3015 = vmatmul.bf16.gmra.mxu0 %v2955
      %v3016 = vpop.f32.mrf.mxu0
      %v3017 = vadd.f32 0.0, %v3016
      %v3018 = vpop.f32.mrf.mxu0
      %v3019 = vadd.f32 0.0, %v3018
      %3020 = vmatmul.bf16.gmra.mxu0 %v2958
      %v3021 = vpop.f32.mrf.mxu0
      %v3022 = vadd.f32 0.0, %v3021
      %v3023 = vpop.f32.mrf.mxu0
      %v3024 = vadd.f32 0.0, %v3023
      %3025 = vmatmul.bf16.gmra.mxu0 %v2961
      %v3026 = vpop.f32.mrf.mxu0
      %v3027 = vadd.f32 0.0, %v3026
      %v3028 = vpop.f32.mrf.mxu0
      %v3029 = vadd.f32 0.0, %v3028
      %3030 = vmatmul.bf16.gmra.mxu0 %v2964
      %v3031 = vpop.f32.mrf.mxu0
      %v3032 = vadd.f32 0.0, %v3031
      %v3033 = vpop.f32.mrf.mxu0
      %v3034 = vadd.f32 0.0, %v3033
      %3035 = vmatmul.bf16.gmra.mxu0 %v2967
      %v3036 = vpop.f32.mrf.mxu0
      %v3037 = vadd.f32 0.0, %v3036
      %v3038 = vpop.f32.mrf.mxu0
      %v3039 = vadd.f32 0.0, %v3038
      %3040 = vmatmul.bf16.gmra.mxu0 %v2970
      %v3041 = vpop.f32.mrf.mxu0
      %v3042 = vadd.f32 0.0, %v3041
      %v3043 = vpop.f32.mrf.mxu0
      %v3044 = vadd.f32 0.0, %v3043
      %3045 = vmatmul.bf16.gmra.mxu0 %v2973
      %v3046 = vpop.f32.mrf.mxu0
      %v3047 = vadd.f32 0.0, %v3046
      %v3048 = vpop.f32.mrf.mxu0
      %v3049 = vadd.f32 0.0, %v3048
      %3050 = vmatmul.bf16.gmra.mxu0 %v2976
      %v3051 = vpop.f32.mrf.mxu0
      %v3052 = vadd.f32 0.0, %v3051
      %v3053 = vpop.f32.mrf.mxu0
      %v3054 = vadd.f32 0.0, %v3053
      %3055 = vmatmul.bf16.gmra.mxu0 %v2979
      %v3056 = vpop.f32.mrf.mxu0
      %v3057 = vadd.f32 0.0, %v3056
      %v3058 = vpop.f32.mrf.mxu0
      %v3059 = vadd.f32 0.0, %v3058
      %3060 = vmatmul.bf16.gmra.mxu0 %v2982
      %v3061 = vpop.f32.mrf.mxu0
      %v3062 = vadd.f32 0.0, %v3061
      %v3063 = vpop.f32.mrf.mxu0
      %v3064 = vadd.f32 0.0, %v3063
      %3065 = vmatmul.bf16.gmra.mxu0 %v2985
      %v3066 = vpop.f32.mrf.mxu0
      %v3067 = vadd.f32 0.0, %v3066
      %v3068 = vpop.f32.mrf.mxu0
      %v3069 = vadd.f32 0.0, %v3068
      %3070 = vmatmul.bf16.gmra.mxu0 %v2988
      %v3071 = vpop.f32.mrf.mxu0
      %v3072 = vadd.f32 0.0, %v3071
      %v3073 = vpop.f32.mrf.mxu0
      %v3074 = vadd.f32 0.0, %v3073
      %3075 = vmatmul.bf16.gmra.mxu0 %v2991
      %v3076 = vpop.f32.mrf.mxu0
      %v3077 = vadd.f32 0.0, %v3076
      %v3078 = vpop.f32.mrf.mxu0
      %v3079 = vadd.f32 0.0, %v3078
      %3080 = vmatmul.bf16.gmra.mxu0 %v2994
      %v3081 = vpop.f32.mrf.mxu0
      %v3082 = vadd.f32 0.0, %v3081
      %v3083 = vpop.f32.mrf.mxu0
      %v3084 = vadd.f32 0.0, %v3083
      %3085 = vmatmul.bf16.gmra.mxu0 %v2997
      %v3086 = vpop.f32.mrf.mxu0
      %v3087 = vadd.f32 0.0, %v3086
      %v3088 = vpop.f32.mrf.mxu0
      %v3089 = vadd.f32 0.0, %v3088
      %3090 = vdwg.mxu0
      %v3091 = vadd.f32 %v2482, %v3012
      %v3092 = vadd.f32 %v2483, %v3014
      %v3093 = vadd.f32 %v2484, %v3017
      %v3094 = vadd.f32 %v2485, %v3019
      %v3095 = vadd.f32 %v2486, %v3022
      %v3096 = vadd.f32 %v2487, %v3024
      %v3097 = vadd.f32 %v2488, %v3027
      %v3098 = vadd.f32 %v2489, %v3029
      %v3099 = vadd.f32 %v2490, %v3032
      %v3100 = vadd.f32 %v2491, %v3034
      %v3101 = vadd.f32 %v2492, %v3037
      %v3102 = vadd.f32 %v2493, %v3039
      %v3103 = vadd.f32 %v2494, %v3042
      %v3104 = vadd.f32 %v2495, %v3044
      %v3105 = vadd.f32 %v2496, %v3047
      %v3106 = vadd.f32 %v2497, %v3049
      %v3107 = vadd.f32 %v2498, %v3052
      %v3108 = vadd.f32 %v2499, %v3054
      %v3109 = vadd.f32 %v2500, %v3057
      %v3110 = vadd.f32 %v2501, %v3059
      %v3111 = vadd.f32 %v2502, %v3062
      %v3112 = vadd.f32 %v2503, %v3064
      %v3113 = vadd.f32 %v2504, %v3067
      %v3114 = vadd.f32 %v2505, %v3069
      %v3115 = vadd.f32 %v2506, %v3072
      %v3116 = vadd.f32 %v2507, %v3074
      %v3117 = vadd.f32 %v2508, %v3077
      %v3118 = vadd.f32 %v2509, %v3079
      %v3119 = vadd.f32 %v2510, %v3082
      %v3120 = vadd.f32 %v2511, %v3084
      %v3121 = vadd.f32 %v2512, %v3087
      %v3122 = vadd.f32 %v2513, %v3089
      %v3123 = vld [vmem:[%s226] sm:$0x8]
      %v3124 = vld [vmem:[%s226 + $0xc] sm:$0x8]
      %v3125 = vld [vmem:[%s226 + $0x18] sm:$0x8]
      %v3126 = vld [vmem:[%s226 + $0x24] sm:$0x8]
      %v3127 = vld [vmem:[%s226 + $0x30] sm:$0x8]
      %v3128 = vld [vmem:[%s226 + $0x3c] sm:$0x8]
      %v3129 = vld [vmem:[%s226 + $0x48] sm:$0x8]
      %v3130 = vld [vmem:[%s226 + $0x54] sm:$0x8]
      %v3131 = vld [vmem:[%s226 + $0x60] sm:$0x8]
      %v3132 = vld [vmem:[%s226 + $0x6c] sm:$0x8]
      %v3133 = vld [vmem:[%s226 + $0x78] sm:$0x8]
      %v3134 = vld [vmem:[%s226 + $0x84] sm:$0x8]
      %v3135 = vld [vmem:[%s226 + $0x90] sm:$0x8]
      %v3136 = vld [vmem:[%s226 + $0x9c] sm:$0x8]
      %v3137 = vld [vmem:[%s226 + $0xa8] sm:$0x8]
      %v3138 = vld [vmem:[%s226 + $0xb4] sm:$0x8]
      %vm3171 = vcmask 1040384
      %vm3172 = vcmask 1044484
      %vm3173 = vmor %vm3171, %vm3172
      %v3174 = vrot.slane %v3123, 7
      %v3175 = vrot.slane %v3174, 4
      %v3176 = vrot.slane %v288, 7
      %v3177 = vsel %vm3173, %v3175, %v3176
      %v3178 = vrot.slane %v3176, 4
      %v3179 = vrot.slane %v2514, 7
      %v3180 = vsel %vm3173, %v3178, %v3179
      %v3181 = vrot.slane %v3124, 7
      %v3182 = vrot.slane %v3181, 4
      %v3183 = vrot.slane %v290, 7
      %v3184 = vsel %vm3173, %v3182, %v3183
      %v3185 = vrot.slane %v3183, 4
      %v3186 = vrot.slane %v2515, 7
      %v3187 = vsel %vm3173, %v3185, %v3186
      %v3188 = vrot.slane %v3125, 7
      %v3189 = vrot.slane %v3188, 4
      %v3190 = vrot.slane %v292, 7
      %v3191 = vsel %vm3173, %v3189, %v3190
      %v3192 = vrot.slane %v3190, 4
      %v3193 = vrot.slane %v2516, 7
      %v3194 = vsel %vm3173, %v3192, %v3193
      %v3195 = vrot.slane %v3126, 7
      %v3196 = vrot.slane %v3195, 4
      %v3197 = vrot.slane %v294, 7
      %v3198 = vsel %vm3173, %v3196, %v3197
      %v3199 = vrot.slane %v3197, 4
      %v3200 = vrot.slane %v2517, 7
      %v3201 = vsel %vm3173, %v3199, %v3200
      %v3202 = vrot.slane %v3127, 7
      %v3203 = vrot.slane %v3202, 4
      %v3204 = vrot.slane %v296, 7
      %v3205 = vsel %vm3173, %v3203, %v3204
      %v3206 = vrot.slane %v3204, 4
      %v3207 = vrot.slane %v2518, 7
      %v3208 = vsel %vm3173, %v3206, %v3207
      %v3209 = vrot.slane %v3128, 7
      %v3210 = vrot.slane %v3209, 4
      %v3211 = vrot.slane %v298, 7
      %v3212 = vsel %vm3173, %v3210, %v3211
      %v3213 = vrot.slane %v3211, 4
      %v3214 = vrot.slane %v2519, 7
      %v3215 = vsel %vm3173, %v3213, %v3214
      %v3216 = vrot.slane %v3129, 7
      %v3217 = vrot.slane %v3216, 4
      %v3218 = vrot.slane %v300, 7
      %v3219 = vsel %vm3173, %v3217, %v3218
      %v3220 = vrot.slane %v3218, 4
      %v3221 = vrot.slane %v2520, 7
      %v3222 = vsel %vm3173, %v3220, %v3221
      %v3223 = vrot.slane %v3130, 7
      %v3224 = vrot.slane %v3223, 4
      %v3225 = vrot.slane %v302, 7
      %v3226 = vsel %vm3173, %v3224, %v3225
      %v3227 = vrot.slane %v3225, 4
      %v3228 = vrot.slane %v2521, 7
      %v3229 = vsel %vm3173, %v3227, %v3228
      %v3230 = vrot.slane %v3131, 7
      %v3231 = vrot.slane %v3230, 4
      %v3232 = vrot.slane %v304, 7
      %v3233 = vsel %vm3173, %v3231, %v3232
      %v3234 = vrot.slane %v3232, 4
      %v3235 = vrot.slane %v2522, 7
      %v3236 = vsel %vm3173, %v3234, %v3235
      %v3237 = vrot.slane %v3132, 7
      %v3238 = vrot.slane %v3237, 4
      %v3239 = vrot.slane %v306, 7
      %v3240 = vsel %vm3173, %v3238, %v3239
      %v3241 = vrot.slane %v3239, 4
      %v3242 = vrot.slane %v2523, 7
      %v3243 = vsel %vm3173, %v3241, %v3242
      %v3244 = vrot.slane %v3133, 7
      %v3245 = vrot.slane %v3244, 4
      %v3246 = vrot.slane %v308, 7
      %v3247 = vsel %vm3173, %v3245, %v3246
      %v3248 = vrot.slane %v3246, 4
      %v3249 = vrot.slane %v2524, 7
      %v3250 = vsel %vm3173, %v3248, %v3249
      %v3251 = vrot.slane %v3134, 7
      %v3252 = vrot.slane %v3251, 4
      %v3253 = vrot.slane %v310, 7
      %v3254 = vsel %vm3173, %v3252, %v3253
      %v3255 = vrot.slane %v3253, 4
      %v3256 = vrot.slane %v2525, 7
      %v3257 = vsel %vm3173, %v3255, %v3256
      %v3258 = vrot.slane %v3135, 7
      %v3259 = vrot.slane %v3258, 4
      %v3260 = vrot.slane %v312, 7
      %v3261 = vsel %vm3173, %v3259, %v3260
      %v3262 = vrot.slane %v3260, 4
      %v3263 = vrot.slane %v2526, 7
      %v3264 = vsel %vm3173, %v3262, %v3263
      %v3265 = vrot.slane %v3136, 7
      %v3266 = vrot.slane %v3265, 4
      %v3267 = vrot.slane %v314, 7
      %v3268 = vsel %vm3173, %v3266, %v3267
      %v3269 = vrot.slane %v3267, 4
      %v3270 = vrot.slane %v2527, 7
      %v3271 = vsel %vm3173, %v3269, %v3270
      %v3272 = vrot.slane %v3137, 7
      %v3273 = vrot.slane %v3272, 4
      %v3274 = vrot.slane %v316, 7
      %v3275 = vsel %vm3173, %v3273, %v3274
      %v3276 = vrot.slane %v3274, 4
      %v3277 = vrot.slane %v2528, 7
      %v3278 = vsel %vm3173, %v3276, %v3277
      %v3279 = vrot.slane %v3138, 7
      %v3280 = vrot.slane %v3279, 4
      %v3281 = vrot.slane %v318, 7
      %v3282 = vsel %vm3173, %v3280, %v3281
      %v3283 = vrot.slane %v3281, 4
      %v3284 = vrot.slane %v2529, 7
      %v3285 = vsel %vm3173, %v3283, %v3284
      %s3286 = scalar_lea.vmem %s234, 12
      %v3287 = vld [vmem:[%s3286] sm:$0x3]
      %v3288 = vunpack.c.l.b16 %v3177
      %v3289 = vunpack.c.l.b16 %v3180
      %v3290 = vunpack.c.l.b16 %v3184
      %v3291 = vunpack.c.l.b16 %v3187
      %v3292 = vunpack.c.l.b16 %v3191
      %v3293 = vunpack.c.l.b16 %v3194
      %v3294 = vunpack.c.l.b16 %v3198
      %v3295 = vunpack.c.l.b16 %v3201
      %v3296 = vunpack.c.l.b16 %v3205
      %v3297 = vunpack.c.l.b16 %v3208
      %v3298 = vunpack.c.l.b16 %v3212
      %v3299 = vunpack.c.l.b16 %v3215
      %v3300 = vunpack.c.l.b16 %v3219
      %v3301 = vunpack.c.l.b16 %v3222
      %v3302 = vunpack.c.l.b16 %v3226
      %v3303 = vunpack.c.l.b16 %v3229
      %v3304 = vunpack.c.l.b16 %v3233
      %v3305 = vunpack.c.l.b16 %v3236
      %v3306 = vunpack.c.l.b16 %v3240
      %v3307 = vunpack.c.l.b16 %v3243
      %v3308 = vunpack.c.l.b16 %v3247
      %v3309 = vunpack.c.l.b16 %v3250
      %v3310 = vunpack.c.l.b16 %v3254
      %v3311 = vunpack.c.l.b16 %v3257
      %v3312 = vunpack.c.l.b16 %v3261
      %v3313 = vunpack.c.l.b16 %v3264
      %v3314 = vunpack.c.l.b16 %v3268
      %v3315 = vunpack.c.l.b16 %v3271
      %v3316 = vunpack.c.l.b16 %v3275
      %v3317 = vunpack.c.l.b16 %v3278
      %v3318 = vunpack.c.l.b16 %v3282
      %v3319 = vunpack.c.l.b16 %v3285
      %v3320 = vpack.c.b16 %v3289, %v3288
      %v3321 = vpack.c.b16 %v3291, %v3290
      %v3322 = vpack.c.b16 %v3293, %v3292
      %v3323 = vpack.c.b16 %v3295, %v3294
      %v3324 = vpack.c.b16 %v3297, %v3296
      %v3325 = vpack.c.b16 %v3299, %v3298
      %v3326 = vpack.c.b16 %v3301, %v3300
      %v3327 = vpack.c.b16 %v3303, %v3302
      %v3328 = vpack.c.b16 %v3305, %v3304
      %v3329 = vpack.c.b16 %v3307, %v3306
      %v3330 = vpack.c.b16 %v3309, %v3308
      %v3331 = vpack.c.b16 %v3311, %v3310
      %v3332 = vpack.c.b16 %v3313, %v3312
      %v3333 = vpack.c.b16 %v3315, %v3314
      %v3334 = vpack.c.b16 %v3317, %v3316
      %v3335 = vpack.c.b16 %v3319, %v3318
      %v3337 = vsel %vm773, %v3320, 0
      %v3340 = vsel %vm773, %v3321, 0
      %v3343 = vsel %vm773, %v3322, 0
      %v3346 = vsel %vm773, %v3323, 0
      %v3349 = vsel %vm773, %v3324, 0
      %v3352 = vsel %vm773, %v3325, 0
      %v3355 = vsel %vm773, %v3326, 0
      %v3358 = vsel %vm773, %v3327, 0
      %v3361 = vsel %vm773, %v3328, 0
      %v3364 = vsel %vm773, %v3329, 0
      %v3367 = vsel %vm773, %v3330, 0
      %v3370 = vsel %vm773, %v3331, 0
      %v3373 = vsel %vm773, %v3332, 0
      %v3376 = vsel %vm773, %v3333, 0
      %v3379 = vsel %vm773, %v3334, 0
      %v3382 = vsel %vm773, %v3335, 0
      %v3385 = vsel %vm822, %v3287, 0
      %3387 = vmatpush.bf16.msra.mxu0 0
      %3388 = vmatpush.bf16.msra.mxu0 0
      %3389 = vmatpush.bf16.msra.mxu0 0
      %3390 = vmatpush.bf16.msra.mxu0 0
      %3391 = vmatpush.bf16.msra.mxu0 0
      %3392 = vmatpush.bf16.msra.mxu0 0
      %3393 = vmatpush.bf16.msra.mxu0 0
      %3394 = vmatpush.bf16.msra.mxu0 %v3385
      %3395 = vmatmul.bf16.gmra.mxu0 %v3337
      %v3396 = vpop.f32.mrf.mxu0
      %v3397 = vadd.f32 0.0, %v3396
      %v3398 = vpop.f32.mrf.mxu0
      %v3399 = vadd.f32 0.0, %v3398
      %3400 = vmatmul.bf16.gmra.mxu0 %v3340
      %v3401 = vpop.f32.mrf.mxu0
      %v3402 = vadd.f32 0.0, %v3401
      %v3403 = vpop.f32.mrf.mxu0
      %v3404 = vadd.f32 0.0, %v3403
      %3405 = vmatmul.bf16.gmra.mxu0 %v3343
      %v3406 = vpop.f32.mrf.mxu0
      %v3407 = vadd.f32 0.0, %v3406
      %v3408 = vpop.f32.mrf.mxu0
      %v3409 = vadd.f32 0.0, %v3408
      %3410 = vmatmul.bf16.gmra.mxu0 %v3346
      %v3411 = vpop.f32.mrf.mxu0
      %v3412 = vadd.f32 0.0, %v3411
      %v3413 = vpop.f32.mrf.mxu0
      %v3414 = vadd.f32 0.0, %v3413
      %3415 = vmatmul.bf16.gmra.mxu0 %v3349
      %v3416 = vpop.f32.mrf.mxu0
      %v3417 = vadd.f32 0.0, %v3416
      %v3418 = vpop.f32.mrf.mxu0
      %v3419 = vadd.f32 0.0, %v3418
      %3420 = vmatmul.bf16.gmra.mxu0 %v3352
      %v3421 = vpop.f32.mrf.mxu0
      %v3422 = vadd.f32 0.0, %v3421
      %v3423 = vpop.f32.mrf.mxu0
      %v3424 = vadd.f32 0.0, %v3423
      %3425 = vmatmul.bf16.gmra.mxu0 %v3355
      %v3426 = vpop.f32.mrf.mxu0
      %v3427 = vadd.f32 0.0, %v3426
      %v3428 = vpop.f32.mrf.mxu0
      %v3429 = vadd.f32 0.0, %v3428
      %3430 = vmatmul.bf16.gmra.mxu0 %v3358
      %v3431 = vpop.f32.mrf.mxu0
      %v3432 = vadd.f32 0.0, %v3431
      %v3433 = vpop.f32.mrf.mxu0
      %v3434 = vadd.f32 0.0, %v3433
      %3435 = vmatmul.bf16.gmra.mxu0 %v3361
      %v3436 = vpop.f32.mrf.mxu0
      %v3437 = vadd.f32 0.0, %v3436
      %v3438 = vpop.f32.mrf.mxu0
      %v3439 = vadd.f32 0.0, %v3438
      %3440 = vmatmul.bf16.gmra.mxu0 %v3364
      %v3441 = vpop.f32.mrf.mxu0
      %v3442 = vadd.f32 0.0, %v3441
      %v3443 = vpop.f32.mrf.mxu0
      %v3444 = vadd.f32 0.0, %v3443
      %3445 = vmatmul.bf16.gmra.mxu0 %v3367
      %v3446 = vpop.f32.mrf.mxu0
      %v3447 = vadd.f32 0.0, %v3446
      %v3448 = vpop.f32.mrf.mxu0
      %v3449 = vadd.f32 0.0, %v3448
      %3450 = vmatmul.bf16.gmra.mxu0 %v3370
      %v3451 = vpop.f32.mrf.mxu0
      %v3452 = vadd.f32 0.0, %v3451
      %v3453 = vpop.f32.mrf.mxu0
      %v3454 = vadd.f32 0.0, %v3453
      %3455 = vmatmul.bf16.gmra.mxu0 %v3373
      %v3456 = vpop.f32.mrf.mxu0
      %v3457 = vadd.f32 0.0, %v3456
      %v3458 = vpop.f32.mrf.mxu0
      %v3459 = vadd.f32 0.0, %v3458
      %3460 = vmatmul.bf16.gmra.mxu0 %v3376
      %v3461 = vpop.f32.mrf.mxu0
      %v3462 = vadd.f32 0.0, %v3461
      %v3463 = vpop.f32.mrf.mxu0
      %v3464 = vadd.f32 0.0, %v3463
      %3465 = vmatmul.bf16.gmra.mxu0 %v3379
      %v3466 = vpop.f32.mrf.mxu0
      %v3467 = vadd.f32 0.0, %v3466
      %v3468 = vpop.f32.mrf.mxu0
      %v3469 = vadd.f32 0.0, %v3468
      %3470 = vmatmul.bf16.gmra.mxu0 %v3382
      %v3471 = vpop.f32.mrf.mxu0
      %v3472 = vadd.f32 0.0, %v3471
      %v3473 = vpop.f32.mrf.mxu0
      %v3474 = vadd.f32 0.0, %v3473
      %3475 = vdwg.mxu0
      %v3476 = vadd.f32 %v3091, %v3397
      %v3477 = vadd.f32 %v3092, %v3399
      %v3478 = vadd.f32 %v3093, %v3402
      %v3479 = vadd.f32 %v3094, %v3404
      %v3480 = vadd.f32 %v3095, %v3407
      %v3481 = vadd.f32 %v3096, %v3409
      %v3482 = vadd.f32 %v3097, %v3412
      %v3483 = vadd.f32 %v3098, %v3414
      %v3484 = vadd.f32 %v3099, %v3417
      %v3485 = vadd.f32 %v3100, %v3419
      %v3486 = vadd.f32 %v3101, %v3422
      %v3487 = vadd.f32 %v3102, %v3424
      %v3488 = vadd.f32 %v3103, %v3427
      %v3489 = vadd.f32 %v3104, %v3429
      %v3490 = vadd.f32 %v3105, %v3432
      %v3491 = vadd.f32 %v3106, %v3434
      %v3492 = vadd.f32 %v3107, %v3437
      %v3493 = vadd.f32 %v3108, %v3439
      %v3494 = vadd.f32 %v3109, %v3442
      %v3495 = vadd.f32 %v3110, %v3444
      %v3496 = vadd.f32 %v3111, %v3447
      %v3497 = vadd.f32 %v3112, %v3449
      %v3498 = vadd.f32 %v3113, %v3452
      %v3499 = vadd.f32 %v3114, %v3454
      %v3500 = vadd.f32 %v3115, %v3457
      %v3501 = vadd.f32 %v3116, %v3459
      %v3502 = vadd.f32 %v3117, %v3462
      %v3503 = vadd.f32 %v3118, %v3464
      %v3504 = vadd.f32 %v3119, %v3467
      %v3505 = vadd.f32 %v3120, %v3469
      %v3506 = vadd.f32 %v3121, %v3472
      %v3507 = vadd.f32 %v3122, %v3474
      %v3508 = vld [vmem:[#allocation2] sm:$0xff]
      %v3509 = vld [vmem:[#allocation2 + $0x8] sm:$0xff]
      %v3510 = vld [vmem:[#allocation2 + $0x10] sm:$0xff]
      %v3511 = vld [vmem:[#allocation2 + $0x18] sm:$0xff]
      %v3512 = vld [vmem:[#allocation2 + $0x20] sm:$0xff]
      %v3513 = vld [vmem:[#allocation2 + $0x28] sm:$0xff]
      %v3514 = vld [vmem:[#allocation2 + $0x30] sm:$0xff]
      %v3515 = vld [vmem:[#allocation2 + $0x38] sm:$0xff]
      %v3516 = vld [vmem:[#allocation2 + $0x40] sm:$0xff]
      %v3517 = vld [vmem:[#allocation2 + $0x48] sm:$0xff]
      %v3518 = vld [vmem:[#allocation2 + $0x50] sm:$0xff]
      %v3519 = vld [vmem:[#allocation2 + $0x58] sm:$0xff]
      %v3520 = vld [vmem:[#allocation2 + $0x60] sm:$0xff]
      %v3521 = vld [vmem:[#allocation2 + $0x68] sm:$0xff]
      %v3522 = vld [vmem:[#allocation2 + $0x70] sm:$0xff]
      %v3523 = vld [vmem:[#allocation2 + $0x78] sm:$0xff]
      %v3524 = vld [vmem:[#allocation2 + $0x80] sm:$0xff]
      %v3525 = vld [vmem:[#allocation2 + $0x88] sm:$0xff]
      %v3526 = vld [vmem:[#allocation2 + $0x90] sm:$0xff]
      %v3527 = vld [vmem:[#allocation2 + $0x98] sm:$0xff]
      %v3528 = vld [vmem:[#allocation2 + $0xa0] sm:$0xff]
      %v3529 = vld [vmem:[#allocation2 + $0xa8] sm:$0xff]
      %v3530 = vld [vmem:[#allocation2 + $0xb0] sm:$0xff]
      %v3531 = vld [vmem:[#allocation2 + $0xb8] sm:$0xff]
      %v3532 = vld [vmem:[#allocation2 + $0xc0] sm:$0xff]
      %v3533 = vld [vmem:[#allocation2 + $0xc8] sm:$0xff]
      %v3534 = vld [vmem:[#allocation2 + $0xd0] sm:$0xff]
      %v3535 = vld [vmem:[#allocation2 + $0xd8] sm:$0xff]
      %v3536 = vld [vmem:[#allocation2 + $0xe0] sm:$0xff]
      %v3537 = vld [vmem:[#allocation2 + $0xe8] sm:$0xff]
      %v3538 = vld [vmem:[#allocation2 + $0xf0] sm:$0xff]
      %v3539 = vld [vmem:[#allocation2 + $0xf8] sm:$0xff]
      %v3540 = vadd.f32 %v3508, %v3476
      %v3541 = vadd.f32 %v3509, %v3477
      %v3542 = vadd.f32 %v3510, %v3478
      %v3543 = vadd.f32 %v3511, %v3479
      %v3544 = vadd.f32 %v3512, %v3480
      %v3545 = vadd.f32 %v3513, %v3481
      %v3546 = vadd.f32 %v3514, %v3482
      %v3547 = vadd.f32 %v3515, %v3483
      %v3548 = vadd.f32 %v3516, %v3484
      %v3549 = vadd.f32 %v3517, %v3485
      %v3550 = vadd.f32 %v3518, %v3486
      %v3551 = vadd.f32 %v3519, %v3487
      %v3552 = vadd.f32 %v3520, %v3488
      %v3553 = vadd.f32 %v3521, %v3489
      %v3554 = vadd.f32 %v3522, %v3490
      %v3555 = vadd.f32 %v3523, %v3491
      %v3556 = vadd.f32 %v3524, %v3492
      %v3557 = vadd.f32 %v3525, %v3493
      %v3558 = vadd.f32 %v3526, %v3494
      %v3559 = vadd.f32 %v3527, %v3495
      %v3560 = vadd.f32 %v3528, %v3496
      %v3561 = vadd.f32 %v3529, %v3497
      %v3562 = vadd.f32 %v3530, %v3498
      %v3563 = vadd.f32 %v3531, %v3499
      %v3564 = vadd.f32 %v3532, %v3500
      %v3565 = vadd.f32 %v3533, %v3501
      %v3566 = vadd.f32 %v3534, %v3502
      %v3567 = vadd.f32 %v3535, %v3503
      %v3568 = vadd.f32 %v3536, %v3504
      %v3569 = vadd.f32 %v3537, %v3505
      %v3570 = vadd.f32 %v3538, %v3506
      %v3571 = vadd.f32 %v3539, %v3507
      %vm3572 = vcmask 64512
      %3573 = vst.msk [vmem:[#allocation2] sm:$0xff] %vm3572, %v3540
      %3574 = vst.msk [vmem:[#allocation2 + $0x8] sm:$0xff] %vm3572, %v3541
      %3575 = vst.msk [vmem:[#allocation2 + $0x10] sm:$0xff] %vm3572, %v3542
      %3576 = vst.msk [vmem:[#allocation2 + $0x18] sm:$0xff] %vm3572, %v3543
      %3577 = vst.msk [vmem:[#allocation2 + $0x20] sm:$0xff] %vm3572, %v3544
      %3578 = vst.msk [vmem:[#allocation2 + $0x28] sm:$0xff] %vm3572, %v3545
      %3579 = vst.msk [vmem:[#allocation2 + $0x30] sm:$0xff] %vm3572, %v3546
      %3580 = vst.msk [vmem:[#allocation2 + $0x38] sm:$0xff] %vm3572, %v3547
      %3581 = vst.msk [vmem:[#allocation2 + $0x40] sm:$0xff] %vm3572, %v3548
      %3582 = vst.msk [vmem:[#allocation2 + $0x48] sm:$0xff] %vm3572, %v3549
      %3583 = vst.msk [vmem:[#allocation2 + $0x50] sm:$0xff] %vm3572, %v3550
      %3584 = vst.msk [vmem:[#allocation2 + $0x58] sm:$0xff] %vm3572, %v3551
      %3585 = vst.msk [vmem:[#allocation2 + $0x60] sm:$0xff] %vm3572, %v3552
      %3586 = vst.msk [vmem:[#allocation2 + $0x68] sm:$0xff] %vm3572, %v3553
      %3587 = vst.msk [vmem:[#allocation2 + $0x70] sm:$0xff] %vm3572, %v3554
      %3588 = vst.msk [vmem:[#allocation2 + $0x78] sm:$0xff] %vm3572, %v3555
      %3589 = vst.msk [vmem:[#allocation2 + $0x80] sm:$0xff] %vm3572, %v3556
      %3590 = vst.msk [vmem:[#allocation2 + $0x88] sm:$0xff] %vm3572, %v3557
      %3591 = vst.msk [vmem:[#allocation2 + $0x90] sm:$0xff] %vm3572, %v3558
      %3592 = vst.msk [vmem:[#allocation2 + $0x98] sm:$0xff] %vm3572, %v3559
      %3593 = vst.msk [vmem:[#allocation2 + $0xa0] sm:$0xff] %vm3572, %v3560
      %3594 = vst.msk [vmem:[#allocation2 + $0xa8] sm:$0xff] %vm3572, %v3561
      %3595 = vst.msk [vmem:[#allocation2 + $0xb0] sm:$0xff] %vm3572, %v3562
      %3596 = vst.msk [vmem:[#allocation2 + $0xb8] sm:$0xff] %vm3572, %v3563
      %3597 = vst.msk [vmem:[#allocation2 + $0xc0] sm:$0xff] %vm3572, %v3564
      %3598 = vst.msk [vmem:[#allocation2 + $0xc8] sm:$0xff] %vm3572, %v3565
      %3599 = vst.msk [vmem:[#allocation2 + $0xd0] sm:$0xff] %vm3572, %v3566
      %3600 = vst.msk [vmem:[#allocation2 + $0xd8] sm:$0xff] %vm3572, %v3567
      %3601 = vst.msk [vmem:[#allocation2 + $0xe0] sm:$0xff] %vm3572, %v3568
      %3602 = vst.msk [vmem:[#allocation2 + $0xe8] sm:$0xff] %vm3572, %v3569
      %3603 = vst.msk [vmem:[#allocation2 + $0xf0] sm:$0xff] %vm3572, %v3570
      %3604 = vst.msk [vmem:[#allocation2 + $0xf8] sm:$0xff] %vm3572, %v3571
      // Predicated region
      $region33: #{global_conv_forward.6} parent=27 // pred_check
        %p3605 = pneg %p250
      $region34: #{global_conv_forward.6} parent=27 // pred_check_branch
        %3607 = sbr.rel (%p3605) target = $region36
      $region35: #{global_conv_forward.6} parent=27 // pred_region
        %v3608 = vld [vmem:[#allocation2] sm:$0xff]
        %v3609 = vld [vmem:[#allocation2 + $0x8] sm:$0xff]
        %v3610 = vld [vmem:[#allocation2 + $0x10] sm:$0xff]
        %v3611 = vld [vmem:[#allocation2 + $0x18] sm:$0xff]
        %v3612 = vld [vmem:[#allocation2 + $0x20] sm:$0xff]
        %v3613 = vld [vmem:[#allocation2 + $0x28] sm:$0xff]
        %v3614 = vld [vmem:[#allocation2 + $0x30] sm:$0xff]
        %v3615 = vld [vmem:[#allocation2 + $0x38] sm:$0xff]
        %v3616 = vld [vmem:[#allocation2 + $0x40] sm:$0xff]
        %v3617 = vld [vmem:[#allocation2 + $0x48] sm:$0xff]
        %v3618 = vld [vmem:[#allocation2 + $0x50] sm:$0xff]
        %v3619 = vld [vmem:[#allocation2 + $0x58] sm:$0xff]
        %v3620 = vld [vmem:[#allocation2 + $0x60] sm:$0xff]
        %v3621 = vld [vmem:[#allocation2 + $0x68] sm:$0xff]
        %v3622 = vld [vmem:[#allocation2 + $0x70] sm:$0xff]
        %v3623 = vld [vmem:[#allocation2 + $0x78] sm:$0xff]
        %v3624 = vld [vmem:[#allocation2 + $0x80] sm:$0xff]
        %v3625 = vld [vmem:[#allocation2 + $0x88] sm:$0xff]
        %v3626 = vld [vmem:[#allocation2 + $0x90] sm:$0xff]
        %v3627 = vld [vmem:[#allocation2 + $0x98] sm:$0xff]
        %v3628 = vld [vmem:[#allocation2 + $0xa0] sm:$0xff]
        %v3629 = vld [vmem:[#allocation2 + $0xa8] sm:$0xff]
        %v3630 = vld [vmem:[#allocation2 + $0xb0] sm:$0xff]
        %v3631 = vld [vmem:[#allocation2 + $0xb8] sm:$0xff]
        %v3632 = vld [vmem:[#allocation2 + $0xc0] sm:$0xff]
        %v3633 = vld [vmem:[#allocation2 + $0xc8] sm:$0xff]
        %v3634 = vld [vmem:[#allocation2 + $0xd0] sm:$0xff]
        %v3635 = vld [vmem:[#allocation2 + $0xd8] sm:$0xff]
        %v3636 = vld [vmem:[#allocation2 + $0xe0] sm:$0xff]
        %v3637 = vld [vmem:[#allocation2 + $0xe8] sm:$0xff]
        %v3638 = vld [vmem:[#allocation2 + $0xf0] sm:$0xff]
        %v3639 = vld [vmem:[#allocation2 + $0xf8] sm:$0xff]
        %v3640 = vpack.c.bf16 %v3608, %v3608
        %v3641 = vpack.c.bf16 %v3609, %v3609
        %v3642 = vpack.c.bf16 %v3610, %v3610
        %v3643 = vpack.c.bf16 %v3611, %v3611
        %v3644 = vpack.c.bf16 %v3612, %v3612
        %v3645 = vpack.c.bf16 %v3613, %v3613
        %v3646 = vpack.c.bf16 %v3614, %v3614
        %v3647 = vpack.c.bf16 %v3615, %v3615
        %v3648 = vpack.c.bf16 %v3616, %v3616
        %v3649 = vpack.c.bf16 %v3617, %v3617
        %v3650 = vpack.c.bf16 %v3618, %v3618
        %v3651 = vpack.c.bf16 %v3619, %v3619
        %v3652 = vpack.c.bf16 %v3620, %v3620
        %v3653 = vpack.c.bf16 %v3621, %v3621
        %v3654 = vpack.c.bf16 %v3622, %v3622
        %v3655 = vpack.c.bf16 %v3623, %v3623
        %v3656 = vpack.c.bf16 %v3624, %v3624
        %v3657 = vpack.c.bf16 %v3625, %v3625
        %v3658 = vpack.c.bf16 %v3626, %v3626
        %v3659 = vpack.c.bf16 %v3627, %v3627
        %v3660 = vpack.c.bf16 %v3628, %v3628
        %v3661 = vpack.c.bf16 %v3629, %v3629
        %v3662 = vpack.c.bf16 %v3630, %v3630
        %v3663 = vpack.c.bf16 %v3631, %v3631
        %v3664 = vpack.c.bf16 %v3632, %v3632
        %v3665 = vpack.c.bf16 %v3633, %v3633
        %v3666 = vpack.c.bf16 %v3634, %v3634
        %v3667 = vpack.c.bf16 %v3635, %v3635
        %v3668 = vpack.c.bf16 %v3636, %v3636
        %v3669 = vpack.c.bf16 %v3637, %v3637
        %v3670 = vpack.c.bf16 %v3638, %v3638
        %v3671 = vpack.c.bf16 %v3639, %v3639
        %vm3672 = vcmask 60416
        %3673 = vst.msk [vmem:[%s247] sm:$0xf] %vm3672, %v3640
        %3674 = vst.msk [vmem:[%s247 + $0x4] sm:$0xf] %vm3672, %v3641
        %3675 = vst.msk [vmem:[%s247 + $0x8] sm:$0xf] %vm3672, %v3642
        %3676 = vst.msk [vmem:[%s247 + $0xc] sm:$0xf] %vm3672, %v3643
        %3677 = vst.msk [vmem:[%s247 + $0x10] sm:$0xf] %vm3672, %v3644
        %3678 = vst.msk [vmem:[%s247 + $0x14] sm:$0xf] %vm3672, %v3645
        %3679 = vst.msk [vmem:[%s247 + $0x18] sm:$0xf] %vm3672, %v3646
        %3680 = vst.msk [vmem:[%s247 + $0x1c] sm:$0xf] %vm3672, %v3647
        %3681 = vst.msk [vmem:[%s247 + $0x20] sm:$0xf] %vm3672, %v3648
        %3682 = vst.msk [vmem:[%s247 + $0x24] sm:$0xf] %vm3672, %v3649
        %3683 = vst.msk [vmem:[%s247 + $0x28] sm:$0xf] %vm3672, %v3650
        %3684 = vst.msk [vmem:[%s247 + $0x2c] sm:$0xf] %vm3672, %v3651
        %3685 = vst.msk [vmem:[%s247 + $0x30] sm:$0xf] %vm3672, %v3652
        %3686 = vst.msk [vmem:[%s247 + $0x34] sm:$0xf] %vm3672, %v3653
        %3687 = vst.msk [vmem:[%s247 + $0x38] sm:$0xf] %vm3672, %v3654
        %3688 = vst.msk [vmem:[%s247 + $0x3c] sm:$0xf] %vm3672, %v3655
        %3689 = vst.msk [vmem:[%s247 + $0x40] sm:$0xf] %vm3672, %v3656
        %3690 = vst.msk [vmem:[%s247 + $0x44] sm:$0xf] %vm3672, %v3657
        %3691 = vst.msk [vmem:[%s247 + $0x48] sm:$0xf] %vm3672, %v3658
        %3692 = vst.msk [vmem:[%s247 + $0x4c] sm:$0xf] %vm3672, %v3659
        %3693 = vst.msk [vmem:[%s247 + $0x50] sm:$0xf] %vm3672, %v3660
        %3694 = vst.msk [vmem:[%s247 + $0x54] sm:$0xf] %vm3672, %v3661
        %3695 = vst.msk [vmem:[%s247 + $0x58] sm:$0xf] %vm3672, %v3662
        %3696 = vst.msk [vmem:[%s247 + $0x5c] sm:$0xf] %vm3672, %v3663
        %3697 = vst.msk [vmem:[%s247 + $0x60] sm:$0xf] %vm3672, %v3664
        %3698 = vst.msk [vmem:[%s247 + $0x64] sm:$0xf] %vm3672, %v3665
        %3699 = vst.msk [vmem:[%s247 + $0x68] sm:$0xf] %vm3672, %v3666
        %3700 = vst.msk [vmem:[%s247 + $0x6c] sm:$0xf] %vm3672, %v3667
        %3701 = vst.msk [vmem:[%s247 + $0x70] sm:$0xf] %vm3672, %v3668
        %3702 = vst.msk [vmem:[%s247 + $0x74] sm:$0xf] %vm3672, %v3669
        %3703 = vst.msk [vmem:[%s247 + $0x78] sm:$0xf] %vm3672, %v3670
        %3704 = vst.msk [vmem:[%s247 + $0x7c] sm:$0xf] %vm3672, %v3671
      $region36: #{global_conv_forward.6} parent=27 // pred_fallthru
        _
      %s3705 = smul.u32 16, %s20
      %p3706 = scmp.lt.s32.totalorder %s19, 1
      %s3707 = scalar_select %p3706, %s19, 1
      %p3708 = scmp.lt.s32.totalorder %s3705, 15
      %s3709 = scalar_select %p3708, %s3705, 15
      %p3710 = scmp.lt.s32.totalorder %s21, 0
      %s3711 = scalar_select %p3710, %s21, 0
      %s3712 = smul.addr %s3709, 2
      %s3713 = sadd.s32 %s3711, %s3712
      %s3714 = smul.addr %s3707, 32
      %s3715 = sadd.s32 %s3713, %s3714
      %s3716 = smul.addr %s3715, 4
      %s3717 = scalar_lea.vmem %s2, %s3716
      // Predicated region
      $region37: #{global_conv_forward.6} parent=27 // pred_check
        %p3718 = pneg %p119
      $region38: #{global_conv_forward.6} parent=27 // pred_check_branch
        %3720 = sbr.rel (%p3718) target = $region40
      $region39: #{global_conv_forward.6} parent=27 // pred_region
        %s3721 = smul.u32 16, %s20
      $region40: #{global_conv_forward.6} parent=27 // pred_fallthru
        _
    $region28: #{global_conv_forward.6} parent=5 // pred_fallthru
      _
    %p3722 = scmp.le.s32.totalorder 2, %s8
    // Predicated region
    $region41: #{global_conv_forward.6} parent=5 // pred_check
      %p3723 = pneg %p3722
    $region42: #{global_conv_forward.6} parent=5 // pred_check_branch
      %3725 = sbr.rel (%p3723) target = $region44
    $region43: #{global_conv_forward.6} parent=5 // pred_region
      %s3726 = ssub.s32 %s8, 2
      // Predicated region
      $region45: #{global_conv_forward.6} parent=43 // pred_check
        %p3727 = pneg %p125
      $region46: #{global_conv_forward.6} parent=43 // pred_check_branch
        %3729 = sbr.rel (%p3727) target = $region48
      $region47: #{global_conv_forward.6} parent=43 // pred_region
        %s3730 = smul.u32 16, %s24
        %p3731 = scmp.lt.s32.totalorder %s23, 1
        %s3732 = scalar_select %p3731, %s23, 1
        %p3733 = scmp.lt.s32.totalorder %s3730, 15
        %s3734 = scalar_select %p3733, %s3730, 15
        %p3735 = scmp.lt.s32.totalorder %s25, 0
        %s3736 = scalar_select %p3735, %s25, 0
        %s3737 = smul.addr %s3734, 2
        %s3738 = sadd.s32 %s3736, %s3737
        %s3739 = smul.addr %s3732, 32
        %s3740 = sadd.s32 %s3738, %s3739
        %s3741 = smul.addr %s3740, 4
        %s3742 = scalar_lea.vmem %s2, %s3741
      $region48: #{global_conv_forward.6} parent=43 // pred_fallthru
        _
    $region44: #{global_conv_forward.6} parent=5 // pred_fallthru
      _
  $region6: #{global_conv_forward.6} parent=0 // loop_footer
    %s12 = sadd.s32 1, %s8
  $region7: #{global_conv_forward.6} parent=0 // loop_footer_branch
    %7 = sbr.rel target = $region3
  $region8: #{global_conv_forward.6} parent=0 // loop_exit
    _

</llo_original>
